<compile_context>
chip_gen: v6e
topology: v6e:2x2x1
jax: 0.10.0
libtpu: 0.0.40
codegen_flags: <defaults>
</compile_context>

<pallas_src>
import jax
import jax.numpy as jnp
from jax import lax
from jax.experimental import pallas as pl
from jax.experimental.pallas import tpu as pltpu

# ----------------------- configuration (small, consistent with the module) --
DIM = 32            # dim       (PyTorch default 256)
NUM_HEADS = 4       # num_heads (PyTorch default 16)
HEAD_DIM = DIM // NUM_HEADS
WS = 8              # window_size
WS2 = WS * WS
SCALE = HEAD_DIM ** -0.5
BN_EPS = 1e-5

# bf16 matmul operands (f32 accumulation, f32 softmax/elementwise) pay off on
# v5e/v6e/v7x alike.  TODO(synk): pass jnp.float32 here for pre-v5 chips.
COMPUTE_DTYPE = jnp.bfloat16


# ============================ Pallas kernels =================================
def _fused_attn_local2_kernel(x_ref, w_ref, lbias_ref, bias_ref, cmask_ref,
                              attn_ref, local_ref):
    # x_ref:     (T, WS2, C)           T windows of pixels (compute dtype)
    # w_ref:     (C, 4C)               columns = [local2 (BN folded) | q*scale | k | v]
    # lbias_ref: (1, C)         f32    folded local2 BN bias
    # bias_ref:  (NH*WS2, WS2)  f32    relative position bias, heads stacked on rows
    # cmask_ref: (NH, C)        f32    cmask[h, c] = 1 if c // HEAD_DIM == h else 0
    # attn_ref:  (T, WS2, C)           window-attention output (channel = h*HEAD_DIM + d)
    # local_ref: (T, WS2, C)           local2 (1x1 ConvBN) output
    T = x_ref.shape[0]
    cdt = x_ref.dtype

    # One big pointwise MXU matmul for local2 + q + k + v (f32 accumulation).
    xf = x_ref[...].reshape(T * WS2, DIM)
    y = jnp.dot(xf, w_ref[...], preferred_element_type=jnp.float32)   # (T*WS2, 4C)

    # local2 branch (single store, cast on store).
    local_ref[...] = (y[:, :DIM] + lbias_ref[...]
                      ).reshape(T, WS2, DIM).astype(local_ref.dtype)

    q = y[:, DIM:2 * DIM].reshape(T, WS2, DIM).astype(cdt)   # attn scale pre-folded
    k = y[:, 2 * DIM:3 * DIM].reshape(T, WS2, DIM).astype(cdt)
    v = y[:, 3 * DIM:].reshape(T, WS2, DIM).astype(cdt)

    # Head-merged attention: stack the four per-head query blocks along the
    # row (sublane) axis, masked so each block only "sees" its head's 8 dims:
    #   q_bd[t, h*WS2 + i, c] = q[t, i, c] * (c // HEAD_DIM == h)
    cmask = cmask_ref[...]                                    # (NH, DIM) f32
    q_bd = (q[:, None, :, :] * cmask.astype(cdt)[None, :, None, :]
            ).reshape(T, NUM_HEADS * WS2, DIM)                # (T, NH*WS2, DIM)

    # dots[t, h*WS2 + i, j] = <q_h[i], k_h[j]> -- one matmul per window,
    # contraction depth DIM (32) instead of HEAD_DIM (8), no per-head loop,
    # softmax reduction stays a plain last-axis (lane) reduction.
    dots = jnp.einsum("tqd,tkd->tqk", q_bd, k,
                      preferred_element_type=jnp.float32)     # (T, NH*WS2, WS2)
    dots = dots + bias_ref[...]                               # rel-pos bias
    dots = dots - jnp.max(dots, axis=-1, keepdims=True)
    p = jnp.exp(dots)
    inv = pl.reciprocal(jnp.sum(p, axis=-1, keepdims=True), approx=True)
    attn = (p * inv).astype(cdt)                              # (T, NH*WS2, WS2)

    # attn @ V over the full 32 channels, then keep each head's own 8-column
    # slot with a masked sublane-group sum.  The 4x MAC overshoot is free on
    # this memory-bound kernel and avoids 8-lane-per-head outputs + concat.
    om = jnp.einsum("tqk,tkd->tqd", attn, v,
                    preferred_element_type=jnp.float32)       # (T, NH*WS2, DIM)
    om = om.reshape(T, NUM_HEADS, WS2, DIM) * cmask[None, :, None, :]
    attn_ref[...] = jnp.sum(om, axis=1).astype(attn_ref.dtype)


def fused_window_attention_local2(x_win, w_cat, local2_bias, rel_bias,
                                  block_windows=64, out_dtype=None):
    """x_win: (NW, WS2, C) -> (attn (NW, WS2, C), local2 (NW, WS2, C)).

    Processes `block_windows` windows per grid step (T=64 keeps the f32
    in-kernel temps + double-buffered IO comfortably inside v7x's 32 MiB
    scoped VMEM default; raise + set vmem_limit_bytes to sweep higher on v6e).
    Zero-padded windows (nwp > nw) are computed and cropped -- harmless.
    """
    nw = x_win.shape[0]
    cdt = x_win.dtype
    if out_dtype is None:
        out_dtype = cdt
    T = max(1, min(block_windows, nw))
    nwp = pl.cdiv(nw, T) * T
    if nwp != nw:
        x_win = jnp.pad(x_win, ((0, nwp - nw), (0, 0), (0, 0)))

    # heads stacked on the row axis: bias_merged[h*WS2 + i, j] = rel_bias[h, i, j]
    bias_merged = rel_bias.reshape(NUM_HEADS * WS2, WS2).astype(jnp.float32)
    cmask = (jnp.arange(DIM)[None, :] // HEAD_DIM ==
             jnp.arange(NUM_HEADS)[:, None]).astype(jnp.float32)       # (NH, DIM)

    esize = jnp.dtype(cdt).itemsize
    osize = jnp.dtype(out_dtype).itemsize
    cost = pl.CostEstimate(
        flops=2 * nwp * WS2 * DIM * 4 * DIM
        + 2 * 2 * nwp * NUM_HEADS * WS2 * WS2 * DIM,
        transcendentals=nwp * NUM_HEADS * WS2 * WS2,
        bytes_accessed=nwp * WS2 * DIM * esize + DIM * 4 * DIM * esize
        + NUM_HEADS * WS2 * WS2 * 4 + 2 * nwp * WS2 * DIM * osize)

    attn, local2 = pl.pallas_call(
        _fused_attn_local2_kernel,
        out_shape=(jax.ShapeDtypeStruct((nwp, WS2, DIM), out_dtype),
                   jax.ShapeDtypeStruct((nwp, WS2, DIM), out_dtype)),
        grid_spec=pltpu.PrefetchScalarGridSpec(
            num_scalar_prefetch=0,
            grid=(nwp // T,),
            in_specs=[
                pl.BlockSpec((T, WS2, DIM), lambda i: (i, 0, 0)),
                pl.BlockSpec((DIM, 4 * DIM), lambda i: (0, 0)),
                pl.BlockSpec((1, DIM), lambda i: (0, 0)),
                pl.BlockSpec((NUM_HEADS * WS2, WS2), lambda i: (0, 0)),
                pl.BlockSpec((NUM_HEADS, DIM), lambda i: (0, 0)),
            ],
            out_specs=[
                pl.BlockSpec((T, WS2, DIM), lambda i: (i, 0, 0)),
                pl.BlockSpec((T, WS2, DIM), lambda i: (i, 0, 0)),
            ],
        ),
        compiler_params=pltpu.CompilerParams(dimension_semantics=("parallel",)),
        cost_estimate=cost,
    )(x_win, w_cat,
      local2_bias.reshape(1, DIM).astype(jnp.float32), bias_merged, cmask)
    return attn[:nw], local2[:nw]


def _matmul_bias_kernel(x_ref, w_ref, b_ref, o_ref):
    # (TILE, 128) @ (128, 128) + per-lane bias (folded BN), f32 accumulation.
    y = jnp.dot(x_ref[...], w_ref[...], preferred_element_type=jnp.float32)
    o_ref[...] = (y + b_ref[...]).astype(o_ref.dtype)


def conv1x1_bias(x_nhwc, w_mat, bias, tile_rows=2048, compute_dtype=jnp.bfloat16):
    """1x1 conv (matmul over all pixels) + per-channel bias (folded BN).

    Lane-dense version: Cout=32 would make every load/store a 32-of-128-lane
    masked op, so PACK=4 consecutive pixels are packed along the lane axis
    ((N, 32) -> (N/4, 128)), the weight becomes block-diagonal (128, 128) and
    the bias is tiled; the kernel is an unmasked (tile,128)@(128,128)+bias
    matmul.  tile_rows=2048 packed rows = 8192 pixels -> ~0.5 MiB bf16 in /
    1 MiB f32 out per block (double-buffered ~3 MiB, VMEM-safe on all gens).
    Zero-padded rows (rows_p > rows) are computed and cropped -- harmless.
    """
    B, H, W, Cin = x_nhwc.shape
    Cout = w_mat.shape[1]
    N = B * H * W
    pack = max(1, 128 // max(Cin, Cout))
    rows = pl.cdiv(N, pack)
    tile = min(tile_rows, pl.cdiv(rows, 8) * 8)
    rows_p = pl.cdiv(rows, tile) * tile

    xf = x_nhwc.reshape(N, Cin).astype(compute_dtype)
    if rows_p * pack != N:
        xf = jnp.pad(xf, ((0, rows_p * pack - N), (0, 0)))
    x_packed = xf.reshape(rows_p, pack * Cin)

    w_bd = jnp.kron(jnp.eye(pack, dtype=jnp.float32),
                    w_mat.astype(jnp.float32)).astype(compute_dtype)
    b_packed = jnp.tile(bias.astype(jnp.float32), pack).reshape(1, pack * Cout)

    esize = jnp.dtype(compute_dtype).itemsize
    cost = pl.CostEstimate(
        flops=2 * rows_p * (pack * Cin) * (pack * Cout),
        transcendentals=0,
        bytes_accessed=rows_p * pack * Cin * esize
        + (pack * Cin) * (pack * Cout) * esize + rows_p * pack * Cout * 4)

    out = pl.pallas_call(
        _matmul_bias_kernel,
        out_shape=jax.ShapeDtypeStruct((rows_p, pack * Cout), jnp.float32),
        grid_spec=pltpu.PrefetchScalarGridSpec(
            num_scalar_prefetch=0,
            grid=(rows_p // tile,),
            in_specs=[
                pl.BlockSpec((tile, pack * Cin), lambda i: (i, 0)),
                pl.BlockSpec((pack * Cin, pack * Cout), lambda i: (0, 0)),
                pl.BlockSpec((1, pack * Cout), lambda i: (0, 0)),
            ],
            out_specs=pl.BlockSpec((tile, pack * Cout), lambda i: (i, 0)),
        ),
        compiler_params=pltpu.CompilerParams(dimension_semantics=("parallel",)),
        cost_estimate=cost,
    )(x_packed, w_bd, b_packed)
    return out.reshape(rows_p * pack, Cout)[:N].reshape(B, H, W, Cout)


# ============================ JAX glue =======================================
def bn_scale_bias(gamma, beta, mean, var, eps=BN_EPS):
    s = gamma / jnp.sqrt(var + eps)
    return s, beta - mean * s


def build_fused_weight(local2_w, local2_scale, qkv_w):
    # columns: [ local2 (BN scale folded) | q (*SCALE folded) | k | v ]
    return jnp.concatenate(
        [local2_w * local2_scale[None, :],
         qkv_w[:, :DIM] * SCALE,
         qkv_w[:, DIM:2 * DIM],
         qkv_w[:, 2 * DIM:]], axis=1)


def relative_position_index(ws):
    coords = jnp.stack(jnp.meshgrid(jnp.arange(ws), jnp.arange(ws), indexing="ij"))
    flat = coords.reshape(2, -1)                       # (2, ws2)
    rel = flat[:, :, None] - flat[:, None, :]          # (2, ws2, ws2)
    rel = rel.transpose(1, 2, 0)                       # (ws2, ws2, 2)
    rel = rel.at[:, :, 0].add(ws - 1)
    rel = rel.at[:, :, 1].add(ws - 1)
    rel = rel.at[:, :, 0].multiply(2 * ws - 1)
    return rel.sum(-1)                                 # (ws2, ws2)


def window_partition(x_nhwc, ws):
    B, H, W, C = x_nhwc.shape
    hh, ww = H // ws, W // ws
    x = x_nhwc.reshape(B, hh, ws, ww, ws, C).transpose(0, 1, 3, 2, 4, 5)
    return x.reshape(B * hh * ww, ws * ws, C)


def window_merge(x_win, B, H, W, ws):
    hh, ww = H // ws, W // ws
    C = x_win.shape[-1]
    x = x_win.reshape(B, hh, ww, ws, ws, C).transpose(0, 1, 3, 2, 4, 5)
    return x.reshape(B, H, W, C)


def conv2d_nhwc(x, w_hwio, padding, groups=1):
    # TODO(synk): spatial 3x3 / depthwise 8x8 convs stay in lax.conv (glue), not Pallas.
    return lax.conv_general_dilated(
        x, w_hwio, window_strides=(1, 1),
        padding=[(padding, padding), (padding, padding)],
        dimension_numbers=("NHWC", "HWIO", "NHWC"),
        feature_group_count=groups)


def avg_pool_axis(x, axis, k, pad):
    # nn.AvgPool2d with count_include_pad=True: zero-pad, sliding sum, divide
    # by k.  Input may be bf16; accumulate in f32.
    pads = [(0, 0)] * 4
    pads[axis] = (pad, pad)
    xp = jnp.pad(x, pads).astype(jnp.float32)
    wdims = [1, 1, 1, 1]
    wdims[axis] = k
    s = lax.reduce_window(xp, 0.0, lax.add, tuple(wdims), (1, 1, 1, 1), "VALID")
    return s / k


def pad_to_multiple(x, ws):
    B, H, W, C = x.shape
    pad_h = (ws - H % ws) % ws
    pad_w = (ws - W % ws) % ws
    if pad_w:
        x = jnp.pad(x, ((0, 0), (0, 0), (0, pad_w), (0, 0)), mode="reflect")
    if pad_h:
        x = jnp.pad(x, ((0, 0), (0, pad_h), (0, 0), (0, 0)), mode="reflect")
    return x


def global_local_attention_forward(x_nhwc, params, compute_dtype=COMPUTE_DTYPE):
    B, H, W, C = x_nhwc.shape
    cdt = compute_dtype

    # local1 = 3x3 ConvBN (glue); BN scale folded into the conv weights.
    s1, b1 = bn_scale_bias(*params["local1_bn"])
    local1 = conv2d_nhwc(x_nhwc, params["local1_w"] * s1, padding=1) + b1

    # reflect-pad to a multiple of the window size; cast to the compute dtype
    # BEFORE partitioning so the materialized (NW, WS2, C) intermediate is bf16.
    xp = pad_to_multiple(x_nhwc, WS).astype(cdt)
    Hp, Wp = xp.shape[1], xp.shape[2]
    # TODO(synk): fold window_partition/window_merge into the Pallas grid
    # (NHWC-layout in_specs/out_specs) to drop these extra full-activation HBM passes.
    x_win = window_partition(xp, WS)

    # fused Pallas kernel: local2 1x1 ConvBN + qkv 1x1 conv + windowed MHSA.
    # (both 1x1 convs are pointwise, so evaluating them on the reflect-padded
    # input and cropping afterwards is exact.)
    s2, b2 = bn_scale_bias(*params["local2_bn"])
    w_cat = build_fused_weight(params["local2_w"], s2, params["qkv_w"]).astype(cdt)
    attn_win, local2_win = fused_window_attention_local2(
        x_win, w_cat, b2, params["rel_bias"], out_dtype=cdt)
    attn = window_merge(attn_win, B, Hp, Wp, WS)[:, :H, :W, :]
    local2 = window_merge(local2_win, B, Hp, Wp, WS)[:, :H, :W, :]
    local = local2.astype(jnp.float32) + local1

    # attn_x / attn_y average-pool branches (glue; bf16 reads, f32 accumulation)
    attn_hpad = jnp.pad(attn, ((0, 0), (0, 1), (0, 0), (0, 0)), mode="reflect")
    out_x = avg_pool_axis(attn_hpad, axis=1, k=WS, pad=WS // 2 - 1)
    attn_wpad = jnp.pad(attn, ((0, 0), (0, 0), (0, 1), (0, 0)), mode="reflect")
    out_y = avg_pool_axis(attn_wpad, axis=2, k=WS, pad=WS // 2 - 1)
    out = out_x + out_y + local

    # pad_out + SeparableConvBN(proj): depthwise WSxWS conv stays in lax.conv;
    # its BN is folded into the pointwise 1x1 conv, which runs as a lane-dense
    # Pallas matmul + bias.
    out = jnp.pad(out, ((0, 0), (0, 1), (0, 1), (0, 0)), mode="reflect")
    dw = conv2d_nhwc(out, params["proj_dw_w"], padding=(WS - 1) // 2, groups=C)
    sp, bp = bn_scale_bias(*params["proj_bn"])
    w_eff = params["proj_pw_w"] * sp[:, None]          # BN scale -> pw weight
    b_eff = bp @ params["proj_pw_w"]                   # BN shift -> pw bias
    out = conv1x1_bias(dw, w_eff, b_eff, compute_dtype=cdt)

    return out[:, :H, :W, :]


# ============================ parameter init =================================
def init_params(key):
    ks = jax.random.split(key, 9)

    def nrm(k, shape, scale=0.1):
        return scale * jax.random.normal(k, shape, jnp.float32)

    def bn(k):
        k1, k2, k3, k4 = jax.random.split(k, 4)
        gamma = 1.0 + 0.1 * jax.random.normal(k1, (DIM,), jnp.float32)
        beta = 0.1 * jax.random.normal(k2, (DIM,), jnp.float32)
        mean = 0.05 * jax.random.normal(k3, (DIM,), jnp.float32)
        var = 1.0 + 0.1 * jnp.abs(jax.random.normal(k4, (DIM,), jnp.float32))
        return gamma, beta, mean, var

    # PyTorch-shaped weights (OIHW), converted to the kernel layouts below.
    local1_w_oihw = nrm(ks[0], (DIM, DIM, 3, 3))
    local2_w_oihw = nrm(ks[1], (DIM, DIM, 1, 1))
    qkv_w_oihw = nrm(ks[2], (3 * DIM, DIM, 1, 1))
    proj_dw_oihw = nrm(ks[3], (DIM, 1, WS, WS))
    proj_pw_oihw = nrm(ks[4], (DIM, DIM, 1, 1))
    table = 0.02 * jax.random.truncated_normal(
        ks[5], -2.0, 2.0, ((2 * WS - 1) * (2 * WS - 1), NUM_HEADS), jnp.float32)

    idx = relative_position_index(WS)                              # (WS2, WS2)
    rel_bias = table[idx.reshape(-1)].reshape(WS2, WS2, NUM_HEADS)
    rel_bias = jnp.asarray(rel_bias.transpose(2, 0, 1), jnp.float32)  # (NH, WS2, WS2)

    return dict(
        local1_w=jnp.transpose(local1_w_oihw, (2, 3, 1, 0)),       # HWIO
        local1_bn=bn(ks[6]),
        local2_w=local2_w_oihw[:, :, 0, 0].T,                      # (Cin, Cout)
        local2_bn=bn(ks[7]),
        qkv_w=qkv_w_oihw[:, :, 0, 0].T,                            # (C, 3C)
        proj_dw_w=jnp.transpose(proj_dw_oihw, (2, 3, 1, 0)),       # (WS, WS, 1, C)
        proj_bn=bn(ks[8]),
        proj_pw_w=proj_pw_oihw[:, :, 0, 0].T,                      # (C, C)
        rel_bias=rel_bias,
    )


# pure-JAX reference of the fused kernel (sanity check)
def fused_attention_ref(x_win, w_cat, local2_bias, rel_bias):
    x = x_win.astype(jnp.float32)
    w = w_cat.astype(jnp.float32)
    nw = x.shape[0]
    y = jnp.einsum("npc,cd->npd", x, w)
    local2 = y[..., :DIM] + local2_bias[None, None, :]
    qkv = y[..., DIM:].reshape(nw, WS2, 3, NUM_HEADS, HEAD_DIM)
    q = qkv[:, :, 0].transpose(0, 2, 1, 3)
    k = qkv[:, :, 1].transpose(0, 2, 1, 3)
    v = qkv[:, :, 2].transpose(0, 2, 1, 3)
    dots = jnp.einsum("nhqd,nhkd->nhqk", q, k) + rel_bias[None]   # SCALE pre-folded
    attn = jax.nn.softmax(dots, axis=-1)
    o = jnp.einsum("nhqk,nhkd->nhqd", attn, v)
    return o.transpose(0, 2, 1, 3).reshape(nw, WS2, DIM), local2


if __name__ == "__main__":
    key = jax.random.PRNGKey(0)
    kx, kp = jax.random.split(key)
    B, H, W = 2, 16, 16

    x_nchw = jax.random.normal(kx, (B, DIM, H, W), jnp.float32)   # PyTorch NCHW input
    params = init_params(kp)

    x_nhwc = jnp.transpose(x_nchw, (0, 2, 3, 1))                  # internal NHWC
    out_nhwc = jax.jit(global_local_attention_forward)(x_nhwc, params)
    out = jnp.transpose(out_nhwc, (0, 3, 1, 2))                   # back to NCHW
    jax.block_until_ready(out)
    assert out.shape == (B, DIM, H, W)

    # sanity-check the fused Pallas kernel against a pure-JAX reference
    xpad = pad_to_multiple(x_nhwc, WS).astype(COMPUTE_DTYPE)
    x_win = window_partition(xpad, WS)
    s2, b2 = bn_scale_bias(*params["local2_bn"])
    w_cat = build_fused_weight(params["local2_w"], s2,
                               params["qkv_w"]).astype(COMPUTE_DTYPE)
    a_pl, l_pl = fused_window_attention_local2(x_win, w_cat, b2,
                                               params["rel_bias"],
                                               out_dtype=COMPUTE_DTYPE)
    jax.block_until_ready(a_pl)
    jax.block_until_ready(l_pl)
    a_ref, l_ref = fused_attention_ref(x_win, w_cat, b2, params["rel_bias"])
    tol = dict(rtol=3e-2, atol=3e-2)   # bf16 operands + bf16 outputs + approx recip
    assert jnp.allclose(a_pl.astype(jnp.float32), a_ref, **tol), "attention kernel mismatch"
    assert jnp.allclose(l_pl.astype(jnp.float32), l_ref, **tol), "local2 kernel mismatch"

    # sanity-check the lane-dense conv1x1 kernel against a plain matmul
    sp, bp = bn_scale_bias(*params["proj_bn"])
    w_eff = params["proj_pw_w"] * sp[:, None]
    b_eff = bp @ params["proj_pw_w"]
    xc = jax.random.normal(jax.random.PRNGKey(1), (B, H, W, DIM), jnp.float32)
    c_pl = conv1x1_bias(xc, w_eff, b_eff, compute_dtype=COMPUTE_DTYPE)
    c_ref = (xc.reshape(-1, DIM) @ w_eff + b_eff).reshape(B, H, W, DIM)
    assert jnp.allclose(c_pl, c_ref, **tol), "conv1x1 kernel mismatch"

    print("KERNEL_OK")
</pallas_src>

<mosaic_0001>
module attributes {stable_mosaic.version = 11 : i64} {
  func.func @_fused_attn_local2_kernel(%arg0: i32, %arg1: memref<8x64x32xbf16, #tpu.memory_space<vmem>>, %arg2: memref<32x128xbf16, #tpu.memory_space<vmem>>, %arg3: memref<1x32xf32, #tpu.memory_space<vmem>>, %arg4: memref<256x64xf32, #tpu.memory_space<vmem>>, %arg5: memref<4x32xf32, #tpu.memory_space<vmem>>, %arg6: memref<8x64x32xbf16, #tpu.memory_space<vmem>>, %arg7: memref<8x64x32xbf16, #tpu.memory_space<vmem>>) attributes {dimension_semantics = [#tpu.dimension_semantics<parallel>], iteration_bounds = array<i64: 1>, scalar_prefetch = 0 : i64, scratch_operands = 0 : i64, tpu.core_type = #tpu.core_type<tc>, window_params = [{transform_indices = @transform_0, window_bounds = array<i64: 8, 64, 32>}, {pipeline_mode = #tpu.pipeline_mode<synchronous>, transform_indices = @transform_1, window_bounds = array<i64: 32, 128>}, {pipeline_mode = #tpu.pipeline_mode<synchronous>, transform_indices = @transform_2, window_bounds = array<i64: 1, 32>}, {pipeline_mode = #tpu.pipeline_mode<synchronous>, transform_indices = @transform_3, window_bounds = array<i64: 256, 64>}, {pipeline_mode = #tpu.pipeline_mode<synchronous>, transform_indices = @transform_4, window_bounds = array<i64: 4, 32>}, {transform_indices = @transform_5, window_bounds = array<i64: 8, 64, 32>}, {transform_indices = @transform_6, window_bounds = array<i64: 8, 64, 32>}]} {
    %c0 = arith.constant 0 : index
    %c0_0 = arith.constant 0 : index
    %c0_1 = arith.constant 0 : index
    %0 = vector.load %arg1[%c0, %c0_0, %c0_1] : memref<8x64x32xbf16, #tpu.memory_space<vmem>>, vector<8x64x32xbf16>
    %1 = vector.shape_cast %0 : vector<8x64x32xbf16> to vector<512x32xbf16>
    %c0_2 = arith.constant 0 : index
    %c0_3 = arith.constant 0 : index
    %2 = vector.load %arg2[%c0_2, %c0_3] : memref<32x128xbf16, #tpu.memory_space<vmem>>, vector<32x128xbf16>
    %cst = arith.constant dense<0.000000e+00> : vector<512x128xf32>
    %3 = tpu.matmul %1, %2, %cst {dimension_numbers = #tpu.dot_dimension_numbers<[1], [0], [0], [1], [0, 0, 1, 1], [], []>} : vector<512x32xbf16>, vector<32x128xbf16>, vector<512x128xf32> -> vector<512x128xf32>
    %4 = vector.extract_strided_slice %3 {offsets = [0, 0], sizes = [512, 32], strides = [1, 1]} : vector<512x128xf32> to vector<512x32xf32>
    %c0_4 = arith.constant 0 : index
    %c0_5 = arith.constant 0 : index
    %5 = vector.load %arg3[%c0_4, %c0_5] : memref<1x32xf32, #tpu.memory_space<vmem>>, vector<1x32xf32>
    %6 = vector.broadcast %5 : vector<1x32xf32> to vector<512x32xf32>
    %7 = arith.addf %4, %6 : vector<512x32xf32>
    %8 = vector.shape_cast %7 : vector<512x32xf32> to vector<8x64x32xf32>
    %9 = arith.truncf %8 : vector<8x64x32xf32> to vector<8x64x32xbf16>
    %c0_6 = arith.constant 0 : index
    %c0_7 = arith.constant 0 : index
    %c0_8 = arith.constant 0 : index
    %10 = vector.load %arg7[%c0_6, %c0_7, %c0_8] : memref<8x64x32xbf16, #tpu.memory_space<vmem>>, vector<8x64x32xbf16>
    tpu.vector_store %arg7[%c0_6, %c0_7, %c0_8], %9 {strides = array<i32>} : memref<8x64x32xbf16, #tpu.memory_space<vmem>>, vector<8x64x32xbf16>,
    %11 = vector.extract_strided_slice %3 {offsets = [0, 32], sizes = [512, 32], strides = [1, 1]} : vector<512x128xf32> to vector<512x32xf32>
    %12 = vector.shape_cast %11 : vector<512x32xf32> to vector<8x64x32xf32>
    %13 = arith.truncf %12 : vector<8x64x32xf32> to vector<8x64x32xbf16>
    %14 = vector.extract_strided_slice %3 {offsets = [0, 64], sizes = [512, 32], strides = [1, 1]} : vector<512x128xf32> to vector<512x32xf32>
    %15 = vector.shape_cast %14 : vector<512x32xf32> to vector<8x64x32xf32>
    %16 = arith.truncf %15 : vector<8x64x32xf32> to vector<8x64x32xbf16>
    %17 = vector.extract_strided_slice %3 {offsets = [0, 96], sizes = [512, 32], strides = [1, 1]} : vector<512x128xf32> to vector<512x32xf32>
    %18 = vector.shape_cast %17 : vector<512x32xf32> to vector<8x64x32xf32>
    %19 = arith.truncf %18 : vector<8x64x32xf32> to vector<8x64x32xbf16>
    %c0_9 = arith.constant 0 : index
    %c0_10 = arith.constant 0 : index
    %20 = vector.load %arg5[%c0_9, %c0_10] : memref<4x32xf32, #tpu.memory_space<vmem>>, vector<4x32xf32>
    %21 = vector.shape_cast %13 : vector<8x64x32xbf16> to vector<8x1x64x32xbf16>
    %22 = arith.truncf %20 : vector<4x32xf32> to vector<4x32xbf16>
    %23 = vector.shape_cast %22 : vector<4x32xbf16> to vector<1x4x1x32xbf16>
    %24 = vector.broadcast %21 : vector<8x1x64x32xbf16> to vector<8x4x64x32xbf16>
    %25 = vector.broadcast %23 : vector<1x4x1x32xbf16> to vector<8x4x64x32xbf16>
    %26 = arith.mulf %24, %25 : vector<8x4x64x32xbf16>
    %27 = vector.shape_cast %26 : vector<8x4x64x32xbf16> to vector<8x256x32xbf16>
    "tpu.trace_start"() <{level = 10 : i32, message = "tqd,tkd->tqk"}> : () -> ()
    %cst_11 = arith.constant dense<0.000000e+00> : vector<8x256x64xf32>
    %28 = tpu.matmul %27, %16, %cst_11 {dimension_numbers = #tpu.dot_dimension_numbers<[2], [2], [1], [1], [0, 0, 0, 1, 1, 1], [0], [0]>} : vector<8x256x32xbf16>, vector<8x64x32xbf16>, vector<8x256x64xf32> -> vector<8x256x64xf32>
    "tpu.trace_stop"() : () -> ()
    %c0_12 = arith.constant 0 : index
    %c0_13 = arith.constant 0 : index
    %29 = vector.load %arg4[%c0_12, %c0_13] : memref<256x64xf32, #tpu.memory_space<vmem>>, vector<256x64xf32>
    %30 = vector.shape_cast %29 : vector<256x64xf32> to vector<1x256x64xf32>
    %31 = vector.broadcast %30 : vector<1x256x64xf32> to vector<8x256x64xf32>
    %32 = arith.addf %28, %31 : vector<8x256x64xf32>
    %cst_14 = arith.constant dense<0xFF800000> : vector<8x256xf32>
    %33 = vector.multi_reduction <maximumf>, %32, %cst_14 [2] : vector<8x256x64xf32> to vector<8x256xf32>
    %34 = vector.shape_cast %33 : vector<8x256xf32> to vector<8x256x1xf32>
    %35 = vector.broadcast %34 : vector<8x256x1xf32> to vector<8x256x64xf32>
    %36 = arith.subf %32, %35 : vector<8x256x64xf32>
    %37 = math.exp %36 : vector<8x256x64xf32>
    %cst_15 = arith.constant dense<0.000000e+00> : vector<8x256xf32>
    %38 = vector.multi_reduction <add>, %37, %cst_15 [2] : vector<8x256x64xf32> to vector<8x256xf32>
    %39 = vector.shape_cast %38 : vector<8x256xf32> to vector<8x256x1xf32>
    %40 = tpu.reciprocal %39 {approx = true} : vector<8x256x1xf32> -> vector<8x256x1xf32>
    %41 = vector.broadcast %40 : vector<8x256x1xf32> to vector<8x256x64xf32>
    %42 = arith.mulf %37, %41 : vector<8x256x64xf32>
    %43 = arith.truncf %42 : vector<8x256x64xf32> to vector<8x256x64xbf16>
    "tpu.trace_start"() <{level = 10 : i32, message = "tqk,tkd->tqd"}> : () -> ()
    %cst_16 = arith.constant dense<0.000000e+00> : vector<8x256x32xf32>
    %44 = tpu.matmul %43, %19, %cst_16 {dimension_numbers = #tpu.dot_dimension_numbers<[2], [1], [1], [2], [0, 0, 0, 1, 1, 2], [0], [0]>} : vector<8x256x64xbf16>, vector<8x64x32xbf16>, vector<8x256x32xf32> -> vector<8x256x32xf32>
    "tpu.trace_stop"() : () -> ()
    %45 = vector.shape_cast %44 : vector<8x256x32xf32> to vector<8x4x64x32xf32>
    %46 = vector.shape_cast %20 : vector<4x32xf32> to vector<1x4x1x32xf32>
    %47 = vector.broadcast %46 : vector<1x4x1x32xf32> to vector<8x4x64x32xf32>
    %48 = arith.mulf %45, %47 : vector<8x4x64x32xf32>
    %cst_17 = arith.constant dense<0.000000e+00> : vector<8x64x32xf32>
    %49 = vector.multi_reduction <add>, %48, %cst_17 [1] : vector<8x4x64x32xf32> to vector<8x64x32xf32>
    %50 = arith.truncf %49 : vector<8x64x32xf32> to vector<8x64x32xbf16>
    %c0_18 = arith.constant 0 : index
    %c0_19 = arith.constant 0 : index
    %c0_20 = arith.constant 0 : index
    %51 = vector.load %arg6[%c0_18, %c0_19, %c0_20] : memref<8x64x32xbf16, #tpu.memory_space<vmem>>, vector<8x64x32xbf16>
    tpu.vector_store %arg6[%c0_18, %c0_19, %c0_20], %50 {strides = array<i32>} : memref<8x64x32xbf16, #tpu.memory_space<vmem>>, vector<8x64x32xbf16>,
    return
  }
  func.func @transform_0(%arg0: i32) -> (i32, i32, i32) {
    %c0_i32 = arith.constant 0 : i32
    %c0_i32_0 = arith.constant 0 : i32
    %c0_i32_1 = arith.constant 0 : i32
    return %arg0, %c0_i32, %c0_i32_0 : i32, i32, i32
  }
  func.func @transform_1(%arg0: i32) -> (i32, i32) {
    %c0_i32 = arith.constant 0 : i32
    %c0_i32_0 = arith.constant 0 : i32
    %c0_i32_1 = arith.constant 0 : i32
    return %c0_i32, %c0_i32_0 : i32, i32
  }
  func.func @transform_2(%arg0: i32) -> (i32, i32) {
    %c0_i32 = arith.constant 0 : i32
    %c0_i32_0 = arith.constant 0 : i32
    %c0_i32_1 = arith.constant 0 : i32
    return %c0_i32, %c0_i32_0 : i32, i32
  }
  func.func @transform_3(%arg0: i32) -> (i32, i32) {
    %c0_i32 = arith.constant 0 : i32
    %c0_i32_0 = arith.constant 0 : i32
    %c0_i32_1 = arith.constant 0 : i32
    return %c0_i32, %c0_i32_0 : i32, i32
  }
  func.func @transform_4(%arg0: i32) -> (i32, i32) {
    %c0_i32 = arith.constant 0 : i32
    %c0_i32_0 = arith.constant 0 : i32
    %c0_i32_1 = arith.constant 0 : i32
    return %c0_i32, %c0_i32_0 : i32, i32
  }
  func.func @transform_5(%arg0: i32) -> (i32, i32, i32) {
    %c0_i32 = arith.constant 0 : i32
    %c0_i32_0 = arith.constant 0 : i32
    %c0_i32_1 = arith.constant 0 : i32
    return %arg0, %c0_i32, %c0_i32_0 : i32, i32, i32
  }
  func.func @transform_6(%arg0: i32) -> (i32, i32, i32) {
    %c0_i32 = arith.constant 0 : i32
    %c0_i32_0 = arith.constant 0 : i32
    %c0_i32_1 = arith.constant 0 : i32
    return %arg0, %c0_i32, %c0_i32_0 : i32, i32, i32
  }
}

module attributes {stable_mosaic.version = 11 : i64} {
  func.func @_matmul_bias_kernel(%arg0: i32, %arg1: memref<128x128xbf16, #tpu.memory_space<vmem>>, %arg2: memref<128x128xbf16, #tpu.memory_space<vmem>>, %arg3: memref<1x128xf32, #tpu.memory_space<vmem>>, %arg4: memref<128x128xf32, #tpu.memory_space<vmem>>) attributes {dimension_semantics = [#tpu.dimension_semantics<parallel>], iteration_bounds = array<i64: 1>, scalar_prefetch = 0 : i64, scratch_operands = 0 : i64, tpu.core_type = #tpu.core_type<tc>, window_params = [{transform_indices = @transform_0, window_bounds = array<i64: 128, 128>}, {pipeline_mode = #tpu.pipeline_mode<synchronous>, transform_indices = @transform_1, window_bounds = array<i64: 128, 128>}, {pipeline_mode = #tpu.pipeline_mode<synchronous>, transform_indices = @transform_2, window_bounds = array<i64: 1, 128>}, {transform_indices = @transform_3, window_bounds = array<i64: 128, 128>}]} {
    %c0 = arith.constant 0 : index
    %c0_0 = arith.constant 0 : index
    %0 = vector.load %arg1[%c0, %c0_0] : memref<128x128xbf16, #tpu.memory_space<vmem>>, vector<128x128xbf16>
    %c0_1 = arith.constant 0 : index
    %c0_2 = arith.constant 0 : index
    %1 = vector.load %arg2[%c0_1, %c0_2] : memref<128x128xbf16, #tpu.memory_space<vmem>>, vector<128x128xbf16>
    %cst = arith.constant dense<0.000000e+00> : vector<128x128xf32>
    %2 = tpu.matmul %0, %1, %cst {dimension_numbers = #tpu.dot_dimension_numbers<[1], [0], [0], [1], [0, 0, 1, 1], [], []>} : vector<128x128xbf16>, vector<128x128xbf16>, vector<128x128xf32> -> vector<128x128xf32>
    %c0_3 = arith.constant 0 : index
    %c0_4 = arith.constant 0 : index
    %3 = vector.load %arg3[%c0_3, %c0_4] : memref<1x128xf32, #tpu.memory_space<vmem>>, vector<1x128xf32>
    %4 = vector.broadcast %3 : vector<1x128xf32> to vector<128x128xf32>
    %5 = arith.addf %2, %4 : vector<128x128xf32>
    %c0_5 = arith.constant 0 : index
    %c0_6 = arith.constant 0 : index
    %6 = vector.load %arg4[%c0_5, %c0_6] : memref<128x128xf32, #tpu.memory_space<vmem>>, vector<128x128xf32>
    tpu.vector_store %arg4[%c0_5, %c0_6], %5 {strides = array<i32>} : memref<128x128xf32, #tpu.memory_space<vmem>>, vector<128x128xf32>,
    return
  }
  func.func @transform_0(%arg0: i32) -> (i32, i32) {
    %c0_i32 = arith.constant 0 : i32
    %c0_i32_0 = arith.constant 0 : i32
    return %arg0, %c0_i32 : i32, i32
  }
  func.func @transform_1(%arg0: i32) -> (i32, i32) {
    %c0_i32 = arith.constant 0 : i32
    %c0_i32_0 = arith.constant 0 : i32
    %c0_i32_1 = arith.constant 0 : i32
    return %c0_i32, %c0_i32_0 : i32, i32
  }
  func.func @transform_2(%arg0: i32) -> (i32, i32) {
    %c0_i32 = arith.constant 0 : i32
    %c0_i32_0 = arith.constant 0 : i32
    %c0_i32_1 = arith.constant 0 : i32
    return %c0_i32, %c0_i32_0 : i32, i32
  }
  func.func @transform_3(%arg0: i32) -> (i32, i32) {
    %c0_i32 = arith.constant 0 : i32
    %c0_i32_0 = arith.constant 0 : i32
    return %arg0, %c0_i32 : i32, i32
  }
}

</mosaic_0001>

<llo_original>
// kernel: global_local_attention_forward.2
$region0: #{global_local_attention_forward.2}
  #allocation0 [shape = 'u32[]', space=smem, size = 0x4, offset = 0x4, fixed_abs, tag = 'smem constant byte address 0x4 - core index']
  #allocation1 [shape = 'u32[144,128]{1,0:T(1,128)}', space=vmem, size = 0x12000, scoped, tag = 'internal scratch']
  %s0 = inlined_call_operand.vmem [shape: bf16[8,64,32], index: 0, kind: input, shape index: {}]
  %s1 = inlined_call_operand.vmem [shape: bf16[32,128], index: 1, kind: input, shape index: {}]
  %s2 = inlined_call_operand.vmem [shape: f32[1,32], index: 2, kind: input, shape index: {}]
  %s3 = inlined_call_operand.vmem [shape: f32[256,64], index: 3, kind: input, shape index: {}]
  %s4 = inlined_call_operand.vmem [shape: f32[4,32], index: 4, kind: input, shape index: {}]
  %s5 = inlined_call_operand.vmem [shape: bf16[8,64,32], index: 5, kind: output, shape index: {0}]
  %s6 = inlined_call_operand.vmem [shape: bf16[8,64,32], index: 6, kind: output, shape index: {1}]
  %7 = xla_tuple %s5, %s6
  %s8 = sld [smem:[#allocation0]]
  $region38: #{global_local_attention_forward.2} parent=0
    _
  %s10 = ssub.s32 1, %s8
  %s11 = scalar_select 0, %s10, %s8
  // Predicated region
  $region2: #{global_local_attention_forward.2} parent=0 // pred_check
    _
  $region3: #{global_local_attention_forward.2} parent=0 // pred_check_branch
    %13 = sbr.rel (0) target = $region5
  $region4: #{global_local_attention_forward.2} parent=0 // pred_region
    _
  $region5: #{global_local_attention_forward.2} parent=0 // pred_fallthru
    _
  // Predicated region
  $region6: #{global_local_attention_forward.2} parent=0 // pred_check
    _
  $region7: #{global_local_attention_forward.2} parent=0 // pred_check_branch
    %15 = sbr.rel (0) target = $region9
  $region8: #{global_local_attention_forward.2} parent=0 // pred_region
    _
  $region9: #{global_local_attention_forward.2} parent=0 // pred_fallthru
    _
  // Predicated region
  $region10: #{global_local_attention_forward.2} parent=0 // pred_check
    _
  $region11: #{global_local_attention_forward.2} parent=0 // pred_check_branch
    %17 = sbr.rel (0) target = $region13
  $region12: #{global_local_attention_forward.2} parent=0 // pred_region
    _
  $region13: #{global_local_attention_forward.2} parent=0 // pred_fallthru
    _
  // Predicated region
  $region14: #{global_local_attention_forward.2} parent=0 // pred_check
    _
  $region15: #{global_local_attention_forward.2} parent=0 // pred_check_branch
    %19 = sbr.rel (0) target = $region17
  $region16: #{global_local_attention_forward.2} parent=0 // pred_region
    _
  $region17: #{global_local_attention_forward.2} parent=0 // pred_fallthru
    _
  // Predicated region
  $region18: #{global_local_attention_forward.2} parent=0 // pred_check
    _
  $region19: #{global_local_attention_forward.2} parent=0 // pred_check_branch
    %21 = sbr.rel (0) target = $region21
  $region20: #{global_local_attention_forward.2} parent=0 // pred_region
    _
  $region21: #{global_local_attention_forward.2} parent=0 // pred_fallthru
    _
  %v23 = vld [vmem:[%s0] sm:$0xf]
  %v24 = vld [vmem:[%s0 + $0x4] sm:$0xf]
  %v25 = vld [vmem:[%s0 + $0x8] sm:$0xf]
  %v26 = vld [vmem:[%s0 + $0xc] sm:$0xf]
  %v27 = vld [vmem:[%s0 + $0x10] sm:$0xf]
  %v28 = vld [vmem:[%s0 + $0x14] sm:$0xf]
  %v29 = vld [vmem:[%s0 + $0x18] sm:$0xf]
  %v30 = vld [vmem:[%s0 + $0x1c] sm:$0xf]
  %v31 = vld [vmem:[%s0 + $0x20] sm:$0xf]
  %v32 = vld [vmem:[%s0 + $0x24] sm:$0xf]
  %v33 = vld [vmem:[%s0 + $0x28] sm:$0xf]
  %v34 = vld [vmem:[%s0 + $0x2c] sm:$0xf]
  %v35 = vld [vmem:[%s0 + $0x30] sm:$0xf]
  %v36 = vld [vmem:[%s0 + $0x34] sm:$0xf]
  %v37 = vld [vmem:[%s0 + $0x38] sm:$0xf]
  %v38 = vld [vmem:[%s0 + $0x3c] sm:$0xf]
  %v39 = vld [vmem:[%s0 + $0x40] sm:$0xf]
  %v40 = vld [vmem:[%s0 + $0x44] sm:$0xf]
  %v41 = vld [vmem:[%s0 + $0x48] sm:$0xf]
  %v42 = vld [vmem:[%s0 + $0x4c] sm:$0xf]
  %v43 = vld [vmem:[%s0 + $0x50] sm:$0xf]
  %v44 = vld [vmem:[%s0 + $0x54] sm:$0xf]
  %v45 = vld [vmem:[%s0 + $0x58] sm:$0xf]
  %v46 = vld [vmem:[%s0 + $0x5c] sm:$0xf]
  %v47 = vld [vmem:[%s0 + $0x60] sm:$0xf]
  %v48 = vld [vmem:[%s0 + $0x64] sm:$0xf]
  %v49 = vld [vmem:[%s0 + $0x68] sm:$0xf]
  %v50 = vld [vmem:[%s0 + $0x6c] sm:$0xf]
  %v51 = vld [vmem:[%s0 + $0x70] sm:$0xf]
  %v52 = vld [vmem:[%s0 + $0x74] sm:$0xf]
  %v53 = vld [vmem:[%s0 + $0x78] sm:$0xf]
  %v54 = vld [vmem:[%s0 + $0x7c] sm:$0xf]
  %v55 = vld [vmem:[%s0 + $0x80] sm:$0xf]
  %v56 = vld [vmem:[%s0 + $0x84] sm:$0xf]
  %v57 = vld [vmem:[%s0 + $0x88] sm:$0xf]
  %v58 = vld [vmem:[%s0 + $0x8c] sm:$0xf]
  %v59 = vld [vmem:[%s0 + $0x90] sm:$0xf]
  %v60 = vld [vmem:[%s0 + $0x94] sm:$0xf]
  %v61 = vld [vmem:[%s0 + $0x98] sm:$0xf]
  %v62 = vld [vmem:[%s0 + $0x9c] sm:$0xf]
  %v63 = vld [vmem:[%s0 + $0xa0] sm:$0xf]
  %v64 = vld [vmem:[%s0 + $0xa4] sm:$0xf]
  %v65 = vld [vmem:[%s0 + $0xa8] sm:$0xf]
  %v66 = vld [vmem:[%s0 + $0xac] sm:$0xf]
  %v67 = vld [vmem:[%s0 + $0xb0] sm:$0xf]
  %v68 = vld [vmem:[%s0 + $0xb4] sm:$0xf]
  %v69 = vld [vmem:[%s0 + $0xb8] sm:$0xf]
  %v70 = vld [vmem:[%s0 + $0xbc] sm:$0xf]
  %v71 = vld [vmem:[%s0 + $0xc0] sm:$0xf]
  %v72 = vld [vmem:[%s0 + $0xc4] sm:$0xf]
  %v73 = vld [vmem:[%s0 + $0xc8] sm:$0xf]
  %v74 = vld [vmem:[%s0 + $0xcc] sm:$0xf]
  %v75 = vld [vmem:[%s0 + $0xd0] sm:$0xf]
  %v76 = vld [vmem:[%s0 + $0xd4] sm:$0xf]
  %v77 = vld [vmem:[%s0 + $0xd8] sm:$0xf]
  %v78 = vld [vmem:[%s0 + $0xdc] sm:$0xf]
  %v79 = vld [vmem:[%s0 + $0xe0] sm:$0xf]
  %v80 = vld [vmem:[%s0 + $0xe4] sm:$0xf]
  %v81 = vld [vmem:[%s0 + $0xe8] sm:$0xf]
  %v82 = vld [vmem:[%s0 + $0xec] sm:$0xf]
  %v83 = vld [vmem:[%s0 + $0xf0] sm:$0xf]
  %v84 = vld [vmem:[%s0 + $0xf4] sm:$0xf]
  %v85 = vld [vmem:[%s0 + $0xf8] sm:$0xf]
  %v86 = vld [vmem:[%s0 + $0xfc] sm:$0xf]
  %v87 = vld [vmem:[%s1] sm:$0xf]
  %v88 = vld [vmem:[%s1 + $0x4] sm:$0xf]
  %v89 = vld [vmem:[%s1 + $0x8] sm:$0xf]
  %v90 = vld [vmem:[%s1 + $0xc] sm:$0xf]
  %v155 = vunpack.c.l.b16 %v23
  %v156 = vunpack.c.l.b16 %v24
  %v157 = vunpack.c.l.b16 %v25
  %v158 = vunpack.c.l.b16 %v26
  %v159 = vunpack.c.l.b16 %v27
  %v160 = vunpack.c.l.b16 %v28
  %v161 = vunpack.c.l.b16 %v29
  %v162 = vunpack.c.l.b16 %v30
  %v163 = vunpack.c.l.b16 %v31
  %v164 = vunpack.c.l.b16 %v32
  %v165 = vunpack.c.l.b16 %v33
  %v166 = vunpack.c.l.b16 %v34
  %v167 = vunpack.c.l.b16 %v35
  %v168 = vunpack.c.l.b16 %v36
  %v169 = vunpack.c.l.b16 %v37
  %v170 = vunpack.c.l.b16 %v38
  %v171 = vunpack.c.l.b16 %v39
  %v172 = vunpack.c.l.b16 %v40
  %v173 = vunpack.c.l.b16 %v41
  %v174 = vunpack.c.l.b16 %v42
  %v175 = vunpack.c.l.b16 %v43
  %v176 = vunpack.c.l.b16 %v44
  %v177 = vunpack.c.l.b16 %v45
  %v178 = vunpack.c.l.b16 %v46
  %v179 = vunpack.c.l.b16 %v47
  %v180 = vunpack.c.l.b16 %v48
  %v181 = vunpack.c.l.b16 %v49
  %v182 = vunpack.c.l.b16 %v50
  %v183 = vunpack.c.l.b16 %v51
  %v184 = vunpack.c.l.b16 %v52
  %v185 = vunpack.c.l.b16 %v53
  %v186 = vunpack.c.l.b16 %v54
  %v187 = vunpack.c.l.b16 %v55
  %v188 = vunpack.c.l.b16 %v56
  %v189 = vunpack.c.l.b16 %v57
  %v190 = vunpack.c.l.b16 %v58
  %v191 = vunpack.c.l.b16 %v59
  %v192 = vunpack.c.l.b16 %v60
  %v193 = vunpack.c.l.b16 %v61
  %v194 = vunpack.c.l.b16 %v62
  %v195 = vunpack.c.l.b16 %v63
  %v196 = vunpack.c.l.b16 %v64
  %v197 = vunpack.c.l.b16 %v65
  %v198 = vunpack.c.l.b16 %v66
  %v199 = vunpack.c.l.b16 %v67
  %v200 = vunpack.c.l.b16 %v68
  %v201 = vunpack.c.l.b16 %v69
  %v202 = vunpack.c.l.b16 %v70
  %v203 = vunpack.c.l.b16 %v71
  %v204 = vunpack.c.l.b16 %v72
  %v205 = vunpack.c.l.b16 %v73
  %v206 = vunpack.c.l.b16 %v74
  %v207 = vunpack.c.l.b16 %v75
  %v208 = vunpack.c.l.b16 %v76
  %v209 = vunpack.c.l.b16 %v77
  %v210 = vunpack.c.l.b16 %v78
  %v211 = vunpack.c.l.b16 %v79
  %v212 = vunpack.c.l.b16 %v80
  %v213 = vunpack.c.l.b16 %v81
  %v214 = vunpack.c.l.b16 %v82
  %v215 = vunpack.c.l.b16 %v83
  %v216 = vunpack.c.l.b16 %v84
  %v217 = vunpack.c.l.b16 %v85
  %v218 = vunpack.c.l.b16 %v86
  %v219 = vpack.c.b16 %v156, %v155
  %v220 = vpack.c.b16 %v158, %v157
  %v221 = vpack.c.b16 %v160, %v159
  %v222 = vpack.c.b16 %v162, %v161
  %v223 = vpack.c.b16 %v164, %v163
  %v224 = vpack.c.b16 %v166, %v165
  %v225 = vpack.c.b16 %v168, %v167
  %v226 = vpack.c.b16 %v170, %v169
  %v227 = vpack.c.b16 %v172, %v171
  %v228 = vpack.c.b16 %v174, %v173
  %v229 = vpack.c.b16 %v176, %v175
  %v230 = vpack.c.b16 %v178, %v177
  %v231 = vpack.c.b16 %v180, %v179
  %v232 = vpack.c.b16 %v182, %v181
  %v233 = vpack.c.b16 %v184, %v183
  %v234 = vpack.c.b16 %v186, %v185
  %v235 = vpack.c.b16 %v188, %v187
  %v236 = vpack.c.b16 %v190, %v189
  %v237 = vpack.c.b16 %v192, %v191
  %v238 = vpack.c.b16 %v194, %v193
  %v239 = vpack.c.b16 %v196, %v195
  %v240 = vpack.c.b16 %v198, %v197
  %v241 = vpack.c.b16 %v200, %v199
  %v242 = vpack.c.b16 %v202, %v201
  %v243 = vpack.c.b16 %v204, %v203
  %v244 = vpack.c.b16 %v206, %v205
  %v245 = vpack.c.b16 %v208, %v207
  %v246 = vpack.c.b16 %v210, %v209
  %v247 = vpack.c.b16 %v212, %v211
  %v248 = vpack.c.b16 %v214, %v213
  %v249 = vpack.c.b16 %v216, %v215
  %v250 = vpack.c.b16 %v218, %v217
  %v255 = vunpack.c.l.b16 %v87
  %v256 = vunpack.c.l.b16 %v88
  %v257 = vunpack.c.l.b16 %v89
  %v258 = vunpack.c.l.b16 %v90
  %v259 = vpack.c.b16 %v256, %v255
  %v260 = vpack.c.b16 %v258, %v257
  %vm263 = vcmask 261120
  %v265 = vsel %vm263, %v219, 0
  %v268 = vsel %vm263, %v220, 0
  %v271 = vsel %vm263, %v221, 0
  %v274 = vsel %vm263, %v222, 0
  %v277 = vsel %vm263, %v223, 0
  %v280 = vsel %vm263, %v224, 0
  %v283 = vsel %vm263, %v225, 0
  %v286 = vsel %vm263, %v226, 0
  %v289 = vsel %vm263, %v227, 0
  %v292 = vsel %vm263, %v228, 0
  %v295 = vsel %vm263, %v229, 0
  %v298 = vsel %vm263, %v230, 0
  %v301 = vsel %vm263, %v231, 0
  %v304 = vsel %vm263, %v232, 0
  %v307 = vsel %vm263, %v233, 0
  %v310 = vsel %vm263, %v234, 0
  %v313 = vsel %vm263, %v235, 0
  %v316 = vsel %vm263, %v236, 0
  %v319 = vsel %vm263, %v237, 0
  %v322 = vsel %vm263, %v238, 0
  %v325 = vsel %vm263, %v239, 0
  %v328 = vsel %vm263, %v240, 0
  %v331 = vsel %vm263, %v241, 0
  %v334 = vsel %vm263, %v242, 0
  %v337 = vsel %vm263, %v243, 0
  %v340 = vsel %vm263, %v244, 0
  %v343 = vsel %vm263, %v245, 0
  %v346 = vsel %vm263, %v246, 0
  %v349 = vsel %vm263, %v247, 0
  %v352 = vsel %vm263, %v248, 0
  %v355 = vsel %vm263, %v249, 0
  %v358 = vsel %vm263, %v250, 0
  %360 = vmatprep.subr.bf16.mxu0 0
  %361 = vmatpush1.bf16.msra.mxu0 0
  %362 = vmatprep.subr.bf16.mxu0 0
  %363 = vmatpush1.bf16.msra.mxu0 0
  %364 = vmatprep.subr.bf16.mxu0 0
  %365 = vmatpush1.bf16.msra.mxu0 0
  %366 = vmatprep.subr.bf16.mxu0 0
  %367 = vmatpush1.bf16.msra.mxu0 0
  %368 = vmatprep.subr.bf16.mxu0 0
  %369 = vmatpush1.bf16.msra.mxu0 0
  %370 = vmatprep.subr.bf16.mxu0 0
  %371 = vmatpush1.bf16.msra.mxu0 0
  %372 = vmatprep.subr.bf16.mxu0 0
  %373 = vmatpush1.bf16.msra.mxu0 %v260
  %374 = vmatprep.subr.bf16.mxu0 0
  %375 = vmatpush1.bf16.msra.mxu0 %v259
  %376 = vmatprep.subr.bf16.mxu0 0
  %377 = vmatpush2.bf16.msra.mxu0 0
  %378 = vmatprep.subr.bf16.mxu0 0
  %379 = vmatpush2.bf16.msra.mxu0 0
  %380 = vmatprep.subr.bf16.mxu0 0
  %381 = vmatpush2.bf16.msra.mxu0 0
  %382 = vmatprep.subr.bf16.mxu0 0
  %383 = vmatpush2.bf16.msra.mxu0 0
  %384 = vmatprep.subr.bf16.mxu0 0
  %385 = vmatpush2.bf16.msra.mxu0 0
  %386 = vmatprep.subr.bf16.mxu0 0
  %387 = vmatpush2.bf16.msra.mxu0 0
  %388 = vmatprep.subr.bf16.mxu0 0
  %389 = vmatpush2.bf16.msra.mxu0 0
  %390 = vmatprep.subr.bf16.mxu0 0
  %391 = vmatpush2.bf16.msra.mxu0 0
  %392 = vmatprep.mubr.bf16.mxu0 0
  %393 = vmatmul.mubr.bf16.gmra.mxu0 %v265
  %v394 = vpop.f32.mrf.mxu0
  %v395 = vadd.f32 0.0, %v394
  %v396 = vpop.f32.mrf.mxu0
  %v397 = vpop.f32.mrf.mxu0
  %v398 = vadd.f32 0.0, %v397
  %v399 = vpop.f32.mrf.mxu0
  %400 = vmatprep.mubr.bf16.mxu0 0
  %401 = vmatmul.mubr.bf16.gmra.mxu0 %v268
  %v402 = vpop.f32.mrf.mxu0
  %v403 = vadd.f32 0.0, %v402
  %v404 = vpop.f32.mrf.mxu0
  %v405 = vpop.f32.mrf.mxu0
  %v406 = vadd.f32 0.0, %v405
  %v407 = vpop.f32.mrf.mxu0
  %408 = vmatprep.mubr.bf16.mxu0 0
  %409 = vmatmul.mubr.bf16.gmra.mxu0 %v271
  %v410 = vpop.f32.mrf.mxu0
  %v411 = vadd.f32 0.0, %v410
  %v412 = vpop.f32.mrf.mxu0
  %v413 = vpop.f32.mrf.mxu0
  %v414 = vadd.f32 0.0, %v413
  %v415 = vpop.f32.mrf.mxu0
  %416 = vmatprep.mubr.bf16.mxu0 0
  %417 = vmatmul.mubr.bf16.gmra.mxu0 %v274
  %v418 = vpop.f32.mrf.mxu0
  %v419 = vadd.f32 0.0, %v418
  %v420 = vpop.f32.mrf.mxu0
  %v421 = vpop.f32.mrf.mxu0
  %v422 = vadd.f32 0.0, %v421
  %v423 = vpop.f32.mrf.mxu0
  %424 = vmatprep.mubr.bf16.mxu0 0
  %425 = vmatmul.mubr.bf16.gmra.mxu0 %v277
  %v426 = vpop.f32.mrf.mxu0
  %v427 = vadd.f32 0.0, %v426
  %v428 = vpop.f32.mrf.mxu0
  %v429 = vpop.f32.mrf.mxu0
  %v430 = vadd.f32 0.0, %v429
  %v431 = vpop.f32.mrf.mxu0
  %432 = vmatprep.mubr.bf16.mxu0 0
  %433 = vmatmul.mubr.bf16.gmra.mxu0 %v280
  %v434 = vpop.f32.mrf.mxu0
  %v435 = vadd.f32 0.0, %v434
  %v436 = vpop.f32.mrf.mxu0
  %v437 = vpop.f32.mrf.mxu0
  %v438 = vadd.f32 0.0, %v437
  %v439 = vpop.f32.mrf.mxu0
  %440 = vmatprep.mubr.bf16.mxu0 0
  %441 = vmatmul.mubr.bf16.gmra.mxu0 %v283
  %v442 = vpop.f32.mrf.mxu0
  %v443 = vadd.f32 0.0, %v442
  %v444 = vpop.f32.mrf.mxu0
  %v445 = vpop.f32.mrf.mxu0
  %v446 = vadd.f32 0.0, %v445
  %v447 = vpop.f32.mrf.mxu0
  %448 = vmatprep.mubr.bf16.mxu0 0
  %449 = vmatmul.mubr.bf16.gmra.mxu0 %v286
  %v450 = vpop.f32.mrf.mxu0
  %v451 = vadd.f32 0.0, %v450
  %v452 = vpop.f32.mrf.mxu0
  %v453 = vpop.f32.mrf.mxu0
  %v454 = vadd.f32 0.0, %v453
  %v455 = vpop.f32.mrf.mxu0
  %456 = vmatprep.mubr.bf16.mxu0 0
  %457 = vmatmul.mubr.bf16.gmra.mxu0 %v289
  %v458 = vpop.f32.mrf.mxu0
  %v459 = vadd.f32 0.0, %v458
  %v460 = vpop.f32.mrf.mxu0
  %v461 = vpop.f32.mrf.mxu0
  %v462 = vadd.f32 0.0, %v461
  %v463 = vpop.f32.mrf.mxu0
  %464 = vmatprep.mubr.bf16.mxu0 0
  %465 = vmatmul.mubr.bf16.gmra.mxu0 %v292
  %v466 = vpop.f32.mrf.mxu0
  %v467 = vadd.f32 0.0, %v466
  %v468 = vpop.f32.mrf.mxu0
  %v469 = vpop.f32.mrf.mxu0
  %v470 = vadd.f32 0.0, %v469
  %v471 = vpop.f32.mrf.mxu0
  %472 = vmatprep.mubr.bf16.mxu0 0
  %473 = vmatmul.mubr.bf16.gmra.mxu0 %v295
  %v474 = vpop.f32.mrf.mxu0
  %v475 = vadd.f32 0.0, %v474
  %v476 = vpop.f32.mrf.mxu0
  %v477 = vpop.f32.mrf.mxu0
  %v478 = vadd.f32 0.0, %v477
  %v479 = vpop.f32.mrf.mxu0
  %480 = vmatprep.mubr.bf16.mxu0 0
  %481 = vmatmul.mubr.bf16.gmra.mxu0 %v298
  %v482 = vpop.f32.mrf.mxu0
  %v483 = vadd.f32 0.0, %v482
  %v484 = vpop.f32.mrf.mxu0
  %v485 = vpop.f32.mrf.mxu0
  %v486 = vadd.f32 0.0, %v485
  %v487 = vpop.f32.mrf.mxu0
  %488 = vmatprep.mubr.bf16.mxu0 0
  %489 = vmatmul.mubr.bf16.gmra.mxu0 %v301
  %v490 = vpop.f32.mrf.mxu0
  %v491 = vadd.f32 0.0, %v490
  %v492 = vpop.f32.mrf.mxu0
  %v493 = vpop.f32.mrf.mxu0
  %v494 = vadd.f32 0.0, %v493
  %v495 = vpop.f32.mrf.mxu0
  %496 = vmatprep.mubr.bf16.mxu0 0
  %497 = vmatmul.mubr.bf16.gmra.mxu0 %v304
  %v498 = vpop.f32.mrf.mxu0
  %v499 = vadd.f32 0.0, %v498
  %v500 = vpop.f32.mrf.mxu0
  %v501 = vpop.f32.mrf.mxu0
  %v502 = vadd.f32 0.0, %v501
  %v503 = vpop.f32.mrf.mxu0
  %504 = vmatprep.mubr.bf16.mxu0 0
  %505 = vmatmul.mubr.bf16.gmra.mxu0 %v307
  %v506 = vpop.f32.mrf.mxu0
  %v507 = vadd.f32 0.0, %v506
  %v508 = vpop.f32.mrf.mxu0
  %v509 = vpop.f32.mrf.mxu0
  %v510 = vadd.f32 0.0, %v509
  %v511 = vpop.f32.mrf.mxu0
  %512 = vmatprep.mubr.bf16.mxu0 0
  %513 = vmatmul.mubr.bf16.gmra.mxu0 %v310
  %v514 = vpop.f32.mrf.mxu0
  %v515 = vadd.f32 0.0, %v514
  %v516 = vpop.f32.mrf.mxu0
  %v517 = vpop.f32.mrf.mxu0
  %v518 = vadd.f32 0.0, %v517
  %v519 = vpop.f32.mrf.mxu0
  %520 = vmatprep.mubr.bf16.mxu0 0
  %521 = vmatmul.mubr.bf16.gmra.mxu0 %v313
  %v522 = vpop.f32.mrf.mxu0
  %v523 = vadd.f32 0.0, %v522
  %v524 = vpop.f32.mrf.mxu0
  %v525 = vpop.f32.mrf.mxu0
  %v526 = vadd.f32 0.0, %v525
  %v527 = vpop.f32.mrf.mxu0
  %528 = vmatprep.mubr.bf16.mxu0 0
  %529 = vmatmul.mubr.bf16.gmra.mxu0 %v316
  %v530 = vpop.f32.mrf.mxu0
  %v531 = vadd.f32 0.0, %v530
  %v532 = vpop.f32.mrf.mxu0
  %v533 = vpop.f32.mrf.mxu0
  %v534 = vadd.f32 0.0, %v533
  %v535 = vpop.f32.mrf.mxu0
  %536 = vmatprep.mubr.bf16.mxu0 0
  %537 = vmatmul.mubr.bf16.gmra.mxu0 %v319
  %v538 = vpop.f32.mrf.mxu0
  %v539 = vadd.f32 0.0, %v538
  %v540 = vpop.f32.mrf.mxu0
  %v541 = vpop.f32.mrf.mxu0
  %v542 = vadd.f32 0.0, %v541
  %v543 = vpop.f32.mrf.mxu0
  %544 = vmatprep.mubr.bf16.mxu0 0
  %545 = vmatmul.mubr.bf16.gmra.mxu0 %v322
  %v546 = vpop.f32.mrf.mxu0
  %v547 = vadd.f32 0.0, %v546
  %v548 = vpop.f32.mrf.mxu0
  %v549 = vpop.f32.mrf.mxu0
  %v550 = vadd.f32 0.0, %v549
  %v551 = vpop.f32.mrf.mxu0
  %552 = vmatprep.mubr.bf16.mxu0 0
  %553 = vmatmul.mubr.bf16.gmra.mxu0 %v325
  %v554 = vpop.f32.mrf.mxu0
  %v555 = vadd.f32 0.0, %v554
  %v556 = vpop.f32.mrf.mxu0
  %v557 = vpop.f32.mrf.mxu0
  %v558 = vadd.f32 0.0, %v557
  %v559 = vpop.f32.mrf.mxu0
  %560 = vmatprep.mubr.bf16.mxu0 0
  %561 = vmatmul.mubr.bf16.gmra.mxu0 %v328
  %v562 = vpop.f32.mrf.mxu0
  %v563 = vadd.f32 0.0, %v562
  %v564 = vpop.f32.mrf.mxu0
  %v565 = vpop.f32.mrf.mxu0
  %v566 = vadd.f32 0.0, %v565
  %v567 = vpop.f32.mrf.mxu0
  %568 = vmatprep.mubr.bf16.mxu0 0
  %569 = vmatmul.mubr.bf16.gmra.mxu0 %v331
  %v570 = vpop.f32.mrf.mxu0
  %v571 = vadd.f32 0.0, %v570
  %v572 = vpop.f32.mrf.mxu0
  %v573 = vpop.f32.mrf.mxu0
  %v574 = vadd.f32 0.0, %v573
  %v575 = vpop.f32.mrf.mxu0
  %576 = vmatprep.mubr.bf16.mxu0 0
  %577 = vmatmul.mubr.bf16.gmra.mxu0 %v334
  %v578 = vpop.f32.mrf.mxu0
  %v579 = vadd.f32 0.0, %v578
  %v580 = vpop.f32.mrf.mxu0
  %v581 = vpop.f32.mrf.mxu0
  %v582 = vadd.f32 0.0, %v581
  %v583 = vpop.f32.mrf.mxu0
  %584 = vmatprep.mubr.bf16.mxu0 0
  %585 = vmatmul.mubr.bf16.gmra.mxu0 %v337
  %v586 = vpop.f32.mrf.mxu0
  %v587 = vadd.f32 0.0, %v586
  %v588 = vpop.f32.mrf.mxu0
  %v589 = vpop.f32.mrf.mxu0
  %v590 = vadd.f32 0.0, %v589
  %v591 = vpop.f32.mrf.mxu0
  %592 = vmatprep.mubr.bf16.mxu0 0
  %593 = vmatmul.mubr.bf16.gmra.mxu0 %v340
  %v594 = vpop.f32.mrf.mxu0
  %v595 = vadd.f32 0.0, %v594
  %v596 = vpop.f32.mrf.mxu0
  %v597 = vpop.f32.mrf.mxu0
  %v598 = vadd.f32 0.0, %v597
  %v599 = vpop.f32.mrf.mxu0
  %600 = vmatprep.mubr.bf16.mxu0 0
  %601 = vmatmul.mubr.bf16.gmra.mxu0 %v343
  %v602 = vpop.f32.mrf.mxu0
  %v603 = vadd.f32 0.0, %v602
  %v604 = vpop.f32.mrf.mxu0
  %v605 = vpop.f32.mrf.mxu0
  %v606 = vadd.f32 0.0, %v605
  %v607 = vpop.f32.mrf.mxu0
  %608 = vmatprep.mubr.bf16.mxu0 0
  %609 = vmatmul.mubr.bf16.gmra.mxu0 %v346
  %v610 = vpop.f32.mrf.mxu0
  %v611 = vadd.f32 0.0, %v610
  %v612 = vpop.f32.mrf.mxu0
  %v613 = vpop.f32.mrf.mxu0
  %v614 = vadd.f32 0.0, %v613
  %v615 = vpop.f32.mrf.mxu0
  %616 = vmatprep.mubr.bf16.mxu0 0
  %617 = vmatmul.mubr.bf16.gmra.mxu0 %v349
  %v618 = vpop.f32.mrf.mxu0
  %v619 = vadd.f32 0.0, %v618
  %v620 = vpop.f32.mrf.mxu0
  %v621 = vpop.f32.mrf.mxu0
  %v622 = vadd.f32 0.0, %v621
  %v623 = vpop.f32.mrf.mxu0
  %624 = vmatprep.mubr.bf16.mxu0 0
  %625 = vmatmul.mubr.bf16.gmra.mxu0 %v352
  %v626 = vpop.f32.mrf.mxu0
  %v627 = vadd.f32 0.0, %v626
  %v628 = vpop.f32.mrf.mxu0
  %v629 = vpop.f32.mrf.mxu0
  %v630 = vadd.f32 0.0, %v629
  %v631 = vpop.f32.mrf.mxu0
  %632 = vmatprep.mubr.bf16.mxu0 0
  %633 = vmatmul.mubr.bf16.gmra.mxu0 %v355
  %v634 = vpop.f32.mrf.mxu0
  %v635 = vadd.f32 0.0, %v634
  %v636 = vpop.f32.mrf.mxu0
  %v637 = vpop.f32.mrf.mxu0
  %v638 = vadd.f32 0.0, %v637
  %v639 = vpop.f32.mrf.mxu0
  %640 = vmatprep.mubr.bf16.mxu0 0
  %641 = vmatmul.mubr.bf16.gmra.mxu0 %v358
  %v642 = vpop.f32.mrf.mxu0
  %v643 = vadd.f32 0.0, %v642
  %v644 = vpop.f32.mrf.mxu0
  %v645 = vpop.f32.mrf.mxu0
  %v646 = vadd.f32 0.0, %v645
  %v647 = vpop.f32.mrf.mxu0
  %648 = vdwg.mxu0
  %v649 = vld [vmem:[%s2] sm:$0x1]
  %v651 = vlaneseq
  %v652 = vshrl.u32 %v651, 7
  %v653 = vsub.s32 0, %v652
  %v654 = vrot.slane %v649, %v653
  %v656 = vadd.f32 %v395, %v654
  %v657 = vadd.f32 %v398, %v654
  %v658 = vadd.f32 %v403, %v654
  %v659 = vadd.f32 %v406, %v654
  %v660 = vadd.f32 %v411, %v654
  %v661 = vadd.f32 %v414, %v654
  %v662 = vadd.f32 %v419, %v654
  %v663 = vadd.f32 %v422, %v654
  %v664 = vadd.f32 %v427, %v654
  %v665 = vadd.f32 %v430, %v654
  %v666 = vadd.f32 %v435, %v654
  %v667 = vadd.f32 %v438, %v654
  %v668 = vadd.f32 %v443, %v654
  %v669 = vadd.f32 %v446, %v654
  %v670 = vadd.f32 %v451, %v654
  %v671 = vadd.f32 %v454, %v654
  %v672 = vadd.f32 %v459, %v654
  %v673 = vadd.f32 %v462, %v654
  %v674 = vadd.f32 %v467, %v654
  %v675 = vadd.f32 %v470, %v654
  %v676 = vadd.f32 %v475, %v654
  %v677 = vadd.f32 %v478, %v654
  %v678 = vadd.f32 %v483, %v654
  %v679 = vadd.f32 %v486, %v654
  %v680 = vadd.f32 %v491, %v654
  %v681 = vadd.f32 %v494, %v654
  %v682 = vadd.f32 %v499, %v654
  %v683 = vadd.f32 %v502, %v654
  %v684 = vadd.f32 %v507, %v654
  %v685 = vadd.f32 %v510, %v654
  %v686 = vadd.f32 %v515, %v654
  %v687 = vadd.f32 %v518, %v654
  %v688 = vadd.f32 %v523, %v654
  %v689 = vadd.f32 %v526, %v654
  %v690 = vadd.f32 %v531, %v654
  %v691 = vadd.f32 %v534, %v654
  %v692 = vadd.f32 %v539, %v654
  %v693 = vadd.f32 %v542, %v654
  %v694 = vadd.f32 %v547, %v654
  %v695 = vadd.f32 %v550, %v654
  %v696 = vadd.f32 %v555, %v654
  %v697 = vadd.f32 %v558, %v654
  %v698 = vadd.f32 %v563, %v654
  %v699 = vadd.f32 %v566, %v654
  %v700 = vadd.f32 %v571, %v654
  %v701 = vadd.f32 %v574, %v654
  %v702 = vadd.f32 %v579, %v654
  %v703 = vadd.f32 %v582, %v654
  %v704 = vadd.f32 %v587, %v654
  %v705 = vadd.f32 %v590, %v654
  %v706 = vadd.f32 %v595, %v654
  %v707 = vadd.f32 %v598, %v654
  %v708 = vadd.f32 %v603, %v654
  %v709 = vadd.f32 %v606, %v654
  %v710 = vadd.f32 %v611, %v654
  %v711 = vadd.f32 %v614, %v654
  %v712 = vadd.f32 %v619, %v654
  %v713 = vadd.f32 %v622, %v654
  %v714 = vadd.f32 %v627, %v654
  %v715 = vadd.f32 %v630, %v654
  %v716 = vadd.f32 %v635, %v654
  %v717 = vadd.f32 %v638, %v654
  %v718 = vadd.f32 %v643, %v654
  %v719 = vadd.f32 %v646, %v654
  %v720 = vpack.c.bf16 %v657, %v656
  %v721 = vpack.c.bf16 %v659, %v658
  %v722 = vpack.c.bf16 %v661, %v660
  %v723 = vpack.c.bf16 %v663, %v662
  %v724 = vpack.c.bf16 %v665, %v664
  %v725 = vpack.c.bf16 %v667, %v666
  %v726 = vpack.c.bf16 %v669, %v668
  %v727 = vpack.c.bf16 %v671, %v670
  %v728 = vpack.c.bf16 %v673, %v672
  %v729 = vpack.c.bf16 %v675, %v674
  %v730 = vpack.c.bf16 %v677, %v676
  %v731 = vpack.c.bf16 %v679, %v678
  %v732 = vpack.c.bf16 %v681, %v680
  %v733 = vpack.c.bf16 %v683, %v682
  %v734 = vpack.c.bf16 %v685, %v684
  %v735 = vpack.c.bf16 %v687, %v686
  %v736 = vpack.c.bf16 %v689, %v688
  %v737 = vpack.c.bf16 %v691, %v690
  %v738 = vpack.c.bf16 %v693, %v692
  %v739 = vpack.c.bf16 %v695, %v694
  %v740 = vpack.c.bf16 %v697, %v696
  %v741 = vpack.c.bf16 %v699, %v698
  %v742 = vpack.c.bf16 %v701, %v700
  %v743 = vpack.c.bf16 %v703, %v702
  %v744 = vpack.c.bf16 %v705, %v704
  %v745 = vpack.c.bf16 %v707, %v706
  %v746 = vpack.c.bf16 %v709, %v708
  %v747 = vpack.c.bf16 %v711, %v710
  %v748 = vpack.c.bf16 %v713, %v712
  %v749 = vpack.c.bf16 %v715, %v714
  %v750 = vpack.c.bf16 %v717, %v716
  %v751 = vpack.c.bf16 %v719, %v718
  %v784 = vunpack.c.l.b16 %v720
  %v785 = vunpack.c.h.b16 %v720
  %v786 = vunpack.c.l.b16 %v721
  %v787 = vunpack.c.h.b16 %v721
  %v788 = vunpack.c.l.b16 %v722
  %v789 = vunpack.c.h.b16 %v722
  %v790 = vunpack.c.l.b16 %v723
  %v791 = vunpack.c.h.b16 %v723
  %v792 = vunpack.c.l.b16 %v724
  %v793 = vunpack.c.h.b16 %v724
  %v794 = vunpack.c.l.b16 %v725
  %v795 = vunpack.c.h.b16 %v725
  %v796 = vunpack.c.l.b16 %v726
  %v797 = vunpack.c.h.b16 %v726
  %v798 = vunpack.c.l.b16 %v727
  %v799 = vunpack.c.h.b16 %v727
  %v800 = vunpack.c.l.b16 %v728
  %v801 = vunpack.c.h.b16 %v728
  %v802 = vunpack.c.l.b16 %v729
  %v803 = vunpack.c.h.b16 %v729
  %v804 = vunpack.c.l.b16 %v730
  %v805 = vunpack.c.h.b16 %v730
  %v806 = vunpack.c.l.b16 %v731
  %v807 = vunpack.c.h.b16 %v731
  %v808 = vunpack.c.l.b16 %v732
  %v809 = vunpack.c.h.b16 %v732
  %v810 = vunpack.c.l.b16 %v733
  %v811 = vunpack.c.h.b16 %v733
  %v812 = vunpack.c.l.b16 %v734
  %v813 = vunpack.c.h.b16 %v734
  %v814 = vunpack.c.l.b16 %v735
  %v815 = vunpack.c.h.b16 %v735
  %v816 = vunpack.c.l.b16 %v736
  %v817 = vunpack.c.h.b16 %v736
  %v818 = vunpack.c.l.b16 %v737
  %v819 = vunpack.c.h.b16 %v737
  %v820 = vunpack.c.l.b16 %v738
  %v821 = vunpack.c.h.b16 %v738
  %v822 = vunpack.c.l.b16 %v739
  %v823 = vunpack.c.h.b16 %v739
  %v824 = vunpack.c.l.b16 %v740
  %v825 = vunpack.c.h.b16 %v740
  %v826 = vunpack.c.l.b16 %v741
  %v827 = vunpack.c.h.b16 %v741
  %v828 = vunpack.c.l.b16 %v742
  %v829 = vunpack.c.h.b16 %v742
  %v830 = vunpack.c.l.b16 %v743
  %v831 = vunpack.c.h.b16 %v743
  %v832 = vunpack.c.l.b16 %v744
  %v833 = vunpack.c.h.b16 %v744
  %v834 = vunpack.c.l.b16 %v745
  %v835 = vunpack.c.h.b16 %v745
  %v836 = vunpack.c.l.b16 %v746
  %v837 = vunpack.c.h.b16 %v746
  %v838 = vunpack.c.l.b16 %v747
  %v839 = vunpack.c.h.b16 %v747
  %v840 = vunpack.c.l.b16 %v748
  %v841 = vunpack.c.h.b16 %v748
  %v842 = vunpack.c.l.b16 %v749
  %v843 = vunpack.c.h.b16 %v749
  %v844 = vunpack.c.l.b16 %v750
  %v845 = vunpack.c.h.b16 %v750
  %v846 = vunpack.c.l.b16 %v751
  %v847 = vunpack.c.h.b16 %v751
  %v848 = vpack.c.b16 %v784, %v784
  %v849 = vpack.c.b16 %v785, %v785
  %v850 = vpack.c.b16 %v786, %v786
  %v851 = vpack.c.b16 %v787, %v787
  %v852 = vpack.c.b16 %v788, %v788
  %v853 = vpack.c.b16 %v789, %v789
  %v854 = vpack.c.b16 %v790, %v790
  %v855 = vpack.c.b16 %v791, %v791
  %v856 = vpack.c.b16 %v792, %v792
  %v857 = vpack.c.b16 %v793, %v793
  %v858 = vpack.c.b16 %v794, %v794
  %v859 = vpack.c.b16 %v795, %v795
  %v860 = vpack.c.b16 %v796, %v796
  %v861 = vpack.c.b16 %v797, %v797
  %v862 = vpack.c.b16 %v798, %v798
  %v863 = vpack.c.b16 %v799, %v799
  %v864 = vpack.c.b16 %v800, %v800
  %v865 = vpack.c.b16 %v801, %v801
  %v866 = vpack.c.b16 %v802, %v802
  %v867 = vpack.c.b16 %v803, %v803
  %v868 = vpack.c.b16 %v804, %v804
  %v869 = vpack.c.b16 %v805, %v805
  %v870 = vpack.c.b16 %v806, %v806
  %v871 = vpack.c.b16 %v807, %v807
  %v872 = vpack.c.b16 %v808, %v808
  %v873 = vpack.c.b16 %v809, %v809
  %v874 = vpack.c.b16 %v810, %v810
  %v875 = vpack.c.b16 %v811, %v811
  %v876 = vpack.c.b16 %v812, %v812
  %v877 = vpack.c.b16 %v813, %v813
  %v878 = vpack.c.b16 %v814, %v814
  %v879 = vpack.c.b16 %v815, %v815
  %v880 = vpack.c.b16 %v816, %v816
  %v881 = vpack.c.b16 %v817, %v817
  %v882 = vpack.c.b16 %v818, %v818
  %v883 = vpack.c.b16 %v819, %v819
  %v884 = vpack.c.b16 %v820, %v820
  %v885 = vpack.c.b16 %v821, %v821
  %v886 = vpack.c.b16 %v822, %v822
  %v887 = vpack.c.b16 %v823, %v823
  %v888 = vpack.c.b16 %v824, %v824
  %v889 = vpack.c.b16 %v825, %v825
  %v890 = vpack.c.b16 %v826, %v826
  %v891 = vpack.c.b16 %v827, %v827
  %v892 = vpack.c.b16 %v828, %v828
  %v893 = vpack.c.b16 %v829, %v829
  %v894 = vpack.c.b16 %v830, %v830
  %v895 = vpack.c.b16 %v831, %v831
  %v896 = vpack.c.b16 %v832, %v832
  %v897 = vpack.c.b16 %v833, %v833
  %v898 = vpack.c.b16 %v834, %v834
  %v899 = vpack.c.b16 %v835, %v835
  %v900 = vpack.c.b16 %v836, %v836
  %v901 = vpack.c.b16 %v837, %v837
  %v902 = vpack.c.b16 %v838, %v838
  %v903 = vpack.c.b16 %v839, %v839
  %v904 = vpack.c.b16 %v840, %v840
  %v905 = vpack.c.b16 %v841, %v841
  %v906 = vpack.c.b16 %v842, %v842
  %v907 = vpack.c.b16 %v843, %v843
  %v908 = vpack.c.b16 %v844, %v844
  %v909 = vpack.c.b16 %v845, %v845
  %v910 = vpack.c.b16 %v846, %v846
  %v911 = vpack.c.b16 %v847, %v847
  %vm976 = vcmask 257024
  %977 = vst.msk [vmem:[%s6] sm:$0xf] %vm976, %v848
  %978 = vst.msk [vmem:[%s6 + $0x4] sm:$0xf] %vm976, %v849
  %979 = vst.msk [vmem:[%s6 + $0x8] sm:$0xf] %vm976, %v850
  %980 = vst.msk [vmem:[%s6 + $0xc] sm:$0xf] %vm976, %v851
  %981 = vst.msk [vmem:[%s6 + $0x10] sm:$0xf] %vm976, %v852
  %982 = vst.msk [vmem:[%s6 + $0x14] sm:$0xf] %vm976, %v853
  %983 = vst.msk [vmem:[%s6 + $0x18] sm:$0xf] %vm976, %v854
  %984 = vst.msk [vmem:[%s6 + $0x1c] sm:$0xf] %vm976, %v855
  %985 = vst.msk [vmem:[%s6 + $0x20] sm:$0xf] %vm976, %v856
  %986 = vst.msk [vmem:[%s6 + $0x24] sm:$0xf] %vm976, %v857
  %987 = vst.msk [vmem:[%s6 + $0x28] sm:$0xf] %vm976, %v858
  %988 = vst.msk [vmem:[%s6 + $0x2c] sm:$0xf] %vm976, %v859
  %989 = vst.msk [vmem:[%s6 + $0x30] sm:$0xf] %vm976, %v860
  %990 = vst.msk [vmem:[%s6 + $0x34] sm:$0xf] %vm976, %v861
  %991 = vst.msk [vmem:[%s6 + $0x38] sm:$0xf] %vm976, %v862
  %992 = vst.msk [vmem:[%s6 + $0x3c] sm:$0xf] %vm976, %v863
  %993 = vst.msk [vmem:[%s6 + $0x40] sm:$0xf] %vm976, %v864
  %994 = vst.msk [vmem:[%s6 + $0x44] sm:$0xf] %vm976, %v865
  %995 = vst.msk [vmem:[%s6 + $0x48] sm:$0xf] %vm976, %v866
  %996 = vst.msk [vmem:[%s6 + $0x4c] sm:$0xf] %vm976, %v867
  %997 = vst.msk [vmem:[%s6 + $0x50] sm:$0xf] %vm976, %v868
  %998 = vst.msk [vmem:[%s6 + $0x54] sm:$0xf] %vm976, %v869
  %999 = vst.msk [vmem:[%s6 + $0x58] sm:$0xf] %vm976, %v870
  %1000 = vst.msk [vmem:[%s6 + $0x5c] sm:$0xf] %vm976, %v871
  %1001 = vst.msk [vmem:[%s6 + $0x60] sm:$0xf] %vm976, %v872
  %1002 = vst.msk [vmem:[%s6 + $0x64] sm:$0xf] %vm976, %v873
  %1003 = vst.msk [vmem:[%s6 + $0x68] sm:$0xf] %vm976, %v874
  %1004 = vst.msk [vmem:[%s6 + $0x6c] sm:$0xf] %vm976, %v875
  %1005 = vst.msk [vmem:[%s6 + $0x70] sm:$0xf] %vm976, %v876
  %1006 = vst.msk [vmem:[%s6 + $0x74] sm:$0xf] %vm976, %v877
  %1007 = vst.msk [vmem:[%s6 + $0x78] sm:$0xf] %vm976, %v878
  %1008 = vst.msk [vmem:[%s6 + $0x7c] sm:$0xf] %vm976, %v879
  %1009 = vst.msk [vmem:[%s6 + $0x80] sm:$0xf] %vm976, %v880
  %1010 = vst.msk [vmem:[%s6 + $0x84] sm:$0xf] %vm976, %v881
  %1011 = vst.msk [vmem:[%s6 + $0x88] sm:$0xf] %vm976, %v882
  %1012 = vst.msk [vmem:[%s6 + $0x8c] sm:$0xf] %vm976, %v883
  %1013 = vst.msk [vmem:[%s6 + $0x90] sm:$0xf] %vm976, %v884
  %1014 = vst.msk [vmem:[%s6 + $0x94] sm:$0xf] %vm976, %v885
  %1015 = vst.msk [vmem:[%s6 + $0x98] sm:$0xf] %vm976, %v886
  %1016 = vst.msk [vmem:[%s6 + $0x9c] sm:$0xf] %vm976, %v887
  %1017 = vst.msk [vmem:[%s6 + $0xa0] sm:$0xf] %vm976, %v888
  %1018 = vst.msk [vmem:[%s6 + $0xa4] sm:$0xf] %vm976, %v889
  %1019 = vst.msk [vmem:[%s6 + $0xa8] sm:$0xf] %vm976, %v890
  %1020 = vst.msk [vmem:[%s6 + $0xac] sm:$0xf] %vm976, %v891
  %1021 = vst.msk [vmem:[%s6 + $0xb0] sm:$0xf] %vm976, %v892
  %1022 = vst.msk [vmem:[%s6 + $0xb4] sm:$0xf] %vm976, %v893
  %1023 = vst.msk [vmem:[%s6 + $0xb8] sm:$0xf] %vm976, %v894
  %1024 = vst.msk [vmem:[%s6 + $0xbc] sm:$0xf] %vm976, %v895
  %1025 = vst.msk [vmem:[%s6 + $0xc0] sm:$0xf] %vm976, %v896
  %1026 = vst.msk [vmem:[%s6 + $0xc4] sm:$0xf] %vm976, %v897
  %1027 = vst.msk [vmem:[%s6 + $0xc8] sm:$0xf] %vm976, %v898
  %1028 = vst.msk [vmem:[%s6 + $0xcc] sm:$0xf] %vm976, %v899
  %1029 = vst.msk [vmem:[%s6 + $0xd0] sm:$0xf] %vm976, %v900
  %1030 = vst.msk [vmem:[%s6 + $0xd4] sm:$0xf] %vm976, %v901
  %1031 = vst.msk [vmem:[%s6 + $0xd8] sm:$0xf] %vm976, %v902
  %1032 = vst.msk [vmem:[%s6 + $0xdc] sm:$0xf] %vm976, %v903
  %1033 = vst.msk [vmem:[%s6 + $0xe0] sm:$0xf] %vm976, %v904
  %1034 = vst.msk [vmem:[%s6 + $0xe4] sm:$0xf] %vm976, %v905
  %1035 = vst.msk [vmem:[%s6 + $0xe8] sm:$0xf] %vm976, %v906
  %1036 = vst.msk [vmem:[%s6 + $0xec] sm:$0xf] %vm976, %v907
  %1037 = vst.msk [vmem:[%s6 + $0xf0] sm:$0xf] %vm976, %v908
  %1038 = vst.msk [vmem:[%s6 + $0xf4] sm:$0xf] %vm976, %v909
  %1039 = vst.msk [vmem:[%s6 + $0xf8] sm:$0xf] %vm976, %v910
  %1040 = vst.msk [vmem:[%s6 + $0xfc] sm:$0xf] %vm976, %v911
  %v1041 = vpack.c.bf16 %v398, %v395
  %v1042 = vpack.c.bf16 %v406, %v403
  %v1043 = vpack.c.bf16 %v414, %v411
  %v1044 = vpack.c.bf16 %v422, %v419
  %v1045 = vpack.c.bf16 %v430, %v427
  %v1046 = vpack.c.bf16 %v438, %v435
  %v1047 = vpack.c.bf16 %v446, %v443
  %v1048 = vpack.c.bf16 %v454, %v451
  %v1049 = vpack.c.bf16 %v462, %v459
  %v1050 = vpack.c.bf16 %v470, %v467
  %v1051 = vpack.c.bf16 %v478, %v475
  %v1052 = vpack.c.bf16 %v486, %v483
  %v1053 = vpack.c.bf16 %v494, %v491
  %v1054 = vpack.c.bf16 %v502, %v499
  %v1055 = vpack.c.bf16 %v510, %v507
  %v1056 = vpack.c.bf16 %v518, %v515
  %v1057 = vpack.c.bf16 %v526, %v523
  %v1058 = vpack.c.bf16 %v534, %v531
  %v1059 = vpack.c.bf16 %v542, %v539
  %v1060 = vpack.c.bf16 %v550, %v547
  %v1061 = vpack.c.bf16 %v558, %v555
  %v1062 = vpack.c.bf16 %v566, %v563
  %v1063 = vpack.c.bf16 %v574, %v571
  %v1064 = vpack.c.bf16 %v582, %v579
  %v1065 = vpack.c.bf16 %v590, %v587
  %v1066 = vpack.c.bf16 %v598, %v595
  %v1067 = vpack.c.bf16 %v606, %v603
  %v1068 = vpack.c.bf16 %v614, %v611
  %v1069 = vpack.c.bf16 %v622, %v619
  %v1070 = vpack.c.bf16 %v630, %v627
  %v1071 = vpack.c.bf16 %v638, %v635
  %v1072 = vpack.c.bf16 %v646, %v643
  %v1073 = vld [vmem:[%s4] sm:$0xf]
  %v1074 = vpack.c.bf16 %v1073, %v1073
  %v1077 = vunpack.c.l.s4 1966171168
  %v1078 = vunpack.c.0.s8 %v1077
  %v1079 = vlaneseq
  %v1080 = vshrl.u32 %v1079, 7
  %v1081 = vsub.s32 %v1078, %v1080
  %v1082 = vrot.slane %v1074, %v1081
  %v1083 = vcombine.high %v1082, %v1082
  %v1085 = vunpack.c.l.s4 1966171168
  %v1086 = vunpack.c.0.s8 %v1085
  %v1087 = vlaneseq
  %v1088 = vshrl.u32 %v1087, 7
  %v1089 = vsub.s32 %v1086, %v1088
  %v1090 = vrot.slane %v1082, %v1089
  %v1092 = vunpack.c.l.s4 1966171168
  %v1093 = vunpack.c.0.s8 %v1092
  %v1094 = vlaneseq
  %v1095 = vshrl.u32 %v1094, 7
  %v1096 = vsub.s32 %v1093, %v1095
  %v1097 = vrot.slane %v1083, %v1096
  %v1098 = vunpack.i.l.s16 %v1090
  %v1099 = vunpack.i.h.s16 %v1090
  %v1100 = vunpack.i.l.s16 %v1097
  %v1101 = vunpack.i.h.s16 %v1097
  %v1102 = vpack.i.b16 %v1098, %v1098
  %v1103 = vpack.i.b16 %v1099, %v1099
  %v1104 = vpack.i.b16 %v1100, %v1100
  %v1105 = vpack.i.b16 %v1101, %v1101
  %v1106 = vlaneseq
  %v1107 = vshrl.u32 %v1106, 7
  %v1108 = vsub.s32 0, %v1107
  %v1109 = vrot.slane %v1102, %v1108
  %v1110 = vlaneseq
  %v1111 = vshrl.u32 %v1110, 7
  %v1112 = vsub.s32 0, %v1111
  %v1113 = vrot.slane %v1103, %v1112
  %v1114 = vlaneseq
  %v1115 = vshrl.u32 %v1114, 7
  %v1116 = vsub.s32 0, %v1115
  %v1117 = vrot.slane %v1104, %v1116
  %v1118 = vlaneseq
  %v1119 = vshrl.u32 %v1118, 7
  %v1120 = vsub.s32 0, %v1119
  %v1121 = vrot.slane %v1105, %v1120
  %v1123 = vpack.i.b16 %v1109, %v1109
  %v1125 = vlaneseq
  %v1126 = vshrl.u32 %v1125, 7
  %v1127 = vsub.s32 0, %v1126
  %v1128 = vrot.slane %v1123, %v1127
  %v1130 = vpack.i.b16 %v1113, %v1113
  %v1132 = vlaneseq
  %v1133 = vshrl.u32 %v1132, 7
  %v1134 = vsub.s32 0, %v1133
  %v1135 = vrot.slane %v1130, %v1134
  %v1137 = vpack.i.b16 %v1117, %v1117
  %v1139 = vlaneseq
  %v1140 = vshrl.u32 %v1139, 7
  %v1141 = vsub.s32 0, %v1140
  %v1142 = vrot.slane %v1137, %v1141
  %v1144 = vpack.i.b16 %v1121, %v1121
  %v1146 = vlaneseq
  %v1147 = vshrl.u32 %v1146, 7
  %v1148 = vsub.s32 0, %v1147
  %v1149 = vrot.slane %v1144, %v1148
  %1154 = vrot.lane.b32.xlu0 %v1128, 32
  %v1155 = vpop.permute.xlu0 %1154
  %1156 = vrot.lane.b32.xlu0 %v1135, 32
  %v1157 = vpop.permute.xlu0 %1156
  %1158 = vrot.lane.b32.xlu0 %v1142, 32
  %v1159 = vpop.permute.xlu0 %1158
  %1160 = vrot.lane.b32.xlu0 %v1149, 32
  %v1161 = vpop.permute.xlu0 %1160
  %v1166 = vmul.bf16 %v1041, %v1155
  %v1167 = vmul.bf16 %v1042, %v1155
  %v1168 = vmul.bf16 %v1043, %v1155
  %v1169 = vmul.bf16 %v1044, %v1155
  %v1170 = vmul.bf16 %v1041, %v1157
  %v1171 = vmul.bf16 %v1042, %v1157
  %v1172 = vmul.bf16 %v1043, %v1157
  %v1173 = vmul.bf16 %v1044, %v1157
  %v1174 = vmul.bf16 %v1041, %v1159
  %v1175 = vmul.bf16 %v1042, %v1159
  %v1176 = vmul.bf16 %v1043, %v1159
  %v1177 = vmul.bf16 %v1044, %v1159
  %v1178 = vmul.bf16 %v1041, %v1161
  %v1179 = vmul.bf16 %v1042, %v1161
  %v1180 = vmul.bf16 %v1043, %v1161
  %v1181 = vmul.bf16 %v1044, %v1161
  %v1182 = vmul.bf16 %v1045, %v1155
  %v1183 = vmul.bf16 %v1046, %v1155
  %v1184 = vmul.bf16 %v1047, %v1155
  %v1185 = vmul.bf16 %v1048, %v1155
  %v1186 = vmul.bf16 %v1045, %v1157
  %v1187 = vmul.bf16 %v1046, %v1157
  %v1188 = vmul.bf16 %v1047, %v1157
  %v1189 = vmul.bf16 %v1048, %v1157
  %v1190 = vmul.bf16 %v1045, %v1159
  %v1191 = vmul.bf16 %v1046, %v1159
  %v1192 = vmul.bf16 %v1047, %v1159
  %v1193 = vmul.bf16 %v1048, %v1159
  %v1194 = vmul.bf16 %v1045, %v1161
  %v1195 = vmul.bf16 %v1046, %v1161
  %v1196 = vmul.bf16 %v1047, %v1161
  %v1197 = vmul.bf16 %v1048, %v1161
  %v1198 = vmul.bf16 %v1049, %v1155
  %v1199 = vmul.bf16 %v1050, %v1155
  %v1200 = vmul.bf16 %v1051, %v1155
  %v1201 = vmul.bf16 %v1052, %v1155
  %v1202 = vmul.bf16 %v1049, %v1157
  %v1203 = vmul.bf16 %v1050, %v1157
  %v1204 = vmul.bf16 %v1051, %v1157
  %v1205 = vmul.bf16 %v1052, %v1157
  %v1206 = vmul.bf16 %v1049, %v1159
  %v1207 = vmul.bf16 %v1050, %v1159
  %v1208 = vmul.bf16 %v1051, %v1159
  %v1209 = vmul.bf16 %v1052, %v1159
  %v1210 = vmul.bf16 %v1049, %v1161
  %v1211 = vmul.bf16 %v1050, %v1161
  %v1212 = vmul.bf16 %v1051, %v1161
  %v1213 = vmul.bf16 %v1052, %v1161
  %v1214 = vmul.bf16 %v1053, %v1155
  %v1215 = vmul.bf16 %v1054, %v1155
  %v1216 = vmul.bf16 %v1055, %v1155
  %v1217 = vmul.bf16 %v1056, %v1155
  %v1218 = vmul.bf16 %v1053, %v1157
  %v1219 = vmul.bf16 %v1054, %v1157
  %v1220 = vmul.bf16 %v1055, %v1157
  %v1221 = vmul.bf16 %v1056, %v1157
  %v1222 = vmul.bf16 %v1053, %v1159
  %v1223 = vmul.bf16 %v1054, %v1159
  %v1224 = vmul.bf16 %v1055, %v1159
  %v1225 = vmul.bf16 %v1056, %v1159
  %v1226 = vmul.bf16 %v1053, %v1161
  %v1227 = vmul.bf16 %v1054, %v1161
  %v1228 = vmul.bf16 %v1055, %v1161
  %v1229 = vmul.bf16 %v1056, %v1161
  %v1230 = vmul.bf16 %v1057, %v1155
  %v1231 = vmul.bf16 %v1058, %v1155
  %v1232 = vmul.bf16 %v1059, %v1155
  %v1233 = vmul.bf16 %v1060, %v1155
  %v1234 = vmul.bf16 %v1057, %v1157
  %v1235 = vmul.bf16 %v1058, %v1157
  %v1236 = vmul.bf16 %v1059, %v1157
  %v1237 = vmul.bf16 %v1060, %v1157
  %v1238 = vmul.bf16 %v1057, %v1159
  %v1239 = vmul.bf16 %v1058, %v1159
  %v1240 = vmul.bf16 %v1059, %v1159
  %v1241 = vmul.bf16 %v1060, %v1159
  %v1242 = vmul.bf16 %v1057, %v1161
  %v1243 = vmul.bf16 %v1058, %v1161
  %v1244 = vmul.bf16 %v1059, %v1161
  %v1245 = vmul.bf16 %v1060, %v1161
  %v1246 = vmul.bf16 %v1061, %v1155
  %v1247 = vmul.bf16 %v1062, %v1155
  %v1248 = vmul.bf16 %v1063, %v1155
  %v1249 = vmul.bf16 %v1064, %v1155
  %v1250 = vmul.bf16 %v1061, %v1157
  %v1251 = vmul.bf16 %v1062, %v1157
  %v1252 = vmul.bf16 %v1063, %v1157
  %v1253 = vmul.bf16 %v1064, %v1157
  %v1254 = vmul.bf16 %v1061, %v1159
  %v1255 = vmul.bf16 %v1062, %v1159
  %v1256 = vmul.bf16 %v1063, %v1159
  %v1257 = vmul.bf16 %v1064, %v1159
  %v1258 = vmul.bf16 %v1061, %v1161
  %v1259 = vmul.bf16 %v1062, %v1161
  %v1260 = vmul.bf16 %v1063, %v1161
  %v1261 = vmul.bf16 %v1064, %v1161
  %v1262 = vmul.bf16 %v1065, %v1155
  %v1263 = vmul.bf16 %v1066, %v1155
  %v1264 = vmul.bf16 %v1067, %v1155
  %v1265 = vmul.bf16 %v1068, %v1155
  %v1266 = vmul.bf16 %v1065, %v1157
  %v1267 = vmul.bf16 %v1066, %v1157
  %v1268 = vmul.bf16 %v1067, %v1157
  %v1269 = vmul.bf16 %v1068, %v1157
  %v1270 = vmul.bf16 %v1065, %v1159
  %v1271 = vmul.bf16 %v1066, %v1159
  %v1272 = vmul.bf16 %v1067, %v1159
  %v1273 = vmul.bf16 %v1068, %v1159
  %v1274 = vmul.bf16 %v1065, %v1161
  %v1275 = vmul.bf16 %v1066, %v1161
  %v1276 = vmul.bf16 %v1067, %v1161
  %v1277 = vmul.bf16 %v1068, %v1161
  %v1278 = vmul.bf16 %v1069, %v1155
  %v1279 = vmul.bf16 %v1070, %v1155
  %v1280 = vmul.bf16 %v1071, %v1155
  %v1281 = vmul.bf16 %v1072, %v1155
  %v1282 = vmul.bf16 %v1069, %v1157
  %v1283 = vmul.bf16 %v1070, %v1157
  %v1284 = vmul.bf16 %v1071, %v1157
  %v1285 = vmul.bf16 %v1072, %v1157
  %v1286 = vmul.bf16 %v1069, %v1159
  %v1287 = vmul.bf16 %v1070, %v1159
  %v1288 = vmul.bf16 %v1071, %v1159
  %v1289 = vmul.bf16 %v1072, %v1159
  %v1290 = vmul.bf16 %v1069, %v1161
  %v1291 = vmul.bf16 %v1070, %v1161
  %v1292 = vmul.bf16 %v1071, %v1161
  %v1293 = vmul.bf16 %v1072, %v1161
  %v1294 = vld [vmem:[%s3] sm:$0xff]
  %v1295 = vld [vmem:[%s3 + $0x8] sm:$0xff]
  %v1296 = vld [vmem:[%s3 + $0x10] sm:$0xff]
  %v1297 = vld [vmem:[%s3 + $0x18] sm:$0xff]
  %v1298 = vld [vmem:[%s3 + $0x20] sm:$0xff]
  %v1299 = vld [vmem:[%s3 + $0x28] sm:$0xff]
  %v1300 = vld [vmem:[%s3 + $0x30] sm:$0xff]
  %v1301 = vld [vmem:[%s3 + $0x38] sm:$0xff]
  %v1302 = vld [vmem:[%s3 + $0x40] sm:$0xff]
  %v1303 = vld [vmem:[%s3 + $0x48] sm:$0xff]
  %v1304 = vld [vmem:[%s3 + $0x50] sm:$0xff]
  %v1305 = vld [vmem:[%s3 + $0x58] sm:$0xff]
  %v1306 = vld [vmem:[%s3 + $0x60] sm:$0xff]
  %v1307 = vld [vmem:[%s3 + $0x68] sm:$0xff]
  %v1308 = vld [vmem:[%s3 + $0x70] sm:$0xff]
  %v1309 = vld [vmem:[%s3 + $0x78] sm:$0xff]
  %v1310 = vld [vmem:[%s3 + $0x80] sm:$0xff]
  %v1311 = vld [vmem:[%s3 + $0x88] sm:$0xff]
  %v1312 = vld [vmem:[%s3 + $0x90] sm:$0xff]
  %v1313 = vld [vmem:[%s3 + $0x98] sm:$0xff]
  %v1314 = vld [vmem:[%s3 + $0xa0] sm:$0xff]
  %v1315 = vld [vmem:[%s3 + $0xa8] sm:$0xff]
  %v1316 = vld [vmem:[%s3 + $0xb0] sm:$0xff]
  %v1317 = vld [vmem:[%s3 + $0xb8] sm:$0xff]
  %v1318 = vld [vmem:[%s3 + $0xc0] sm:$0xff]
  %v1319 = vld [vmem:[%s3 + $0xc8] sm:$0xff]
  %v1320 = vld [vmem:[%s3 + $0xd0] sm:$0xff]
  %v1321 = vld [vmem:[%s3 + $0xd8] sm:$0xff]
  %v1322 = vld [vmem:[%s3 + $0xe0] sm:$0xff]
  %v1323 = vld [vmem:[%s3 + $0xe8] sm:$0xff]
  %v1324 = vld [vmem:[%s3 + $0xf0] sm:$0xff]
  %v1325 = vld [vmem:[%s3 + $0xf8] sm:$0xff]
  %1342 = vrot.lane.b32.xlu0 %v1166, 96
  %v1343 = vpop.permute.xlu0 %1342
  %1344 = vrot.lane.b32.xlu0 %v1167, 96
  %v1345 = vpop.permute.xlu0 %1344
  %1346 = vrot.lane.b32.xlu0 %v1168, 96
  %v1347 = vpop.permute.xlu0 %1346
  %1348 = vrot.lane.b32.xlu0 %v1169, 96
  %v1349 = vpop.permute.xlu0 %1348
  %1350 = vrot.lane.b32.xlu0 %v1170, 96
  %v1351 = vpop.permute.xlu0 %1350
  %1352 = vrot.lane.b32.xlu0 %v1171, 96
  %v1353 = vpop.permute.xlu0 %1352
  %1354 = vrot.lane.b32.xlu0 %v1172, 96
  %v1355 = vpop.permute.xlu0 %1354
  %1356 = vrot.lane.b32.xlu0 %v1173, 96
  %v1357 = vpop.permute.xlu0 %1356
  %1358 = vrot.lane.b32.xlu0 %v1174, 96
  %v1359 = vpop.permute.xlu0 %1358
  %1360 = vrot.lane.b32.xlu0 %v1175, 96
  %v1361 = vpop.permute.xlu0 %1360
  %1362 = vrot.lane.b32.xlu0 %v1176, 96
  %v1363 = vpop.permute.xlu0 %1362
  %1364 = vrot.lane.b32.xlu0 %v1177, 96
  %v1365 = vpop.permute.xlu0 %1364
  %1366 = vrot.lane.b32.xlu0 %v1178, 96
  %v1367 = vpop.permute.xlu0 %1366
  %1368 = vrot.lane.b32.xlu0 %v1179, 96
  %v1369 = vpop.permute.xlu0 %1368
  %1370 = vrot.lane.b32.xlu0 %v1180, 96
  %v1371 = vpop.permute.xlu0 %1370
  %1372 = vrot.lane.b32.xlu0 %v1181, 96
  %v1373 = vpop.permute.xlu0 %1372
  %1378 = vrot.lane.b32.xlu0 %v1041, 64
  %v1379 = vpop.permute.xlu0 %1378
  %1380 = vrot.lane.b32.xlu0 %v1042, 64
  %v1381 = vpop.permute.xlu0 %1380
  %1382 = vrot.lane.b32.xlu0 %v1043, 64
  %v1383 = vpop.permute.xlu0 %1382
  %1384 = vrot.lane.b32.xlu0 %v1044, 64
  %v1385 = vpop.permute.xlu0 %1384
  %v1387 = vsel %vm263, %v1343, 0
  %v1390 = vsel %vm263, %v1345, 0
  %v1393 = vsel %vm263, %v1347, 0
  %v1396 = vsel %vm263, %v1349, 0
  %v1399 = vsel %vm263, %v1351, 0
  %v1402 = vsel %vm263, %v1353, 0
  %v1405 = vsel %vm263, %v1355, 0
  %v1408 = vsel %vm263, %v1357, 0
  %v1411 = vsel %vm263, %v1359, 0
  %v1414 = vsel %vm263, %v1361, 0
  %v1417 = vsel %vm263, %v1363, 0
  %v1420 = vsel %vm263, %v1365, 0
  %v1423 = vsel %vm263, %v1367, 0
  %v1426 = vsel %vm263, %v1369, 0
  %v1429 = vsel %vm263, %v1371, 0
  %v1432 = vsel %vm263, %v1373, 0
  %v1435 = vsel %vm263, %v1379, 0
  %v1438 = vsel %vm263, %v1381, 0
  %v1441 = vsel %vm263, %v1383, 0
  %v1444 = vsel %vm263, %v1385, 0
  %1446 = vmatprep.subr.bf16.mxu0 0
  %1447 = vmatpush1.bf16.xpose.msra.mxu0 0
  %1448 = vmatprep.subr.bf16.mxu0 0
  %1449 = vmatpush1.bf16.xpose.msra.mxu0 0
  %1450 = vmatprep.subr.bf16.mxu0 0
  %1451 = vmatpush1.bf16.xpose.msra.mxu0 0
  %1452 = vmatprep.subr.bf16.mxu0 0
  %1453 = vmatpush1.bf16.xpose.msra.mxu0 0
  %1454 = vmatprep.subr.bf16.mxu0 0
  %1455 = vmatpush1.bf16.xpose.msra.mxu0 %v1444
  %1456 = vmatprep.subr.bf16.mxu0 0
  %1457 = vmatpush1.bf16.xpose.msra.mxu0 %v1441
  %1458 = vmatprep.subr.bf16.mxu0 0
  %1459 = vmatpush1.bf16.xpose.msra.mxu0 %v1438
  %1460 = vmatprep.subr.bf16.mxu0 0
  %1461 = vmatpush1.bf16.xpose.msra.mxu0 %v1435
  %1462 = vmatprep.subr.bf16.mxu0 0
  %1463 = vmatpush2.bf16.xpose.msra.mxu0 0
  %1464 = vmatprep.subr.bf16.mxu0 0
  %1465 = vmatpush2.bf16.xpose.msra.mxu0 0
  %1466 = vmatprep.subr.bf16.mxu0 0
  %1467 = vmatpush2.bf16.xpose.msra.mxu0 0
  %1468 = vmatprep.subr.bf16.mxu0 0
  %1469 = vmatpush2.bf16.xpose.msra.mxu0 0
  %1470 = vmatprep.subr.bf16.mxu0 0
  %1471 = vmatpush2.bf16.xpose.msra.mxu0 0
  %1472 = vmatprep.subr.bf16.mxu0 0
  %1473 = vmatpush2.bf16.xpose.msra.mxu0 0
  %1474 = vmatprep.subr.bf16.mxu0 0
  %1475 = vmatpush2.bf16.xpose.msra.mxu0 0
  %1476 = vmatprep.subr.bf16.mxu0 0
  %1477 = vmatpush2.bf16.xpose.msra.mxu0 0
  %1478 = vmatprep.mubr.bf16.mxu0 0
  %1479 = vmatmul.mubr.bf16.gmra.mxu0 %v1387
  %v1480 = vpop.f32.mrf.mxu0
  %v1481 = vadd.f32 %v1294, %v1480
  %v1482 = vpop.f32.mrf.mxu0
  %v1483 = vpop.f32.mrf.mxu0
  %v1484 = vadd.f32 %v1295, %v1483
  %v1485 = vpop.f32.mrf.mxu0
  %1486 = vmatprep.mubr.bf16.mxu0 0
  %1487 = vmatmul.mubr.bf16.gmra.mxu0 %v1390
  %v1488 = vpop.f32.mrf.mxu0
  %v1489 = vadd.f32 %v1296, %v1488
  %v1490 = vpop.f32.mrf.mxu0
  %v1491 = vpop.f32.mrf.mxu0
  %v1492 = vadd.f32 %v1297, %v1491
  %v1493 = vpop.f32.mrf.mxu0
  %1494 = vmatprep.mubr.bf16.mxu0 0
  %1495 = vmatmul.mubr.bf16.gmra.mxu0 %v1393
  %v1496 = vpop.f32.mrf.mxu0
  %v1497 = vadd.f32 %v1298, %v1496
  %v1498 = vpop.f32.mrf.mxu0
  %v1499 = vpop.f32.mrf.mxu0
  %v1500 = vadd.f32 %v1299, %v1499
  %v1501 = vpop.f32.mrf.mxu0
  %1502 = vmatprep.mubr.bf16.mxu0 0
  %1503 = vmatmul.mubr.bf16.gmra.mxu0 %v1396
  %v1504 = vpop.f32.mrf.mxu0
  %v1505 = vadd.f32 %v1300, %v1504
  %v1506 = vpop.f32.mrf.mxu0
  %v1507 = vpop.f32.mrf.mxu0
  %v1508 = vadd.f32 %v1301, %v1507
  %v1509 = vpop.f32.mrf.mxu0
  %1510 = vmatprep.mubr.bf16.mxu0 0
  %1511 = vmatmul.mubr.bf16.gmra.mxu0 %v1399
  %v1512 = vpop.f32.mrf.mxu0
  %v1513 = vadd.f32 %v1302, %v1512
  %v1514 = vpop.f32.mrf.mxu0
  %v1515 = vpop.f32.mrf.mxu0
  %v1516 = vadd.f32 %v1303, %v1515
  %v1517 = vpop.f32.mrf.mxu0
  %1518 = vmatprep.mubr.bf16.mxu0 0
  %1519 = vmatmul.mubr.bf16.gmra.mxu0 %v1402
  %v1520 = vpop.f32.mrf.mxu0
  %v1521 = vadd.f32 %v1304, %v1520
  %v1522 = vpop.f32.mrf.mxu0
  %v1523 = vpop.f32.mrf.mxu0
  %v1524 = vadd.f32 %v1305, %v1523
  %v1525 = vpop.f32.mrf.mxu0
  %1526 = vmatprep.mubr.bf16.mxu0 0
  %1527 = vmatmul.mubr.bf16.gmra.mxu0 %v1405
  %v1528 = vpop.f32.mrf.mxu0
  %v1529 = vadd.f32 %v1306, %v1528
  %v1530 = vpop.f32.mrf.mxu0
  %v1531 = vpop.f32.mrf.mxu0
  %v1532 = vadd.f32 %v1307, %v1531
  %v1533 = vpop.f32.mrf.mxu0
  %1534 = vmatprep.mubr.bf16.mxu0 0
  %1535 = vmatmul.mubr.bf16.gmra.mxu0 %v1408
  %v1536 = vpop.f32.mrf.mxu0
  %v1537 = vadd.f32 %v1308, %v1536
  %v1538 = vpop.f32.mrf.mxu0
  %v1539 = vpop.f32.mrf.mxu0
  %v1540 = vadd.f32 %v1309, %v1539
  %v1541 = vpop.f32.mrf.mxu0
  %1542 = vmatprep.mubr.bf16.mxu0 0
  %1543 = vmatmul.mubr.bf16.gmra.mxu0 %v1411
  %v1544 = vpop.f32.mrf.mxu0
  %v1545 = vadd.f32 %v1310, %v1544
  %v1546 = vpop.f32.mrf.mxu0
  %v1547 = vpop.f32.mrf.mxu0
  %v1548 = vadd.f32 %v1311, %v1547
  %v1549 = vpop.f32.mrf.mxu0
  %1550 = vmatprep.mubr.bf16.mxu0 0
  %1551 = vmatmul.mubr.bf16.gmra.mxu0 %v1414
  %v1552 = vpop.f32.mrf.mxu0
  %v1553 = vadd.f32 %v1312, %v1552
  %v1554 = vpop.f32.mrf.mxu0
  %v1555 = vpop.f32.mrf.mxu0
  %v1556 = vadd.f32 %v1313, %v1555
  %v1557 = vpop.f32.mrf.mxu0
  %1558 = vmatprep.mubr.bf16.mxu0 0
  %1559 = vmatmul.mubr.bf16.gmra.mxu0 %v1417
  %v1560 = vpop.f32.mrf.mxu0
  %v1561 = vadd.f32 %v1314, %v1560
  %v1562 = vpop.f32.mrf.mxu0
  %v1563 = vpop.f32.mrf.mxu0
  %v1564 = vadd.f32 %v1315, %v1563
  %v1565 = vpop.f32.mrf.mxu0
  %1566 = vmatprep.mubr.bf16.mxu0 0
  %1567 = vmatmul.mubr.bf16.gmra.mxu0 %v1420
  %v1568 = vpop.f32.mrf.mxu0
  %v1569 = vadd.f32 %v1316, %v1568
  %v1570 = vpop.f32.mrf.mxu0
  %v1571 = vpop.f32.mrf.mxu0
  %v1572 = vadd.f32 %v1317, %v1571
  %v1573 = vpop.f32.mrf.mxu0
  %1574 = vmatprep.mubr.bf16.mxu0 0
  %1575 = vmatmul.mubr.bf16.gmra.mxu0 %v1423
  %v1576 = vpop.f32.mrf.mxu0
  %v1577 = vadd.f32 %v1318, %v1576
  %v1578 = vpop.f32.mrf.mxu0
  %v1579 = vpop.f32.mrf.mxu0
  %v1580 = vadd.f32 %v1319, %v1579
  %v1581 = vpop.f32.mrf.mxu0
  %1582 = vmatprep.mubr.bf16.mxu0 0
  %1583 = vmatmul.mubr.bf16.gmra.mxu0 %v1426
  %v1584 = vpop.f32.mrf.mxu0
  %v1585 = vadd.f32 %v1320, %v1584
  %v1586 = vpop.f32.mrf.mxu0
  %v1587 = vpop.f32.mrf.mxu0
  %v1588 = vadd.f32 %v1321, %v1587
  %v1589 = vpop.f32.mrf.mxu0
  %1590 = vmatprep.mubr.bf16.mxu0 0
  %1591 = vmatmul.mubr.bf16.gmra.mxu0 %v1429
  %v1592 = vpop.f32.mrf.mxu0
  %v1593 = vadd.f32 %v1322, %v1592
  %v1594 = vpop.f32.mrf.mxu0
  %v1595 = vpop.f32.mrf.mxu0
  %v1596 = vadd.f32 %v1323, %v1595
  %v1597 = vpop.f32.mrf.mxu0
  %1598 = vmatprep.mubr.bf16.mxu0 0
  %1599 = vmatmul.mubr.bf16.gmra.mxu0 %v1432
  %v1600 = vpop.f32.mrf.mxu0
  %v1601 = vadd.f32 %v1324, %v1600
  %v1602 = vpop.f32.mrf.mxu0
  %v1603 = vpop.f32.mrf.mxu0
  %v1604 = vadd.f32 %v1325, %v1603
  %v1605 = vpop.f32.mrf.mxu0
  %1606 = vdwg.mxu0
  %1623 = vrot.lane.b32.xlu0 %v1182, 96
  %v1624 = vpop.permute.xlu0 %1623
  %1625 = vrot.lane.b32.xlu0 %v1183, 96
  %v1626 = vpop.permute.xlu0 %1625
  %1627 = vrot.lane.b32.xlu0 %v1184, 96
  %v1628 = vpop.permute.xlu0 %1627
  %1629 = vrot.lane.b32.xlu0 %v1185, 96
  %v1630 = vpop.permute.xlu0 %1629
  %1631 = vrot.lane.b32.xlu0 %v1186, 96
  %v1632 = vpop.permute.xlu0 %1631
  %1633 = vrot.lane.b32.xlu0 %v1187, 96
  %v1634 = vpop.permute.xlu0 %1633
  %1635 = vrot.lane.b32.xlu0 %v1188, 96
  %v1636 = vpop.permute.xlu0 %1635
  %1637 = vrot.lane.b32.xlu0 %v1189, 96
  %v1638 = vpop.permute.xlu0 %1637
  %1639 = vrot.lane.b32.xlu0 %v1190, 96
  %v1640 = vpop.permute.xlu0 %1639
  %1641 = vrot.lane.b32.xlu0 %v1191, 96
  %v1642 = vpop.permute.xlu0 %1641
  %1643 = vrot.lane.b32.xlu0 %v1192, 96
  %v1644 = vpop.permute.xlu0 %1643
  %1645 = vrot.lane.b32.xlu0 %v1193, 96
  %v1646 = vpop.permute.xlu0 %1645
  %1647 = vrot.lane.b32.xlu0 %v1194, 96
  %v1648 = vpop.permute.xlu0 %1647
  %1649 = vrot.lane.b32.xlu0 %v1195, 96
  %v1650 = vpop.permute.xlu0 %1649
  %1651 = vrot.lane.b32.xlu0 %v1196, 96
  %v1652 = vpop.permute.xlu0 %1651
  %1653 = vrot.lane.b32.xlu0 %v1197, 96
  %v1654 = vpop.permute.xlu0 %1653
  %1659 = vrot.lane.b32.xlu0 %v1045, 64
  %v1660 = vpop.permute.xlu0 %1659
  %1661 = vrot.lane.b32.xlu0 %v1046, 64
  %v1662 = vpop.permute.xlu0 %1661
  %1663 = vrot.lane.b32.xlu0 %v1047, 64
  %v1664 = vpop.permute.xlu0 %1663
  %1665 = vrot.lane.b32.xlu0 %v1048, 64
  %v1666 = vpop.permute.xlu0 %1665
  %v1668 = vsel %vm263, %v1624, 0
  %v1671 = vsel %vm263, %v1626, 0
  %v1674 = vsel %vm263, %v1628, 0
  %v1677 = vsel %vm263, %v1630, 0
  %v1680 = vsel %vm263, %v1632, 0
  %v1683 = vsel %vm263, %v1634, 0
  %v1686 = vsel %vm263, %v1636, 0
  %v1689 = vsel %vm263, %v1638, 0
  %v1692 = vsel %vm263, %v1640, 0
  %v1695 = vsel %vm263, %v1642, 0
  %v1698 = vsel %vm263, %v1644, 0
  %v1701 = vsel %vm263, %v1646, 0
  %v1704 = vsel %vm263, %v1648, 0
  %v1707 = vsel %vm263, %v1650, 0
  %v1710 = vsel %vm263, %v1652, 0
  %v1713 = vsel %vm263, %v1654, 0
  %v1716 = vsel %vm263, %v1660, 0
  %v1719 = vsel %vm263, %v1662, 0
  %v1722 = vsel %vm263, %v1664, 0
  %v1725 = vsel %vm263, %v1666, 0
  %1727 = vmatprep.subr.bf16.mxu0 0
  %1728 = vmatpush1.bf16.xpose.msra.mxu0 0
  %1729 = vmatprep.subr.bf16.mxu0 0
  %1730 = vmatpush1.bf16.xpose.msra.mxu0 0
  %1731 = vmatprep.subr.bf16.mxu0 0
  %1732 = vmatpush1.bf16.xpose.msra.mxu0 0
  %1733 = vmatprep.subr.bf16.mxu0 0
  %1734 = vmatpush1.bf16.xpose.msra.mxu0 0
  %1735 = vmatprep.subr.bf16.mxu0 0
  %1736 = vmatpush1.bf16.xpose.msra.mxu0 %v1725
  %1737 = vmatprep.subr.bf16.mxu0 0
  %1738 = vmatpush1.bf16.xpose.msra.mxu0 %v1722
  %1739 = vmatprep.subr.bf16.mxu0 0
  %1740 = vmatpush1.bf16.xpose.msra.mxu0 %v1719
  %1741 = vmatprep.subr.bf16.mxu0 0
  %1742 = vmatpush1.bf16.xpose.msra.mxu0 %v1716
  %1743 = vmatprep.subr.bf16.mxu0 0
  %1744 = vmatpush2.bf16.xpose.msra.mxu0 0
  %1745 = vmatprep.subr.bf16.mxu0 0
  %1746 = vmatpush2.bf16.xpose.msra.mxu0 0
  %1747 = vmatprep.subr.bf16.mxu0 0
  %1748 = vmatpush2.bf16.xpose.msra.mxu0 0
  %1749 = vmatprep.subr.bf16.mxu0 0
  %1750 = vmatpush2.bf16.xpose.msra.mxu0 0
  %1751 = vmatprep.subr.bf16.mxu0 0
  %1752 = vmatpush2.bf16.xpose.msra.mxu0 0
  %1753 = vmatprep.subr.bf16.mxu0 0
  %1754 = vmatpush2.bf16.xpose.msra.mxu0 0
  %1755 = vmatprep.subr.bf16.mxu0 0
  %1756 = vmatpush2.bf16.xpose.msra.mxu0 0
  %1757 = vmatprep.subr.bf16.mxu0 0
  %1758 = vmatpush2.bf16.xpose.msra.mxu0 0
  %1759 = vmatprep.mubr.bf16.mxu0 0
  %1760 = vmatmul.mubr.bf16.gmra.mxu0 %v1668
  %v1761 = vpop.f32.mrf.mxu0
  %v1762 = vadd.f32 %v1294, %v1761
  %v1763 = vpop.f32.mrf.mxu0
  %v1764 = vpop.f32.mrf.mxu0
  %v1765 = vadd.f32 %v1295, %v1764
  %v1766 = vpop.f32.mrf.mxu0
  %1767 = vmatprep.mubr.bf16.mxu0 0
  %1768 = vmatmul.mubr.bf16.gmra.mxu0 %v1671
  %v1769 = vpop.f32.mrf.mxu0
  %v1770 = vadd.f32 %v1296, %v1769
  %v1771 = vpop.f32.mrf.mxu0
  %v1772 = vpop.f32.mrf.mxu0
  %v1773 = vadd.f32 %v1297, %v1772
  %v1774 = vpop.f32.mrf.mxu0
  %1775 = vmatprep.mubr.bf16.mxu0 0
  %1776 = vmatmul.mubr.bf16.gmra.mxu0 %v1674
  %v1777 = vpop.f32.mrf.mxu0
  %v1778 = vadd.f32 %v1298, %v1777
  %v1779 = vpop.f32.mrf.mxu0
  %v1780 = vpop.f32.mrf.mxu0
  %v1781 = vadd.f32 %v1299, %v1780
  %v1782 = vpop.f32.mrf.mxu0
  %1783 = vmatprep.mubr.bf16.mxu0 0
  %1784 = vmatmul.mubr.bf16.gmra.mxu0 %v1677
  %v1785 = vpop.f32.mrf.mxu0
  %v1786 = vadd.f32 %v1300, %v1785
  %v1787 = vpop.f32.mrf.mxu0
  %v1788 = vpop.f32.mrf.mxu0
  %v1789 = vadd.f32 %v1301, %v1788
  %v1790 = vpop.f32.mrf.mxu0
  %1791 = vmatprep.mubr.bf16.mxu0 0
  %1792 = vmatmul.mubr.bf16.gmra.mxu0 %v1680
  %v1793 = vpop.f32.mrf.mxu0
  %v1794 = vadd.f32 %v1302, %v1793
  %v1795 = vpop.f32.mrf.mxu0
  %v1796 = vpop.f32.mrf.mxu0
  %v1797 = vadd.f32 %v1303, %v1796
  %v1798 = vpop.f32.mrf.mxu0
  %1799 = vmatprep.mubr.bf16.mxu0 0
  %1800 = vmatmul.mubr.bf16.gmra.mxu0 %v1683
  %v1801 = vpop.f32.mrf.mxu0
  %v1802 = vadd.f32 %v1304, %v1801
  %v1803 = vpop.f32.mrf.mxu0
  %v1804 = vpop.f32.mrf.mxu0
  %v1805 = vadd.f32 %v1305, %v1804
  %v1806 = vpop.f32.mrf.mxu0
  %1807 = vmatprep.mubr.bf16.mxu0 0
  %1808 = vmatmul.mubr.bf16.gmra.mxu0 %v1686
  %v1809 = vpop.f32.mrf.mxu0
  %v1810 = vadd.f32 %v1306, %v1809
  %v1811 = vpop.f32.mrf.mxu0
  %v1812 = vpop.f32.mrf.mxu0
  %v1813 = vadd.f32 %v1307, %v1812
  %v1814 = vpop.f32.mrf.mxu0
  %1815 = vmatprep.mubr.bf16.mxu0 0
  %1816 = vmatmul.mubr.bf16.gmra.mxu0 %v1689
  %v1817 = vpop.f32.mrf.mxu0
  %v1818 = vadd.f32 %v1308, %v1817
  %v1819 = vpop.f32.mrf.mxu0
  %v1820 = vpop.f32.mrf.mxu0
  %v1821 = vadd.f32 %v1309, %v1820
  %v1822 = vpop.f32.mrf.mxu0
  %1823 = vmatprep.mubr.bf16.mxu0 0
  %1824 = vmatmul.mubr.bf16.gmra.mxu0 %v1692
  %v1825 = vpop.f32.mrf.mxu0
  %v1826 = vadd.f32 %v1310, %v1825
  %v1827 = vpop.f32.mrf.mxu0
  %v1828 = vpop.f32.mrf.mxu0
  %v1829 = vadd.f32 %v1311, %v1828
  %v1830 = vpop.f32.mrf.mxu0
  %1831 = vmatprep.mubr.bf16.mxu0 0
  %1832 = vmatmul.mubr.bf16.gmra.mxu0 %v1695
  %v1833 = vpop.f32.mrf.mxu0
  %v1834 = vadd.f32 %v1312, %v1833
  %v1835 = vpop.f32.mrf.mxu0
  %v1836 = vpop.f32.mrf.mxu0
  %v1837 = vadd.f32 %v1313, %v1836
  %v1838 = vpop.f32.mrf.mxu0
  %1839 = vmatprep.mubr.bf16.mxu0 0
  %1840 = vmatmul.mubr.bf16.gmra.mxu0 %v1698
  %v1841 = vpop.f32.mrf.mxu0
  %v1842 = vadd.f32 %v1314, %v1841
  %v1843 = vpop.f32.mrf.mxu0
  %v1844 = vpop.f32.mrf.mxu0
  %v1845 = vadd.f32 %v1315, %v1844
  %v1846 = vpop.f32.mrf.mxu0
  %1847 = vmatprep.mubr.bf16.mxu0 0
  %1848 = vmatmul.mubr.bf16.gmra.mxu0 %v1701
  %v1849 = vpop.f32.mrf.mxu0
  %v1850 = vadd.f32 %v1316, %v1849
  %v1851 = vpop.f32.mrf.mxu0
  %v1852 = vpop.f32.mrf.mxu0
  %v1853 = vadd.f32 %v1317, %v1852
  %v1854 = vpop.f32.mrf.mxu0
  %1855 = vmatprep.mubr.bf16.mxu0 0
  %1856 = vmatmul.mubr.bf16.gmra.mxu0 %v1704
  %v1857 = vpop.f32.mrf.mxu0
  %v1858 = vadd.f32 %v1318, %v1857
  %v1859 = vpop.f32.mrf.mxu0
  %v1860 = vpop.f32.mrf.mxu0
  %v1861 = vadd.f32 %v1319, %v1860
  %v1862 = vpop.f32.mrf.mxu0
  %1863 = vmatprep.mubr.bf16.mxu0 0
  %1864 = vmatmul.mubr.bf16.gmra.mxu0 %v1707
  %v1865 = vpop.f32.mrf.mxu0
  %v1866 = vadd.f32 %v1320, %v1865
  %v1867 = vpop.f32.mrf.mxu0
  %v1868 = vpop.f32.mrf.mxu0
  %v1869 = vadd.f32 %v1321, %v1868
  %v1870 = vpop.f32.mrf.mxu0
  %1871 = vmatprep.mubr.bf16.mxu0 0
  %1872 = vmatmul.mubr.bf16.gmra.mxu0 %v1710
  %v1873 = vpop.f32.mrf.mxu0
  %v1874 = vadd.f32 %v1322, %v1873
  %v1875 = vpop.f32.mrf.mxu0
  %v1876 = vpop.f32.mrf.mxu0
  %v1877 = vadd.f32 %v1323, %v1876
  %v1878 = vpop.f32.mrf.mxu0
  %1879 = vmatprep.mubr.bf16.mxu0 0
  %1880 = vmatmul.mubr.bf16.gmra.mxu0 %v1713
  %v1881 = vpop.f32.mrf.mxu0
  %v1882 = vadd.f32 %v1324, %v1881
  %v1883 = vpop.f32.mrf.mxu0
  %v1884 = vpop.f32.mrf.mxu0
  %v1885 = vadd.f32 %v1325, %v1884
  %v1886 = vpop.f32.mrf.mxu0
  %1887 = vdwg.mxu0
  %1904 = vrot.lane.b32.xlu0 %v1198, 96
  %v1905 = vpop.permute.xlu0 %1904
  %1906 = vrot.lane.b32.xlu0 %v1199, 96
  %v1907 = vpop.permute.xlu0 %1906
  %1908 = vrot.lane.b32.xlu0 %v1200, 96
  %v1909 = vpop.permute.xlu0 %1908
  %1910 = vrot.lane.b32.xlu0 %v1201, 96
  %v1911 = vpop.permute.xlu0 %1910
  %1912 = vrot.lane.b32.xlu0 %v1202, 96
  %v1913 = vpop.permute.xlu0 %1912
  %1914 = vrot.lane.b32.xlu0 %v1203, 96
  %v1915 = vpop.permute.xlu0 %1914
  %1916 = vrot.lane.b32.xlu0 %v1204, 96
  %v1917 = vpop.permute.xlu0 %1916
  %1918 = vrot.lane.b32.xlu0 %v1205, 96
  %v1919 = vpop.permute.xlu0 %1918
  %1920 = vrot.lane.b32.xlu0 %v1206, 96
  %v1921 = vpop.permute.xlu0 %1920
  %1922 = vrot.lane.b32.xlu0 %v1207, 96
  %v1923 = vpop.permute.xlu0 %1922
  %1924 = vrot.lane.b32.xlu0 %v1208, 96
  %v1925 = vpop.permute.xlu0 %1924
  %1926 = vrot.lane.b32.xlu0 %v1209, 96
  %v1927 = vpop.permute.xlu0 %1926
  %1928 = vrot.lane.b32.xlu0 %v1210, 96
  %v1929 = vpop.permute.xlu0 %1928
  %1930 = vrot.lane.b32.xlu0 %v1211, 96
  %v1931 = vpop.permute.xlu0 %1930
  %1932 = vrot.lane.b32.xlu0 %v1212, 96
  %v1933 = vpop.permute.xlu0 %1932
  %1934 = vrot.lane.b32.xlu0 %v1213, 96
  %v1935 = vpop.permute.xlu0 %1934
  %1940 = vrot.lane.b32.xlu0 %v1049, 64
  %v1941 = vpop.permute.xlu0 %1940
  %1942 = vrot.lane.b32.xlu0 %v1050, 64
  %v1943 = vpop.permute.xlu0 %1942
  %1944 = vrot.lane.b32.xlu0 %v1051, 64
  %v1945 = vpop.permute.xlu0 %1944
  %1946 = vrot.lane.b32.xlu0 %v1052, 64
  %v1947 = vpop.permute.xlu0 %1946
  %v1949 = vsel %vm263, %v1905, 0
  %v1952 = vsel %vm263, %v1907, 0
  %v1955 = vsel %vm263, %v1909, 0
  %v1958 = vsel %vm263, %v1911, 0
  %v1961 = vsel %vm263, %v1913, 0
  %v1964 = vsel %vm263, %v1915, 0
  %v1967 = vsel %vm263, %v1917, 0
  %v1970 = vsel %vm263, %v1919, 0
  %v1973 = vsel %vm263, %v1921, 0
  %v1976 = vsel %vm263, %v1923, 0
  %v1979 = vsel %vm263, %v1925, 0
  %v1982 = vsel %vm263, %v1927, 0
  %v1985 = vsel %vm263, %v1929, 0
  %v1988 = vsel %vm263, %v1931, 0
  %v1991 = vsel %vm263, %v1933, 0
  %v1994 = vsel %vm263, %v1935, 0
  %v1997 = vsel %vm263, %v1941, 0
  %v2000 = vsel %vm263, %v1943, 0
  %v2003 = vsel %vm263, %v1945, 0
  %v2006 = vsel %vm263, %v1947, 0
  %2008 = vmatprep.subr.bf16.mxu0 0
  %2009 = vmatpush1.bf16.xpose.msra.mxu0 0
  %2010 = vmatprep.subr.bf16.mxu0 0
  %2011 = vmatpush1.bf16.xpose.msra.mxu0 0
  %2012 = vmatprep.subr.bf16.mxu0 0
  %2013 = vmatpush1.bf16.xpose.msra.mxu0 0
  %2014 = vmatprep.subr.bf16.mxu0 0
  %2015 = vmatpush1.bf16.xpose.msra.mxu0 0
  %2016 = vmatprep.subr.bf16.mxu0 0
  %2017 = vmatpush1.bf16.xpose.msra.mxu0 %v2006
  %2018 = vmatprep.subr.bf16.mxu0 0
  %2019 = vmatpush1.bf16.xpose.msra.mxu0 %v2003
  %2020 = vmatprep.subr.bf16.mxu0 0
  %2021 = vmatpush1.bf16.xpose.msra.mxu0 %v2000
  %2022 = vmatprep.subr.bf16.mxu0 0
  %2023 = vmatpush1.bf16.xpose.msra.mxu0 %v1997
  %2024 = vmatprep.subr.bf16.mxu0 0
  %2025 = vmatpush2.bf16.xpose.msra.mxu0 0
  %2026 = vmatprep.subr.bf16.mxu0 0
  %2027 = vmatpush2.bf16.xpose.msra.mxu0 0
  %2028 = vmatprep.subr.bf16.mxu0 0
  %2029 = vmatpush2.bf16.xpose.msra.mxu0 0
  %2030 = vmatprep.subr.bf16.mxu0 0
  %2031 = vmatpush2.bf16.xpose.msra.mxu0 0
  %2032 = vmatprep.subr.bf16.mxu0 0
  %2033 = vmatpush2.bf16.xpose.msra.mxu0 0
  %2034 = vmatprep.subr.bf16.mxu0 0
  %2035 = vmatpush2.bf16.xpose.msra.mxu0 0
  %2036 = vmatprep.subr.bf16.mxu0 0
  %2037 = vmatpush2.bf16.xpose.msra.mxu0 0
  %2038 = vmatprep.subr.bf16.mxu0 0
  %2039 = vmatpush2.bf16.xpose.msra.mxu0 0
  %2040 = vmatprep.mubr.bf16.mxu0 0
  %2041 = vmatmul.mubr.bf16.gmra.mxu0 %v1949
  %v2042 = vpop.f32.mrf.mxu0
  %v2043 = vadd.f32 %v1294, %v2042
  %v2044 = vpop.f32.mrf.mxu0
  %v2045 = vpop.f32.mrf.mxu0
  %v2046 = vadd.f32 %v1295, %v2045
  %v2047 = vpop.f32.mrf.mxu0
  %2048 = vmatprep.mubr.bf16.mxu0 0
  %2049 = vmatmul.mubr.bf16.gmra.mxu0 %v1952
  %v2050 = vpop.f32.mrf.mxu0
  %v2051 = vadd.f32 %v1296, %v2050
  %v2052 = vpop.f32.mrf.mxu0
  %v2053 = vpop.f32.mrf.mxu0
  %v2054 = vadd.f32 %v1297, %v2053
  %v2055 = vpop.f32.mrf.mxu0
  %2056 = vmatprep.mubr.bf16.mxu0 0
  %2057 = vmatmul.mubr.bf16.gmra.mxu0 %v1955
  %v2058 = vpop.f32.mrf.mxu0
  %v2059 = vadd.f32 %v1298, %v2058
  %v2060 = vpop.f32.mrf.mxu0
  %v2061 = vpop.f32.mrf.mxu0
  %v2062 = vadd.f32 %v1299, %v2061
  %v2063 = vpop.f32.mrf.mxu0
  %2064 = vmatprep.mubr.bf16.mxu0 0
  %2065 = vmatmul.mubr.bf16.gmra.mxu0 %v1958
  %v2066 = vpop.f32.mrf.mxu0
  %v2067 = vadd.f32 %v1300, %v2066
  %v2068 = vpop.f32.mrf.mxu0
  %v2069 = vpop.f32.mrf.mxu0
  %v2070 = vadd.f32 %v1301, %v2069
  %v2071 = vpop.f32.mrf.mxu0
  %2072 = vmatprep.mubr.bf16.mxu0 0
  %2073 = vmatmul.mubr.bf16.gmra.mxu0 %v1961
  %v2074 = vpop.f32.mrf.mxu0
  %v2075 = vadd.f32 %v1302, %v2074
  %v2076 = vpop.f32.mrf.mxu0
  %v2077 = vpop.f32.mrf.mxu0
  %v2078 = vadd.f32 %v1303, %v2077
  %v2079 = vpop.f32.mrf.mxu0
  %2080 = vmatprep.mubr.bf16.mxu0 0
  %2081 = vmatmul.mubr.bf16.gmra.mxu0 %v1964
  %v2082 = vpop.f32.mrf.mxu0
  %v2083 = vadd.f32 %v1304, %v2082
  %v2084 = vpop.f32.mrf.mxu0
  %v2085 = vpop.f32.mrf.mxu0
  %v2086 = vadd.f32 %v1305, %v2085
  %v2087 = vpop.f32.mrf.mxu0
  %2088 = vmatprep.mubr.bf16.mxu0 0
  %2089 = vmatmul.mubr.bf16.gmra.mxu0 %v1967
  %v2090 = vpop.f32.mrf.mxu0
  %v2091 = vadd.f32 %v1306, %v2090
  %v2092 = vpop.f32.mrf.mxu0
  %v2093 = vpop.f32.mrf.mxu0
  %v2094 = vadd.f32 %v1307, %v2093
  %v2095 = vpop.f32.mrf.mxu0
  %2096 = vmatprep.mubr.bf16.mxu0 0
  %2097 = vmatmul.mubr.bf16.gmra.mxu0 %v1970
  %v2098 = vpop.f32.mrf.mxu0
  %v2099 = vadd.f32 %v1308, %v2098
  %v2100 = vpop.f32.mrf.mxu0
  %v2101 = vpop.f32.mrf.mxu0
  %v2102 = vadd.f32 %v1309, %v2101
  %v2103 = vpop.f32.mrf.mxu0
  %2104 = vmatprep.mubr.bf16.mxu0 0
  %2105 = vmatmul.mubr.bf16.gmra.mxu0 %v1973
  %v2106 = vpop.f32.mrf.mxu0
  %v2107 = vadd.f32 %v1310, %v2106
  %v2108 = vpop.f32.mrf.mxu0
  %v2109 = vpop.f32.mrf.mxu0
  %v2110 = vadd.f32 %v1311, %v2109
  %v2111 = vpop.f32.mrf.mxu0
  %2112 = vmatprep.mubr.bf16.mxu0 0
  %2113 = vmatmul.mubr.bf16.gmra.mxu0 %v1976
  %v2114 = vpop.f32.mrf.mxu0
  %v2115 = vadd.f32 %v1312, %v2114
  %v2116 = vpop.f32.mrf.mxu0
  %v2117 = vpop.f32.mrf.mxu0
  %v2118 = vadd.f32 %v1313, %v2117
  %v2119 = vpop.f32.mrf.mxu0
  %2120 = vmatprep.mubr.bf16.mxu0 0
  %2121 = vmatmul.mubr.bf16.gmra.mxu0 %v1979
  %v2122 = vpop.f32.mrf.mxu0
  %v2123 = vadd.f32 %v1314, %v2122
  %v2124 = vpop.f32.mrf.mxu0
  %v2125 = vpop.f32.mrf.mxu0
  %v2126 = vadd.f32 %v1315, %v2125
  %v2127 = vpop.f32.mrf.mxu0
  %2128 = vmatprep.mubr.bf16.mxu0 0
  %2129 = vmatmul.mubr.bf16.gmra.mxu0 %v1982
  %v2130 = vpop.f32.mrf.mxu0
  %v2131 = vadd.f32 %v1316, %v2130
  %v2132 = vpop.f32.mrf.mxu0
  %v2133 = vpop.f32.mrf.mxu0
  %v2134 = vadd.f32 %v1317, %v2133
  %v2135 = vpop.f32.mrf.mxu0
  %2136 = vmatprep.mubr.bf16.mxu0 0
  %2137 = vmatmul.mubr.bf16.gmra.mxu0 %v1985
  %v2138 = vpop.f32.mrf.mxu0
  %v2139 = vadd.f32 %v1318, %v2138
  %v2140 = vpop.f32.mrf.mxu0
  %v2141 = vpop.f32.mrf.mxu0
  %v2142 = vadd.f32 %v1319, %v2141
  %v2143 = vpop.f32.mrf.mxu0
  %2144 = vmatprep.mubr.bf16.mxu0 0
  %2145 = vmatmul.mubr.bf16.gmra.mxu0 %v1988
  %v2146 = vpop.f32.mrf.mxu0
  %v2147 = vadd.f32 %v1320, %v2146
  %v2148 = vpop.f32.mrf.mxu0
  %v2149 = vpop.f32.mrf.mxu0
  %v2150 = vadd.f32 %v1321, %v2149
  %v2151 = vpop.f32.mrf.mxu0
  %2152 = vmatprep.mubr.bf16.mxu0 0
  %2153 = vmatmul.mubr.bf16.gmra.mxu0 %v1991
  %v2154 = vpop.f32.mrf.mxu0
  %v2155 = vadd.f32 %v1322, %v2154
  %v2156 = vpop.f32.mrf.mxu0
  %v2157 = vpop.f32.mrf.mxu0
  %v2158 = vadd.f32 %v1323, %v2157
  %v2159 = vpop.f32.mrf.mxu0
  %2160 = vmatprep.mubr.bf16.mxu0 0
  %2161 = vmatmul.mubr.bf16.gmra.mxu0 %v1994
  %v2162 = vpop.f32.mrf.mxu0
  %v2163 = vadd.f32 %v1324, %v2162
  %v2164 = vpop.f32.mrf.mxu0
  %v2165 = vpop.f32.mrf.mxu0
  %v2166 = vadd.f32 %v1325, %v2165
  %v2167 = vpop.f32.mrf.mxu0
  %2168 = vdwg.mxu0
  %2185 = vrot.lane.b32.xlu0 %v1214, 96
  %v2186 = vpop.permute.xlu0 %2185
  %2187 = vrot.lane.b32.xlu0 %v1215, 96
  %v2188 = vpop.permute.xlu0 %2187
  %2189 = vrot.lane.b32.xlu0 %v1216, 96
  %v2190 = vpop.permute.xlu0 %2189
  %2191 = vrot.lane.b32.xlu0 %v1217, 96
  %v2192 = vpop.permute.xlu0 %2191
  %2193 = vrot.lane.b32.xlu0 %v1218, 96
  %v2194 = vpop.permute.xlu0 %2193
  %2195 = vrot.lane.b32.xlu0 %v1219, 96
  %v2196 = vpop.permute.xlu0 %2195
  %2197 = vrot.lane.b32.xlu0 %v1220, 96
  %v2198 = vpop.permute.xlu0 %2197
  %2199 = vrot.lane.b32.xlu0 %v1221, 96
  %v2200 = vpop.permute.xlu0 %2199
  %2201 = vrot.lane.b32.xlu0 %v1222, 96
  %v2202 = vpop.permute.xlu0 %2201
  %2203 = vrot.lane.b32.xlu0 %v1223, 96
  %v2204 = vpop.permute.xlu0 %2203
  %2205 = vrot.lane.b32.xlu0 %v1224, 96
  %v2206 = vpop.permute.xlu0 %2205
  %2207 = vrot.lane.b32.xlu0 %v1225, 96
  %v2208 = vpop.permute.xlu0 %2207
  %2209 = vrot.lane.b32.xlu0 %v1226, 96
  %v2210 = vpop.permute.xlu0 %2209
  %2211 = vrot.lane.b32.xlu0 %v1227, 96
  %v2212 = vpop.permute.xlu0 %2211
  %2213 = vrot.lane.b32.xlu0 %v1228, 96
  %v2214 = vpop.permute.xlu0 %2213
  %2215 = vrot.lane.b32.xlu0 %v1229, 96
  %v2216 = vpop.permute.xlu0 %2215
  %2221 = vrot.lane.b32.xlu0 %v1053, 64
  %v2222 = vpop.permute.xlu0 %2221
  %2223 = vrot.lane.b32.xlu0 %v1054, 64
  %v2224 = vpop.permute.xlu0 %2223
  %2225 = vrot.lane.b32.xlu0 %v1055, 64
  %v2226 = vpop.permute.xlu0 %2225
  %2227 = vrot.lane.b32.xlu0 %v1056, 64
  %v2228 = vpop.permute.xlu0 %2227
  %v2230 = vsel %vm263, %v2186, 0
  %v2233 = vsel %vm263, %v2188, 0
  %v2236 = vsel %vm263, %v2190, 0
  %v2239 = vsel %vm263, %v2192, 0
  %v2242 = vsel %vm263, %v2194, 0
  %v2245 = vsel %vm263, %v2196, 0
  %v2248 = vsel %vm263, %v2198, 0
  %v2251 = vsel %vm263, %v2200, 0
  %v2254 = vsel %vm263, %v2202, 0
  %v2257 = vsel %vm263, %v2204, 0
  %v2260 = vsel %vm263, %v2206, 0
  %v2263 = vsel %vm263, %v2208, 0
  %v2266 = vsel %vm263, %v2210, 0
  %v2269 = vsel %vm263, %v2212, 0
  %v2272 = vsel %vm263, %v2214, 0
  %v2275 = vsel %vm263, %v2216, 0
  %v2278 = vsel %vm263, %v2222, 0
  %v2281 = vsel %vm263, %v2224, 0
  %v2284 = vsel %vm263, %v2226, 0
  %v2287 = vsel %vm263, %v2228, 0
  %2289 = vmatprep.subr.bf16.mxu0 0
  %2290 = vmatpush1.bf16.xpose.msra.mxu0 0
  %2291 = vmatprep.subr.bf16.mxu0 0
  %2292 = vmatpush1.bf16.xpose.msra.mxu0 0
  %2293 = vmatprep.subr.bf16.mxu0 0
  %2294 = vmatpush1.bf16.xpose.msra.mxu0 0
  %2295 = vmatprep.subr.bf16.mxu0 0
  %2296 = vmatpush1.bf16.xpose.msra.mxu0 0
  %2297 = vmatprep.subr.bf16.mxu0 0
  %2298 = vmatpush1.bf16.xpose.msra.mxu0 %v2287
  %2299 = vmatprep.subr.bf16.mxu0 0
  %2300 = vmatpush1.bf16.xpose.msra.mxu0 %v2284
  %2301 = vmatprep.subr.bf16.mxu0 0
  %2302 = vmatpush1.bf16.xpose.msra.mxu0 %v2281
  %2303 = vmatprep.subr.bf16.mxu0 0
  %2304 = vmatpush1.bf16.xpose.msra.mxu0 %v2278
  %2305 = vmatprep.subr.bf16.mxu0 0
  %2306 = vmatpush2.bf16.xpose.msra.mxu0 0
  %2307 = vmatprep.subr.bf16.mxu0 0
  %2308 = vmatpush2.bf16.xpose.msra.mxu0 0
  %2309 = vmatprep.subr.bf16.mxu0 0
  %2310 = vmatpush2.bf16.xpose.msra.mxu0 0
  %2311 = vmatprep.subr.bf16.mxu0 0
  %2312 = vmatpush2.bf16.xpose.msra.mxu0 0
  %2313 = vmatprep.subr.bf16.mxu0 0
  %2314 = vmatpush2.bf16.xpose.msra.mxu0 0
  %2315 = vmatprep.subr.bf16.mxu0 0
  %2316 = vmatpush2.bf16.xpose.msra.mxu0 0
  %2317 = vmatprep.subr.bf16.mxu0 0
  %2318 = vmatpush2.bf16.xpose.msra.mxu0 0
  %2319 = vmatprep.subr.bf16.mxu0 0
  %2320 = vmatpush2.bf16.xpose.msra.mxu0 0
  %2321 = vmatprep.mubr.bf16.mxu0 0
  %2322 = vmatmul.mubr.bf16.gmra.mxu0 %v2230
  %v2323 = vpop.f32.mrf.mxu0
  %v2324 = vadd.f32 %v1294, %v2323
  %v2325 = vpop.f32.mrf.mxu0
  %v2326 = vpop.f32.mrf.mxu0
  %v2327 = vadd.f32 %v1295, %v2326
  %v2328 = vpop.f32.mrf.mxu0
  %2329 = vmatprep.mubr.bf16.mxu0 0
  %2330 = vmatmul.mubr.bf16.gmra.mxu0 %v2233
  %v2331 = vpop.f32.mrf.mxu0
  %v2332 = vadd.f32 %v1296, %v2331
  %v2333 = vpop.f32.mrf.mxu0
  %v2334 = vpop.f32.mrf.mxu0
  %v2335 = vadd.f32 %v1297, %v2334
  %v2336 = vpop.f32.mrf.mxu0
  %2337 = vmatprep.mubr.bf16.mxu0 0
  %2338 = vmatmul.mubr.bf16.gmra.mxu0 %v2236
  %v2339 = vpop.f32.mrf.mxu0
  %v2340 = vadd.f32 %v1298, %v2339
  %v2341 = vpop.f32.mrf.mxu0
  %v2342 = vpop.f32.mrf.mxu0
  %v2343 = vadd.f32 %v1299, %v2342
  %v2344 = vpop.f32.mrf.mxu0
  %2345 = vmatprep.mubr.bf16.mxu0 0
  %2346 = vmatmul.mubr.bf16.gmra.mxu0 %v2239
  %v2347 = vpop.f32.mrf.mxu0
  %v2348 = vadd.f32 %v1300, %v2347
  %v2349 = vpop.f32.mrf.mxu0
  %v2350 = vpop.f32.mrf.mxu0
  %v2351 = vadd.f32 %v1301, %v2350
  %v2352 = vpop.f32.mrf.mxu0
  %2353 = vmatprep.mubr.bf16.mxu0 0
  %2354 = vmatmul.mubr.bf16.gmra.mxu0 %v2242
  %v2355 = vpop.f32.mrf.mxu0
  %v2356 = vadd.f32 %v1302, %v2355
  %v2357 = vpop.f32.mrf.mxu0
  %v2358 = vpop.f32.mrf.mxu0
  %v2359 = vadd.f32 %v1303, %v2358
  %v2360 = vpop.f32.mrf.mxu0
  %2361 = vmatprep.mubr.bf16.mxu0 0
  %2362 = vmatmul.mubr.bf16.gmra.mxu0 %v2245
  %v2363 = vpop.f32.mrf.mxu0
  %v2364 = vadd.f32 %v1304, %v2363
  %v2365 = vpop.f32.mrf.mxu0
  %v2366 = vpop.f32.mrf.mxu0
  %v2367 = vadd.f32 %v1305, %v2366
  %v2368 = vpop.f32.mrf.mxu0
  %2369 = vmatprep.mubr.bf16.mxu0 0
  %2370 = vmatmul.mubr.bf16.gmra.mxu0 %v2248
  %v2371 = vpop.f32.mrf.mxu0
  %v2372 = vadd.f32 %v1306, %v2371
  %v2373 = vpop.f32.mrf.mxu0
  %v2374 = vpop.f32.mrf.mxu0
  %v2375 = vadd.f32 %v1307, %v2374
  %v2376 = vpop.f32.mrf.mxu0
  %2377 = vmatprep.mubr.bf16.mxu0 0
  %2378 = vmatmul.mubr.bf16.gmra.mxu0 %v2251
  %v2379 = vpop.f32.mrf.mxu0
  %v2380 = vadd.f32 %v1308, %v2379
  %v2381 = vpop.f32.mrf.mxu0
  %v2382 = vpop.f32.mrf.mxu0
  %v2383 = vadd.f32 %v1309, %v2382
  %v2384 = vpop.f32.mrf.mxu0
  %2385 = vmatprep.mubr.bf16.mxu0 0
  %2386 = vmatmul.mubr.bf16.gmra.mxu0 %v2254
  %v2387 = vpop.f32.mrf.mxu0
  %v2388 = vadd.f32 %v1310, %v2387
  %v2389 = vpop.f32.mrf.mxu0
  %v2390 = vpop.f32.mrf.mxu0
  %v2391 = vadd.f32 %v1311, %v2390
  %v2392 = vpop.f32.mrf.mxu0
  %2393 = vmatprep.mubr.bf16.mxu0 0
  %2394 = vmatmul.mubr.bf16.gmra.mxu0 %v2257
  %v2395 = vpop.f32.mrf.mxu0
  %v2396 = vadd.f32 %v1312, %v2395
  %v2397 = vpop.f32.mrf.mxu0
  %v2398 = vpop.f32.mrf.mxu0
  %v2399 = vadd.f32 %v1313, %v2398
  %v2400 = vpop.f32.mrf.mxu0
  %2401 = vmatprep.mubr.bf16.mxu0 0
  %2402 = vmatmul.mubr.bf16.gmra.mxu0 %v2260
  %v2403 = vpop.f32.mrf.mxu0
  %v2404 = vadd.f32 %v1314, %v2403
  %v2405 = vpop.f32.mrf.mxu0
  %v2406 = vpop.f32.mrf.mxu0
  %v2407 = vadd.f32 %v1315, %v2406
  %v2408 = vpop.f32.mrf.mxu0
  %2409 = vmatprep.mubr.bf16.mxu0 0
  %2410 = vmatmul.mubr.bf16.gmra.mxu0 %v2263
  %v2411 = vpop.f32.mrf.mxu0
  %v2412 = vadd.f32 %v1316, %v2411
  %v2413 = vpop.f32.mrf.mxu0
  %v2414 = vpop.f32.mrf.mxu0
  %v2415 = vadd.f32 %v1317, %v2414
  %v2416 = vpop.f32.mrf.mxu0
  %2417 = vmatprep.mubr.bf16.mxu0 0
  %2418 = vmatmul.mubr.bf16.gmra.mxu0 %v2266
  %v2419 = vpop.f32.mrf.mxu0
  %v2420 = vadd.f32 %v1318, %v2419
  %v2421 = vpop.f32.mrf.mxu0
  %v2422 = vpop.f32.mrf.mxu0
  %v2423 = vadd.f32 %v1319, %v2422
  %v2424 = vpop.f32.mrf.mxu0
  %2425 = vmatprep.mubr.bf16.mxu0 0
  %2426 = vmatmul.mubr.bf16.gmra.mxu0 %v2269
  %v2427 = vpop.f32.mrf.mxu0
  %v2428 = vadd.f32 %v1320, %v2427
  %v2429 = vpop.f32.mrf.mxu0
  %v2430 = vpop.f32.mrf.mxu0
  %v2431 = vadd.f32 %v1321, %v2430
  %v2432 = vpop.f32.mrf.mxu0
  %2433 = vmatprep.mubr.bf16.mxu0 0
  %2434 = vmatmul.mubr.bf16.gmra.mxu0 %v2272
  %v2435 = vpop.f32.mrf.mxu0
  %v2436 = vadd.f32 %v1322, %v2435
  %v2437 = vpop.f32.mrf.mxu0
  %v2438 = vpop.f32.mrf.mxu0
  %v2439 = vadd.f32 %v1323, %v2438
  %v2440 = vpop.f32.mrf.mxu0
  %2441 = vmatprep.mubr.bf16.mxu0 0
  %2442 = vmatmul.mubr.bf16.gmra.mxu0 %v2275
  %v2443 = vpop.f32.mrf.mxu0
  %v2444 = vadd.f32 %v1324, %v2443
  %v2445 = vpop.f32.mrf.mxu0
  %v2446 = vpop.f32.mrf.mxu0
  %v2447 = vadd.f32 %v1325, %v2446
  %v2448 = vpop.f32.mrf.mxu0
  %2449 = vdwg.mxu0
  %2466 = vrot.lane.b32.xlu0 %v1230, 96
  %v2467 = vpop.permute.xlu0 %2466
  %2468 = vrot.lane.b32.xlu0 %v1231, 96
  %v2469 = vpop.permute.xlu0 %2468
  %2470 = vrot.lane.b32.xlu0 %v1232, 96
  %v2471 = vpop.permute.xlu0 %2470
  %2472 = vrot.lane.b32.xlu0 %v1233, 96
  %v2473 = vpop.permute.xlu0 %2472
  %2474 = vrot.lane.b32.xlu0 %v1234, 96
  %v2475 = vpop.permute.xlu0 %2474
  %2476 = vrot.lane.b32.xlu0 %v1235, 96
  %v2477 = vpop.permute.xlu0 %2476
  %2478 = vrot.lane.b32.xlu0 %v1236, 96
  %v2479 = vpop.permute.xlu0 %2478
  %2480 = vrot.lane.b32.xlu0 %v1237, 96
  %v2481 = vpop.permute.xlu0 %2480
  %2482 = vrot.lane.b32.xlu0 %v1238, 96
  %v2483 = vpop.permute.xlu0 %2482
  %2484 = vrot.lane.b32.xlu0 %v1239, 96
  %v2485 = vpop.permute.xlu0 %2484
  %2486 = vrot.lane.b32.xlu0 %v1240, 96
  %v2487 = vpop.permute.xlu0 %2486
  %2488 = vrot.lane.b32.xlu0 %v1241, 96
  %v2489 = vpop.permute.xlu0 %2488
  %2490 = vrot.lane.b32.xlu0 %v1242, 96
  %v2491 = vpop.permute.xlu0 %2490
  %2492 = vrot.lane.b32.xlu0 %v1243, 96
  %v2493 = vpop.permute.xlu0 %2492
  %2494 = vrot.lane.b32.xlu0 %v1244, 96
  %v2495 = vpop.permute.xlu0 %2494
  %2496 = vrot.lane.b32.xlu0 %v1245, 96
  %v2497 = vpop.permute.xlu0 %2496
  %2502 = vrot.lane.b32.xlu0 %v1057, 64
  %v2503 = vpop.permute.xlu0 %2502
  %2504 = vrot.lane.b32.xlu0 %v1058, 64
  %v2505 = vpop.permute.xlu0 %2504
  %2506 = vrot.lane.b32.xlu0 %v1059, 64
  %v2507 = vpop.permute.xlu0 %2506
  %2508 = vrot.lane.b32.xlu0 %v1060, 64
  %v2509 = vpop.permute.xlu0 %2508
  %v2511 = vsel %vm263, %v2467, 0
  %v2514 = vsel %vm263, %v2469, 0
  %v2517 = vsel %vm263, %v2471, 0
  %v2520 = vsel %vm263, %v2473, 0
  %v2523 = vsel %vm263, %v2475, 0
  %v2526 = vsel %vm263, %v2477, 0
  %v2529 = vsel %vm263, %v2479, 0
  %v2532 = vsel %vm263, %v2481, 0
  %v2535 = vsel %vm263, %v2483, 0
  %v2538 = vsel %vm263, %v2485, 0
  %v2541 = vsel %vm263, %v2487, 0
  %v2544 = vsel %vm263, %v2489, 0
  %v2547 = vsel %vm263, %v2491, 0
  %v2550 = vsel %vm263, %v2493, 0
  %v2553 = vsel %vm263, %v2495, 0
  %v2556 = vsel %vm263, %v2497, 0
  %v2559 = vsel %vm263, %v2503, 0
  %v2562 = vsel %vm263, %v2505, 0
  %v2565 = vsel %vm263, %v2507, 0
  %v2568 = vsel %vm263, %v2509, 0
  %2570 = vmatprep.subr.bf16.mxu0 0
  %2571 = vmatpush1.bf16.xpose.msra.mxu0 0
  %2572 = vmatprep.subr.bf16.mxu0 0
  %2573 = vmatpush1.bf16.xpose.msra.mxu0 0
  %2574 = vmatprep.subr.bf16.mxu0 0
  %2575 = vmatpush1.bf16.xpose.msra.mxu0 0
  %2576 = vmatprep.subr.bf16.mxu0 0
  %2577 = vmatpush1.bf16.xpose.msra.mxu0 0
  %2578 = vmatprep.subr.bf16.mxu0 0
  %2579 = vmatpush1.bf16.xpose.msra.mxu0 %v2568
  %2580 = vmatprep.subr.bf16.mxu0 0
  %2581 = vmatpush1.bf16.xpose.msra.mxu0 %v2565
  %2582 = vmatprep.subr.bf16.mxu0 0
  %2583 = vmatpush1.bf16.xpose.msra.mxu0 %v2562
  %2584 = vmatprep.subr.bf16.mxu0 0
  %2585 = vmatpush1.bf16.xpose.msra.mxu0 %v2559
  %2586 = vmatprep.subr.bf16.mxu0 0
  %2587 = vmatpush2.bf16.xpose.msra.mxu0 0
  %2588 = vmatprep.subr.bf16.mxu0 0
  %2589 = vmatpush2.bf16.xpose.msra.mxu0 0
  %2590 = vmatprep.subr.bf16.mxu0 0
  %2591 = vmatpush2.bf16.xpose.msra.mxu0 0
  %2592 = vmatprep.subr.bf16.mxu0 0
  %2593 = vmatpush2.bf16.xpose.msra.mxu0 0
  %2594 = vmatprep.subr.bf16.mxu0 0
  %2595 = vmatpush2.bf16.xpose.msra.mxu0 0
  %2596 = vmatprep.subr.bf16.mxu0 0
  %2597 = vmatpush2.bf16.xpose.msra.mxu0 0
  %2598 = vmatprep.subr.bf16.mxu0 0
  %2599 = vmatpush2.bf16.xpose.msra.mxu0 0
  %2600 = vmatprep.subr.bf16.mxu0 0
  %2601 = vmatpush2.bf16.xpose.msra.mxu0 0
  %2602 = vmatprep.mubr.bf16.mxu0 0
  %2603 = vmatmul.mubr.bf16.gmra.mxu0 %v2511
  %v2604 = vpop.f32.mrf.mxu0
  %v2605 = vadd.f32 %v1294, %v2604
  %v2606 = vpop.f32.mrf.mxu0
  %v2607 = vpop.f32.mrf.mxu0
  %v2608 = vadd.f32 %v1295, %v2607
  %v2609 = vpop.f32.mrf.mxu0
  %2610 = vmatprep.mubr.bf16.mxu0 0
  %2611 = vmatmul.mubr.bf16.gmra.mxu0 %v2514
  %v2612 = vpop.f32.mrf.mxu0
  %v2613 = vadd.f32 %v1296, %v2612
  %v2614 = vpop.f32.mrf.mxu0
  %v2615 = vpop.f32.mrf.mxu0
  %v2616 = vadd.f32 %v1297, %v2615
  %v2617 = vpop.f32.mrf.mxu0
  %2618 = vmatprep.mubr.bf16.mxu0 0
  %2619 = vmatmul.mubr.bf16.gmra.mxu0 %v2517
  %v2620 = vpop.f32.mrf.mxu0
  %v2621 = vadd.f32 %v1298, %v2620
  %v2622 = vpop.f32.mrf.mxu0
  %v2623 = vpop.f32.mrf.mxu0
  %v2624 = vadd.f32 %v1299, %v2623
  %v2625 = vpop.f32.mrf.mxu0
  %2626 = vmatprep.mubr.bf16.mxu0 0
  %2627 = vmatmul.mubr.bf16.gmra.mxu0 %v2520
  %v2628 = vpop.f32.mrf.mxu0
  %v2629 = vadd.f32 %v1300, %v2628
  %v2630 = vpop.f32.mrf.mxu0
  %v2631 = vpop.f32.mrf.mxu0
  %v2632 = vadd.f32 %v1301, %v2631
  %v2633 = vpop.f32.mrf.mxu0
  %2634 = vmatprep.mubr.bf16.mxu0 0
  %2635 = vmatmul.mubr.bf16.gmra.mxu0 %v2523
  %v2636 = vpop.f32.mrf.mxu0
  %v2637 = vadd.f32 %v1302, %v2636
  %v2638 = vpop.f32.mrf.mxu0
  %v2639 = vpop.f32.mrf.mxu0
  %v2640 = vadd.f32 %v1303, %v2639
  %v2641 = vpop.f32.mrf.mxu0
  %2642 = vmatprep.mubr.bf16.mxu0 0
  %2643 = vmatmul.mubr.bf16.gmra.mxu0 %v2526
  %v2644 = vpop.f32.mrf.mxu0
  %v2645 = vadd.f32 %v1304, %v2644
  %v2646 = vpop.f32.mrf.mxu0
  %v2647 = vpop.f32.mrf.mxu0
  %v2648 = vadd.f32 %v1305, %v2647
  %v2649 = vpop.f32.mrf.mxu0
  %2650 = vmatprep.mubr.bf16.mxu0 0
  %2651 = vmatmul.mubr.bf16.gmra.mxu0 %v2529
  %v2652 = vpop.f32.mrf.mxu0
  %v2653 = vadd.f32 %v1306, %v2652
  %v2654 = vpop.f32.mrf.mxu0
  %v2655 = vpop.f32.mrf.mxu0
  %v2656 = vadd.f32 %v1307, %v2655
  %v2657 = vpop.f32.mrf.mxu0
  %2658 = vmatprep.mubr.bf16.mxu0 0
  %2659 = vmatmul.mubr.bf16.gmra.mxu0 %v2532
  %v2660 = vpop.f32.mrf.mxu0
  %v2661 = vadd.f32 %v1308, %v2660
  %v2662 = vpop.f32.mrf.mxu0
  %v2663 = vpop.f32.mrf.mxu0
  %v2664 = vadd.f32 %v1309, %v2663
  %v2665 = vpop.f32.mrf.mxu0
  %2666 = vmatprep.mubr.bf16.mxu0 0
  %2667 = vmatmul.mubr.bf16.gmra.mxu0 %v2535
  %v2668 = vpop.f32.mrf.mxu0
  %v2669 = vadd.f32 %v1310, %v2668
  %v2670 = vpop.f32.mrf.mxu0
  %v2671 = vpop.f32.mrf.mxu0
  %v2672 = vadd.f32 %v1311, %v2671
  %v2673 = vpop.f32.mrf.mxu0
  %2674 = vmatprep.mubr.bf16.mxu0 0
  %2675 = vmatmul.mubr.bf16.gmra.mxu0 %v2538
  %v2676 = vpop.f32.mrf.mxu0
  %v2677 = vadd.f32 %v1312, %v2676
  %v2678 = vpop.f32.mrf.mxu0
  %v2679 = vpop.f32.mrf.mxu0
  %v2680 = vadd.f32 %v1313, %v2679
  %v2681 = vpop.f32.mrf.mxu0
  %2682 = vmatprep.mubr.bf16.mxu0 0
  %2683 = vmatmul.mubr.bf16.gmra.mxu0 %v2541
  %v2684 = vpop.f32.mrf.mxu0
  %v2685 = vadd.f32 %v1314, %v2684
  %v2686 = vpop.f32.mrf.mxu0
  %v2687 = vpop.f32.mrf.mxu0
  %v2688 = vadd.f32 %v1315, %v2687
  %v2689 = vpop.f32.mrf.mxu0
  %2690 = vmatprep.mubr.bf16.mxu0 0
  %2691 = vmatmul.mubr.bf16.gmra.mxu0 %v2544
  %v2692 = vpop.f32.mrf.mxu0
  %v2693 = vadd.f32 %v1316, %v2692
  %v2694 = vpop.f32.mrf.mxu0
  %v2695 = vpop.f32.mrf.mxu0
  %v2696 = vadd.f32 %v1317, %v2695
  %v2697 = vpop.f32.mrf.mxu0
  %2698 = vmatprep.mubr.bf16.mxu0 0
  %2699 = vmatmul.mubr.bf16.gmra.mxu0 %v2547
  %v2700 = vpop.f32.mrf.mxu0
  %v2701 = vadd.f32 %v1318, %v2700
  %v2702 = vpop.f32.mrf.mxu0
  %v2703 = vpop.f32.mrf.mxu0
  %v2704 = vadd.f32 %v1319, %v2703
  %v2705 = vpop.f32.mrf.mxu0
  %2706 = vmatprep.mubr.bf16.mxu0 0
  %2707 = vmatmul.mubr.bf16.gmra.mxu0 %v2550
  %v2708 = vpop.f32.mrf.mxu0
  %v2709 = vadd.f32 %v1320, %v2708
  %v2710 = vpop.f32.mrf.mxu0
  %v2711 = vpop.f32.mrf.mxu0
  %v2712 = vadd.f32 %v1321, %v2711
  %v2713 = vpop.f32.mrf.mxu0
  %2714 = vmatprep.mubr.bf16.mxu0 0
  %2715 = vmatmul.mubr.bf16.gmra.mxu0 %v2553
  %v2716 = vpop.f32.mrf.mxu0
  %v2717 = vadd.f32 %v1322, %v2716
  %v2718 = vpop.f32.mrf.mxu0
  %v2719 = vpop.f32.mrf.mxu0
  %v2720 = vadd.f32 %v1323, %v2719
  %v2721 = vpop.f32.mrf.mxu0
  %2722 = vmatprep.mubr.bf16.mxu0 0
  %2723 = vmatmul.mubr.bf16.gmra.mxu0 %v2556
  %v2724 = vpop.f32.mrf.mxu0
  %v2725 = vadd.f32 %v1324, %v2724
  %v2726 = vpop.f32.mrf.mxu0
  %v2727 = vpop.f32.mrf.mxu0
  %v2728 = vadd.f32 %v1325, %v2727
  %v2729 = vpop.f32.mrf.mxu0
  %2730 = vdwg.mxu0
  %2747 = vrot.lane.b32.xlu0 %v1246, 96
  %v2748 = vpop.permute.xlu0 %2747
  %2749 = vrot.lane.b32.xlu0 %v1247, 96
  %v2750 = vpop.permute.xlu0 %2749
  %2751 = vrot.lane.b32.xlu0 %v1248, 96
  %v2752 = vpop.permute.xlu0 %2751
  %2753 = vrot.lane.b32.xlu0 %v1249, 96
  %v2754 = vpop.permute.xlu0 %2753
  %2755 = vrot.lane.b32.xlu0 %v1250, 96
  %v2756 = vpop.permute.xlu0 %2755
  %2757 = vrot.lane.b32.xlu0 %v1251, 96
  %v2758 = vpop.permute.xlu0 %2757
  %2759 = vrot.lane.b32.xlu0 %v1252, 96
  %v2760 = vpop.permute.xlu0 %2759
  %2761 = vrot.lane.b32.xlu0 %v1253, 96
  %v2762 = vpop.permute.xlu0 %2761
  %2763 = vrot.lane.b32.xlu0 %v1254, 96
  %v2764 = vpop.permute.xlu0 %2763
  %2765 = vrot.lane.b32.xlu0 %v1255, 96
  %v2766 = vpop.permute.xlu0 %2765
  %2767 = vrot.lane.b32.xlu0 %v1256, 96
  %v2768 = vpop.permute.xlu0 %2767
  %2769 = vrot.lane.b32.xlu0 %v1257, 96
  %v2770 = vpop.permute.xlu0 %2769
  %2771 = vrot.lane.b32.xlu0 %v1258, 96
  %v2772 = vpop.permute.xlu0 %2771
  %2773 = vrot.lane.b32.xlu0 %v1259, 96
  %v2774 = vpop.permute.xlu0 %2773
  %2775 = vrot.lane.b32.xlu0 %v1260, 96
  %v2776 = vpop.permute.xlu0 %2775
  %2777 = vrot.lane.b32.xlu0 %v1261, 96
  %v2778 = vpop.permute.xlu0 %2777
  %2783 = vrot.lane.b32.xlu0 %v1061, 64
  %v2784 = vpop.permute.xlu0 %2783
  %2785 = vrot.lane.b32.xlu0 %v1062, 64
  %v2786 = vpop.permute.xlu0 %2785
  %2787 = vrot.lane.b32.xlu0 %v1063, 64
  %v2788 = vpop.permute.xlu0 %2787
  %2789 = vrot.lane.b32.xlu0 %v1064, 64
  %v2790 = vpop.permute.xlu0 %2789
  %v2792 = vsel %vm263, %v2748, 0
  %v2795 = vsel %vm263, %v2750, 0
  %v2798 = vsel %vm263, %v2752, 0
  %v2801 = vsel %vm263, %v2754, 0
  %v2804 = vsel %vm263, %v2756, 0
  %v2807 = vsel %vm263, %v2758, 0
  %v2810 = vsel %vm263, %v2760, 0
  %v2813 = vsel %vm263, %v2762, 0
  %v2816 = vsel %vm263, %v2764, 0
  %v2819 = vsel %vm263, %v2766, 0
  %v2822 = vsel %vm263, %v2768, 0
  %v2825 = vsel %vm263, %v2770, 0
  %v2828 = vsel %vm263, %v2772, 0
  %v2831 = vsel %vm263, %v2774, 0
  %v2834 = vsel %vm263, %v2776, 0
  %v2837 = vsel %vm263, %v2778, 0
  %v2840 = vsel %vm263, %v2784, 0
  %v2843 = vsel %vm263, %v2786, 0
  %v2846 = vsel %vm263, %v2788, 0
  %v2849 = vsel %vm263, %v2790, 0
  %2851 = vmatprep.subr.bf16.mxu0 0
  %2852 = vmatpush1.bf16.xpose.msra.mxu0 0
  %2853 = vmatprep.subr.bf16.mxu0 0
  %2854 = vmatpush1.bf16.xpose.msra.mxu0 0
  %2855 = vmatprep.subr.bf16.mxu0 0
  %2856 = vmatpush1.bf16.xpose.msra.mxu0 0
  %2857 = vmatprep.subr.bf16.mxu0 0
  %2858 = vmatpush1.bf16.xpose.msra.mxu0 0
  %2859 = vmatprep.subr.bf16.mxu0 0
  %2860 = vmatpush1.bf16.xpose.msra.mxu0 %v2849
  %2861 = vmatprep.subr.bf16.mxu0 0
  %2862 = vmatpush1.bf16.xpose.msra.mxu0 %v2846
  %2863 = vmatprep.subr.bf16.mxu0 0
  %2864 = vmatpush1.bf16.xpose.msra.mxu0 %v2843
  %2865 = vmatprep.subr.bf16.mxu0 0
  %2866 = vmatpush1.bf16.xpose.msra.mxu0 %v2840
  %2867 = vmatprep.subr.bf16.mxu0 0
  %2868 = vmatpush2.bf16.xpose.msra.mxu0 0
  %2869 = vmatprep.subr.bf16.mxu0 0
  %2870 = vmatpush2.bf16.xpose.msra.mxu0 0
  %2871 = vmatprep.subr.bf16.mxu0 0
  %2872 = vmatpush2.bf16.xpose.msra.mxu0 0
  %2873 = vmatprep.subr.bf16.mxu0 0
  %2874 = vmatpush2.bf16.xpose.msra.mxu0 0
  %2875 = vmatprep.subr.bf16.mxu0 0
  %2876 = vmatpush2.bf16.xpose.msra.mxu0 0
  %2877 = vmatprep.subr.bf16.mxu0 0
  %2878 = vmatpush2.bf16.xpose.msra.mxu0 0
  %2879 = vmatprep.subr.bf16.mxu0 0
  %2880 = vmatpush2.bf16.xpose.msra.mxu0 0
  %2881 = vmatprep.subr.bf16.mxu0 0
  %2882 = vmatpush2.bf16.xpose.msra.mxu0 0
  %2883 = vmatprep.mubr.bf16.mxu0 0
  %2884 = vmatmul.mubr.bf16.gmra.mxu0 %v2792
  %v2885 = vpop.f32.mrf.mxu0
  %v2886 = vadd.f32 %v1294, %v2885
  %v2887 = vpop.f32.mrf.mxu0
  %v2888 = vpop.f32.mrf.mxu0
  %v2889 = vadd.f32 %v1295, %v2888
  %v2890 = vpop.f32.mrf.mxu0
  %2891 = vmatprep.mubr.bf16.mxu0 0
  %2892 = vmatmul.mubr.bf16.gmra.mxu0 %v2795
  %v2893 = vpop.f32.mrf.mxu0
  %v2894 = vadd.f32 %v1296, %v2893
  %v2895 = vpop.f32.mrf.mxu0
  %v2896 = vpop.f32.mrf.mxu0
  %v2897 = vadd.f32 %v1297, %v2896
  %v2898 = vpop.f32.mrf.mxu0
  %2899 = vmatprep.mubr.bf16.mxu0 0
  %2900 = vmatmul.mubr.bf16.gmra.mxu0 %v2798
  %v2901 = vpop.f32.mrf.mxu0
  %v2902 = vadd.f32 %v1298, %v2901
  %v2903 = vpop.f32.mrf.mxu0
  %v2904 = vpop.f32.mrf.mxu0
  %v2905 = vadd.f32 %v1299, %v2904
  %v2906 = vpop.f32.mrf.mxu0
  %2907 = vmatprep.mubr.bf16.mxu0 0
  %2908 = vmatmul.mubr.bf16.gmra.mxu0 %v2801
  %v2909 = vpop.f32.mrf.mxu0
  %v2910 = vadd.f32 %v1300, %v2909
  %v2911 = vpop.f32.mrf.mxu0
  %v2912 = vpop.f32.mrf.mxu0
  %v2913 = vadd.f32 %v1301, %v2912
  %v2914 = vpop.f32.mrf.mxu0
  %2915 = vmatprep.mubr.bf16.mxu0 0
  %2916 = vmatmul.mubr.bf16.gmra.mxu0 %v2804
  %v2917 = vpop.f32.mrf.mxu0
  %v2918 = vadd.f32 %v1302, %v2917
  %v2919 = vpop.f32.mrf.mxu0
  %v2920 = vpop.f32.mrf.mxu0
  %v2921 = vadd.f32 %v1303, %v2920
  %v2922 = vpop.f32.mrf.mxu0
  %2923 = vmatprep.mubr.bf16.mxu0 0
  %2924 = vmatmul.mubr.bf16.gmra.mxu0 %v2807
  %v2925 = vpop.f32.mrf.mxu0
  %v2926 = vadd.f32 %v1304, %v2925
  %v2927 = vpop.f32.mrf.mxu0
  %v2928 = vpop.f32.mrf.mxu0
  %v2929 = vadd.f32 %v1305, %v2928
  %v2930 = vpop.f32.mrf.mxu0
  %2931 = vmatprep.mubr.bf16.mxu0 0
  %2932 = vmatmul.mubr.bf16.gmra.mxu0 %v2810
  %v2933 = vpop.f32.mrf.mxu0
  %v2934 = vadd.f32 %v1306, %v2933
  %v2935 = vpop.f32.mrf.mxu0
  %v2936 = vpop.f32.mrf.mxu0
  %v2937 = vadd.f32 %v1307, %v2936
  %v2938 = vpop.f32.mrf.mxu0
  %2939 = vmatprep.mubr.bf16.mxu0 0
  %2940 = vmatmul.mubr.bf16.gmra.mxu0 %v2813
  %v2941 = vpop.f32.mrf.mxu0
  %v2942 = vadd.f32 %v1308, %v2941
  %v2943 = vpop.f32.mrf.mxu0
  %v2944 = vpop.f32.mrf.mxu0
  %v2945 = vadd.f32 %v1309, %v2944
  %v2946 = vpop.f32.mrf.mxu0
  %2947 = vmatprep.mubr.bf16.mxu0 0
  %2948 = vmatmul.mubr.bf16.gmra.mxu0 %v2816
  %v2949 = vpop.f32.mrf.mxu0
  %v2950 = vadd.f32 %v1310, %v2949
  %v2951 = vpop.f32.mrf.mxu0
  %v2952 = vpop.f32.mrf.mxu0
  %v2953 = vadd.f32 %v1311, %v2952
  %v2954 = vpop.f32.mrf.mxu0
  %2955 = vmatprep.mubr.bf16.mxu0 0
  %2956 = vmatmul.mubr.bf16.gmra.mxu0 %v2819
  %v2957 = vpop.f32.mrf.mxu0
  %v2958 = vadd.f32 %v1312, %v2957
  %v2959 = vpop.f32.mrf.mxu0
  %v2960 = vpop.f32.mrf.mxu0
  %v2961 = vadd.f32 %v1313, %v2960
  %v2962 = vpop.f32.mrf.mxu0
  %2963 = vmatprep.mubr.bf16.mxu0 0
  %2964 = vmatmul.mubr.bf16.gmra.mxu0 %v2822
  %v2965 = vpop.f32.mrf.mxu0
  %v2966 = vadd.f32 %v1314, %v2965
  %v2967 = vpop.f32.mrf.mxu0
  %v2968 = vpop.f32.mrf.mxu0
  %v2969 = vadd.f32 %v1315, %v2968
  %v2970 = vpop.f32.mrf.mxu0
  %2971 = vmatprep.mubr.bf16.mxu0 0
  %2972 = vmatmul.mubr.bf16.gmra.mxu0 %v2825
  %v2973 = vpop.f32.mrf.mxu0
  %v2974 = vadd.f32 %v1316, %v2973
  %v2975 = vpop.f32.mrf.mxu0
  %v2976 = vpop.f32.mrf.mxu0
  %v2977 = vadd.f32 %v1317, %v2976
  %v2978 = vpop.f32.mrf.mxu0
  %2979 = vmatprep.mubr.bf16.mxu0 0
  %2980 = vmatmul.mubr.bf16.gmra.mxu0 %v2828
  %v2981 = vpop.f32.mrf.mxu0
  %v2982 = vadd.f32 %v1318, %v2981
  %v2983 = vpop.f32.mrf.mxu0
  %v2984 = vpop.f32.mrf.mxu0
  %v2985 = vadd.f32 %v1319, %v2984
  %v2986 = vpop.f32.mrf.mxu0
  %2987 = vmatprep.mubr.bf16.mxu0 0
  %2988 = vmatmul.mubr.bf16.gmra.mxu0 %v2831
  %v2989 = vpop.f32.mrf.mxu0
  %v2990 = vadd.f32 %v1320, %v2989
  %v2991 = vpop.f32.mrf.mxu0
  %v2992 = vpop.f32.mrf.mxu0
  %v2993 = vadd.f32 %v1321, %v2992
  %v2994 = vpop.f32.mrf.mxu0
  %2995 = vmatprep.mubr.bf16.mxu0 0
  %2996 = vmatmul.mubr.bf16.gmra.mxu0 %v2834
  %v2997 = vpop.f32.mrf.mxu0
  %v2998 = vadd.f32 %v1322, %v2997
  %v2999 = vpop.f32.mrf.mxu0
  %v3000 = vpop.f32.mrf.mxu0
  %v3001 = vadd.f32 %v1323, %v3000
  %v3002 = vpop.f32.mrf.mxu0
  %3003 = vmatprep.mubr.bf16.mxu0 0
  %3004 = vmatmul.mubr.bf16.gmra.mxu0 %v2837
  %v3005 = vpop.f32.mrf.mxu0
  %v3006 = vadd.f32 %v1324, %v3005
  %v3007 = vpop.f32.mrf.mxu0
  %v3008 = vpop.f32.mrf.mxu0
  %v3009 = vadd.f32 %v1325, %v3008
  %v3010 = vpop.f32.mrf.mxu0
  %3011 = vdwg.mxu0
  %3028 = vrot.lane.b32.xlu0 %v1262, 96
  %v3029 = vpop.permute.xlu0 %3028
  %3030 = vrot.lane.b32.xlu0 %v1263, 96
  %v3031 = vpop.permute.xlu0 %3030
  %3032 = vrot.lane.b32.xlu0 %v1264, 96
  %v3033 = vpop.permute.xlu0 %3032
  %3034 = vrot.lane.b32.xlu0 %v1265, 96
  %v3035 = vpop.permute.xlu0 %3034
  %3036 = vrot.lane.b32.xlu0 %v1266, 96
  %v3037 = vpop.permute.xlu0 %3036
  %3038 = vrot.lane.b32.xlu0 %v1267, 96
  %v3039 = vpop.permute.xlu0 %3038
  %3040 = vrot.lane.b32.xlu0 %v1268, 96
  %v3041 = vpop.permute.xlu0 %3040
  %3042 = vrot.lane.b32.xlu0 %v1269, 96
  %v3043 = vpop.permute.xlu0 %3042
  %3044 = vrot.lane.b32.xlu0 %v1270, 96
  %v3045 = vpop.permute.xlu0 %3044
  %3046 = vrot.lane.b32.xlu0 %v1271, 96
  %v3047 = vpop.permute.xlu0 %3046
  %3048 = vrot.lane.b32.xlu0 %v1272, 96
  %v3049 = vpop.permute.xlu0 %3048
  %3050 = vrot.lane.b32.xlu0 %v1273, 96
  %v3051 = vpop.permute.xlu0 %3050
  %3052 = vrot.lane.b32.xlu0 %v1274, 96
  %v3053 = vpop.permute.xlu0 %3052
  %3054 = vrot.lane.b32.xlu0 %v1275, 96
  %v3055 = vpop.permute.xlu0 %3054
  %3056 = vrot.lane.b32.xlu0 %v1276, 96
  %v3057 = vpop.permute.xlu0 %3056
  %3058 = vrot.lane.b32.xlu0 %v1277, 96
  %v3059 = vpop.permute.xlu0 %3058
  %3064 = vrot.lane.b32.xlu0 %v1065, 64
  %v3065 = vpop.permute.xlu0 %3064
  %3066 = vrot.lane.b32.xlu0 %v1066, 64
  %v3067 = vpop.permute.xlu0 %3066
  %3068 = vrot.lane.b32.xlu0 %v1067, 64
  %v3069 = vpop.permute.xlu0 %3068
  %3070 = vrot.lane.b32.xlu0 %v1068, 64
  %v3071 = vpop.permute.xlu0 %3070
  %v3073 = vsel %vm263, %v3029, 0
  %v3076 = vsel %vm263, %v3031, 0
  %v3079 = vsel %vm263, %v3033, 0
  %v3082 = vsel %vm263, %v3035, 0
  %v3085 = vsel %vm263, %v3037, 0
  %v3088 = vsel %vm263, %v3039, 0
  %v3091 = vsel %vm263, %v3041, 0
  %v3094 = vsel %vm263, %v3043, 0
  %v3097 = vsel %vm263, %v3045, 0
  %v3100 = vsel %vm263, %v3047, 0
  %v3103 = vsel %vm263, %v3049, 0
  %v3106 = vsel %vm263, %v3051, 0
  %v3109 = vsel %vm263, %v3053, 0
  %v3112 = vsel %vm263, %v3055, 0
  %v3115 = vsel %vm263, %v3057, 0
  %v3118 = vsel %vm263, %v3059, 0
  %v3121 = vsel %vm263, %v3065, 0
  %v3124 = vsel %vm263, %v3067, 0
  %v3127 = vsel %vm263, %v3069, 0
  %v3130 = vsel %vm263, %v3071, 0
  %3132 = vmatprep.subr.bf16.mxu0 0
  %3133 = vmatpush1.bf16.xpose.msra.mxu0 0
  %3134 = vmatprep.subr.bf16.mxu0 0
  %3135 = vmatpush1.bf16.xpose.msra.mxu0 0
  %3136 = vmatprep.subr.bf16.mxu0 0
  %3137 = vmatpush1.bf16.xpose.msra.mxu0 0
  %3138 = vmatprep.subr.bf16.mxu0 0
  %3139 = vmatpush1.bf16.xpose.msra.mxu0 0
  %3140 = vmatprep.subr.bf16.mxu0 0
  %3141 = vmatpush1.bf16.xpose.msra.mxu0 %v3130
  %3142 = vmatprep.subr.bf16.mxu0 0
  %3143 = vmatpush1.bf16.xpose.msra.mxu0 %v3127
  %3144 = vmatprep.subr.bf16.mxu0 0
  %3145 = vmatpush1.bf16.xpose.msra.mxu0 %v3124
  %3146 = vmatprep.subr.bf16.mxu0 0
  %3147 = vmatpush1.bf16.xpose.msra.mxu0 %v3121
  %3148 = vmatprep.subr.bf16.mxu0 0
  %3149 = vmatpush2.bf16.xpose.msra.mxu0 0
  %3150 = vmatprep.subr.bf16.mxu0 0
  %3151 = vmatpush2.bf16.xpose.msra.mxu0 0
  %3152 = vmatprep.subr.bf16.mxu0 0
  %3153 = vmatpush2.bf16.xpose.msra.mxu0 0
  %3154 = vmatprep.subr.bf16.mxu0 0
  %3155 = vmatpush2.bf16.xpose.msra.mxu0 0
  %3156 = vmatprep.subr.bf16.mxu0 0
  %3157 = vmatpush2.bf16.xpose.msra.mxu0 0
  %3158 = vmatprep.subr.bf16.mxu0 0
  %3159 = vmatpush2.bf16.xpose.msra.mxu0 0
  %3160 = vmatprep.subr.bf16.mxu0 0
  %3161 = vmatpush2.bf16.xpose.msra.mxu0 0
  %3162 = vmatprep.subr.bf16.mxu0 0
  %3163 = vmatpush2.bf16.xpose.msra.mxu0 0
  %3164 = vmatprep.mubr.bf16.mxu0 0
  %3165 = vmatmul.mubr.bf16.gmra.mxu0 %v3073
  %v3166 = vpop.f32.mrf.mxu0
  %v3167 = vadd.f32 %v1294, %v3166
  %v3168 = vpop.f32.mrf.mxu0
  %v3169 = vpop.f32.mrf.mxu0
  %v3170 = vadd.f32 %v1295, %v3169
  %v3171 = vpop.f32.mrf.mxu0
  %3172 = vmatprep.mubr.bf16.mxu0 0
  %3173 = vmatmul.mubr.bf16.gmra.mxu0 %v3076
  %v3174 = vpop.f32.mrf.mxu0
  %v3175 = vadd.f32 %v1296, %v3174
  %v3176 = vpop.f32.mrf.mxu0
  %v3177 = vpop.f32.mrf.mxu0
  %v3178 = vadd.f32 %v1297, %v3177
  %v3179 = vpop.f32.mrf.mxu0
  %3180 = vmatprep.mubr.bf16.mxu0 0
  %3181 = vmatmul.mubr.bf16.gmra.mxu0 %v3079
  %v3182 = vpop.f32.mrf.mxu0
  %v3183 = vadd.f32 %v1298, %v3182
  %v3184 = vpop.f32.mrf.mxu0
  %v3185 = vpop.f32.mrf.mxu0
  %v3186 = vadd.f32 %v1299, %v3185
  %v3187 = vpop.f32.mrf.mxu0
  %3188 = vmatprep.mubr.bf16.mxu0 0
  %3189 = vmatmul.mubr.bf16.gmra.mxu0 %v3082
  %v3190 = vpop.f32.mrf.mxu0
  %v3191 = vadd.f32 %v1300, %v3190
  %v3192 = vpop.f32.mrf.mxu0
  %v3193 = vpop.f32.mrf.mxu0
  %v3194 = vadd.f32 %v1301, %v3193
  %v3195 = vpop.f32.mrf.mxu0
  %3196 = vmatprep.mubr.bf16.mxu0 0
  %3197 = vmatmul.mubr.bf16.gmra.mxu0 %v3085
  %v3198 = vpop.f32.mrf.mxu0
  %v3199 = vadd.f32 %v1302, %v3198
  %v3200 = vpop.f32.mrf.mxu0
  %v3201 = vpop.f32.mrf.mxu0
  %v3202 = vadd.f32 %v1303, %v3201
  %v3203 = vpop.f32.mrf.mxu0
  %3204 = vmatprep.mubr.bf16.mxu0 0
  %3205 = vmatmul.mubr.bf16.gmra.mxu0 %v3088
  %v3206 = vpop.f32.mrf.mxu0
  %v3207 = vadd.f32 %v1304, %v3206
  %v3208 = vpop.f32.mrf.mxu0
  %v3209 = vpop.f32.mrf.mxu0
  %v3210 = vadd.f32 %v1305, %v3209
  %v3211 = vpop.f32.mrf.mxu0
  %3212 = vmatprep.mubr.bf16.mxu0 0
  %3213 = vmatmul.mubr.bf16.gmra.mxu0 %v3091
  %v3214 = vpop.f32.mrf.mxu0
  %v3215 = vadd.f32 %v1306, %v3214
  %v3216 = vpop.f32.mrf.mxu0
  %v3217 = vpop.f32.mrf.mxu0
  %v3218 = vadd.f32 %v1307, %v3217
  %v3219 = vpop.f32.mrf.mxu0
  %3220 = vmatprep.mubr.bf16.mxu0 0
  %3221 = vmatmul.mubr.bf16.gmra.mxu0 %v3094
  %v3222 = vpop.f32.mrf.mxu0
  %v3223 = vadd.f32 %v1308, %v3222
  %v3224 = vpop.f32.mrf.mxu0
  %v3225 = vpop.f32.mrf.mxu0
  %v3226 = vadd.f32 %v1309, %v3225
  %v3227 = vpop.f32.mrf.mxu0
  %3228 = vmatprep.mubr.bf16.mxu0 0
  %3229 = vmatmul.mubr.bf16.gmra.mxu0 %v3097
  %v3230 = vpop.f32.mrf.mxu0
  %v3231 = vadd.f32 %v1310, %v3230
  %v3232 = vpop.f32.mrf.mxu0
  %v3233 = vpop.f32.mrf.mxu0
  %v3234 = vadd.f32 %v1311, %v3233
  %v3235 = vpop.f32.mrf.mxu0
  %3236 = vmatprep.mubr.bf16.mxu0 0
  %3237 = vmatmul.mubr.bf16.gmra.mxu0 %v3100
  %v3238 = vpop.f32.mrf.mxu0
  %v3239 = vadd.f32 %v1312, %v3238
  %v3240 = vpop.f32.mrf.mxu0
  %v3241 = vpop.f32.mrf.mxu0
  %v3242 = vadd.f32 %v1313, %v3241
  %v3243 = vpop.f32.mrf.mxu0
  %3244 = vmatprep.mubr.bf16.mxu0 0
  %3245 = vmatmul.mubr.bf16.gmra.mxu0 %v3103
  %v3246 = vpop.f32.mrf.mxu0
  %v3247 = vadd.f32 %v1314, %v3246
  %v3248 = vpop.f32.mrf.mxu0
  %v3249 = vpop.f32.mrf.mxu0
  %v3250 = vadd.f32 %v1315, %v3249
  %v3251 = vpop.f32.mrf.mxu0
  %3252 = vmatprep.mubr.bf16.mxu0 0
  %3253 = vmatmul.mubr.bf16.gmra.mxu0 %v3106
  %v3254 = vpop.f32.mrf.mxu0
  %v3255 = vadd.f32 %v1316, %v3254
  %v3256 = vpop.f32.mrf.mxu0
  %v3257 = vpop.f32.mrf.mxu0
  %v3258 = vadd.f32 %v1317, %v3257
  %v3259 = vpop.f32.mrf.mxu0
  %3260 = vmatprep.mubr.bf16.mxu0 0
  %3261 = vmatmul.mubr.bf16.gmra.mxu0 %v3109
  %v3262 = vpop.f32.mrf.mxu0
  %v3263 = vadd.f32 %v1318, %v3262
  %v3264 = vpop.f32.mrf.mxu0
  %v3265 = vpop.f32.mrf.mxu0
  %v3266 = vadd.f32 %v1319, %v3265
  %v3267 = vpop.f32.mrf.mxu0
  %3268 = vmatprep.mubr.bf16.mxu0 0
  %3269 = vmatmul.mubr.bf16.gmra.mxu0 %v3112
  %v3270 = vpop.f32.mrf.mxu0
  %v3271 = vadd.f32 %v1320, %v3270
  %v3272 = vpop.f32.mrf.mxu0
  %v3273 = vpop.f32.mrf.mxu0
  %v3274 = vadd.f32 %v1321, %v3273
  %v3275 = vpop.f32.mrf.mxu0
  %3276 = vmatprep.mubr.bf16.mxu0 0
  %3277 = vmatmul.mubr.bf16.gmra.mxu0 %v3115
  %v3278 = vpop.f32.mrf.mxu0
  %v3279 = vadd.f32 %v1322, %v3278
  %v3280 = vpop.f32.mrf.mxu0
  %v3281 = vpop.f32.mrf.mxu0
  %v3282 = vadd.f32 %v1323, %v3281
  %v3283 = vpop.f32.mrf.mxu0
  %3284 = vmatprep.mubr.bf16.mxu0 0
  %3285 = vmatmul.mubr.bf16.gmra.mxu0 %v3118
  %v3286 = vpop.f32.mrf.mxu0
  %v3287 = vadd.f32 %v1324, %v3286
  %v3288 = vpop.f32.mrf.mxu0
  %v3289 = vpop.f32.mrf.mxu0
  %v3290 = vadd.f32 %v1325, %v3289
  %v3291 = vpop.f32.mrf.mxu0
  %3292 = vdwg.mxu0
  %3309 = vrot.lane.b32.xlu0 %v1278, 96
  %v3310 = vpop.permute.xlu0 %3309
  %3311 = vrot.lane.b32.xlu0 %v1279, 96
  %v3312 = vpop.permute.xlu0 %3311
  %3313 = vrot.lane.b32.xlu0 %v1280, 96
  %v3314 = vpop.permute.xlu0 %3313
  %3315 = vrot.lane.b32.xlu0 %v1281, 96
  %v3316 = vpop.permute.xlu0 %3315
  %3317 = vrot.lane.b32.xlu0 %v1282, 96
  %v3318 = vpop.permute.xlu0 %3317
  %3319 = vrot.lane.b32.xlu0 %v1283, 96
  %v3320 = vpop.permute.xlu0 %3319
  %3321 = vrot.lane.b32.xlu0 %v1284, 96
  %v3322 = vpop.permute.xlu0 %3321
  %3323 = vrot.lane.b32.xlu0 %v1285, 96
  %v3324 = vpop.permute.xlu0 %3323
  %3325 = vrot.lane.b32.xlu0 %v1286, 96
  %v3326 = vpop.permute.xlu0 %3325
  %3327 = vrot.lane.b32.xlu0 %v1287, 96
  %v3328 = vpop.permute.xlu0 %3327
  %3329 = vrot.lane.b32.xlu0 %v1288, 96
  %v3330 = vpop.permute.xlu0 %3329
  %3331 = vrot.lane.b32.xlu0 %v1289, 96
  %v3332 = vpop.permute.xlu0 %3331
  %3333 = vrot.lane.b32.xlu0 %v1290, 96
  %v3334 = vpop.permute.xlu0 %3333
  %3335 = vrot.lane.b32.xlu0 %v1291, 96
  %v3336 = vpop.permute.xlu0 %3335
  %3337 = vrot.lane.b32.xlu0 %v1292, 96
  %v3338 = vpop.permute.xlu0 %3337
  %3339 = vrot.lane.b32.xlu0 %v1293, 96
  %v3340 = vpop.permute.xlu0 %3339
  %3345 = vrot.lane.b32.xlu0 %v1069, 64
  %v3346 = vpop.permute.xlu0 %3345
  %3347 = vrot.lane.b32.xlu0 %v1070, 64
  %v3348 = vpop.permute.xlu0 %3347
  %3349 = vrot.lane.b32.xlu0 %v1071, 64
  %v3350 = vpop.permute.xlu0 %3349
  %3351 = vrot.lane.b32.xlu0 %v1072, 64
  %v3352 = vpop.permute.xlu0 %3351
  %v3354 = vsel %vm263, %v3310, 0
  %v3357 = vsel %vm263, %v3312, 0
  %v3360 = vsel %vm263, %v3314, 0
  %v3363 = vsel %vm263, %v3316, 0
  %v3366 = vsel %vm263, %v3318, 0
  %v3369 = vsel %vm263, %v3320, 0
  %v3372 = vsel %vm263, %v3322, 0
  %v3375 = vsel %vm263, %v3324, 0
  %v3378 = vsel %vm263, %v3326, 0
  %v3381 = vsel %vm263, %v3328, 0
  %v3384 = vsel %vm263, %v3330, 0
  %v3387 = vsel %vm263, %v3332, 0
  %v3390 = vsel %vm263, %v3334, 0
  %v3393 = vsel %vm263, %v3336, 0
  %v3396 = vsel %vm263, %v3338, 0
  %v3399 = vsel %vm263, %v3340, 0
  %v3402 = vsel %vm263, %v3346, 0
  %v3405 = vsel %vm263, %v3348, 0
  %v3408 = vsel %vm263, %v3350, 0
  %v3411 = vsel %vm263, %v3352, 0
  %3413 = vmatprep.subr.bf16.mxu0 0
  %3414 = vmatpush1.bf16.xpose.msra.mxu0 0
  %3415 = vmatprep.subr.bf16.mxu0 0
  %3416 = vmatpush1.bf16.xpose.msra.mxu0 0
  %3417 = vmatprep.subr.bf16.mxu0 0
  %3418 = vmatpush1.bf16.xpose.msra.mxu0 0
  %3419 = vmatprep.subr.bf16.mxu0 0
  %3420 = vmatpush1.bf16.xpose.msra.mxu0 0
  %3421 = vmatprep.subr.bf16.mxu0 0
  %3422 = vmatpush1.bf16.xpose.msra.mxu0 %v3411
  %3423 = vmatprep.subr.bf16.mxu0 0
  %3424 = vmatpush1.bf16.xpose.msra.mxu0 %v3408
  %3425 = vmatprep.subr.bf16.mxu0 0
  %3426 = vmatpush1.bf16.xpose.msra.mxu0 %v3405
  %3427 = vmatprep.subr.bf16.mxu0 0
  %3428 = vmatpush1.bf16.xpose.msra.mxu0 %v3402
  %3429 = vmatprep.subr.bf16.mxu0 0
  %3430 = vmatpush2.bf16.xpose.msra.mxu0 0
  %3431 = vmatprep.subr.bf16.mxu0 0
  %3432 = vmatpush2.bf16.xpose.msra.mxu0 0
  %3433 = vmatprep.subr.bf16.mxu0 0
  %3434 = vmatpush2.bf16.xpose.msra.mxu0 0
  %3435 = vmatprep.subr.bf16.mxu0 0
  %3436 = vmatpush2.bf16.xpose.msra.mxu0 0
  %3437 = vmatprep.subr.bf16.mxu0 0
  %3438 = vmatpush2.bf16.xpose.msra.mxu0 0
  %3439 = vmatprep.subr.bf16.mxu0 0
  %3440 = vmatpush2.bf16.xpose.msra.mxu0 0
  %3441 = vmatprep.subr.bf16.mxu0 0
  %3442 = vmatpush2.bf16.xpose.msra.mxu0 0
  %3443 = vmatprep.subr.bf16.mxu0 0
  %3444 = vmatpush2.bf16.xpose.msra.mxu0 0
  %3445 = vmatprep.mubr.bf16.mxu0 0
  %3446 = vmatmul.mubr.bf16.gmra.mxu0 %v3354
  %v3447 = vpop.f32.mrf.mxu0
  %v3448 = vadd.f32 %v1294, %v3447
  %v3449 = vpop.f32.mrf.mxu0
  %v3450 = vpop.f32.mrf.mxu0
  %v3451 = vadd.f32 %v1295, %v3450
  %v3452 = vpop.f32.mrf.mxu0
  %3453 = vmatprep.mubr.bf16.mxu0 0
  %3454 = vmatmul.mubr.bf16.gmra.mxu0 %v3357
  %v3455 = vpop.f32.mrf.mxu0
  %v3456 = vadd.f32 %v1296, %v3455
  %v3457 = vpop.f32.mrf.mxu0
  %v3458 = vpop.f32.mrf.mxu0
  %v3459 = vadd.f32 %v1297, %v3458
  %v3460 = vpop.f32.mrf.mxu0
  %3461 = vmatprep.mubr.bf16.mxu0 0
  %3462 = vmatmul.mubr.bf16.gmra.mxu0 %v3360
  %v3463 = vpop.f32.mrf.mxu0
  %v3464 = vadd.f32 %v1298, %v3463
  %v3465 = vpop.f32.mrf.mxu0
  %v3466 = vpop.f32.mrf.mxu0
  %v3467 = vadd.f32 %v1299, %v3466
  %v3468 = vpop.f32.mrf.mxu0
  %3469 = vmatprep.mubr.bf16.mxu0 0
  %3470 = vmatmul.mubr.bf16.gmra.mxu0 %v3363
  %v3471 = vpop.f32.mrf.mxu0
  %v3472 = vadd.f32 %v1300, %v3471
  %v3473 = vpop.f32.mrf.mxu0
  %v3474 = vpop.f32.mrf.mxu0
  %v3475 = vadd.f32 %v1301, %v3474
  %v3476 = vpop.f32.mrf.mxu0
  %3477 = vmatprep.mubr.bf16.mxu0 0
  %3478 = vmatmul.mubr.bf16.gmra.mxu0 %v3366
  %v3479 = vpop.f32.mrf.mxu0
  %v3480 = vadd.f32 %v1302, %v3479
  %v3481 = vpop.f32.mrf.mxu0
  %v3482 = vpop.f32.mrf.mxu0
  %v3483 = vadd.f32 %v1303, %v3482
  %v3484 = vpop.f32.mrf.mxu0
  %3485 = vmatprep.mubr.bf16.mxu0 0
  %3486 = vmatmul.mubr.bf16.gmra.mxu0 %v3369
  %v3487 = vpop.f32.mrf.mxu0
  %v3488 = vadd.f32 %v1304, %v3487
  %v3489 = vpop.f32.mrf.mxu0
  %v3490 = vpop.f32.mrf.mxu0
  %v3491 = vadd.f32 %v1305, %v3490
  %v3492 = vpop.f32.mrf.mxu0
  %3493 = vmatprep.mubr.bf16.mxu0 0
  %3494 = vmatmul.mubr.bf16.gmra.mxu0 %v3372
  %v3495 = vpop.f32.mrf.mxu0
  %v3496 = vadd.f32 %v1306, %v3495
  %v3497 = vpop.f32.mrf.mxu0
  %v3498 = vpop.f32.mrf.mxu0
  %v3499 = vadd.f32 %v1307, %v3498
  %v3500 = vpop.f32.mrf.mxu0
  %3501 = vmatprep.mubr.bf16.mxu0 0
  %3502 = vmatmul.mubr.bf16.gmra.mxu0 %v3375
  %v3503 = vpop.f32.mrf.mxu0
  %v3504 = vadd.f32 %v1308, %v3503
  %v3505 = vpop.f32.mrf.mxu0
  %v3506 = vpop.f32.mrf.mxu0
  %v3507 = vadd.f32 %v1309, %v3506
  %v3508 = vpop.f32.mrf.mxu0
  %3509 = vmatprep.mubr.bf16.mxu0 0
  %3510 = vmatmul.mubr.bf16.gmra.mxu0 %v3378
  %v3511 = vpop.f32.mrf.mxu0
  %v3512 = vadd.f32 %v1310, %v3511
  %v3513 = vpop.f32.mrf.mxu0
  %v3514 = vpop.f32.mrf.mxu0
  %v3515 = vadd.f32 %v1311, %v3514
  %v3516 = vpop.f32.mrf.mxu0
  %3517 = vmatprep.mubr.bf16.mxu0 0
  %3518 = vmatmul.mubr.bf16.gmra.mxu0 %v3381
  %v3519 = vpop.f32.mrf.mxu0
  %v3520 = vadd.f32 %v1312, %v3519
  %v3521 = vpop.f32.mrf.mxu0
  %v3522 = vpop.f32.mrf.mxu0
  %v3523 = vadd.f32 %v1313, %v3522
  %v3524 = vpop.f32.mrf.mxu0
  %3525 = vmatprep.mubr.bf16.mxu0 0
  %3526 = vmatmul.mubr.bf16.gmra.mxu0 %v3384
  %v3527 = vpop.f32.mrf.mxu0
  %v3528 = vadd.f32 %v1314, %v3527
  %v3529 = vpop.f32.mrf.mxu0
  %v3530 = vpop.f32.mrf.mxu0
  %v3531 = vadd.f32 %v1315, %v3530
  %v3532 = vpop.f32.mrf.mxu0
  %3533 = vmatprep.mubr.bf16.mxu0 0
  %3534 = vmatmul.mubr.bf16.gmra.mxu0 %v3387
  %v3535 = vpop.f32.mrf.mxu0
  %v3536 = vadd.f32 %v1316, %v3535
  %v3537 = vpop.f32.mrf.mxu0
  %v3538 = vpop.f32.mrf.mxu0
  %v3539 = vadd.f32 %v1317, %v3538
  %v3540 = vpop.f32.mrf.mxu0
  %3541 = vmatprep.mubr.bf16.mxu0 0
  %3542 = vmatmul.mubr.bf16.gmra.mxu0 %v3390
  %v3543 = vpop.f32.mrf.mxu0
  %v3544 = vadd.f32 %v1318, %v3543
  %v3545 = vpop.f32.mrf.mxu0
  %v3546 = vpop.f32.mrf.mxu0
  %v3547 = vadd.f32 %v1319, %v3546
  %v3548 = vpop.f32.mrf.mxu0
  %3549 = vmatprep.mubr.bf16.mxu0 0
  %3550 = vmatmul.mubr.bf16.gmra.mxu0 %v3393
  %v3551 = vpop.f32.mrf.mxu0
  %v3552 = vadd.f32 %v1320, %v3551
  %v3553 = vpop.f32.mrf.mxu0
  %v3554 = vpop.f32.mrf.mxu0
  %v3555 = vadd.f32 %v1321, %v3554
  %v3556 = vpop.f32.mrf.mxu0
  %3557 = vmatprep.mubr.bf16.mxu0 0
  %3558 = vmatmul.mubr.bf16.gmra.mxu0 %v3396
  %v3559 = vpop.f32.mrf.mxu0
  %v3560 = vadd.f32 %v1322, %v3559
  %v3561 = vpop.f32.mrf.mxu0
  %v3562 = vpop.f32.mrf.mxu0
  %v3563 = vadd.f32 %v1323, %v3562
  %v3564 = vpop.f32.mrf.mxu0
  %3565 = vmatprep.mubr.bf16.mxu0 0
  %3566 = vmatmul.mubr.bf16.gmra.mxu0 %v3399
  %v3567 = vpop.f32.mrf.mxu0
  %v3568 = vadd.f32 %v1324, %v3567
  %v3569 = vpop.f32.mrf.mxu0
  %v3570 = vpop.f32.mrf.mxu0
  %v3571 = vadd.f32 %v1325, %v3570
  %v3572 = vpop.f32.mrf.mxu0
  %3573 = vdwg.mxu0
  %vm3574 = vcmask 523264
  %v3575 = vsel %vm3574, %v1481, -inf
  %3576 = vmax.xlane.f32.xlu0 %v3575
  %v3577 = vpop.xlane.xlu0 %3576
  %v3578 = vsel %vm3574, %v1484, -inf
  %3579 = vmax.xlane.f32.xlu0 %v3578
  %v3580 = vpop.xlane.xlu0 %3579
  %v3581 = vsel %vm3574, %v1489, -inf
  %3582 = vmax.xlane.f32.xlu0 %v3581
  %v3583 = vpop.xlane.xlu0 %3582
  %v3584 = vsel %vm3574, %v1492, -inf
  %3585 = vmax.xlane.f32.xlu0 %v3584
  %v3586 = vpop.xlane.xlu0 %3585
  %v3587 = vsel %vm3574, %v1497, -inf
  %3588 = vmax.xlane.f32.xlu0 %v3587
  %v3589 = vpop.xlane.xlu0 %3588
  %v3590 = vsel %vm3574, %v1500, -inf
  %3591 = vmax.xlane.f32.xlu0 %v3590
  %v3592 = vpop.xlane.xlu0 %3591
  %v3593 = vsel %vm3574, %v1505, -inf
  %3594 = vmax.xlane.f32.xlu0 %v3593
  %v3595 = vpop.xlane.xlu0 %3594
  %v3596 = vsel %vm3574, %v1508, -inf
  %3597 = vmax.xlane.f32.xlu0 %v3596
  %v3598 = vpop.xlane.xlu0 %3597
  %v3599 = vsel %vm3574, %v1513, -inf
  %3600 = vmax.xlane.f32.xlu0 %v3599
  %v3601 = vpop.xlane.xlu0 %3600
  %v3602 = vsel %vm3574, %v1516, -inf
  %3603 = vmax.xlane.f32.xlu0 %v3602
  %v3604 = vpop.xlane.xlu0 %3603
  %v3605 = vsel %vm3574, %v1521, -inf
  %3606 = vmax.xlane.f32.xlu0 %v3605
  %v3607 = vpop.xlane.xlu0 %3606
  %v3608 = vsel %vm3574, %v1524, -inf
  %3609 = vmax.xlane.f32.xlu0 %v3608
  %v3610 = vpop.xlane.xlu0 %3609
  %v3611 = vsel %vm3574, %v1529, -inf
  %3612 = vmax.xlane.f32.xlu0 %v3611
  %v3613 = vpop.xlane.xlu0 %3612
  %v3614 = vsel %vm3574, %v1532, -inf
  %3615 = vmax.xlane.f32.xlu0 %v3614
  %v3616 = vpop.xlane.xlu0 %3615
  %v3617 = vsel %vm3574, %v1537, -inf
  %3618 = vmax.xlane.f32.xlu0 %v3617
  %v3619 = vpop.xlane.xlu0 %3618
  %v3620 = vsel %vm3574, %v1540, -inf
  %3621 = vmax.xlane.f32.xlu0 %v3620
  %v3622 = vpop.xlane.xlu0 %3621
  %v3623 = vsel %vm3574, %v1545, -inf
  %3624 = vmax.xlane.f32.xlu0 %v3623
  %v3625 = vpop.xlane.xlu0 %3624
  %v3626 = vsel %vm3574, %v1548, -inf
  %3627 = vmax.xlane.f32.xlu0 %v3626
  %v3628 = vpop.xlane.xlu0 %3627
  %v3629 = vsel %vm3574, %v1553, -inf
  %3630 = vmax.xlane.f32.xlu0 %v3629
  %v3631 = vpop.xlane.xlu0 %3630
  %v3632 = vsel %vm3574, %v1556, -inf
  %3633 = vmax.xlane.f32.xlu0 %v3632
  %v3634 = vpop.xlane.xlu0 %3633
  %v3635 = vsel %vm3574, %v1561, -inf
  %3636 = vmax.xlane.f32.xlu0 %v3635
  %v3637 = vpop.xlane.xlu0 %3636
  %v3638 = vsel %vm3574, %v1564, -inf
  %3639 = vmax.xlane.f32.xlu0 %v3638
  %v3640 = vpop.xlane.xlu0 %3639
  %v3641 = vsel %vm3574, %v1569, -inf
  %3642 = vmax.xlane.f32.xlu0 %v3641
  %v3643 = vpop.xlane.xlu0 %3642
  %v3644 = vsel %vm3574, %v1572, -inf
  %3645 = vmax.xlane.f32.xlu0 %v3644
  %v3646 = vpop.xlane.xlu0 %3645
  %v3647 = vsel %vm3574, %v1577, -inf
  %3648 = vmax.xlane.f32.xlu0 %v3647
  %v3649 = vpop.xlane.xlu0 %3648
  %v3650 = vsel %vm3574, %v1580, -inf
  %3651 = vmax.xlane.f32.xlu0 %v3650
  %v3652 = vpop.xlane.xlu0 %3651
  %v3653 = vsel %vm3574, %v1585, -inf
  %3654 = vmax.xlane.f32.xlu0 %v3653
  %v3655 = vpop.xlane.xlu0 %3654
  %v3656 = vsel %vm3574, %v1588, -inf
  %3657 = vmax.xlane.f32.xlu0 %v3656
  %v3658 = vpop.xlane.xlu0 %3657
  %v3659 = vsel %vm3574, %v1593, -inf
  %3660 = vmax.xlane.f32.xlu0 %v3659
  %v3661 = vpop.xlane.xlu0 %3660
  %v3662 = vsel %vm3574, %v1596, -inf
  %3663 = vmax.xlane.f32.xlu0 %v3662
  %v3664 = vpop.xlane.xlu0 %3663
  %v3665 = vsel %vm3574, %v1601, -inf
  %3666 = vmax.xlane.f32.xlu0 %v3665
  %v3667 = vpop.xlane.xlu0 %3666
  %v3668 = vsel %vm3574, %v1604, -inf
  %3669 = vmax.xlane.f32.xlu0 %v3668
  %v3670 = vpop.xlane.xlu0 %3669
  %v3671 = vsel %vm3574, %v1762, -inf
  %3672 = vmax.xlane.f32.xlu0 %v3671
  %v3673 = vpop.xlane.xlu0 %3672
  %v3674 = vsel %vm3574, %v1765, -inf
  %3675 = vmax.xlane.f32.xlu0 %v3674
  %v3676 = vpop.xlane.xlu0 %3675
  %v3677 = vsel %vm3574, %v1770, -inf
  %3678 = vmax.xlane.f32.xlu0 %v3677
  %v3679 = vpop.xlane.xlu0 %3678
  %v3680 = vsel %vm3574, %v1773, -inf
  %3681 = vmax.xlane.f32.xlu0 %v3680
  %v3682 = vpop.xlane.xlu0 %3681
  %v3683 = vsel %vm3574, %v1778, -inf
  %3684 = vmax.xlane.f32.xlu0 %v3683
  %v3685 = vpop.xlane.xlu0 %3684
  %v3686 = vsel %vm3574, %v1781, -inf
  %3687 = vmax.xlane.f32.xlu0 %v3686
  %v3688 = vpop.xlane.xlu0 %3687
  %v3689 = vsel %vm3574, %v1786, -inf
  %3690 = vmax.xlane.f32.xlu0 %v3689
  %v3691 = vpop.xlane.xlu0 %3690
  %v3692 = vsel %vm3574, %v1789, -inf
  %3693 = vmax.xlane.f32.xlu0 %v3692
  %v3694 = vpop.xlane.xlu0 %3693
  %v3695 = vsel %vm3574, %v1794, -inf
  %3696 = vmax.xlane.f32.xlu0 %v3695
  %v3697 = vpop.xlane.xlu0 %3696
  %v3698 = vsel %vm3574, %v1797, -inf
  %3699 = vmax.xlane.f32.xlu0 %v3698
  %v3700 = vpop.xlane.xlu0 %3699
  %v3701 = vsel %vm3574, %v1802, -inf
  %3702 = vmax.xlane.f32.xlu0 %v3701
  %v3703 = vpop.xlane.xlu0 %3702
  %v3704 = vsel %vm3574, %v1805, -inf
  %3705 = vmax.xlane.f32.xlu0 %v3704
  %v3706 = vpop.xlane.xlu0 %3705
  %v3707 = vsel %vm3574, %v1810, -inf
  %3708 = vmax.xlane.f32.xlu0 %v3707
  %v3709 = vpop.xlane.xlu0 %3708
  %v3710 = vsel %vm3574, %v1813, -inf
  %3711 = vmax.xlane.f32.xlu0 %v3710
  %v3712 = vpop.xlane.xlu0 %3711
  %v3713 = vsel %vm3574, %v1818, -inf
  %3714 = vmax.xlane.f32.xlu0 %v3713
  %v3715 = vpop.xlane.xlu0 %3714
  %v3716 = vsel %vm3574, %v1821, -inf
  %3717 = vmax.xlane.f32.xlu0 %v3716
  %v3718 = vpop.xlane.xlu0 %3717
  %v3719 = vsel %vm3574, %v1826, -inf
  %3720 = vmax.xlane.f32.xlu0 %v3719
  %v3721 = vpop.xlane.xlu0 %3720
  %v3722 = vsel %vm3574, %v1829, -inf
  %3723 = vmax.xlane.f32.xlu0 %v3722
  %v3724 = vpop.xlane.xlu0 %3723
  %v3725 = vsel %vm3574, %v1834, -inf
  %3726 = vmax.xlane.f32.xlu0 %v3725
  %v3727 = vpop.xlane.xlu0 %3726
  %v3728 = vsel %vm3574, %v1837, -inf
  %3729 = vmax.xlane.f32.xlu0 %v3728
  %v3730 = vpop.xlane.xlu0 %3729
  %v3731 = vsel %vm3574, %v1842, -inf
  %3732 = vmax.xlane.f32.xlu0 %v3731
  %v3733 = vpop.xlane.xlu0 %3732
  %v3734 = vsel %vm3574, %v1845, -inf
  %3735 = vmax.xlane.f32.xlu0 %v3734
  %v3736 = vpop.xlane.xlu0 %3735
  %v3737 = vsel %vm3574, %v1850, -inf
  %3738 = vmax.xlane.f32.xlu0 %v3737
  %v3739 = vpop.xlane.xlu0 %3738
  %v3740 = vsel %vm3574, %v1853, -inf
  %3741 = vmax.xlane.f32.xlu0 %v3740
  %v3742 = vpop.xlane.xlu0 %3741
  %v3743 = vsel %vm3574, %v1858, -inf
  %3744 = vmax.xlane.f32.xlu0 %v3743
  %v3745 = vpop.xlane.xlu0 %3744
  %v3746 = vsel %vm3574, %v1861, -inf
  %3747 = vmax.xlane.f32.xlu0 %v3746
  %v3748 = vpop.xlane.xlu0 %3747
  %v3749 = vsel %vm3574, %v1866, -inf
  %3750 = vmax.xlane.f32.xlu0 %v3749
  %v3751 = vpop.xlane.xlu0 %3750
  %v3752 = vsel %vm3574, %v1869, -inf
  %3753 = vmax.xlane.f32.xlu0 %v3752
  %v3754 = vpop.xlane.xlu0 %3753
  %v3755 = vsel %vm3574, %v1874, -inf
  %3756 = vmax.xlane.f32.xlu0 %v3755
  %v3757 = vpop.xlane.xlu0 %3756
  %v3758 = vsel %vm3574, %v1877, -inf
  %3759 = vmax.xlane.f32.xlu0 %v3758
  %v3760 = vpop.xlane.xlu0 %3759
  %v3761 = vsel %vm3574, %v1882, -inf
  %3762 = vmax.xlane.f32.xlu0 %v3761
  %v3763 = vpop.xlane.xlu0 %3762
  %v3764 = vsel %vm3574, %v1885, -inf
  %3765 = vmax.xlane.f32.xlu0 %v3764
  %v3766 = vpop.xlane.xlu0 %3765
  %v3767 = vsel %vm3574, %v2043, -inf
  %3768 = vmax.xlane.f32.xlu0 %v3767
  %v3769 = vpop.xlane.xlu0 %3768
  %v3770 = vsel %vm3574, %v2046, -inf
  %3771 = vmax.xlane.f32.xlu0 %v3770
  %v3772 = vpop.xlane.xlu0 %3771
  %v3773 = vsel %vm3574, %v2051, -inf
  %3774 = vmax.xlane.f32.xlu0 %v3773
  %v3775 = vpop.xlane.xlu0 %3774
  %v3776 = vsel %vm3574, %v2054, -inf
  %3777 = vmax.xlane.f32.xlu0 %v3776
  %v3778 = vpop.xlane.xlu0 %3777
  %v3779 = vsel %vm3574, %v2059, -inf
  %3780 = vmax.xlane.f32.xlu0 %v3779
  %v3781 = vpop.xlane.xlu0 %3780
  %v3782 = vsel %vm3574, %v2062, -inf
  %3783 = vmax.xlane.f32.xlu0 %v3782
  %v3784 = vpop.xlane.xlu0 %3783
  %v3785 = vsel %vm3574, %v2067, -inf
  %3786 = vmax.xlane.f32.xlu0 %v3785
  %v3787 = vpop.xlane.xlu0 %3786
  %v3788 = vsel %vm3574, %v2070, -inf
  %3789 = vmax.xlane.f32.xlu0 %v3788
  %v3790 = vpop.xlane.xlu0 %3789
  %v3791 = vsel %vm3574, %v2075, -inf
  %3792 = vmax.xlane.f32.xlu0 %v3791
  %v3793 = vpop.xlane.xlu0 %3792
  %v3794 = vsel %vm3574, %v2078, -inf
  %3795 = vmax.xlane.f32.xlu0 %v3794
  %v3796 = vpop.xlane.xlu0 %3795
  %v3797 = vsel %vm3574, %v2083, -inf
  %3798 = vmax.xlane.f32.xlu0 %v3797
  %v3799 = vpop.xlane.xlu0 %3798
  %v3800 = vsel %vm3574, %v2086, -inf
  %3801 = vmax.xlane.f32.xlu0 %v3800
  %v3802 = vpop.xlane.xlu0 %3801
  %v3803 = vsel %vm3574, %v2091, -inf
  %3804 = vmax.xlane.f32.xlu0 %v3803
  %v3805 = vpop.xlane.xlu0 %3804
  %v3806 = vsel %vm3574, %v2094, -inf
  %3807 = vmax.xlane.f32.xlu0 %v3806
  %v3808 = vpop.xlane.xlu0 %3807
  %v3809 = vsel %vm3574, %v2099, -inf
  %3810 = vmax.xlane.f32.xlu0 %v3809
  %v3811 = vpop.xlane.xlu0 %3810
  %v3812 = vsel %vm3574, %v2102, -inf
  %3813 = vmax.xlane.f32.xlu0 %v3812
  %v3814 = vpop.xlane.xlu0 %3813
  %v3815 = vsel %vm3574, %v2107, -inf
  %3816 = vmax.xlane.f32.xlu0 %v3815
  %v3817 = vpop.xlane.xlu0 %3816
  %v3818 = vsel %vm3574, %v2110, -inf
  %3819 = vmax.xlane.f32.xlu0 %v3818
  %v3820 = vpop.xlane.xlu0 %3819
  %v3821 = vsel %vm3574, %v2115, -inf
  %3822 = vmax.xlane.f32.xlu0 %v3821
  %v3823 = vpop.xlane.xlu0 %3822
  %v3824 = vsel %vm3574, %v2118, -inf
  %3825 = vmax.xlane.f32.xlu0 %v3824
  %v3826 = vpop.xlane.xlu0 %3825
  %v3827 = vsel %vm3574, %v2123, -inf
  %3828 = vmax.xlane.f32.xlu0 %v3827
  %v3829 = vpop.xlane.xlu0 %3828
  %v3830 = vsel %vm3574, %v2126, -inf
  %3831 = vmax.xlane.f32.xlu0 %v3830
  %v3832 = vpop.xlane.xlu0 %3831
  %v3833 = vsel %vm3574, %v2131, -inf
  %3834 = vmax.xlane.f32.xlu0 %v3833
  %v3835 = vpop.xlane.xlu0 %3834
  %v3836 = vsel %vm3574, %v2134, -inf
  %3837 = vmax.xlane.f32.xlu0 %v3836
  %v3838 = vpop.xlane.xlu0 %3837
  %v3839 = vsel %vm3574, %v2139, -inf
  %3840 = vmax.xlane.f32.xlu0 %v3839
  %v3841 = vpop.xlane.xlu0 %3840
  %v3842 = vsel %vm3574, %v2142, -inf
  %3843 = vmax.xlane.f32.xlu0 %v3842
  %v3844 = vpop.xlane.xlu0 %3843
  %v3845 = vsel %vm3574, %v2147, -inf
  %3846 = vmax.xlane.f32.xlu0 %v3845
  %v3847 = vpop.xlane.xlu0 %3846
  %v3848 = vsel %vm3574, %v2150, -inf
  %3849 = vmax.xlane.f32.xlu0 %v3848
  %v3850 = vpop.xlane.xlu0 %3849
  %v3851 = vsel %vm3574, %v2155, -inf
  %3852 = vmax.xlane.f32.xlu0 %v3851
  %v3853 = vpop.xlane.xlu0 %3852
  %v3854 = vsel %vm3574, %v2158, -inf
  %3855 = vmax.xlane.f32.xlu0 %v3854
  %v3856 = vpop.xlane.xlu0 %3855
  %v3857 = vsel %vm3574, %v2163, -inf
  %3858 = vmax.xlane.f32.xlu0 %v3857
  %v3859 = vpop.xlane.xlu0 %3858
  %v3860 = vsel %vm3574, %v2166, -inf
  %3861 = vmax.xlane.f32.xlu0 %v3860
  %v3862 = vpop.xlane.xlu0 %3861
  %v3863 = vsel %vm3574, %v2324, -inf
  %3864 = vmax.xlane.f32.xlu0 %v3863
  %v3865 = vpop.xlane.xlu0 %3864
  %v3866 = vsel %vm3574, %v2327, -inf
  %3867 = vmax.xlane.f32.xlu0 %v3866
  %v3868 = vpop.xlane.xlu0 %3867
  %v3869 = vsel %vm3574, %v2332, -inf
  %3870 = vmax.xlane.f32.xlu0 %v3869
  %v3871 = vpop.xlane.xlu0 %3870
  %v3872 = vsel %vm3574, %v2335, -inf
  %3873 = vmax.xlane.f32.xlu0 %v3872
  %v3874 = vpop.xlane.xlu0 %3873
  %v3875 = vsel %vm3574, %v2340, -inf
  %3876 = vmax.xlane.f32.xlu0 %v3875
  %v3877 = vpop.xlane.xlu0 %3876
  %v3878 = vsel %vm3574, %v2343, -inf
  %3879 = vmax.xlane.f32.xlu0 %v3878
  %v3880 = vpop.xlane.xlu0 %3879
  %v3881 = vsel %vm3574, %v2348, -inf
  %3882 = vmax.xlane.f32.xlu0 %v3881
  %v3883 = vpop.xlane.xlu0 %3882
  %v3884 = vsel %vm3574, %v2351, -inf
  %3885 = vmax.xlane.f32.xlu0 %v3884
  %v3886 = vpop.xlane.xlu0 %3885
  %v3887 = vsel %vm3574, %v2356, -inf
  %3888 = vmax.xlane.f32.xlu0 %v3887
  %v3889 = vpop.xlane.xlu0 %3888
  %v3890 = vsel %vm3574, %v2359, -inf
  %3891 = vmax.xlane.f32.xlu0 %v3890
  %v3892 = vpop.xlane.xlu0 %3891
  %v3893 = vsel %vm3574, %v2364, -inf
  %3894 = vmax.xlane.f32.xlu0 %v3893
  %v3895 = vpop.xlane.xlu0 %3894
  %v3896 = vsel %vm3574, %v2367, -inf
  %3897 = vmax.xlane.f32.xlu0 %v3896
  %v3898 = vpop.xlane.xlu0 %3897
  %v3899 = vsel %vm3574, %v2372, -inf
  %3900 = vmax.xlane.f32.xlu0 %v3899
  %v3901 = vpop.xlane.xlu0 %3900
  %v3902 = vsel %vm3574, %v2375, -inf
  %3903 = vmax.xlane.f32.xlu0 %v3902
  %v3904 = vpop.xlane.xlu0 %3903
  %v3905 = vsel %vm3574, %v2380, -inf
  %3906 = vmax.xlane.f32.xlu0 %v3905
  %v3907 = vpop.xlane.xlu0 %3906
  %v3908 = vsel %vm3574, %v2383, -inf
  %3909 = vmax.xlane.f32.xlu0 %v3908
  %v3910 = vpop.xlane.xlu0 %3909
  %v3911 = vsel %vm3574, %v2388, -inf
  %3912 = vmax.xlane.f32.xlu0 %v3911
  %v3913 = vpop.xlane.xlu0 %3912
  %v3914 = vsel %vm3574, %v2391, -inf
  %3915 = vmax.xlane.f32.xlu0 %v3914
  %v3916 = vpop.xlane.xlu0 %3915
  %v3917 = vsel %vm3574, %v2396, -inf
  %3918 = vmax.xlane.f32.xlu0 %v3917
  %v3919 = vpop.xlane.xlu0 %3918
  %v3920 = vsel %vm3574, %v2399, -inf
  %3921 = vmax.xlane.f32.xlu0 %v3920
  %v3922 = vpop.xlane.xlu0 %3921
  %v3923 = vsel %vm3574, %v2404, -inf
  %3924 = vmax.xlane.f32.xlu0 %v3923
  %v3925 = vpop.xlane.xlu0 %3924
  %v3926 = vsel %vm3574, %v2407, -inf
  %3927 = vmax.xlane.f32.xlu0 %v3926
  %v3928 = vpop.xlane.xlu0 %3927
  %v3929 = vsel %vm3574, %v2412, -inf
  %3930 = vmax.xlane.f32.xlu0 %v3929
  %v3931 = vpop.xlane.xlu0 %3930
  %v3932 = vsel %vm3574, %v2415, -inf
  %3933 = vmax.xlane.f32.xlu0 %v3932
  %v3934 = vpop.xlane.xlu0 %3933
  %v3935 = vsel %vm3574, %v2420, -inf
  %3936 = vmax.xlane.f32.xlu0 %v3935
  %v3937 = vpop.xlane.xlu0 %3936
  %v3938 = vsel %vm3574, %v2423, -inf
  %3939 = vmax.xlane.f32.xlu0 %v3938
  %v3940 = vpop.xlane.xlu0 %3939
  %v3941 = vsel %vm3574, %v2428, -inf
  %3942 = vmax.xlane.f32.xlu0 %v3941
  %v3943 = vpop.xlane.xlu0 %3942
  %v3944 = vsel %vm3574, %v2431, -inf
  %3945 = vmax.xlane.f32.xlu0 %v3944
  %v3946 = vpop.xlane.xlu0 %3945
  %v3947 = vsel %vm3574, %v2436, -inf
  %3948 = vmax.xlane.f32.xlu0 %v3947
  %v3949 = vpop.xlane.xlu0 %3948
  %v3950 = vsel %vm3574, %v2439, -inf
  %3951 = vmax.xlane.f32.xlu0 %v3950
  %v3952 = vpop.xlane.xlu0 %3951
  %v3953 = vsel %vm3574, %v2444, -inf
  %3954 = vmax.xlane.f32.xlu0 %v3953
  %v3955 = vpop.xlane.xlu0 %3954
  %v3956 = vsel %vm3574, %v2447, -inf
  %3957 = vmax.xlane.f32.xlu0 %v3956
  %v3958 = vpop.xlane.xlu0 %3957
  %v3959 = vsel %vm3574, %v2605, -inf
  %3960 = vmax.xlane.f32.xlu0 %v3959
  %v3961 = vpop.xlane.xlu0 %3960
  %v3962 = vsel %vm3574, %v2608, -inf
  %3963 = vmax.xlane.f32.xlu0 %v3962
  %v3964 = vpop.xlane.xlu0 %3963
  %v3965 = vsel %vm3574, %v2613, -inf
  %3966 = vmax.xlane.f32.xlu0 %v3965
  %v3967 = vpop.xlane.xlu0 %3966
  %v3968 = vsel %vm3574, %v2616, -inf
  %3969 = vmax.xlane.f32.xlu0 %v3968
  %v3970 = vpop.xlane.xlu0 %3969
  %v3971 = vsel %vm3574, %v2621, -inf
  %3972 = vmax.xlane.f32.xlu0 %v3971
  %v3973 = vpop.xlane.xlu0 %3972
  %v3974 = vsel %vm3574, %v2624, -inf
  %3975 = vmax.xlane.f32.xlu0 %v3974
  %v3976 = vpop.xlane.xlu0 %3975
  %v3977 = vsel %vm3574, %v2629, -inf
  %3978 = vmax.xlane.f32.xlu0 %v3977
  %v3979 = vpop.xlane.xlu0 %3978
  %v3980 = vsel %vm3574, %v2632, -inf
  %3981 = vmax.xlane.f32.xlu0 %v3980
  %v3982 = vpop.xlane.xlu0 %3981
  %v3983 = vsel %vm3574, %v2637, -inf
  %3984 = vmax.xlane.f32.xlu0 %v3983
  %v3985 = vpop.xlane.xlu0 %3984
  %v3986 = vsel %vm3574, %v2640, -inf
  %3987 = vmax.xlane.f32.xlu0 %v3986
  %v3988 = vpop.xlane.xlu0 %3987
  %v3989 = vsel %vm3574, %v2645, -inf
  %3990 = vmax.xlane.f32.xlu0 %v3989
  %v3991 = vpop.xlane.xlu0 %3990
  %v3992 = vsel %vm3574, %v2648, -inf
  %3993 = vmax.xlane.f32.xlu0 %v3992
  %v3994 = vpop.xlane.xlu0 %3993
  %v3995 = vsel %vm3574, %v2653, -inf
  %3996 = vmax.xlane.f32.xlu0 %v3995
  %v3997 = vpop.xlane.xlu0 %3996
  %v3998 = vsel %vm3574, %v2656, -inf
  %3999 = vmax.xlane.f32.xlu0 %v3998
  %v4000 = vpop.xlane.xlu0 %3999
  %v4001 = vsel %vm3574, %v2661, -inf
  %4002 = vmax.xlane.f32.xlu0 %v4001
  %v4003 = vpop.xlane.xlu0 %4002
  %v4004 = vsel %vm3574, %v2664, -inf
  %4005 = vmax.xlane.f32.xlu0 %v4004
  %v4006 = vpop.xlane.xlu0 %4005
  %v4007 = vsel %vm3574, %v2669, -inf
  %4008 = vmax.xlane.f32.xlu0 %v4007
  %v4009 = vpop.xlane.xlu0 %4008
  %v4010 = vsel %vm3574, %v2672, -inf
  %4011 = vmax.xlane.f32.xlu0 %v4010
  %v4012 = vpop.xlane.xlu0 %4011
  %v4013 = vsel %vm3574, %v2677, -inf
  %4014 = vmax.xlane.f32.xlu0 %v4013
  %v4015 = vpop.xlane.xlu0 %4014
  %v4016 = vsel %vm3574, %v2680, -inf
  %4017 = vmax.xlane.f32.xlu0 %v4016
  %v4018 = vpop.xlane.xlu0 %4017
  %v4019 = vsel %vm3574, %v2685, -inf
  %4020 = vmax.xlane.f32.xlu0 %v4019
  %v4021 = vpop.xlane.xlu0 %4020
  %v4022 = vsel %vm3574, %v2688, -inf
  %4023 = vmax.xlane.f32.xlu0 %v4022
  %v4024 = vpop.xlane.xlu0 %4023
  %v4025 = vsel %vm3574, %v2693, -inf
  %4026 = vmax.xlane.f32.xlu0 %v4025
  %v4027 = vpop.xlane.xlu0 %4026
  %v4028 = vsel %vm3574, %v2696, -inf
  %4029 = vmax.xlane.f32.xlu0 %v4028
  %v4030 = vpop.xlane.xlu0 %4029
  %v4031 = vsel %vm3574, %v2701, -inf
  %4032 = vmax.xlane.f32.xlu0 %v4031
  %v4033 = vpop.xlane.xlu0 %4032
  %v4034 = vsel %vm3574, %v2704, -inf
  %4035 = vmax.xlane.f32.xlu0 %v4034
  %v4036 = vpop.xlane.xlu0 %4035
  %v4037 = vsel %vm3574, %v2709, -inf
  %4038 = vmax.xlane.f32.xlu0 %v4037
  %v4039 = vpop.xlane.xlu0 %4038
  %v4040 = vsel %vm3574, %v2712, -inf
  %4041 = vmax.xlane.f32.xlu0 %v4040
  %v4042 = vpop.xlane.xlu0 %4041
  %v4043 = vsel %vm3574, %v2717, -inf
  %4044 = vmax.xlane.f32.xlu0 %v4043
  %v4045 = vpop.xlane.xlu0 %4044
  %v4046 = vsel %vm3574, %v2720, -inf
  %4047 = vmax.xlane.f32.xlu0 %v4046
  %v4048 = vpop.xlane.xlu0 %4047
  %v4049 = vsel %vm3574, %v2725, -inf
  %4050 = vmax.xlane.f32.xlu0 %v4049
  %v4051 = vpop.xlane.xlu0 %4050
  %v4052 = vsel %vm3574, %v2728, -inf
  %4053 = vmax.xlane.f32.xlu0 %v4052
  %v4054 = vpop.xlane.xlu0 %4053
  %v4055 = vsel %vm3574, %v2886, -inf
  %4056 = vmax.xlane.f32.xlu0 %v4055
  %v4057 = vpop.xlane.xlu0 %4056
  %v4058 = vsel %vm3574, %v2889, -inf
  %4059 = vmax.xlane.f32.xlu0 %v4058
  %v4060 = vpop.xlane.xlu0 %4059
  %v4061 = vsel %vm3574, %v2894, -inf
  %4062 = vmax.xlane.f32.xlu0 %v4061
  %v4063 = vpop.xlane.xlu0 %4062
  %v4064 = vsel %vm3574, %v2897, -inf
  %4065 = vmax.xlane.f32.xlu0 %v4064
  %v4066 = vpop.xlane.xlu0 %4065
  %v4067 = vsel %vm3574, %v2902, -inf
  %4068 = vmax.xlane.f32.xlu0 %v4067
  %v4069 = vpop.xlane.xlu0 %4068
  %v4070 = vsel %vm3574, %v2905, -inf
  %4071 = vmax.xlane.f32.xlu0 %v4070
  %v4072 = vpop.xlane.xlu0 %4071
  %v4073 = vsel %vm3574, %v2910, -inf
  %4074 = vmax.xlane.f32.xlu0 %v4073
  %v4075 = vpop.xlane.xlu0 %4074
  %v4076 = vsel %vm3574, %v2913, -inf
  %4077 = vmax.xlane.f32.xlu0 %v4076
  %v4078 = vpop.xlane.xlu0 %4077
  %v4079 = vsel %vm3574, %v2918, -inf
  %4080 = vmax.xlane.f32.xlu0 %v4079
  %v4081 = vpop.xlane.xlu0 %4080
  %v4082 = vsel %vm3574, %v2921, -inf
  %4083 = vmax.xlane.f32.xlu0 %v4082
  %v4084 = vpop.xlane.xlu0 %4083
  %v4085 = vsel %vm3574, %v2926, -inf
  %4086 = vmax.xlane.f32.xlu0 %v4085
  %v4087 = vpop.xlane.xlu0 %4086
  %v4088 = vsel %vm3574, %v2929, -inf
  %4089 = vmax.xlane.f32.xlu0 %v4088
  %v4090 = vpop.xlane.xlu0 %4089
  %v4091 = vsel %vm3574, %v2934, -inf
  %4092 = vmax.xlane.f32.xlu0 %v4091
  %v4093 = vpop.xlane.xlu0 %4092
  %v4094 = vsel %vm3574, %v2937, -inf
  %4095 = vmax.xlane.f32.xlu0 %v4094
  %v4096 = vpop.xlane.xlu0 %4095
  %v4097 = vsel %vm3574, %v2942, -inf
  %4098 = vmax.xlane.f32.xlu0 %v4097
  %v4099 = vpop.xlane.xlu0 %4098
  %v4100 = vsel %vm3574, %v2945, -inf
  %4101 = vmax.xlane.f32.xlu0 %v4100
  %v4102 = vpop.xlane.xlu0 %4101
  %v4103 = vsel %vm3574, %v2950, -inf
  %4104 = vmax.xlane.f32.xlu0 %v4103
  %v4105 = vpop.xlane.xlu0 %4104
  %v4106 = vsel %vm3574, %v2953, -inf
  %4107 = vmax.xlane.f32.xlu0 %v4106
  %v4108 = vpop.xlane.xlu0 %4107
  %v4109 = vsel %vm3574, %v2958, -inf
  %4110 = vmax.xlane.f32.xlu0 %v4109
  %v4111 = vpop.xlane.xlu0 %4110
  %v4112 = vsel %vm3574, %v2961, -inf
  %4113 = vmax.xlane.f32.xlu0 %v4112
  %v4114 = vpop.xlane.xlu0 %4113
  %v4115 = vsel %vm3574, %v2966, -inf
  %4116 = vmax.xlane.f32.xlu0 %v4115
  %v4117 = vpop.xlane.xlu0 %4116
  %v4118 = vsel %vm3574, %v2969, -inf
  %4119 = vmax.xlane.f32.xlu0 %v4118
  %v4120 = vpop.xlane.xlu0 %4119
  %v4121 = vsel %vm3574, %v2974, -inf
  %4122 = vmax.xlane.f32.xlu0 %v4121
  %v4123 = vpop.xlane.xlu0 %4122
  %v4124 = vsel %vm3574, %v2977, -inf
  %4125 = vmax.xlane.f32.xlu0 %v4124
  %v4126 = vpop.xlane.xlu0 %4125
  %v4127 = vsel %vm3574, %v2982, -inf
  %4128 = vmax.xlane.f32.xlu0 %v4127
  %v4129 = vpop.xlane.xlu0 %4128
  %v4130 = vsel %vm3574, %v2985, -inf
  %4131 = vmax.xlane.f32.xlu0 %v4130
  %v4132 = vpop.xlane.xlu0 %4131
  %v4133 = vsel %vm3574, %v2990, -inf
  %4134 = vmax.xlane.f32.xlu0 %v4133
  %v4135 = vpop.xlane.xlu0 %4134
  %v4136 = vsel %vm3574, %v2993, -inf
  %4137 = vmax.xlane.f32.xlu0 %v4136
  %v4138 = vpop.xlane.xlu0 %4137
  %v4139 = vsel %vm3574, %v2998, -inf
  %4140 = vmax.xlane.f32.xlu0 %v4139
  %v4141 = vpop.xlane.xlu0 %4140
  %v4142 = vsel %vm3574, %v3001, -inf
  %4143 = vmax.xlane.f32.xlu0 %v4142
  %v4144 = vpop.xlane.xlu0 %4143
  %v4145 = vsel %vm3574, %v3006, -inf
  %4146 = vmax.xlane.f32.xlu0 %v4145
  %v4147 = vpop.xlane.xlu0 %4146
  %v4148 = vsel %vm3574, %v3009, -inf
  %4149 = vmax.xlane.f32.xlu0 %v4148
  %v4150 = vpop.xlane.xlu0 %4149
  %v4151 = vsel %vm3574, %v3167, -inf
  %4152 = vmax.xlane.f32.xlu0 %v4151
  %v4153 = vpop.xlane.xlu0 %4152
  %v4154 = vsel %vm3574, %v3170, -inf
  %4155 = vmax.xlane.f32.xlu0 %v4154
  %v4156 = vpop.xlane.xlu0 %4155
  %v4157 = vsel %vm3574, %v3175, -inf
  %4158 = vmax.xlane.f32.xlu0 %v4157
  %v4159 = vpop.xlane.xlu0 %4158
  %v4160 = vsel %vm3574, %v3178, -inf
  %4161 = vmax.xlane.f32.xlu0 %v4160
  %v4162 = vpop.xlane.xlu0 %4161
  %v4163 = vsel %vm3574, %v3183, -inf
  %4164 = vmax.xlane.f32.xlu0 %v4163
  %v4165 = vpop.xlane.xlu0 %4164
  %v4166 = vsel %vm3574, %v3186, -inf
  %4167 = vmax.xlane.f32.xlu0 %v4166
  %v4168 = vpop.xlane.xlu0 %4167
  %v4169 = vsel %vm3574, %v3191, -inf
  %4170 = vmax.xlane.f32.xlu0 %v4169
  %v4171 = vpop.xlane.xlu0 %4170
  %v4172 = vsel %vm3574, %v3194, -inf
  %4173 = vmax.xlane.f32.xlu0 %v4172
  %v4174 = vpop.xlane.xlu0 %4173
  %v4175 = vsel %vm3574, %v3199, -inf
  %4176 = vmax.xlane.f32.xlu0 %v4175
  %v4177 = vpop.xlane.xlu0 %4176
  %v4178 = vsel %vm3574, %v3202, -inf
  %4179 = vmax.xlane.f32.xlu0 %v4178
  %v4180 = vpop.xlane.xlu0 %4179
  %v4181 = vsel %vm3574, %v3207, -inf
  %4182 = vmax.xlane.f32.xlu0 %v4181
  %v4183 = vpop.xlane.xlu0 %4182
  %v4184 = vsel %vm3574, %v3210, -inf
  %4185 = vmax.xlane.f32.xlu0 %v4184
  %v4186 = vpop.xlane.xlu0 %4185
  %v4187 = vsel %vm3574, %v3215, -inf
  %4188 = vmax.xlane.f32.xlu0 %v4187
  %v4189 = vpop.xlane.xlu0 %4188
  %v4190 = vsel %vm3574, %v3218, -inf
  %4191 = vmax.xlane.f32.xlu0 %v4190
  %v4192 = vpop.xlane.xlu0 %4191
  %v4193 = vsel %vm3574, %v3223, -inf
  %4194 = vmax.xlane.f32.xlu0 %v4193
  %v4195 = vpop.xlane.xlu0 %4194
  %v4196 = vsel %vm3574, %v3226, -inf
  %4197 = vmax.xlane.f32.xlu0 %v4196
  %v4198 = vpop.xlane.xlu0 %4197
  %v4199 = vsel %vm3574, %v3231, -inf
  %4200 = vmax.xlane.f32.xlu0 %v4199
  %v4201 = vpop.xlane.xlu0 %4200
  %v4202 = vsel %vm3574, %v3234, -inf
  %4203 = vmax.xlane.f32.xlu0 %v4202
  %v4204 = vpop.xlane.xlu0 %4203
  %v4205 = vsel %vm3574, %v3239, -inf
  %4206 = vmax.xlane.f32.xlu0 %v4205
  %v4207 = vpop.xlane.xlu0 %4206
  %v4208 = vsel %vm3574, %v3242, -inf
  %4209 = vmax.xlane.f32.xlu0 %v4208
  %v4210 = vpop.xlane.xlu0 %4209
  %v4211 = vsel %vm3574, %v3247, -inf
  %4212 = vmax.xlane.f32.xlu0 %v4211
  %v4213 = vpop.xlane.xlu0 %4212
  %v4214 = vsel %vm3574, %v3250, -inf
  %4215 = vmax.xlane.f32.xlu0 %v4214
  %v4216 = vpop.xlane.xlu0 %4215
  %v4217 = vsel %vm3574, %v3255, -inf
  %4218 = vmax.xlane.f32.xlu0 %v4217
  %v4219 = vpop.xlane.xlu0 %4218
  %v4220 = vsel %vm3574, %v3258, -inf
  %4221 = vmax.xlane.f32.xlu0 %v4220
  %v4222 = vpop.xlane.xlu0 %4221
  %v4223 = vsel %vm3574, %v3263, -inf
  %4224 = vmax.xlane.f32.xlu0 %v4223
  %v4225 = vpop.xlane.xlu0 %4224
  %v4226 = vsel %vm3574, %v3266, -inf
  %4227 = vmax.xlane.f32.xlu0 %v4226
  %v4228 = vpop.xlane.xlu0 %4227
  %v4229 = vsel %vm3574, %v3271, -inf
  %4230 = vmax.xlane.f32.xlu0 %v4229
  %v4231 = vpop.xlane.xlu0 %4230
  %v4232 = vsel %vm3574, %v3274, -inf
  %4233 = vmax.xlane.f32.xlu0 %v4232
  %v4234 = vpop.xlane.xlu0 %4233
  %v4235 = vsel %vm3574, %v3279, -inf
  %4236 = vmax.xlane.f32.xlu0 %v4235
  %v4237 = vpop.xlane.xlu0 %4236
  %v4238 = vsel %vm3574, %v3282, -inf
  %4239 = vmax.xlane.f32.xlu0 %v4238
  %v4240 = vpop.xlane.xlu0 %4239
  %v4241 = vsel %vm3574, %v3287, -inf
  %4242 = vmax.xlane.f32.xlu0 %v4241
  %v4243 = vpop.xlane.xlu0 %4242
  %v4244 = vsel %vm3574, %v3290, -inf
  %4245 = vmax.xlane.f32.xlu0 %v4244
  %v4246 = vpop.xlane.xlu0 %4245
  %v4247 = vsel %vm3574, %v3448, -inf
  %4248 = vmax.xlane.f32.xlu0 %v4247
  %v4249 = vpop.xlane.xlu0 %4248
  %v4250 = vsel %vm3574, %v3451, -inf
  %4251 = vmax.xlane.f32.xlu0 %v4250
  %v4252 = vpop.xlane.xlu0 %4251
  %v4253 = vsel %vm3574, %v3456, -inf
  %4254 = vmax.xlane.f32.xlu0 %v4253
  %v4255 = vpop.xlane.xlu0 %4254
  %v4256 = vsel %vm3574, %v3459, -inf
  %4257 = vmax.xlane.f32.xlu0 %v4256
  %v4258 = vpop.xlane.xlu0 %4257
  %v4259 = vsel %vm3574, %v3464, -inf
  %4260 = vmax.xlane.f32.xlu0 %v4259
  %v4261 = vpop.xlane.xlu0 %4260
  %v4262 = vsel %vm3574, %v3467, -inf
  %4263 = vmax.xlane.f32.xlu0 %v4262
  %v4264 = vpop.xlane.xlu0 %4263
  %v4265 = vsel %vm3574, %v3472, -inf
  %4266 = vmax.xlane.f32.xlu0 %v4265
  %v4267 = vpop.xlane.xlu0 %4266
  %v4268 = vsel %vm3574, %v3475, -inf
  %4269 = vmax.xlane.f32.xlu0 %v4268
  %v4270 = vpop.xlane.xlu0 %4269
  %v4271 = vsel %vm3574, %v3480, -inf
  %4272 = vmax.xlane.f32.xlu0 %v4271
  %v4273 = vpop.xlane.xlu0 %4272
  %v4274 = vsel %vm3574, %v3483, -inf
  %4275 = vmax.xlane.f32.xlu0 %v4274
  %v4276 = vpop.xlane.xlu0 %4275
  %v4277 = vsel %vm3574, %v3488, -inf
  %4278 = vmax.xlane.f32.xlu0 %v4277
  %v4279 = vpop.xlane.xlu0 %4278
  %v4280 = vsel %vm3574, %v3491, -inf
  %4281 = vmax.xlane.f32.xlu0 %v4280
  %v4282 = vpop.xlane.xlu0 %4281
  %v4283 = vsel %vm3574, %v3496, -inf
  %4284 = vmax.xlane.f32.xlu0 %v4283
  %v4285 = vpop.xlane.xlu0 %4284
  %v4286 = vsel %vm3574, %v3499, -inf
  %4287 = vmax.xlane.f32.xlu0 %v4286
  %v4288 = vpop.xlane.xlu0 %4287
  %v4289 = vsel %vm3574, %v3504, -inf
  %4290 = vmax.xlane.f32.xlu0 %v4289
  %v4291 = vpop.xlane.xlu0 %4290
  %v4292 = vsel %vm3574, %v3507, -inf
  %4293 = vmax.xlane.f32.xlu0 %v4292
  %v4294 = vpop.xlane.xlu0 %4293
  %v4295 = vsel %vm3574, %v3512, -inf
  %4296 = vmax.xlane.f32.xlu0 %v4295
  %v4297 = vpop.xlane.xlu0 %4296
  %v4298 = vsel %vm3574, %v3515, -inf
  %4299 = vmax.xlane.f32.xlu0 %v4298
  %v4300 = vpop.xlane.xlu0 %4299
  %v4301 = vsel %vm3574, %v3520, -inf
  %4302 = vmax.xlane.f32.xlu0 %v4301
  %v4303 = vpop.xlane.xlu0 %4302
  %v4304 = vsel %vm3574, %v3523, -inf
  %4305 = vmax.xlane.f32.xlu0 %v4304
  %v4306 = vpop.xlane.xlu0 %4305
  %v4307 = vsel %vm3574, %v3528, -inf
  %4308 = vmax.xlane.f32.xlu0 %v4307
  %v4309 = vpop.xlane.xlu0 %4308
  %v4310 = vsel %vm3574, %v3531, -inf
  %4311 = vmax.xlane.f32.xlu0 %v4310
  %v4312 = vpop.xlane.xlu0 %4311
  %v4313 = vsel %vm3574, %v3536, -inf
  %4314 = vmax.xlane.f32.xlu0 %v4313
  %v4315 = vpop.xlane.xlu0 %4314
  %v4316 = vsel %vm3574, %v3539, -inf
  %4317 = vmax.xlane.f32.xlu0 %v4316
  %v4318 = vpop.xlane.xlu0 %4317
  %v4319 = vsel %vm3574, %v3544, -inf
  %4320 = vmax.xlane.f32.xlu0 %v4319
  %v4321 = vpop.xlane.xlu0 %4320
  %v4322 = vsel %vm3574, %v3547, -inf
  %4323 = vmax.xlane.f32.xlu0 %v4322
  %v4324 = vpop.xlane.xlu0 %4323
  %v4325 = vsel %vm3574, %v3552, -inf
  %4326 = vmax.xlane.f32.xlu0 %v4325
  %v4327 = vpop.xlane.xlu0 %4326
  %v4328 = vsel %vm3574, %v3555, -inf
  %4329 = vmax.xlane.f32.xlu0 %v4328
  %v4330 = vpop.xlane.xlu0 %4329
  %v4331 = vsel %vm3574, %v3560, -inf
  %4332 = vmax.xlane.f32.xlu0 %v4331
  %v4333 = vpop.xlane.xlu0 %4332
  %v4334 = vsel %vm3574, %v3563, -inf
  %4335 = vmax.xlane.f32.xlu0 %v4334
  %v4336 = vpop.xlane.xlu0 %4335
  %v4337 = vsel %vm3574, %v3568, -inf
  %4338 = vmax.xlane.f32.xlu0 %v4337
  %v4339 = vpop.xlane.xlu0 %4338
  %v4340 = vsel %vm3574, %v3571, -inf
  %4341 = vmax.xlane.f32.xlu0 %v4340
  %v4342 = vpop.xlane.xlu0 %4341
  %v4343 = vsub.f32 %v1481, %v3577
  %v4344 = vsub.f32 %v1484, %v3580
  %v4345 = vsub.f32 %v1489, %v3583
  %v4346 = vsub.f32 %v1492, %v3586
  %v4347 = vsub.f32 %v1497, %v3589
  %v4348 = vsub.f32 %v1500, %v3592
  %v4349 = vsub.f32 %v1505, %v3595
  %v4350 = vsub.f32 %v1508, %v3598
  %v4351 = vsub.f32 %v1513, %v3601
  %v4352 = vsub.f32 %v1516, %v3604
  %v4353 = vsub.f32 %v1521, %v3607
  %v4354 = vsub.f32 %v1524, %v3610
  %v4355 = vsub.f32 %v1529, %v3613
  %v4356 = vsub.f32 %v1532, %v3616
  %v4357 = vsub.f32 %v1537, %v3619
  %v4358 = vsub.f32 %v1540, %v3622
  %v4359 = vsub.f32 %v1545, %v3625
  %v4360 = vsub.f32 %v1548, %v3628
  %v4361 = vsub.f32 %v1553, %v3631
  %v4362 = vsub.f32 %v1556, %v3634
  %v4363 = vsub.f32 %v1561, %v3637
  %v4364 = vsub.f32 %v1564, %v3640
  %v4365 = vsub.f32 %v1569, %v3643
  %v4366 = vsub.f32 %v1572, %v3646
  %v4367 = vsub.f32 %v1577, %v3649
  %v4368 = vsub.f32 %v1580, %v3652
  %v4369 = vsub.f32 %v1585, %v3655
  %v4370 = vsub.f32 %v1588, %v3658
  %v4371 = vsub.f32 %v1593, %v3661
  %v4372 = vsub.f32 %v1596, %v3664
  %v4373 = vsub.f32 %v1601, %v3667
  %v4374 = vsub.f32 %v1604, %v3670
  %v4375 = vsub.f32 %v1762, %v3673
  %v4376 = vsub.f32 %v1765, %v3676
  %v4377 = vsub.f32 %v1770, %v3679
  %v4378 = vsub.f32 %v1773, %v3682
  %v4379 = vsub.f32 %v1778, %v3685
  %v4380 = vsub.f32 %v1781, %v3688
  %v4381 = vsub.f32 %v1786, %v3691
  %v4382 = vsub.f32 %v1789, %v3694
  %v4383 = vsub.f32 %v1794, %v3697
  %v4384 = vsub.f32 %v1797, %v3700
  %v4385 = vsub.f32 %v1802, %v3703
  %v4386 = vsub.f32 %v1805, %v3706
  %v4387 = vsub.f32 %v1810, %v3709
  %v4388 = vsub.f32 %v1813, %v3712
  %v4389 = vsub.f32 %v1818, %v3715
  %v4390 = vsub.f32 %v1821, %v3718
  %v4391 = vsub.f32 %v1826, %v3721
  %v4392 = vsub.f32 %v1829, %v3724
  %v4393 = vsub.f32 %v1834, %v3727
  %v4394 = vsub.f32 %v1837, %v3730
  %v4395 = vsub.f32 %v1842, %v3733
  %v4396 = vsub.f32 %v1845, %v3736
  %v4397 = vsub.f32 %v1850, %v3739
  %v4398 = vsub.f32 %v1853, %v3742
  %v4399 = vsub.f32 %v1858, %v3745
  %v4400 = vsub.f32 %v1861, %v3748
  %v4401 = vsub.f32 %v1866, %v3751
  %v4402 = vsub.f32 %v1869, %v3754
  %v4403 = vsub.f32 %v1874, %v3757
  %v4404 = vsub.f32 %v1877, %v3760
  %v4405 = vsub.f32 %v1882, %v3763
  %v4406 = vsub.f32 %v1885, %v3766
  %v4407 = vsub.f32 %v2043, %v3769
  %v4408 = vsub.f32 %v2046, %v3772
  %v4409 = vsub.f32 %v2051, %v3775
  %v4410 = vsub.f32 %v2054, %v3778
  %v4411 = vsub.f32 %v2059, %v3781
  %v4412 = vsub.f32 %v2062, %v3784
  %v4413 = vsub.f32 %v2067, %v3787
  %v4414 = vsub.f32 %v2070, %v3790
  %v4415 = vsub.f32 %v2075, %v3793
  %v4416 = vsub.f32 %v2078, %v3796
  %v4417 = vsub.f32 %v2083, %v3799
  %v4418 = vsub.f32 %v2086, %v3802
  %v4419 = vsub.f32 %v2091, %v3805
  %v4420 = vsub.f32 %v2094, %v3808
  %v4421 = vsub.f32 %v2099, %v3811
  %v4422 = vsub.f32 %v2102, %v3814
  %v4423 = vsub.f32 %v2107, %v3817
  %v4424 = vsub.f32 %v2110, %v3820
  %v4425 = vsub.f32 %v2115, %v3823
  %v4426 = vsub.f32 %v2118, %v3826
  %v4427 = vsub.f32 %v2123, %v3829
  %v4428 = vsub.f32 %v2126, %v3832
  %v4429 = vsub.f32 %v2131, %v3835
  %v4430 = vsub.f32 %v2134, %v3838
  %v4431 = vsub.f32 %v2139, %v3841
  %v4432 = vsub.f32 %v2142, %v3844
  %v4433 = vsub.f32 %v2147, %v3847
  %v4434 = vsub.f32 %v2150, %v3850
  %v4435 = vsub.f32 %v2155, %v3853
  %v4436 = vsub.f32 %v2158, %v3856
  %v4437 = vsub.f32 %v2163, %v3859
  %v4438 = vsub.f32 %v2166, %v3862
  %v4439 = vsub.f32 %v2324, %v3865
  %v4440 = vsub.f32 %v2327, %v3868
  %v4441 = vsub.f32 %v2332, %v3871
  %v4442 = vsub.f32 %v2335, %v3874
  %v4443 = vsub.f32 %v2340, %v3877
  %v4444 = vsub.f32 %v2343, %v3880
  %v4445 = vsub.f32 %v2348, %v3883
  %v4446 = vsub.f32 %v2351, %v3886
  %v4447 = vsub.f32 %v2356, %v3889
  %v4448 = vsub.f32 %v2359, %v3892
  %v4449 = vsub.f32 %v2364, %v3895
  %v4450 = vsub.f32 %v2367, %v3898
  %v4451 = vsub.f32 %v2372, %v3901
  %v4452 = vsub.f32 %v2375, %v3904
  %v4453 = vsub.f32 %v2380, %v3907
  %v4454 = vsub.f32 %v2383, %v3910
  %v4455 = vsub.f32 %v2388, %v3913
  %v4456 = vsub.f32 %v2391, %v3916
  %v4457 = vsub.f32 %v2396, %v3919
  %v4458 = vsub.f32 %v2399, %v3922
  %v4459 = vsub.f32 %v2404, %v3925
  %v4460 = vsub.f32 %v2407, %v3928
  %v4461 = vsub.f32 %v2412, %v3931
  %v4462 = vsub.f32 %v2415, %v3934
  %v4463 = vsub.f32 %v2420, %v3937
  %v4464 = vsub.f32 %v2423, %v3940
  %v4465 = vsub.f32 %v2428, %v3943
  %v4466 = vsub.f32 %v2431, %v3946
  %v4467 = vsub.f32 %v2436, %v3949
  %v4468 = vsub.f32 %v2439, %v3952
  %v4469 = vsub.f32 %v2444, %v3955
  %v4470 = vsub.f32 %v2447, %v3958
  %v4471 = vsub.f32 %v2605, %v3961
  %v4472 = vsub.f32 %v2608, %v3964
  %v4473 = vsub.f32 %v2613, %v3967
  %v4474 = vsub.f32 %v2616, %v3970
  %v4475 = vsub.f32 %v2621, %v3973
  %v4476 = vsub.f32 %v2624, %v3976
  %v4477 = vsub.f32 %v2629, %v3979
  %v4478 = vsub.f32 %v2632, %v3982
  %v4479 = vsub.f32 %v2637, %v3985
  %v4480 = vsub.f32 %v2640, %v3988
  %v4481 = vsub.f32 %v2645, %v3991
  %v4482 = vsub.f32 %v2648, %v3994
  %v4483 = vsub.f32 %v2653, %v3997
  %v4484 = vsub.f32 %v2656, %v4000
  %v4485 = vsub.f32 %v2661, %v4003
  %v4486 = vsub.f32 %v2664, %v4006
  %v4487 = vsub.f32 %v2669, %v4009
  %v4488 = vsub.f32 %v2672, %v4012
  %v4489 = vsub.f32 %v2677, %v4015
  %v4490 = vsub.f32 %v2680, %v4018
  %v4491 = vsub.f32 %v2685, %v4021
  %v4492 = vsub.f32 %v2688, %v4024
  %v4493 = vsub.f32 %v2693, %v4027
  %v4494 = vsub.f32 %v2696, %v4030
  %v4495 = vsub.f32 %v2701, %v4033
  %v4496 = vsub.f32 %v2704, %v4036
  %v4497 = vsub.f32 %v2709, %v4039
  %v4498 = vsub.f32 %v2712, %v4042
  %v4499 = vsub.f32 %v2717, %v4045
  %v4500 = vsub.f32 %v2720, %v4048
  %v4501 = vsub.f32 %v2725, %v4051
  %v4502 = vsub.f32 %v2728, %v4054
  %v4503 = vsub.f32 %v2886, %v4057
  %v4504 = vsub.f32 %v2889, %v4060
  %v4505 = vsub.f32 %v2894, %v4063
  %v4506 = vsub.f32 %v2897, %v4066
  %v4507 = vsub.f32 %v2902, %v4069
  %v4508 = vsub.f32 %v2905, %v4072
  %v4509 = vsub.f32 %v2910, %v4075
  %v4510 = vsub.f32 %v2913, %v4078
  %v4511 = vsub.f32 %v2918, %v4081
  %v4512 = vsub.f32 %v2921, %v4084
  %v4513 = vsub.f32 %v2926, %v4087
  %v4514 = vsub.f32 %v2929, %v4090
  %v4515 = vsub.f32 %v2934, %v4093
  %v4516 = vsub.f32 %v2937, %v4096
  %v4517 = vsub.f32 %v2942, %v4099
  %v4518 = vsub.f32 %v2945, %v4102
  %v4519 = vsub.f32 %v2950, %v4105
  %v4520 = vsub.f32 %v2953, %v4108
  %v4521 = vsub.f32 %v2958, %v4111
  %v4522 = vsub.f32 %v2961, %v4114
  %v4523 = vsub.f32 %v2966, %v4117
  %v4524 = vsub.f32 %v2969, %v4120
  %v4525 = vsub.f32 %v2974, %v4123
  %v4526 = vsub.f32 %v2977, %v4126
  %v4527 = vsub.f32 %v2982, %v4129
  %v4528 = vsub.f32 %v2985, %v4132
  %v4529 = vsub.f32 %v2990, %v4135
  %v4530 = vsub.f32 %v2993, %v4138
  %v4531 = vsub.f32 %v2998, %v4141
  %v4532 = vsub.f32 %v3001, %v4144
  %v4533 = vsub.f32 %v3006, %v4147
  %v4534 = vsub.f32 %v3009, %v4150
  %v4535 = vsub.f32 %v3167, %v4153
  %v4536 = vsub.f32 %v3170, %v4156
  %v4537 = vsub.f32 %v3175, %v4159
  %v4538 = vsub.f32 %v3178, %v4162
  %v4539 = vsub.f32 %v3183, %v4165
  %v4540 = vsub.f32 %v3186, %v4168
  %v4541 = vsub.f32 %v3191, %v4171
  %v4542 = vsub.f32 %v3194, %v4174
  %v4543 = vsub.f32 %v3199, %v4177
  %v4544 = vsub.f32 %v3202, %v4180
  %v4545 = vsub.f32 %v3207, %v4183
  %v4546 = vsub.f32 %v3210, %v4186
  %v4547 = vsub.f32 %v3215, %v4189
  %v4548 = vsub.f32 %v3218, %v4192
  %v4549 = vsub.f32 %v3223, %v4195
  %v4550 = vsub.f32 %v3226, %v4198
  %v4551 = vsub.f32 %v3231, %v4201
  %v4552 = vsub.f32 %v3234, %v4204
  %v4553 = vsub.f32 %v3239, %v4207
  %v4554 = vsub.f32 %v3242, %v4210
  %v4555 = vsub.f32 %v3247, %v4213
  %v4556 = vsub.f32 %v3250, %v4216
  %v4557 = vsub.f32 %v3255, %v4219
  %v4558 = vsub.f32 %v3258, %v4222
  %v4559 = vsub.f32 %v3263, %v4225
  %v4560 = vsub.f32 %v3266, %v4228
  %v4561 = vsub.f32 %v3271, %v4231
  %v4562 = vsub.f32 %v3274, %v4234
  %v4563 = vsub.f32 %v3279, %v4237
  %v4564 = vsub.f32 %v3282, %v4240
  %v4565 = vsub.f32 %v3287, %v4243
  %v4566 = vsub.f32 %v3290, %v4246
  %v4567 = vsub.f32 %v3448, %v4249
  %v4568 = vsub.f32 %v3451, %v4252
  %v4569 = vsub.f32 %v3456, %v4255
  %v4570 = vsub.f32 %v3459, %v4258
  %v4571 = vsub.f32 %v3464, %v4261
  %v4572 = vsub.f32 %v3467, %v4264
  %v4573 = vsub.f32 %v3472, %v4267
  %v4574 = vsub.f32 %v3475, %v4270
  %v4575 = vsub.f32 %v3480, %v4273
  %v4576 = vsub.f32 %v3483, %v4276
  %v4577 = vsub.f32 %v3488, %v4279
  %v4578 = vsub.f32 %v3491, %v4282
  %v4579 = vsub.f32 %v3496, %v4285
  %v4580 = vsub.f32 %v3499, %v4288
  %v4581 = vsub.f32 %v3504, %v4291
  %v4582 = vsub.f32 %v3507, %v4294
  %v4583 = vsub.f32 %v3512, %v4297
  %v4584 = vsub.f32 %v3515, %v4300
  %v4585 = vsub.f32 %v3520, %v4303
  %v4586 = vsub.f32 %v3523, %v4306
  %v4587 = vsub.f32 %v3528, %v4309
  %v4588 = vsub.f32 %v3531, %v4312
  %v4589 = vsub.f32 %v3536, %v4315
  %v4590 = vsub.f32 %v3539, %v4318
  %v4591 = vsub.f32 %v3544, %v4321
  %v4592 = vsub.f32 %v3547, %v4324
  %v4593 = vsub.f32 %v3552, %v4327
  %v4594 = vsub.f32 %v3555, %v4330
  %v4595 = vsub.f32 %v3560, %v4333
  %v4596 = vsub.f32 %v3563, %v4336
  %v4597 = vsub.f32 %v3568, %v4339
  %v4598 = vsub.f32 %v3571, %v4342
  %v4599 = vmul.f32 %v4343, 1.442695
  %v4600 = vpow.pop %v4599
  %v4601 = vmul.f32 %v4344, 1.442695
  %v4602 = vpow.pop %v4601
  %v4603 = vmul.f32 %v4345, 1.442695
  %v4604 = vpow.pop %v4603
  %v4605 = vmul.f32 %v4346, 1.442695
  %v4606 = vpow.pop %v4605
  %v4607 = vmul.f32 %v4347, 1.442695
  %v4608 = vpow.pop %v4607
  %v4609 = vmul.f32 %v4348, 1.442695
  %v4610 = vpow.pop %v4609
  %v4611 = vmul.f32 %v4349, 1.442695
  %v4612 = vpow.pop %v4611
  %v4613 = vmul.f32 %v4350, 1.442695
  %v4614 = vpow.pop %v4613
  %v4615 = vmul.f32 %v4351, 1.442695
  %v4616 = vpow.pop %v4615
  %v4617 = vmul.f32 %v4352, 1.442695
  %v4618 = vpow.pop %v4617
  %v4619 = vmul.f32 %v4353, 1.442695
  %v4620 = vpow.pop %v4619
  %v4621 = vmul.f32 %v4354, 1.442695
  %v4622 = vpow.pop %v4621
  %v4623 = vmul.f32 %v4355, 1.442695
  %v4624 = vpow.pop %v4623
  %v4625 = vmul.f32 %v4356, 1.442695
  %v4626 = vpow.pop %v4625
  %v4627 = vmul.f32 %v4357, 1.442695
  %v4628 = vpow.pop %v4627
  %v4629 = vmul.f32 %v4358, 1.442695
  %v4630 = vpow.pop %v4629
  %v4631 = vmul.f32 %v4359, 1.442695
  %v4632 = vpow.pop %v4631
  %v4633 = vmul.f32 %v4360, 1.442695
  %v4634 = vpow.pop %v4633
  %v4635 = vmul.f32 %v4361, 1.442695
  %v4636 = vpow.pop %v4635
  %v4637 = vmul.f32 %v4362, 1.442695
  %v4638 = vpow.pop %v4637
  %v4639 = vmul.f32 %v4363, 1.442695
  %v4640 = vpow.pop %v4639
  %v4641 = vmul.f32 %v4364, 1.442695
  %v4642 = vpow.pop %v4641
  %v4643 = vmul.f32 %v4365, 1.442695
  %v4644 = vpow.pop %v4643
  %v4645 = vmul.f32 %v4366, 1.442695
  %v4646 = vpow.pop %v4645
  %v4647 = vmul.f32 %v4367, 1.442695
  %v4648 = vpow.pop %v4647
  %v4649 = vmul.f32 %v4368, 1.442695
  %v4650 = vpow.pop %v4649
  %v4651 = vmul.f32 %v4369, 1.442695
  %v4652 = vpow.pop %v4651
  %v4653 = vmul.f32 %v4370, 1.442695
  %v4654 = vpow.pop %v4653
  %v4655 = vmul.f32 %v4371, 1.442695
  %v4656 = vpow.pop %v4655
  %v4657 = vmul.f32 %v4372, 1.442695
  %v4658 = vpow.pop %v4657
  %v4659 = vmul.f32 %v4373, 1.442695
  %v4660 = vpow.pop %v4659
  %v4661 = vmul.f32 %v4374, 1.442695
  %v4662 = vpow.pop %v4661
  %v4663 = vmul.f32 %v4375, 1.442695
  %v4664 = vpow.pop %v4663
  %v4665 = vmul.f32 %v4376, 1.442695
  %v4666 = vpow.pop %v4665
  %v4667 = vmul.f32 %v4377, 1.442695
  %v4668 = vpow.pop %v4667
  %v4669 = vmul.f32 %v4378, 1.442695
  %v4670 = vpow.pop %v4669
  %v4671 = vmul.f32 %v4379, 1.442695
  %v4672 = vpow.pop %v4671
  %v4673 = vmul.f32 %v4380, 1.442695
  %v4674 = vpow.pop %v4673
  %v4675 = vmul.f32 %v4381, 1.442695
  %v4676 = vpow.pop %v4675
  %v4677 = vmul.f32 %v4382, 1.442695
  %v4678 = vpow.pop %v4677
  %v4679 = vmul.f32 %v4383, 1.442695
  %v4680 = vpow.pop %v4679
  %v4681 = vmul.f32 %v4384, 1.442695
  %v4682 = vpow.pop %v4681
  %v4683 = vmul.f32 %v4385, 1.442695
  %v4684 = vpow.pop %v4683
  %v4685 = vmul.f32 %v4386, 1.442695
  %v4686 = vpow.pop %v4685
  %v4687 = vmul.f32 %v4387, 1.442695
  %v4688 = vpow.pop %v4687
  %v4689 = vmul.f32 %v4388, 1.442695
  %v4690 = vpow.pop %v4689
  %v4691 = vmul.f32 %v4389, 1.442695
  %v4692 = vpow.pop %v4691
  %v4693 = vmul.f32 %v4390, 1.442695
  %v4694 = vpow.pop %v4693
  %v4695 = vmul.f32 %v4391, 1.442695
  %v4696 = vpow.pop %v4695
  %v4697 = vmul.f32 %v4392, 1.442695
  %v4698 = vpow.pop %v4697
  %v4699 = vmul.f32 %v4393, 1.442695
  %v4700 = vpow.pop %v4699
  %v4701 = vmul.f32 %v4394, 1.442695
  %v4702 = vpow.pop %v4701
  %v4703 = vmul.f32 %v4395, 1.442695
  %v4704 = vpow.pop %v4703
  %v4705 = vmul.f32 %v4396, 1.442695
  %v4706 = vpow.pop %v4705
  %v4707 = vmul.f32 %v4397, 1.442695
  %v4708 = vpow.pop %v4707
  %v4709 = vmul.f32 %v4398, 1.442695
  %v4710 = vpow.pop %v4709
  %v4711 = vmul.f32 %v4399, 1.442695
  %v4712 = vpow.pop %v4711
  %v4713 = vmul.f32 %v4400, 1.442695
  %v4714 = vpow.pop %v4713
  %v4715 = vmul.f32 %v4401, 1.442695
  %v4716 = vpow.pop %v4715
  %v4717 = vmul.f32 %v4402, 1.442695
  %v4718 = vpow.pop %v4717
  %v4719 = vmul.f32 %v4403, 1.442695
  %v4720 = vpow.pop %v4719
  %v4721 = vmul.f32 %v4404, 1.442695
  %v4722 = vpow.pop %v4721
  %v4723 = vmul.f32 %v4405, 1.442695
  %v4724 = vpow.pop %v4723
  %v4725 = vmul.f32 %v4406, 1.442695
  %v4726 = vpow.pop %v4725
  %v4727 = vmul.f32 %v4407, 1.442695
  %v4728 = vpow.pop %v4727
  %v4729 = vmul.f32 %v4408, 1.442695
  %v4730 = vpow.pop %v4729
  %v4731 = vmul.f32 %v4409, 1.442695
  %v4732 = vpow.pop %v4731
  %v4733 = vmul.f32 %v4410, 1.442695
  %v4734 = vpow.pop %v4733
  %v4735 = vmul.f32 %v4411, 1.442695
  %v4736 = vpow.pop %v4735
  %v4737 = vmul.f32 %v4412, 1.442695
  %v4738 = vpow.pop %v4737
  %v4739 = vmul.f32 %v4413, 1.442695
  %v4740 = vpow.pop %v4739
  %v4741 = vmul.f32 %v4414, 1.442695
  %v4742 = vpow.pop %v4741
  %v4743 = vmul.f32 %v4415, 1.442695
  %v4744 = vpow.pop %v4743
  %v4745 = vmul.f32 %v4416, 1.442695
  %v4746 = vpow.pop %v4745
  %v4747 = vmul.f32 %v4417, 1.442695
  %v4748 = vpow.pop %v4747
  %v4749 = vmul.f32 %v4418, 1.442695
  %v4750 = vpow.pop %v4749
  %v4751 = vmul.f32 %v4419, 1.442695
  %v4752 = vpow.pop %v4751
  %v4753 = vmul.f32 %v4420, 1.442695
  %v4754 = vpow.pop %v4753
  %v4755 = vmul.f32 %v4421, 1.442695
  %v4756 = vpow.pop %v4755
  %v4757 = vmul.f32 %v4422, 1.442695
  %v4758 = vpow.pop %v4757
  %v4759 = vmul.f32 %v4423, 1.442695
  %v4760 = vpow.pop %v4759
  %v4761 = vmul.f32 %v4424, 1.442695
  %v4762 = vpow.pop %v4761
  %v4763 = vmul.f32 %v4425, 1.442695
  %v4764 = vpow.pop %v4763
  %v4765 = vmul.f32 %v4426, 1.442695
  %v4766 = vpow.pop %v4765
  %v4767 = vmul.f32 %v4427, 1.442695
  %v4768 = vpow.pop %v4767
  %v4769 = vmul.f32 %v4428, 1.442695
  %v4770 = vpow.pop %v4769
  %v4771 = vmul.f32 %v4429, 1.442695
  %v4772 = vpow.pop %v4771
  %v4773 = vmul.f32 %v4430, 1.442695
  %v4774 = vpow.pop %v4773
  %v4775 = vmul.f32 %v4431, 1.442695
  %v4776 = vpow.pop %v4775
  %v4777 = vmul.f32 %v4432, 1.442695
  %v4778 = vpow.pop %v4777
  %v4779 = vmul.f32 %v4433, 1.442695
  %v4780 = vpow.pop %v4779
  %v4781 = vmul.f32 %v4434, 1.442695
  %v4782 = vpow.pop %v4781
  %v4783 = vmul.f32 %v4435, 1.442695
  %v4784 = vpow.pop %v4783
  %v4785 = vmul.f32 %v4436, 1.442695
  %v4786 = vpow.pop %v4785
  %v4787 = vmul.f32 %v4437, 1.442695
  %v4788 = vpow.pop %v4787
  %v4789 = vmul.f32 %v4438, 1.442695
  %v4790 = vpow.pop %v4789
  %v4791 = vmul.f32 %v4439, 1.442695
  %v4792 = vpow.pop %v4791
  %v4793 = vmul.f32 %v4440, 1.442695
  %v4794 = vpow.pop %v4793
  %v4795 = vmul.f32 %v4441, 1.442695
  %v4796 = vpow.pop %v4795
  %v4797 = vmul.f32 %v4442, 1.442695
  %v4798 = vpow.pop %v4797
  %v4799 = vmul.f32 %v4443, 1.442695
  %v4800 = vpow.pop %v4799
  %v4801 = vmul.f32 %v4444, 1.442695
  %v4802 = vpow.pop %v4801
  %v4803 = vmul.f32 %v4445, 1.442695
  %v4804 = vpow.pop %v4803
  %v4805 = vmul.f32 %v4446, 1.442695
  %v4806 = vpow.pop %v4805
  %v4807 = vmul.f32 %v4447, 1.442695
  %v4808 = vpow.pop %v4807
  %v4809 = vmul.f32 %v4448, 1.442695
  %v4810 = vpow.pop %v4809
  %v4811 = vmul.f32 %v4449, 1.442695
  %v4812 = vpow.pop %v4811
  %v4813 = vmul.f32 %v4450, 1.442695
  %v4814 = vpow.pop %v4813
  %v4815 = vmul.f32 %v4451, 1.442695
  %v4816 = vpow.pop %v4815
  %v4817 = vmul.f32 %v4452, 1.442695
  %v4818 = vpow.pop %v4817
  %v4819 = vmul.f32 %v4453, 1.442695
  %v4820 = vpow.pop %v4819
  %v4821 = vmul.f32 %v4454, 1.442695
  %v4822 = vpow.pop %v4821
  %v4823 = vmul.f32 %v4455, 1.442695
  %v4824 = vpow.pop %v4823
  %v4825 = vmul.f32 %v4456, 1.442695
  %v4826 = vpow.pop %v4825
  %v4827 = vmul.f32 %v4457, 1.442695
  %v4828 = vpow.pop %v4827
  %v4829 = vmul.f32 %v4458, 1.442695
  %v4830 = vpow.pop %v4829
  %v4831 = vmul.f32 %v4459, 1.442695
  %v4832 = vpow.pop %v4831
  %v4833 = vmul.f32 %v4460, 1.442695
  %v4834 = vpow.pop %v4833
  %v4835 = vmul.f32 %v4461, 1.442695
  %v4836 = vpow.pop %v4835
  %v4837 = vmul.f32 %v4462, 1.442695
  %v4838 = vpow.pop %v4837
  %v4839 = vmul.f32 %v4463, 1.442695
  %v4840 = vpow.pop %v4839
  %v4841 = vmul.f32 %v4464, 1.442695
  %v4842 = vpow.pop %v4841
  %v4843 = vmul.f32 %v4465, 1.442695
  %v4844 = vpow.pop %v4843
  %v4845 = vmul.f32 %v4466, 1.442695
  %v4846 = vpow.pop %v4845
  %v4847 = vmul.f32 %v4467, 1.442695
  %v4848 = vpow.pop %v4847
  %v4849 = vmul.f32 %v4468, 1.442695
  %v4850 = vpow.pop %v4849
  %v4851 = vmul.f32 %v4469, 1.442695
  %v4852 = vpow.pop %v4851
  %v4853 = vmul.f32 %v4470, 1.442695
  %v4854 = vpow.pop %v4853
  %v4855 = vmul.f32 %v4471, 1.442695
  %v4856 = vpow.pop %v4855
  %v4857 = vmul.f32 %v4472, 1.442695
  %v4858 = vpow.pop %v4857
  %v4859 = vmul.f32 %v4473, 1.442695
  %v4860 = vpow.pop %v4859
  %v4861 = vmul.f32 %v4474, 1.442695
  %v4862 = vpow.pop %v4861
  %v4863 = vmul.f32 %v4475, 1.442695
  %v4864 = vpow.pop %v4863
  %v4865 = vmul.f32 %v4476, 1.442695
  %v4866 = vpow.pop %v4865
  %v4867 = vmul.f32 %v4477, 1.442695
  %v4868 = vpow.pop %v4867
  %v4869 = vmul.f32 %v4478, 1.442695
  %v4870 = vpow.pop %v4869
  %v4871 = vmul.f32 %v4479, 1.442695
  %v4872 = vpow.pop %v4871
  %v4873 = vmul.f32 %v4480, 1.442695
  %v4874 = vpow.pop %v4873
  %v4875 = vmul.f32 %v4481, 1.442695
  %v4876 = vpow.pop %v4875
  %v4877 = vmul.f32 %v4482, 1.442695
  %v4878 = vpow.pop %v4877
  %v4879 = vmul.f32 %v4483, 1.442695
  %v4880 = vpow.pop %v4879
  %v4881 = vmul.f32 %v4484, 1.442695
  %v4882 = vpow.pop %v4881
  %v4883 = vmul.f32 %v4485, 1.442695
  %v4884 = vpow.pop %v4883
  %v4885 = vmul.f32 %v4486, 1.442695
  %v4886 = vpow.pop %v4885
  %v4887 = vmul.f32 %v4487, 1.442695
  %v4888 = vpow.pop %v4887
  %v4889 = vmul.f32 %v4488, 1.442695
  %v4890 = vpow.pop %v4889
  %v4891 = vmul.f32 %v4489, 1.442695
  %v4892 = vpow.pop %v4891
  %v4893 = vmul.f32 %v4490, 1.442695
  %v4894 = vpow.pop %v4893
  %v4895 = vmul.f32 %v4491, 1.442695
  %v4896 = vpow.pop %v4895
  %v4897 = vmul.f32 %v4492, 1.442695
  %v4898 = vpow.pop %v4897
  %v4899 = vmul.f32 %v4493, 1.442695
  %v4900 = vpow.pop %v4899
  %v4901 = vmul.f32 %v4494, 1.442695
  %v4902 = vpow.pop %v4901
  %v4903 = vmul.f32 %v4495, 1.442695
  %v4904 = vpow.pop %v4903
  %v4905 = vmul.f32 %v4496, 1.442695
  %v4906 = vpow.pop %v4905
  %v4907 = vmul.f32 %v4497, 1.442695
  %v4908 = vpow.pop %v4907
  %v4909 = vmul.f32 %v4498, 1.442695
  %v4910 = vpow.pop %v4909
  %v4911 = vmul.f32 %v4499, 1.442695
  %v4912 = vpow.pop %v4911
  %v4913 = vmul.f32 %v4500, 1.442695
  %v4914 = vpow.pop %v4913
  %v4915 = vmul.f32 %v4501, 1.442695
  %v4916 = vpow.pop %v4915
  %v4917 = vmul.f32 %v4502, 1.442695
  %v4918 = vpow.pop %v4917
  %v4919 = vmul.f32 %v4503, 1.442695
  %v4920 = vpow.pop %v4919
  %v4921 = vmul.f32 %v4504, 1.442695
  %v4922 = vpow.pop %v4921
  %v4923 = vmul.f32 %v4505, 1.442695
  %v4924 = vpow.pop %v4923
  %v4925 = vmul.f32 %v4506, 1.442695
  %v4926 = vpow.pop %v4925
  %v4927 = vmul.f32 %v4507, 1.442695
  %v4928 = vpow.pop %v4927
  %v4929 = vmul.f32 %v4508, 1.442695
  %v4930 = vpow.pop %v4929
  %v4931 = vmul.f32 %v4509, 1.442695
  %v4932 = vpow.pop %v4931
  %v4933 = vmul.f32 %v4510, 1.442695
  %v4934 = vpow.pop %v4933
  %v4935 = vmul.f32 %v4511, 1.442695
  %v4936 = vpow.pop %v4935
  %v4937 = vmul.f32 %v4512, 1.442695
  %v4938 = vpow.pop %v4937
  %v4939 = vmul.f32 %v4513, 1.442695
  %v4940 = vpow.pop %v4939
  %v4941 = vmul.f32 %v4514, 1.442695
  %v4942 = vpow.pop %v4941
  %v4943 = vmul.f32 %v4515, 1.442695
  %v4944 = vpow.pop %v4943
  %v4945 = vmul.f32 %v4516, 1.442695
  %v4946 = vpow.pop %v4945
  %v4947 = vmul.f32 %v4517, 1.442695
  %v4948 = vpow.pop %v4947
  %v4949 = vmul.f32 %v4518, 1.442695
  %v4950 = vpow.pop %v4949
  %v4951 = vmul.f32 %v4519, 1.442695
  %v4952 = vpow.pop %v4951
  %v4953 = vmul.f32 %v4520, 1.442695
  %v4954 = vpow.pop %v4953
  %v4955 = vmul.f32 %v4521, 1.442695
  %v4956 = vpow.pop %v4955
  %v4957 = vmul.f32 %v4522, 1.442695
  %v4958 = vpow.pop %v4957
  %v4959 = vmul.f32 %v4523, 1.442695
  %v4960 = vpow.pop %v4959
  %v4961 = vmul.f32 %v4524, 1.442695
  %v4962 = vpow.pop %v4961
  %v4963 = vmul.f32 %v4525, 1.442695
  %v4964 = vpow.pop %v4963
  %v4965 = vmul.f32 %v4526, 1.442695
  %v4966 = vpow.pop %v4965
  %v4967 = vmul.f32 %v4527, 1.442695
  %v4968 = vpow.pop %v4967
  %v4969 = vmul.f32 %v4528, 1.442695
  %v4970 = vpow.pop %v4969
  %v4971 = vmul.f32 %v4529, 1.442695
  %v4972 = vpow.pop %v4971
  %v4973 = vmul.f32 %v4530, 1.442695
  %v4974 = vpow.pop %v4973
  %v4975 = vmul.f32 %v4531, 1.442695
  %v4976 = vpow.pop %v4975
  %v4977 = vmul.f32 %v4532, 1.442695
  %v4978 = vpow.pop %v4977
  %v4979 = vmul.f32 %v4533, 1.442695
  %v4980 = vpow.pop %v4979
  %v4981 = vmul.f32 %v4534, 1.442695
  %v4982 = vpow.pop %v4981
  %v4983 = vmul.f32 %v4535, 1.442695
  %v4984 = vpow.pop %v4983
  %v4985 = vmul.f32 %v4536, 1.442695
  %v4986 = vpow.pop %v4985
  %v4987 = vmul.f32 %v4537, 1.442695
  %v4988 = vpow.pop %v4987
  %v4989 = vmul.f32 %v4538, 1.442695
  %v4990 = vpow.pop %v4989
  %v4991 = vmul.f32 %v4539, 1.442695
  %v4992 = vpow.pop %v4991
  %v4993 = vmul.f32 %v4540, 1.442695
  %v4994 = vpow.pop %v4993
  %v4995 = vmul.f32 %v4541, 1.442695
  %v4996 = vpow.pop %v4995
  %v4997 = vmul.f32 %v4542, 1.442695
  %v4998 = vpow.pop %v4997
  %v4999 = vmul.f32 %v4543, 1.442695
  %v5000 = vpow.pop %v4999
  %v5001 = vmul.f32 %v4544, 1.442695
  %v5002 = vpow.pop %v5001
  %v5003 = vmul.f32 %v4545, 1.442695
  %v5004 = vpow.pop %v5003
  %v5005 = vmul.f32 %v4546, 1.442695
  %v5006 = vpow.pop %v5005
  %v5007 = vmul.f32 %v4547, 1.442695
  %v5008 = vpow.pop %v5007
  %v5009 = vmul.f32 %v4548, 1.442695
  %v5010 = vpow.pop %v5009
  %v5011 = vmul.f32 %v4549, 1.442695
  %v5012 = vpow.pop %v5011
  %v5013 = vmul.f32 %v4550, 1.442695
  %v5014 = vpow.pop %v5013
  %v5015 = vmul.f32 %v4551, 1.442695
  %v5016 = vpow.pop %v5015
  %v5017 = vmul.f32 %v4552, 1.442695
  %v5018 = vpow.pop %v5017
  %v5019 = vmul.f32 %v4553, 1.442695
  %v5020 = vpow.pop %v5019
  %v5021 = vmul.f32 %v4554, 1.442695
  %v5022 = vpow.pop %v5021
  %v5023 = vmul.f32 %v4555, 1.442695
  %v5024 = vpow.pop %v5023
  %v5025 = vmul.f32 %v4556, 1.442695
  %v5026 = vpow.pop %v5025
  %v5027 = vmul.f32 %v4557, 1.442695
  %v5028 = vpow.pop %v5027
  %v5029 = vmul.f32 %v4558, 1.442695
  %v5030 = vpow.pop %v5029
  %v5031 = vmul.f32 %v4559, 1.442695
  %v5032 = vpow.pop %v5031
  %v5033 = vmul.f32 %v4560, 1.442695
  %v5034 = vpow.pop %v5033
  %v5035 = vmul.f32 %v4561, 1.442695
  %v5036 = vpow.pop %v5035
  %v5037 = vmul.f32 %v4562, 1.442695
  %v5038 = vpow.pop %v5037
  %v5039 = vmul.f32 %v4563, 1.442695
  %v5040 = vpow.pop %v5039
  %v5041 = vmul.f32 %v4564, 1.442695
  %v5042 = vpow.pop %v5041
  %v5043 = vmul.f32 %v4565, 1.442695
  %v5044 = vpow.pop %v5043
  %v5045 = vmul.f32 %v4566, 1.442695
  %v5046 = vpow.pop %v5045
  %v5047 = vmul.f32 %v4567, 1.442695
  %v5048 = vpow.pop %v5047
  %v5049 = vmul.f32 %v4568, 1.442695
  %v5050 = vpow.pop %v5049
  %v5051 = vmul.f32 %v4569, 1.442695
  %v5052 = vpow.pop %v5051
  %v5053 = vmul.f32 %v4570, 1.442695
  %v5054 = vpow.pop %v5053
  %v5055 = vmul.f32 %v4571, 1.442695
  %v5056 = vpow.pop %v5055
  %v5057 = vmul.f32 %v4572, 1.442695
  %v5058 = vpow.pop %v5057
  %v5059 = vmul.f32 %v4573, 1.442695
  %v5060 = vpow.pop %v5059
  %v5061 = vmul.f32 %v4574, 1.442695
  %v5062 = vpow.pop %v5061
  %v5063 = vmul.f32 %v4575, 1.442695
  %v5064 = vpow.pop %v5063
  %v5065 = vmul.f32 %v4576, 1.442695
  %v5066 = vpow.pop %v5065
  %v5067 = vmul.f32 %v4577, 1.442695
  %v5068 = vpow.pop %v5067
  %v5069 = vmul.f32 %v4578, 1.442695
  %v5070 = vpow.pop %v5069
  %v5071 = vmul.f32 %v4579, 1.442695
  %v5072 = vpow.pop %v5071
  %v5073 = vmul.f32 %v4580, 1.442695
  %v5074 = vpow.pop %v5073
  %v5075 = vmul.f32 %v4581, 1.442695
  %v5076 = vpow.pop %v5075
  %v5077 = vmul.f32 %v4582, 1.442695
  %v5078 = vpow.pop %v5077
  %v5079 = vmul.f32 %v4583, 1.442695
  %v5080 = vpow.pop %v5079
  %v5081 = vmul.f32 %v4584, 1.442695
  %v5082 = vpow.pop %v5081
  %v5083 = vmul.f32 %v4585, 1.442695
  %v5084 = vpow.pop %v5083
  %v5085 = vmul.f32 %v4586, 1.442695
  %v5086 = vpow.pop %v5085
  %v5087 = vmul.f32 %v4587, 1.442695
  %v5088 = vpow.pop %v5087
  %v5089 = vmul.f32 %v4588, 1.442695
  %v5090 = vpow.pop %v5089
  %v5091 = vmul.f32 %v4589, 1.442695
  %v5092 = vpow.pop %v5091
  %v5093 = vmul.f32 %v4590, 1.442695
  %v5094 = vpow.pop %v5093
  %v5095 = vmul.f32 %v4591, 1.442695
  %v5096 = vpow.pop %v5095
  %v5097 = vmul.f32 %v4592, 1.442695
  %v5098 = vpow.pop %v5097
  %v5099 = vmul.f32 %v4593, 1.442695
  %v5100 = vpow.pop %v5099
  %v5101 = vmul.f32 %v4594, 1.442695
  %v5102 = vpow.pop %v5101
  %v5103 = vmul.f32 %v4595, 1.442695
  %v5104 = vpow.pop %v5103
  %v5105 = vmul.f32 %v4596, 1.442695
  %v5106 = vpow.pop %v5105
  %v5107 = vmul.f32 %v4597, 1.442695
  %v5108 = vpow.pop %v5107
  %v5109 = vmul.f32 %v4598, 1.442695
  %v5110 = vpow.pop %v5109
  %v5111 = vsel %vm3574, %v4600, 0.0
  %5112 = vadd.xlane.f32.xlu0 %v5111
  %v5113 = vpop.xlane.xlu0 %5112
  %v5114 = vsel %vm3574, %v4602, 0.0
  %5115 = vadd.xlane.f32.xlu0 %v5114
  %v5116 = vpop.xlane.xlu0 %5115
  %v5117 = vsel %vm3574, %v4604, 0.0
  %5118 = vadd.xlane.f32.xlu0 %v5117
  %v5119 = vpop.xlane.xlu0 %5118
  %v5120 = vsel %vm3574, %v4606, 0.0
  %5121 = vadd.xlane.f32.xlu0 %v5120
  %v5122 = vpop.xlane.xlu0 %5121
  %v5123 = vsel %vm3574, %v4608, 0.0
  %5124 = vadd.xlane.f32.xlu0 %v5123
  %v5125 = vpop.xlane.xlu0 %5124
  %v5126 = vsel %vm3574, %v4610, 0.0
  %5127 = vadd.xlane.f32.xlu0 %v5126
  %v5128 = vpop.xlane.xlu0 %5127
  %v5129 = vsel %vm3574, %v4612, 0.0
  %5130 = vadd.xlane.f32.xlu0 %v5129
  %v5131 = vpop.xlane.xlu0 %5130
  %v5132 = vsel %vm3574, %v4614, 0.0
  %5133 = vadd.xlane.f32.xlu0 %v5132
  %v5134 = vpop.xlane.xlu0 %5133
  %v5135 = vsel %vm3574, %v4616, 0.0
  %5136 = vadd.xlane.f32.xlu0 %v5135
  %v5137 = vpop.xlane.xlu0 %5136
  %v5138 = vsel %vm3574, %v4618, 0.0
  %5139 = vadd.xlane.f32.xlu0 %v5138
  %v5140 = vpop.xlane.xlu0 %5139
  %v5141 = vsel %vm3574, %v4620, 0.0
  %5142 = vadd.xlane.f32.xlu0 %v5141
  %v5143 = vpop.xlane.xlu0 %5142
  %v5144 = vsel %vm3574, %v4622, 0.0
  %5145 = vadd.xlane.f32.xlu0 %v5144
  %v5146 = vpop.xlane.xlu0 %5145
  %v5147 = vsel %vm3574, %v4624, 0.0
  %5148 = vadd.xlane.f32.xlu0 %v5147
  %v5149 = vpop.xlane.xlu0 %5148
  %v5150 = vsel %vm3574, %v4626, 0.0
  %5151 = vadd.xlane.f32.xlu0 %v5150
  %v5152 = vpop.xlane.xlu0 %5151
  %v5153 = vsel %vm3574, %v4628, 0.0
  %5154 = vadd.xlane.f32.xlu0 %v5153
  %v5155 = vpop.xlane.xlu0 %5154
  %v5156 = vsel %vm3574, %v4630, 0.0
  %5157 = vadd.xlane.f32.xlu0 %v5156
  %v5158 = vpop.xlane.xlu0 %5157
  %v5159 = vsel %vm3574, %v4632, 0.0
  %5160 = vadd.xlane.f32.xlu0 %v5159
  %v5161 = vpop.xlane.xlu0 %5160
  %v5162 = vsel %vm3574, %v4634, 0.0
  %5163 = vadd.xlane.f32.xlu0 %v5162
  %v5164 = vpop.xlane.xlu0 %5163
  %v5165 = vsel %vm3574, %v4636, 0.0
  %5166 = vadd.xlane.f32.xlu0 %v5165
  %v5167 = vpop.xlane.xlu0 %5166
  %v5168 = vsel %vm3574, %v4638, 0.0
  %5169 = vadd.xlane.f32.xlu0 %v5168
  %v5170 = vpop.xlane.xlu0 %5169
  %v5171 = vsel %vm3574, %v4640, 0.0
  %5172 = vadd.xlane.f32.xlu0 %v5171
  %v5173 = vpop.xlane.xlu0 %5172
  %v5174 = vsel %vm3574, %v4642, 0.0
  %5175 = vadd.xlane.f32.xlu0 %v5174
  %v5176 = vpop.xlane.xlu0 %5175
  %v5177 = vsel %vm3574, %v4644, 0.0
  %5178 = vadd.xlane.f32.xlu0 %v5177
  %v5179 = vpop.xlane.xlu0 %5178
  %v5180 = vsel %vm3574, %v4646, 0.0
  %5181 = vadd.xlane.f32.xlu0 %v5180
  %v5182 = vpop.xlane.xlu0 %5181
  %v5183 = vsel %vm3574, %v4648, 0.0
  %5184 = vadd.xlane.f32.xlu0 %v5183
  %v5185 = vpop.xlane.xlu0 %5184
  %v5186 = vsel %vm3574, %v4650, 0.0
  %5187 = vadd.xlane.f32.xlu0 %v5186
  %v5188 = vpop.xlane.xlu0 %5187
  %v5189 = vsel %vm3574, %v4652, 0.0
  %5190 = vadd.xlane.f32.xlu0 %v5189
  %v5191 = vpop.xlane.xlu0 %5190
  %v5192 = vsel %vm3574, %v4654, 0.0
  %5193 = vadd.xlane.f32.xlu0 %v5192
  %v5194 = vpop.xlane.xlu0 %5193
  %v5195 = vsel %vm3574, %v4656, 0.0
  %5196 = vadd.xlane.f32.xlu0 %v5195
  %v5197 = vpop.xlane.xlu0 %5196
  %v5198 = vsel %vm3574, %v4658, 0.0
  %5199 = vadd.xlane.f32.xlu0 %v5198
  %v5200 = vpop.xlane.xlu0 %5199
  %v5201 = vsel %vm3574, %v4660, 0.0
  %5202 = vadd.xlane.f32.xlu0 %v5201
  %v5203 = vpop.xlane.xlu0 %5202
  %v5204 = vsel %vm3574, %v4662, 0.0
  %5205 = vadd.xlane.f32.xlu0 %v5204
  %v5206 = vpop.xlane.xlu0 %5205
  %v5207 = vsel %vm3574, %v4664, 0.0
  %5208 = vadd.xlane.f32.xlu0 %v5207
  %v5209 = vpop.xlane.xlu0 %5208
  %v5210 = vsel %vm3574, %v4666, 0.0
  %5211 = vadd.xlane.f32.xlu0 %v5210
  %v5212 = vpop.xlane.xlu0 %5211
  %v5213 = vsel %vm3574, %v4668, 0.0
  %5214 = vadd.xlane.f32.xlu0 %v5213
  %v5215 = vpop.xlane.xlu0 %5214
  %v5216 = vsel %vm3574, %v4670, 0.0
  %5217 = vadd.xlane.f32.xlu0 %v5216
  %v5218 = vpop.xlane.xlu0 %5217
  %v5219 = vsel %vm3574, %v4672, 0.0
  %5220 = vadd.xlane.f32.xlu0 %v5219
  %v5221 = vpop.xlane.xlu0 %5220
  %v5222 = vsel %vm3574, %v4674, 0.0
  %5223 = vadd.xlane.f32.xlu0 %v5222
  %v5224 = vpop.xlane.xlu0 %5223
  %v5225 = vsel %vm3574, %v4676, 0.0
  %5226 = vadd.xlane.f32.xlu0 %v5225
  %v5227 = vpop.xlane.xlu0 %5226
  %v5228 = vsel %vm3574, %v4678, 0.0
  %5229 = vadd.xlane.f32.xlu0 %v5228
  %v5230 = vpop.xlane.xlu0 %5229
  %v5231 = vsel %vm3574, %v4680, 0.0
  %5232 = vadd.xlane.f32.xlu0 %v5231
  %v5233 = vpop.xlane.xlu0 %5232
  %v5234 = vsel %vm3574, %v4682, 0.0
  %5235 = vadd.xlane.f32.xlu0 %v5234
  %v5236 = vpop.xlane.xlu0 %5235
  %v5237 = vsel %vm3574, %v4684, 0.0
  %5238 = vadd.xlane.f32.xlu0 %v5237
  %v5239 = vpop.xlane.xlu0 %5238
  %v5240 = vsel %vm3574, %v4686, 0.0
  %5241 = vadd.xlane.f32.xlu0 %v5240
  %v5242 = vpop.xlane.xlu0 %5241
  %v5243 = vsel %vm3574, %v4688, 0.0
  %5244 = vadd.xlane.f32.xlu0 %v5243
  %v5245 = vpop.xlane.xlu0 %5244
  %v5246 = vsel %vm3574, %v4690, 0.0
  %5247 = vadd.xlane.f32.xlu0 %v5246
  %v5248 = vpop.xlane.xlu0 %5247
  %v5249 = vsel %vm3574, %v4692, 0.0
  %5250 = vadd.xlane.f32.xlu0 %v5249
  %v5251 = vpop.xlane.xlu0 %5250
  %v5252 = vsel %vm3574, %v4694, 0.0
  %5253 = vadd.xlane.f32.xlu0 %v5252
  %v5254 = vpop.xlane.xlu0 %5253
  %v5255 = vsel %vm3574, %v4696, 0.0
  %5256 = vadd.xlane.f32.xlu0 %v5255
  %v5257 = vpop.xlane.xlu0 %5256
  %v5258 = vsel %vm3574, %v4698, 0.0
  %5259 = vadd.xlane.f32.xlu0 %v5258
  %v5260 = vpop.xlane.xlu0 %5259
  %v5261 = vsel %vm3574, %v4700, 0.0
  %5262 = vadd.xlane.f32.xlu0 %v5261
  %v5263 = vpop.xlane.xlu0 %5262
  %v5264 = vsel %vm3574, %v4702, 0.0
  %5265 = vadd.xlane.f32.xlu0 %v5264
  %v5266 = vpop.xlane.xlu0 %5265
  %v5267 = vsel %vm3574, %v4704, 0.0
  %5268 = vadd.xlane.f32.xlu0 %v5267
  %v5269 = vpop.xlane.xlu0 %5268
  %v5270 = vsel %vm3574, %v4706, 0.0
  %5271 = vadd.xlane.f32.xlu0 %v5270
  %v5272 = vpop.xlane.xlu0 %5271
  %v5273 = vsel %vm3574, %v4708, 0.0
  %5274 = vadd.xlane.f32.xlu0 %v5273
  %v5275 = vpop.xlane.xlu0 %5274
  %v5276 = vsel %vm3574, %v4710, 0.0
  %5277 = vadd.xlane.f32.xlu0 %v5276
  %v5278 = vpop.xlane.xlu0 %5277
  %v5279 = vsel %vm3574, %v4712, 0.0
  %5280 = vadd.xlane.f32.xlu0 %v5279
  %v5281 = vpop.xlane.xlu0 %5280
  %v5282 = vsel %vm3574, %v4714, 0.0
  %5283 = vadd.xlane.f32.xlu0 %v5282
  %v5284 = vpop.xlane.xlu0 %5283
  %v5285 = vsel %vm3574, %v4716, 0.0
  %5286 = vadd.xlane.f32.xlu0 %v5285
  %v5287 = vpop.xlane.xlu0 %5286
  %v5288 = vsel %vm3574, %v4718, 0.0
  %5289 = vadd.xlane.f32.xlu0 %v5288
  %v5290 = vpop.xlane.xlu0 %5289
  %v5291 = vsel %vm3574, %v4720, 0.0
  %5292 = vadd.xlane.f32.xlu0 %v5291
  %v5293 = vpop.xlane.xlu0 %5292
  %v5294 = vsel %vm3574, %v4722, 0.0
  %5295 = vadd.xlane.f32.xlu0 %v5294
  %v5296 = vpop.xlane.xlu0 %5295
  %v5297 = vsel %vm3574, %v4724, 0.0
  %5298 = vadd.xlane.f32.xlu0 %v5297
  %v5299 = vpop.xlane.xlu0 %5298
  %v5300 = vsel %vm3574, %v4726, 0.0
  %5301 = vadd.xlane.f32.xlu0 %v5300
  %v5302 = vpop.xlane.xlu0 %5301
  %v5303 = vsel %vm3574, %v4728, 0.0
  %5304 = vadd.xlane.f32.xlu0 %v5303
  %v5305 = vpop.xlane.xlu0 %5304
  %v5306 = vsel %vm3574, %v4730, 0.0
  %5307 = vadd.xlane.f32.xlu0 %v5306
  %v5308 = vpop.xlane.xlu0 %5307
  %v5309 = vsel %vm3574, %v4732, 0.0
  %5310 = vadd.xlane.f32.xlu0 %v5309
  %v5311 = vpop.xlane.xlu0 %5310
  %v5312 = vsel %vm3574, %v4734, 0.0
  %5313 = vadd.xlane.f32.xlu0 %v5312
  %v5314 = vpop.xlane.xlu0 %5313
  %v5315 = vsel %vm3574, %v4736, 0.0
  %5316 = vadd.xlane.f32.xlu0 %v5315
  %v5317 = vpop.xlane.xlu0 %5316
  %v5318 = vsel %vm3574, %v4738, 0.0
  %5319 = vadd.xlane.f32.xlu0 %v5318
  %v5320 = vpop.xlane.xlu0 %5319
  %v5321 = vsel %vm3574, %v4740, 0.0
  %5322 = vadd.xlane.f32.xlu0 %v5321
  %v5323 = vpop.xlane.xlu0 %5322
  %v5324 = vsel %vm3574, %v4742, 0.0
  %5325 = vadd.xlane.f32.xlu0 %v5324
  %v5326 = vpop.xlane.xlu0 %5325
  %v5327 = vsel %vm3574, %v4744, 0.0
  %5328 = vadd.xlane.f32.xlu0 %v5327
  %v5329 = vpop.xlane.xlu0 %5328
  %v5330 = vsel %vm3574, %v4746, 0.0
  %5331 = vadd.xlane.f32.xlu0 %v5330
  %v5332 = vpop.xlane.xlu0 %5331
  %v5333 = vsel %vm3574, %v4748, 0.0
  %5334 = vadd.xlane.f32.xlu0 %v5333
  %v5335 = vpop.xlane.xlu0 %5334
  %v5336 = vsel %vm3574, %v4750, 0.0
  %5337 = vadd.xlane.f32.xlu0 %v5336
  %v5338 = vpop.xlane.xlu0 %5337
  %v5339 = vsel %vm3574, %v4752, 0.0
  %5340 = vadd.xlane.f32.xlu0 %v5339
  %v5341 = vpop.xlane.xlu0 %5340
  %v5342 = vsel %vm3574, %v4754, 0.0
  %5343 = vadd.xlane.f32.xlu0 %v5342
  %v5344 = vpop.xlane.xlu0 %5343
  %v5345 = vsel %vm3574, %v4756, 0.0
  %5346 = vadd.xlane.f32.xlu0 %v5345
  %v5347 = vpop.xlane.xlu0 %5346
  %v5348 = vsel %vm3574, %v4758, 0.0
  %5349 = vadd.xlane.f32.xlu0 %v5348
  %v5350 = vpop.xlane.xlu0 %5349
  %v5351 = vsel %vm3574, %v4760, 0.0
  %5352 = vadd.xlane.f32.xlu0 %v5351
  %v5353 = vpop.xlane.xlu0 %5352
  %v5354 = vsel %vm3574, %v4762, 0.0
  %5355 = vadd.xlane.f32.xlu0 %v5354
  %v5356 = vpop.xlane.xlu0 %5355
  %v5357 = vsel %vm3574, %v4764, 0.0
  %5358 = vadd.xlane.f32.xlu0 %v5357
  %v5359 = vpop.xlane.xlu0 %5358
  %v5360 = vsel %vm3574, %v4766, 0.0
  %5361 = vadd.xlane.f32.xlu0 %v5360
  %v5362 = vpop.xlane.xlu0 %5361
  %v5363 = vsel %vm3574, %v4768, 0.0
  %5364 = vadd.xlane.f32.xlu0 %v5363
  %v5365 = vpop.xlane.xlu0 %5364
  %v5366 = vsel %vm3574, %v4770, 0.0
  %5367 = vadd.xlane.f32.xlu0 %v5366
  %v5368 = vpop.xlane.xlu0 %5367
  %v5369 = vsel %vm3574, %v4772, 0.0
  %5370 = vadd.xlane.f32.xlu0 %v5369
  %v5371 = vpop.xlane.xlu0 %5370
  %v5372 = vsel %vm3574, %v4774, 0.0
  %5373 = vadd.xlane.f32.xlu0 %v5372
  %v5374 = vpop.xlane.xlu0 %5373
  %v5375 = vsel %vm3574, %v4776, 0.0
  %5376 = vadd.xlane.f32.xlu0 %v5375
  %v5377 = vpop.xlane.xlu0 %5376
  %v5378 = vsel %vm3574, %v4778, 0.0
  %5379 = vadd.xlane.f32.xlu0 %v5378
  %v5380 = vpop.xlane.xlu0 %5379
  %v5381 = vsel %vm3574, %v4780, 0.0
  %5382 = vadd.xlane.f32.xlu0 %v5381
  %v5383 = vpop.xlane.xlu0 %5382
  %v5384 = vsel %vm3574, %v4782, 0.0
  %5385 = vadd.xlane.f32.xlu0 %v5384
  %v5386 = vpop.xlane.xlu0 %5385
  %v5387 = vsel %vm3574, %v4784, 0.0
  %5388 = vadd.xlane.f32.xlu0 %v5387
  %v5389 = vpop.xlane.xlu0 %5388
  %v5390 = vsel %vm3574, %v4786, 0.0
  %5391 = vadd.xlane.f32.xlu0 %v5390
  %v5392 = vpop.xlane.xlu0 %5391
  %v5393 = vsel %vm3574, %v4788, 0.0
  %5394 = vadd.xlane.f32.xlu0 %v5393
  %v5395 = vpop.xlane.xlu0 %5394
  %v5396 = vsel %vm3574, %v4790, 0.0
  %5397 = vadd.xlane.f32.xlu0 %v5396
  %v5398 = vpop.xlane.xlu0 %5397
  %v5399 = vsel %vm3574, %v4792, 0.0
  %5400 = vadd.xlane.f32.xlu0 %v5399
  %v5401 = vpop.xlane.xlu0 %5400
  %v5402 = vsel %vm3574, %v4794, 0.0
  %5403 = vadd.xlane.f32.xlu0 %v5402
  %v5404 = vpop.xlane.xlu0 %5403
  %v5405 = vsel %vm3574, %v4796, 0.0
  %5406 = vadd.xlane.f32.xlu0 %v5405
  %v5407 = vpop.xlane.xlu0 %5406
  %v5408 = vsel %vm3574, %v4798, 0.0
  %5409 = vadd.xlane.f32.xlu0 %v5408
  %v5410 = vpop.xlane.xlu0 %5409
  %v5411 = vsel %vm3574, %v4800, 0.0
  %5412 = vadd.xlane.f32.xlu0 %v5411
  %v5413 = vpop.xlane.xlu0 %5412
  %v5414 = vsel %vm3574, %v4802, 0.0
  %5415 = vadd.xlane.f32.xlu0 %v5414
  %v5416 = vpop.xlane.xlu0 %5415
  %v5417 = vsel %vm3574, %v4804, 0.0
  %5418 = vadd.xlane.f32.xlu0 %v5417
  %v5419 = vpop.xlane.xlu0 %5418
  %v5420 = vsel %vm3574, %v4806, 0.0
  %5421 = vadd.xlane.f32.xlu0 %v5420
  %v5422 = vpop.xlane.xlu0 %5421
  %v5423 = vsel %vm3574, %v4808, 0.0
  %5424 = vadd.xlane.f32.xlu0 %v5423
  %v5425 = vpop.xlane.xlu0 %5424
  %v5426 = vsel %vm3574, %v4810, 0.0
  %5427 = vadd.xlane.f32.xlu0 %v5426
  %v5428 = vpop.xlane.xlu0 %5427
  %v5429 = vsel %vm3574, %v4812, 0.0
  %5430 = vadd.xlane.f32.xlu0 %v5429
  %v5431 = vpop.xlane.xlu0 %5430
  %v5432 = vsel %vm3574, %v4814, 0.0
  %5433 = vadd.xlane.f32.xlu0 %v5432
  %v5434 = vpop.xlane.xlu0 %5433
  %v5435 = vsel %vm3574, %v4816, 0.0
  %5436 = vadd.xlane.f32.xlu0 %v5435
  %v5437 = vpop.xlane.xlu0 %5436
  %v5438 = vsel %vm3574, %v4818, 0.0
  %5439 = vadd.xlane.f32.xlu0 %v5438
  %v5440 = vpop.xlane.xlu0 %5439
  %v5441 = vsel %vm3574, %v4820, 0.0
  %5442 = vadd.xlane.f32.xlu0 %v5441
  %v5443 = vpop.xlane.xlu0 %5442
  %v5444 = vsel %vm3574, %v4822, 0.0
  %5445 = vadd.xlane.f32.xlu0 %v5444
  %v5446 = vpop.xlane.xlu0 %5445
  %v5447 = vsel %vm3574, %v4824, 0.0
  %5448 = vadd.xlane.f32.xlu0 %v5447
  %v5449 = vpop.xlane.xlu0 %5448
  %v5450 = vsel %vm3574, %v4826, 0.0
  %5451 = vadd.xlane.f32.xlu0 %v5450
  %v5452 = vpop.xlane.xlu0 %5451
  %v5453 = vsel %vm3574, %v4828, 0.0
  %5454 = vadd.xlane.f32.xlu0 %v5453
  %v5455 = vpop.xlane.xlu0 %5454
  %v5456 = vsel %vm3574, %v4830, 0.0
  %5457 = vadd.xlane.f32.xlu0 %v5456
  %v5458 = vpop.xlane.xlu0 %5457
  %v5459 = vsel %vm3574, %v4832, 0.0
  %5460 = vadd.xlane.f32.xlu0 %v5459
  %v5461 = vpop.xlane.xlu0 %5460
  %v5462 = vsel %vm3574, %v4834, 0.0
  %5463 = vadd.xlane.f32.xlu0 %v5462
  %v5464 = vpop.xlane.xlu0 %5463
  %v5465 = vsel %vm3574, %v4836, 0.0
  %5466 = vadd.xlane.f32.xlu0 %v5465
  %v5467 = vpop.xlane.xlu0 %5466
  %v5468 = vsel %vm3574, %v4838, 0.0
  %5469 = vadd.xlane.f32.xlu0 %v5468
  %v5470 = vpop.xlane.xlu0 %5469
  %v5471 = vsel %vm3574, %v4840, 0.0
  %5472 = vadd.xlane.f32.xlu0 %v5471
  %v5473 = vpop.xlane.xlu0 %5472
  %v5474 = vsel %vm3574, %v4842, 0.0
  %5475 = vadd.xlane.f32.xlu0 %v5474
  %v5476 = vpop.xlane.xlu0 %5475
  %v5477 = vsel %vm3574, %v4844, 0.0
  %5478 = vadd.xlane.f32.xlu0 %v5477
  %v5479 = vpop.xlane.xlu0 %5478
  %v5480 = vsel %vm3574, %v4846, 0.0
  %5481 = vadd.xlane.f32.xlu0 %v5480
  %v5482 = vpop.xlane.xlu0 %5481
  %v5483 = vsel %vm3574, %v4848, 0.0
  %5484 = vadd.xlane.f32.xlu0 %v5483
  %v5485 = vpop.xlane.xlu0 %5484
  %v5486 = vsel %vm3574, %v4850, 0.0
  %5487 = vadd.xlane.f32.xlu0 %v5486
  %v5488 = vpop.xlane.xlu0 %5487
  %v5489 = vsel %vm3574, %v4852, 0.0
  %5490 = vadd.xlane.f32.xlu0 %v5489
  %v5491 = vpop.xlane.xlu0 %5490
  %v5492 = vsel %vm3574, %v4854, 0.0
  %5493 = vadd.xlane.f32.xlu0 %v5492
  %v5494 = vpop.xlane.xlu0 %5493
  %v5495 = vsel %vm3574, %v4856, 0.0
  %5496 = vadd.xlane.f32.xlu0 %v5495
  %v5497 = vpop.xlane.xlu0 %5496
  %v5498 = vsel %vm3574, %v4858, 0.0
  %5499 = vadd.xlane.f32.xlu0 %v5498
  %v5500 = vpop.xlane.xlu0 %5499
  %v5501 = vsel %vm3574, %v4860, 0.0
  %5502 = vadd.xlane.f32.xlu0 %v5501
  %v5503 = vpop.xlane.xlu0 %5502
  %v5504 = vsel %vm3574, %v4862, 0.0
  %5505 = vadd.xlane.f32.xlu0 %v5504
  %v5506 = vpop.xlane.xlu0 %5505
  %v5507 = vsel %vm3574, %v4864, 0.0
  %5508 = vadd.xlane.f32.xlu0 %v5507
  %v5509 = vpop.xlane.xlu0 %5508
  %v5510 = vsel %vm3574, %v4866, 0.0
  %5511 = vadd.xlane.f32.xlu0 %v5510
  %v5512 = vpop.xlane.xlu0 %5511
  %v5513 = vsel %vm3574, %v4868, 0.0
  %5514 = vadd.xlane.f32.xlu0 %v5513
  %v5515 = vpop.xlane.xlu0 %5514
  %v5516 = vsel %vm3574, %v4870, 0.0
  %5517 = vadd.xlane.f32.xlu0 %v5516
  %v5518 = vpop.xlane.xlu0 %5517
  %v5519 = vsel %vm3574, %v4872, 0.0
  %5520 = vadd.xlane.f32.xlu0 %v5519
  %v5521 = vpop.xlane.xlu0 %5520
  %v5522 = vsel %vm3574, %v4874, 0.0
  %5523 = vadd.xlane.f32.xlu0 %v5522
  %v5524 = vpop.xlane.xlu0 %5523
  %v5525 = vsel %vm3574, %v4876, 0.0
  %5526 = vadd.xlane.f32.xlu0 %v5525
  %v5527 = vpop.xlane.xlu0 %5526
  %v5528 = vsel %vm3574, %v4878, 0.0
  %5529 = vadd.xlane.f32.xlu0 %v5528
  %v5530 = vpop.xlane.xlu0 %5529
  %v5531 = vsel %vm3574, %v4880, 0.0
  %5532 = vadd.xlane.f32.xlu0 %v5531
  %v5533 = vpop.xlane.xlu0 %5532
  %v5534 = vsel %vm3574, %v4882, 0.0
  %5535 = vadd.xlane.f32.xlu0 %v5534
  %v5536 = vpop.xlane.xlu0 %5535
  %v5537 = vsel %vm3574, %v4884, 0.0
  %5538 = vadd.xlane.f32.xlu0 %v5537
  %v5539 = vpop.xlane.xlu0 %5538
  %v5540 = vsel %vm3574, %v4886, 0.0
  %5541 = vadd.xlane.f32.xlu0 %v5540
  %v5542 = vpop.xlane.xlu0 %5541
  %v5543 = vsel %vm3574, %v4888, 0.0
  %5544 = vadd.xlane.f32.xlu0 %v5543
  %v5545 = vpop.xlane.xlu0 %5544
  %v5546 = vsel %vm3574, %v4890, 0.0
  %5547 = vadd.xlane.f32.xlu0 %v5546
  %v5548 = vpop.xlane.xlu0 %5547
  %v5549 = vsel %vm3574, %v4892, 0.0
  %5550 = vadd.xlane.f32.xlu0 %v5549
  %v5551 = vpop.xlane.xlu0 %5550
  %v5552 = vsel %vm3574, %v4894, 0.0
  %5553 = vadd.xlane.f32.xlu0 %v5552
  %v5554 = vpop.xlane.xlu0 %5553
  %v5555 = vsel %vm3574, %v4896, 0.0
  %5556 = vadd.xlane.f32.xlu0 %v5555
  %v5557 = vpop.xlane.xlu0 %5556
  %v5558 = vsel %vm3574, %v4898, 0.0
  %5559 = vadd.xlane.f32.xlu0 %v5558
  %v5560 = vpop.xlane.xlu0 %5559
  %v5561 = vsel %vm3574, %v4900, 0.0
  %5562 = vadd.xlane.f32.xlu0 %v5561
  %v5563 = vpop.xlane.xlu0 %5562
  %v5564 = vsel %vm3574, %v4902, 0.0
  %5565 = vadd.xlane.f32.xlu0 %v5564
  %v5566 = vpop.xlane.xlu0 %5565
  %v5567 = vsel %vm3574, %v4904, 0.0
  %5568 = vadd.xlane.f32.xlu0 %v5567
  %v5569 = vpop.xlane.xlu0 %5568
  %v5570 = vsel %vm3574, %v4906, 0.0
  %5571 = vadd.xlane.f32.xlu0 %v5570
  %v5572 = vpop.xlane.xlu0 %5571
  %v5573 = vsel %vm3574, %v4908, 0.0
  %5574 = vadd.xlane.f32.xlu0 %v5573
  %v5575 = vpop.xlane.xlu0 %5574
  %v5576 = vsel %vm3574, %v4910, 0.0
  %5577 = vadd.xlane.f32.xlu0 %v5576
  %v5578 = vpop.xlane.xlu0 %5577
  %v5579 = vsel %vm3574, %v4912, 0.0
  %5580 = vadd.xlane.f32.xlu0 %v5579
  %v5581 = vpop.xlane.xlu0 %5580
  %v5582 = vsel %vm3574, %v4914, 0.0
  %5583 = vadd.xlane.f32.xlu0 %v5582
  %v5584 = vpop.xlane.xlu0 %5583
  %v5585 = vsel %vm3574, %v4916, 0.0
  %5586 = vadd.xlane.f32.xlu0 %v5585
  %v5587 = vpop.xlane.xlu0 %5586
  %v5588 = vsel %vm3574, %v4918, 0.0
  %5589 = vadd.xlane.f32.xlu0 %v5588
  %v5590 = vpop.xlane.xlu0 %5589
  %v5591 = vsel %vm3574, %v4920, 0.0
  %5592 = vadd.xlane.f32.xlu0 %v5591
  %v5593 = vpop.xlane.xlu0 %5592
  %v5594 = vsel %vm3574, %v4922, 0.0
  %5595 = vadd.xlane.f32.xlu0 %v5594
  %v5596 = vpop.xlane.xlu0 %5595
  %v5597 = vsel %vm3574, %v4924, 0.0
  %5598 = vadd.xlane.f32.xlu0 %v5597
  %v5599 = vpop.xlane.xlu0 %5598
  %v5600 = vsel %vm3574, %v4926, 0.0
  %5601 = vadd.xlane.f32.xlu0 %v5600
  %v5602 = vpop.xlane.xlu0 %5601
  %v5603 = vsel %vm3574, %v4928, 0.0
  %5604 = vadd.xlane.f32.xlu0 %v5603
  %v5605 = vpop.xlane.xlu0 %5604
  %v5606 = vsel %vm3574, %v4930, 0.0
  %5607 = vadd.xlane.f32.xlu0 %v5606
  %v5608 = vpop.xlane.xlu0 %5607
  %v5609 = vsel %vm3574, %v4932, 0.0
  %5610 = vadd.xlane.f32.xlu0 %v5609
  %v5611 = vpop.xlane.xlu0 %5610
  %v5612 = vsel %vm3574, %v4934, 0.0
  %5613 = vadd.xlane.f32.xlu0 %v5612
  %v5614 = vpop.xlane.xlu0 %5613
  %v5615 = vsel %vm3574, %v4936, 0.0
  %5616 = vadd.xlane.f32.xlu0 %v5615
  %v5617 = vpop.xlane.xlu0 %5616
  %v5618 = vsel %vm3574, %v4938, 0.0
  %5619 = vadd.xlane.f32.xlu0 %v5618
  %v5620 = vpop.xlane.xlu0 %5619
  %v5621 = vsel %vm3574, %v4940, 0.0
  %5622 = vadd.xlane.f32.xlu0 %v5621
  %v5623 = vpop.xlane.xlu0 %5622
  %v5624 = vsel %vm3574, %v4942, 0.0
  %5625 = vadd.xlane.f32.xlu0 %v5624
  %v5626 = vpop.xlane.xlu0 %5625
  %v5627 = vsel %vm3574, %v4944, 0.0
  %5628 = vadd.xlane.f32.xlu0 %v5627
  %v5629 = vpop.xlane.xlu0 %5628
  %v5630 = vsel %vm3574, %v4946, 0.0
  %5631 = vadd.xlane.f32.xlu0 %v5630
  %v5632 = vpop.xlane.xlu0 %5631
  %v5633 = vsel %vm3574, %v4948, 0.0
  %5634 = vadd.xlane.f32.xlu0 %v5633
  %v5635 = vpop.xlane.xlu0 %5634
  %v5636 = vsel %vm3574, %v4950, 0.0
  %5637 = vadd.xlane.f32.xlu0 %v5636
  %v5638 = vpop.xlane.xlu0 %5637
  %v5639 = vsel %vm3574, %v4952, 0.0
  %5640 = vadd.xlane.f32.xlu0 %v5639
  %v5641 = vpop.xlane.xlu0 %5640
  %v5642 = vsel %vm3574, %v4954, 0.0
  %5643 = vadd.xlane.f32.xlu0 %v5642
  %v5644 = vpop.xlane.xlu0 %5643
  %v5645 = vsel %vm3574, %v4956, 0.0
  %5646 = vadd.xlane.f32.xlu0 %v5645
  %v5647 = vpop.xlane.xlu0 %5646
  %v5648 = vsel %vm3574, %v4958, 0.0
  %5649 = vadd.xlane.f32.xlu0 %v5648
  %v5650 = vpop.xlane.xlu0 %5649
  %v5651 = vsel %vm3574, %v4960, 0.0
  %5652 = vadd.xlane.f32.xlu0 %v5651
  %v5653 = vpop.xlane.xlu0 %5652
  %v5654 = vsel %vm3574, %v4962, 0.0
  %5655 = vadd.xlane.f32.xlu0 %v5654
  %v5656 = vpop.xlane.xlu0 %5655
  %v5657 = vsel %vm3574, %v4964, 0.0
  %5658 = vadd.xlane.f32.xlu0 %v5657
  %v5659 = vpop.xlane.xlu0 %5658
  %v5660 = vsel %vm3574, %v4966, 0.0
  %5661 = vadd.xlane.f32.xlu0 %v5660
  %v5662 = vpop.xlane.xlu0 %5661
  %v5663 = vsel %vm3574, %v4968, 0.0
  %5664 = vadd.xlane.f32.xlu0 %v5663
  %v5665 = vpop.xlane.xlu0 %5664
  %v5666 = vsel %vm3574, %v4970, 0.0
  %5667 = vadd.xlane.f32.xlu0 %v5666
  %v5668 = vpop.xlane.xlu0 %5667
  %v5669 = vsel %vm3574, %v4972, 0.0
  %5670 = vadd.xlane.f32.xlu0 %v5669
  %v5671 = vpop.xlane.xlu0 %5670
  %v5672 = vsel %vm3574, %v4974, 0.0
  %5673 = vadd.xlane.f32.xlu0 %v5672
  %v5674 = vpop.xlane.xlu0 %5673
  %v5675 = vsel %vm3574, %v4976, 0.0
  %5676 = vadd.xlane.f32.xlu0 %v5675
  %v5677 = vpop.xlane.xlu0 %5676
  %v5678 = vsel %vm3574, %v4978, 0.0
  %5679 = vadd.xlane.f32.xlu0 %v5678
  %v5680 = vpop.xlane.xlu0 %5679
  %v5681 = vsel %vm3574, %v4980, 0.0
  %5682 = vadd.xlane.f32.xlu0 %v5681
  %v5683 = vpop.xlane.xlu0 %5682
  %v5684 = vsel %vm3574, %v4982, 0.0
  %5685 = vadd.xlane.f32.xlu0 %v5684
  %v5686 = vpop.xlane.xlu0 %5685
  %v5687 = vsel %vm3574, %v4984, 0.0
  %5688 = vadd.xlane.f32.xlu0 %v5687
  %v5689 = vpop.xlane.xlu0 %5688
  %v5690 = vsel %vm3574, %v4986, 0.0
  %5691 = vadd.xlane.f32.xlu0 %v5690
  %v5692 = vpop.xlane.xlu0 %5691
  %v5693 = vsel %vm3574, %v4988, 0.0
  %5694 = vadd.xlane.f32.xlu0 %v5693
  %v5695 = vpop.xlane.xlu0 %5694
  %v5696 = vsel %vm3574, %v4990, 0.0
  %5697 = vadd.xlane.f32.xlu0 %v5696
  %v5698 = vpop.xlane.xlu0 %5697
  %v5699 = vsel %vm3574, %v4992, 0.0
  %5700 = vadd.xlane.f32.xlu0 %v5699
  %v5701 = vpop.xlane.xlu0 %5700
  %v5702 = vsel %vm3574, %v4994, 0.0
  %5703 = vadd.xlane.f32.xlu0 %v5702
  %v5704 = vpop.xlane.xlu0 %5703
  %v5705 = vsel %vm3574, %v4996, 0.0
  %5706 = vadd.xlane.f32.xlu0 %v5705
  %v5707 = vpop.xlane.xlu0 %5706
  %v5708 = vsel %vm3574, %v4998, 0.0
  %5709 = vadd.xlane.f32.xlu0 %v5708
  %v5710 = vpop.xlane.xlu0 %5709
  %v5711 = vsel %vm3574, %v5000, 0.0
  %5712 = vadd.xlane.f32.xlu0 %v5711
  %v5713 = vpop.xlane.xlu0 %5712
  %v5714 = vsel %vm3574, %v5002, 0.0
  %5715 = vadd.xlane.f32.xlu0 %v5714
  %v5716 = vpop.xlane.xlu0 %5715
  %v5717 = vsel %vm3574, %v5004, 0.0
  %5718 = vadd.xlane.f32.xlu0 %v5717
  %v5719 = vpop.xlane.xlu0 %5718
  %v5720 = vsel %vm3574, %v5006, 0.0
  %5721 = vadd.xlane.f32.xlu0 %v5720
  %v5722 = vpop.xlane.xlu0 %5721
  %v5723 = vsel %vm3574, %v5008, 0.0
  %5724 = vadd.xlane.f32.xlu0 %v5723
  %v5725 = vpop.xlane.xlu0 %5724
  %v5726 = vsel %vm3574, %v5010, 0.0
  %5727 = vadd.xlane.f32.xlu0 %v5726
  %v5728 = vpop.xlane.xlu0 %5727
  %v5729 = vsel %vm3574, %v5012, 0.0
  %5730 = vadd.xlane.f32.xlu0 %v5729
  %v5731 = vpop.xlane.xlu0 %5730
  %v5732 = vsel %vm3574, %v5014, 0.0
  %5733 = vadd.xlane.f32.xlu0 %v5732
  %v5734 = vpop.xlane.xlu0 %5733
  %v5735 = vsel %vm3574, %v5016, 0.0
  %5736 = vadd.xlane.f32.xlu0 %v5735
  %v5737 = vpop.xlane.xlu0 %5736
  %v5738 = vsel %vm3574, %v5018, 0.0
  %5739 = vadd.xlane.f32.xlu0 %v5738
  %v5740 = vpop.xlane.xlu0 %5739
  %v5741 = vsel %vm3574, %v5020, 0.0
  %5742 = vadd.xlane.f32.xlu0 %v5741
  %v5743 = vpop.xlane.xlu0 %5742
  %v5744 = vsel %vm3574, %v5022, 0.0
  %5745 = vadd.xlane.f32.xlu0 %v5744
  %v5746 = vpop.xlane.xlu0 %5745
  %v5747 = vsel %vm3574, %v5024, 0.0
  %5748 = vadd.xlane.f32.xlu0 %v5747
  %v5749 = vpop.xlane.xlu0 %5748
  %v5750 = vsel %vm3574, %v5026, 0.0
  %5751 = vadd.xlane.f32.xlu0 %v5750
  %v5752 = vpop.xlane.xlu0 %5751
  %v5753 = vsel %vm3574, %v5028, 0.0
  %5754 = vadd.xlane.f32.xlu0 %v5753
  %v5755 = vpop.xlane.xlu0 %5754
  %v5756 = vsel %vm3574, %v5030, 0.0
  %5757 = vadd.xlane.f32.xlu0 %v5756
  %v5758 = vpop.xlane.xlu0 %5757
  %v5759 = vsel %vm3574, %v5032, 0.0
  %5760 = vadd.xlane.f32.xlu0 %v5759
  %v5761 = vpop.xlane.xlu0 %5760
  %v5762 = vsel %vm3574, %v5034, 0.0
  %5763 = vadd.xlane.f32.xlu0 %v5762
  %v5764 = vpop.xlane.xlu0 %5763
  %v5765 = vsel %vm3574, %v5036, 0.0
  %5766 = vadd.xlane.f32.xlu0 %v5765
  %v5767 = vpop.xlane.xlu0 %5766
  %v5768 = vsel %vm3574, %v5038, 0.0
  %5769 = vadd.xlane.f32.xlu0 %v5768
  %v5770 = vpop.xlane.xlu0 %5769
  %v5771 = vsel %vm3574, %v5040, 0.0
  %5772 = vadd.xlane.f32.xlu0 %v5771
  %v5773 = vpop.xlane.xlu0 %5772
  %v5774 = vsel %vm3574, %v5042, 0.0
  %5775 = vadd.xlane.f32.xlu0 %v5774
  %v5776 = vpop.xlane.xlu0 %5775
  %v5777 = vsel %vm3574, %v5044, 0.0
  %5778 = vadd.xlane.f32.xlu0 %v5777
  %v5779 = vpop.xlane.xlu0 %5778
  %v5780 = vsel %vm3574, %v5046, 0.0
  %5781 = vadd.xlane.f32.xlu0 %v5780
  %v5782 = vpop.xlane.xlu0 %5781
  %v5783 = vsel %vm3574, %v5048, 0.0
  %5784 = vadd.xlane.f32.xlu0 %v5783
  %v5785 = vpop.xlane.xlu0 %5784
  %v5786 = vsel %vm3574, %v5050, 0.0
  %5787 = vadd.xlane.f32.xlu0 %v5786
  %v5788 = vpop.xlane.xlu0 %5787
  %v5789 = vsel %vm3574, %v5052, 0.0
  %5790 = vadd.xlane.f32.xlu0 %v5789
  %v5791 = vpop.xlane.xlu0 %5790
  %v5792 = vsel %vm3574, %v5054, 0.0
  %5793 = vadd.xlane.f32.xlu0 %v5792
  %v5794 = vpop.xlane.xlu0 %5793
  %v5795 = vsel %vm3574, %v5056, 0.0
  %5796 = vadd.xlane.f32.xlu0 %v5795
  %v5797 = vpop.xlane.xlu0 %5796
  %v5798 = vsel %vm3574, %v5058, 0.0
  %5799 = vadd.xlane.f32.xlu0 %v5798
  %v5800 = vpop.xlane.xlu0 %5799
  %v5801 = vsel %vm3574, %v5060, 0.0
  %5802 = vadd.xlane.f32.xlu0 %v5801
  %v5803 = vpop.xlane.xlu0 %5802
  %v5804 = vsel %vm3574, %v5062, 0.0
  %5805 = vadd.xlane.f32.xlu0 %v5804
  %v5806 = vpop.xlane.xlu0 %5805
  %v5807 = vsel %vm3574, %v5064, 0.0
  %5808 = vadd.xlane.f32.xlu0 %v5807
  %v5809 = vpop.xlane.xlu0 %5808
  %v5810 = vsel %vm3574, %v5066, 0.0
  %5811 = vadd.xlane.f32.xlu0 %v5810
  %v5812 = vpop.xlane.xlu0 %5811
  %v5813 = vsel %vm3574, %v5068, 0.0
  %5814 = vadd.xlane.f32.xlu0 %v5813
  %v5815 = vpop.xlane.xlu0 %5814
  %v5816 = vsel %vm3574, %v5070, 0.0
  %5817 = vadd.xlane.f32.xlu0 %v5816
  %v5818 = vpop.xlane.xlu0 %5817
  %v5819 = vsel %vm3574, %v5072, 0.0
  %5820 = vadd.xlane.f32.xlu0 %v5819
  %v5821 = vpop.xlane.xlu0 %5820
  %v5822 = vsel %vm3574, %v5074, 0.0
  %5823 = vadd.xlane.f32.xlu0 %v5822
  %v5824 = vpop.xlane.xlu0 %5823
  %v5825 = vsel %vm3574, %v5076, 0.0
  %5826 = vadd.xlane.f32.xlu0 %v5825
  %v5827 = vpop.xlane.xlu0 %5826
  %v5828 = vsel %vm3574, %v5078, 0.0
  %5829 = vadd.xlane.f32.xlu0 %v5828
  %v5830 = vpop.xlane.xlu0 %5829
  %v5831 = vsel %vm3574, %v5080, 0.0
  %5832 = vadd.xlane.f32.xlu0 %v5831
  %v5833 = vpop.xlane.xlu0 %5832
  %v5834 = vsel %vm3574, %v5082, 0.0
  %5835 = vadd.xlane.f32.xlu0 %v5834
  %v5836 = vpop.xlane.xlu0 %5835
  %v5837 = vsel %vm3574, %v5084, 0.0
  %5838 = vadd.xlane.f32.xlu0 %v5837
  %v5839 = vpop.xlane.xlu0 %5838
  %v5840 = vsel %vm3574, %v5086, 0.0
  %5841 = vadd.xlane.f32.xlu0 %v5840
  %v5842 = vpop.xlane.xlu0 %5841
  %v5843 = vsel %vm3574, %v5088, 0.0
  %5844 = vadd.xlane.f32.xlu0 %v5843
  %v5845 = vpop.xlane.xlu0 %5844
  %v5846 = vsel %vm3574, %v5090, 0.0
  %5847 = vadd.xlane.f32.xlu0 %v5846
  %v5848 = vpop.xlane.xlu0 %5847
  %v5849 = vsel %vm3574, %v5092, 0.0
  %5850 = vadd.xlane.f32.xlu0 %v5849
  %v5851 = vpop.xlane.xlu0 %5850
  %v5852 = vsel %vm3574, %v5094, 0.0
  %5853 = vadd.xlane.f32.xlu0 %v5852
  %v5854 = vpop.xlane.xlu0 %5853
  %v5855 = vsel %vm3574, %v5096, 0.0
  %5856 = vadd.xlane.f32.xlu0 %v5855
  %v5857 = vpop.xlane.xlu0 %5856
  %v5858 = vsel %vm3574, %v5098, 0.0
  %5859 = vadd.xlane.f32.xlu0 %v5858
  %v5860 = vpop.xlane.xlu0 %5859
  %v5861 = vsel %vm3574, %v5100, 0.0
  %5862 = vadd.xlane.f32.xlu0 %v5861
  %v5863 = vpop.xlane.xlu0 %5862
  %v5864 = vsel %vm3574, %v5102, 0.0
  %5865 = vadd.xlane.f32.xlu0 %v5864
  %v5866 = vpop.xlane.xlu0 %5865
  %v5867 = vsel %vm3574, %v5104, 0.0
  %5868 = vadd.xlane.f32.xlu0 %v5867
  %v5869 = vpop.xlane.xlu0 %5868
  %v5870 = vsel %vm3574, %v5106, 0.0
  %5871 = vadd.xlane.f32.xlu0 %v5870
  %v5872 = vpop.xlane.xlu0 %5871
  %v5873 = vsel %vm3574, %v5108, 0.0
  %5874 = vadd.xlane.f32.xlu0 %v5873
  %v5875 = vpop.xlane.xlu0 %5874
  %v5876 = vsel %vm3574, %v5110, 0.0
  %5877 = vadd.xlane.f32.xlu0 %v5876
  %v5878 = vpop.xlane.xlu0 %5877
  %v5879 = vrcp.pop %v5113
  %v5880 = vrcp.pop %v5116
  %v5881 = vrcp.pop %v5119
  %v5882 = vrcp.pop %v5122
  %v5883 = vrcp.pop %v5125
  %v5884 = vrcp.pop %v5128
  %v5885 = vrcp.pop %v5131
  %v5886 = vrcp.pop %v5134
  %v5887 = vrcp.pop %v5137
  %v5888 = vrcp.pop %v5140
  %v5889 = vrcp.pop %v5143
  %v5890 = vrcp.pop %v5146
  %v5891 = vrcp.pop %v5149
  %v5892 = vrcp.pop %v5152
  %v5893 = vrcp.pop %v5155
  %v5894 = vrcp.pop %v5158
  %v5895 = vrcp.pop %v5161
  %v5896 = vrcp.pop %v5164
  %v5897 = vrcp.pop %v5167
  %v5898 = vrcp.pop %v5170
  %v5899 = vrcp.pop %v5173
  %v5900 = vrcp.pop %v5176
  %v5901 = vrcp.pop %v5179
  %v5902 = vrcp.pop %v5182
  %v5903 = vrcp.pop %v5185
  %v5904 = vrcp.pop %v5188
  %v5905 = vrcp.pop %v5191
  %v5906 = vrcp.pop %v5194
  %v5907 = vrcp.pop %v5197
  %v5908 = vrcp.pop %v5200
  %v5909 = vrcp.pop %v5203
  %v5910 = vrcp.pop %v5206
  %v5911 = vrcp.pop %v5209
  %v5912 = vrcp.pop %v5212
  %v5913 = vrcp.pop %v5215
  %v5914 = vrcp.pop %v5218
  %v5915 = vrcp.pop %v5221
  %v5916 = vrcp.pop %v5224
  %v5917 = vrcp.pop %v5227
  %v5918 = vrcp.pop %v5230
  %v5919 = vrcp.pop %v5233
  %v5920 = vrcp.pop %v5236
  %v5921 = vrcp.pop %v5239
  %v5922 = vrcp.pop %v5242
  %v5923 = vrcp.pop %v5245
  %v5924 = vrcp.pop %v5248
  %v5925 = vrcp.pop %v5251
  %v5926 = vrcp.pop %v5254
  %v5927 = vrcp.pop %v5257
  %v5928 = vrcp.pop %v5260
  %v5929 = vrcp.pop %v5263
  %v5930 = vrcp.pop %v5266
  %v5931 = vrcp.pop %v5269
  %v5932 = vrcp.pop %v5272
  %v5933 = vrcp.pop %v5275
  %v5934 = vrcp.pop %v5278
  %v5935 = vrcp.pop %v5281
  %v5936 = vrcp.pop %v5284
  %v5937 = vrcp.pop %v5287
  %v5938 = vrcp.pop %v5290
  %v5939 = vrcp.pop %v5293
  %v5940 = vrcp.pop %v5296
  %v5941 = vrcp.pop %v5299
  %v5942 = vrcp.pop %v5302
  %v5943 = vrcp.pop %v5305
  %v5944 = vrcp.pop %v5308
  %v5945 = vrcp.pop %v5311
  %v5946 = vrcp.pop %v5314
  %v5947 = vrcp.pop %v5317
  %v5948 = vrcp.pop %v5320
  %v5949 = vrcp.pop %v5323
  %v5950 = vrcp.pop %v5326
  %v5951 = vrcp.pop %v5329
  %v5952 = vrcp.pop %v5332
  %v5953 = vrcp.pop %v5335
  %v5954 = vrcp.pop %v5338
  %v5955 = vrcp.pop %v5341
  %v5956 = vrcp.pop %v5344
  %v5957 = vrcp.pop %v5347
  %v5958 = vrcp.pop %v5350
  %v5959 = vrcp.pop %v5353
  %v5960 = vrcp.pop %v5356
  %v5961 = vrcp.pop %v5359
  %v5962 = vrcp.pop %v5362
  %v5963 = vrcp.pop %v5365
  %v5964 = vrcp.pop %v5368
  %v5965 = vrcp.pop %v5371
  %v5966 = vrcp.pop %v5374
  %v5967 = vrcp.pop %v5377
  %v5968 = vrcp.pop %v5380
  %v5969 = vrcp.pop %v5383
  %v5970 = vrcp.pop %v5386
  %v5971 = vrcp.pop %v5389
  %v5972 = vrcp.pop %v5392
  %v5973 = vrcp.pop %v5395
  %v5974 = vrcp.pop %v5398
  %v5975 = vrcp.pop %v5401
  %v5976 = vrcp.pop %v5404
  %v5977 = vrcp.pop %v5407
  %v5978 = vrcp.pop %v5410
  %v5979 = vrcp.pop %v5413
  %v5980 = vrcp.pop %v5416
  %v5981 = vrcp.pop %v5419
  %v5982 = vrcp.pop %v5422
  %v5983 = vrcp.pop %v5425
  %v5984 = vrcp.pop %v5428
  %v5985 = vrcp.pop %v5431
  %v5986 = vrcp.pop %v5434
  %v5987 = vrcp.pop %v5437
  %v5988 = vrcp.pop %v5440
  %v5989 = vrcp.pop %v5443
  %v5990 = vrcp.pop %v5446
  %v5991 = vrcp.pop %v5449
  %v5992 = vrcp.pop %v5452
  %v5993 = vrcp.pop %v5455
  %v5994 = vrcp.pop %v5458
  %v5995 = vrcp.pop %v5461
  %v5996 = vrcp.pop %v5464
  %v5997 = vrcp.pop %v5467
  %v5998 = vrcp.pop %v5470
  %v5999 = vrcp.pop %v5473
  %v6000 = vrcp.pop %v5476
  %v6001 = vrcp.pop %v5479
  %v6002 = vrcp.pop %v5482
  %v6003 = vrcp.pop %v5485
  %v6004 = vrcp.pop %v5488
  %v6005 = vrcp.pop %v5491
  %v6006 = vrcp.pop %v5494
  %v6007 = vrcp.pop %v5497
  %v6008 = vrcp.pop %v5500
  %v6009 = vrcp.pop %v5503
  %v6010 = vrcp.pop %v5506
  %v6011 = vrcp.pop %v5509
  %v6012 = vrcp.pop %v5512
  %v6013 = vrcp.pop %v5515
  %v6014 = vrcp.pop %v5518
  %v6015 = vrcp.pop %v5521
  %v6016 = vrcp.pop %v5524
  %v6017 = vrcp.pop %v5527
  %v6018 = vrcp.pop %v5530
  %v6019 = vrcp.pop %v5533
  %v6020 = vrcp.pop %v5536
  %v6021 = vrcp.pop %v5539
  %v6022 = vrcp.pop %v5542
  %v6023 = vrcp.pop %v5545
  %v6024 = vrcp.pop %v5548
  %v6025 = vrcp.pop %v5551
  %v6026 = vrcp.pop %v5554
  %v6027 = vrcp.pop %v5557
  %v6028 = vrcp.pop %v5560
  %v6029 = vrcp.pop %v5563
  %v6030 = vrcp.pop %v5566
  %v6031 = vrcp.pop %v5569
  %v6032 = vrcp.pop %v5572
  %v6033 = vrcp.pop %v5575
  %v6034 = vrcp.pop %v5578
  %v6035 = vrcp.pop %v5581
  %v6036 = vrcp.pop %v5584
  %v6037 = vrcp.pop %v5587
  %v6038 = vrcp.pop %v5590
  %v6039 = vrcp.pop %v5593
  %v6040 = vrcp.pop %v5596
  %v6041 = vrcp.pop %v5599
  %v6042 = vrcp.pop %v5602
  %v6043 = vrcp.pop %v5605
  %v6044 = vrcp.pop %v5608
  %v6045 = vrcp.pop %v5611
  %v6046 = vrcp.pop %v5614
  %v6047 = vrcp.pop %v5617
  %v6048 = vrcp.pop %v5620
  %v6049 = vrcp.pop %v5623
  %v6050 = vrcp.pop %v5626
  %v6051 = vrcp.pop %v5629
  %v6052 = vrcp.pop %v5632
  %v6053 = vrcp.pop %v5635
  %v6054 = vrcp.pop %v5638
  %v6055 = vrcp.pop %v5641
  %v6056 = vrcp.pop %v5644
  %v6057 = vrcp.pop %v5647
  %v6058 = vrcp.pop %v5650
  %v6059 = vrcp.pop %v5653
  %v6060 = vrcp.pop %v5656
  %v6061 = vrcp.pop %v5659
  %v6062 = vrcp.pop %v5662
  %v6063 = vrcp.pop %v5665
  %v6064 = vrcp.pop %v5668
  %v6065 = vrcp.pop %v5671
  %v6066 = vrcp.pop %v5674
  %v6067 = vrcp.pop %v5677
  %v6068 = vrcp.pop %v5680
  %v6069 = vrcp.pop %v5683
  %v6070 = vrcp.pop %v5686
  %v6071 = vrcp.pop %v5689
  %v6072 = vrcp.pop %v5692
  %v6073 = vrcp.pop %v5695
  %v6074 = vrcp.pop %v5698
  %v6075 = vrcp.pop %v5701
  %v6076 = vrcp.pop %v5704
  %v6077 = vrcp.pop %v5707
  %v6078 = vrcp.pop %v5710
  %v6079 = vrcp.pop %v5713
  %v6080 = vrcp.pop %v5716
  %v6081 = vrcp.pop %v5719
  %v6082 = vrcp.pop %v5722
  %v6083 = vrcp.pop %v5725
  %v6084 = vrcp.pop %v5728
  %v6085 = vrcp.pop %v5731
  %v6086 = vrcp.pop %v5734
  %v6087 = vrcp.pop %v5737
  %v6088 = vrcp.pop %v5740
  %v6089 = vrcp.pop %v5743
  %v6090 = vrcp.pop %v5746
  %v6091 = vrcp.pop %v5749
  %v6092 = vrcp.pop %v5752
  %v6093 = vrcp.pop %v5755
  %v6094 = vrcp.pop %v5758
  %v6095 = vrcp.pop %v5761
  %v6096 = vrcp.pop %v5764
  %v6097 = vrcp.pop %v5767
  %v6098 = vrcp.pop %v5770
  %v6099 = vrcp.pop %v5773
  %v6100 = vrcp.pop %v5776
  %v6101 = vrcp.pop %v5779
  %v6102 = vrcp.pop %v5782
  %v6103 = vrcp.pop %v5785
  %v6104 = vrcp.pop %v5788
  %v6105 = vrcp.pop %v5791
  %v6106 = vrcp.pop %v5794
  %v6107 = vrcp.pop %v5797
  %v6108 = vrcp.pop %v5800
  %v6109 = vrcp.pop %v5803
  %v6110 = vrcp.pop %v5806
  %v6111 = vrcp.pop %v5809
  %v6112 = vrcp.pop %v5812
  %v6113 = vrcp.pop %v5815
  %v6114 = vrcp.pop %v5818
  %v6115 = vrcp.pop %v5821
  %v6116 = vrcp.pop %v5824
  %v6117 = vrcp.pop %v5827
  %v6118 = vrcp.pop %v5830
  %v6119 = vrcp.pop %v5833
  %v6120 = vrcp.pop %v5836
  %v6121 = vrcp.pop %v5839
  %v6122 = vrcp.pop %v5842
  %v6123 = vrcp.pop %v5845
  %v6124 = vrcp.pop %v5848
  %v6125 = vrcp.pop %v5851
  %v6126 = vrcp.pop %v5854
  %v6127 = vrcp.pop %v5857
  %v6128 = vrcp.pop %v5860
  %v6129 = vrcp.pop %v5863
  %v6130 = vrcp.pop %v5866
  %v6131 = vrcp.pop %v5869
  %v6132 = vrcp.pop %v5872
  %v6133 = vrcp.pop %v5875
  %v6134 = vrcp.pop %v5878
  %v6135 = vmul.f32 %v4600, %v5879
  %v6136 = vmul.f32 %v4602, %v5880
  %v6137 = vmul.f32 %v4604, %v5881
  %v6138 = vmul.f32 %v4606, %v5882
  %v6139 = vmul.f32 %v4608, %v5883
  %v6140 = vmul.f32 %v4610, %v5884
  %v6141 = vmul.f32 %v4612, %v5885
  %v6142 = vmul.f32 %v4614, %v5886
  %v6143 = vmul.f32 %v4616, %v5887
  %v6144 = vmul.f32 %v4618, %v5888
  %v6145 = vmul.f32 %v4620, %v5889
  %v6146 = vmul.f32 %v4622, %v5890
  %v6147 = vmul.f32 %v4624, %v5891
  %v6148 = vmul.f32 %v4626, %v5892
  %v6149 = vmul.f32 %v4628, %v5893
  %v6150 = vmul.f32 %v4630, %v5894
  %v6151 = vmul.f32 %v4632, %v5895
  %v6152 = vmul.f32 %v4634, %v5896
  %v6153 = vmul.f32 %v4636, %v5897
  %v6154 = vmul.f32 %v4638, %v5898
  %v6155 = vmul.f32 %v4640, %v5899
  %v6156 = vmul.f32 %v4642, %v5900
  %v6157 = vmul.f32 %v4644, %v5901
  %v6158 = vmul.f32 %v4646, %v5902
  %v6159 = vmul.f32 %v4648, %v5903
  %v6160 = vmul.f32 %v4650, %v5904
  %v6161 = vmul.f32 %v4652, %v5905
  %v6162 = vmul.f32 %v4654, %v5906
  %v6163 = vmul.f32 %v4656, %v5907
  %v6164 = vmul.f32 %v4658, %v5908
  %v6165 = vmul.f32 %v4660, %v5909
  %v6166 = vmul.f32 %v4662, %v5910
  %v6167 = vmul.f32 %v4664, %v5911
  %v6168 = vmul.f32 %v4666, %v5912
  %v6169 = vmul.f32 %v4668, %v5913
  %v6170 = vmul.f32 %v4670, %v5914
  %v6171 = vmul.f32 %v4672, %v5915
  %v6172 = vmul.f32 %v4674, %v5916
  %v6173 = vmul.f32 %v4676, %v5917
  %v6174 = vmul.f32 %v4678, %v5918
  %v6175 = vmul.f32 %v4680, %v5919
  %v6176 = vmul.f32 %v4682, %v5920
  %v6177 = vmul.f32 %v4684, %v5921
  %v6178 = vmul.f32 %v4686, %v5922
  %v6179 = vmul.f32 %v4688, %v5923
  %v6180 = vmul.f32 %v4690, %v5924
  %v6181 = vmul.f32 %v4692, %v5925
  %v6182 = vmul.f32 %v4694, %v5926
  %v6183 = vmul.f32 %v4696, %v5927
  %v6184 = vmul.f32 %v4698, %v5928
  %v6185 = vmul.f32 %v4700, %v5929
  %v6186 = vmul.f32 %v4702, %v5930
  %v6187 = vmul.f32 %v4704, %v5931
  %v6188 = vmul.f32 %v4706, %v5932
  %v6189 = vmul.f32 %v4708, %v5933
  %v6190 = vmul.f32 %v4710, %v5934
  %v6191 = vmul.f32 %v4712, %v5935
  %v6192 = vmul.f32 %v4714, %v5936
  %v6193 = vmul.f32 %v4716, %v5937
  %v6194 = vmul.f32 %v4718, %v5938
  %v6195 = vmul.f32 %v4720, %v5939
  %v6196 = vmul.f32 %v4722, %v5940
  %v6197 = vmul.f32 %v4724, %v5941
  %v6198 = vmul.f32 %v4726, %v5942
  %v6199 = vmul.f32 %v4728, %v5943
  %v6200 = vmul.f32 %v4730, %v5944
  %v6201 = vmul.f32 %v4732, %v5945
  %v6202 = vmul.f32 %v4734, %v5946
  %v6203 = vmul.f32 %v4736, %v5947
  %v6204 = vmul.f32 %v4738, %v5948
  %v6205 = vmul.f32 %v4740, %v5949
  %v6206 = vmul.f32 %v4742, %v5950
  %v6207 = vmul.f32 %v4744, %v5951
  %v6208 = vmul.f32 %v4746, %v5952
  %v6209 = vmul.f32 %v4748, %v5953
  %v6210 = vmul.f32 %v4750, %v5954
  %v6211 = vmul.f32 %v4752, %v5955
  %v6212 = vmul.f32 %v4754, %v5956
  %v6213 = vmul.f32 %v4756, %v5957
  %v6214 = vmul.f32 %v4758, %v5958
  %v6215 = vmul.f32 %v4760, %v5959
  %v6216 = vmul.f32 %v4762, %v5960
  %v6217 = vmul.f32 %v4764, %v5961
  %v6218 = vmul.f32 %v4766, %v5962
  %v6219 = vmul.f32 %v4768, %v5963
  %v6220 = vmul.f32 %v4770, %v5964
  %v6221 = vmul.f32 %v4772, %v5965
  %v6222 = vmul.f32 %v4774, %v5966
  %v6223 = vmul.f32 %v4776, %v5967
  %v6224 = vmul.f32 %v4778, %v5968
  %v6225 = vmul.f32 %v4780, %v5969
  %v6226 = vmul.f32 %v4782, %v5970
  %v6227 = vmul.f32 %v4784, %v5971
  %v6228 = vmul.f32 %v4786, %v5972
  %v6229 = vmul.f32 %v4788, %v5973
  %v6230 = vmul.f32 %v4790, %v5974
  %v6231 = vmul.f32 %v4792, %v5975
  %v6232 = vmul.f32 %v4794, %v5976
  %v6233 = vmul.f32 %v4796, %v5977
  %v6234 = vmul.f32 %v4798, %v5978
  %v6235 = vmul.f32 %v4800, %v5979
  %v6236 = vmul.f32 %v4802, %v5980
  %v6237 = vmul.f32 %v4804, %v5981
  %v6238 = vmul.f32 %v4806, %v5982
  %v6239 = vmul.f32 %v4808, %v5983
  %v6240 = vmul.f32 %v4810, %v5984
  %v6241 = vmul.f32 %v4812, %v5985
  %v6242 = vmul.f32 %v4814, %v5986
  %v6243 = vmul.f32 %v4816, %v5987
  %v6244 = vmul.f32 %v4818, %v5988
  %v6245 = vmul.f32 %v4820, %v5989
  %v6246 = vmul.f32 %v4822, %v5990
  %v6247 = vmul.f32 %v4824, %v5991
  %v6248 = vmul.f32 %v4826, %v5992
  %v6249 = vmul.f32 %v4828, %v5993
  %v6250 = vmul.f32 %v4830, %v5994
  %v6251 = vmul.f32 %v4832, %v5995
  %v6252 = vmul.f32 %v4834, %v5996
  %v6253 = vmul.f32 %v4836, %v5997
  %v6254 = vmul.f32 %v4838, %v5998
  %v6255 = vmul.f32 %v4840, %v5999
  %v6256 = vmul.f32 %v4842, %v6000
  %v6257 = vmul.f32 %v4844, %v6001
  %v6258 = vmul.f32 %v4846, %v6002
  %v6259 = vmul.f32 %v4848, %v6003
  %v6260 = vmul.f32 %v4850, %v6004
  %v6261 = vmul.f32 %v4852, %v6005
  %v6262 = vmul.f32 %v4854, %v6006
  %v6263 = vmul.f32 %v4856, %v6007
  %v6264 = vmul.f32 %v4858, %v6008
  %v6265 = vmul.f32 %v4860, %v6009
  %v6266 = vmul.f32 %v4862, %v6010
  %v6267 = vmul.f32 %v4864, %v6011
  %v6268 = vmul.f32 %v4866, %v6012
  %v6269 = vmul.f32 %v4868, %v6013
  %v6270 = vmul.f32 %v4870, %v6014
  %v6271 = vmul.f32 %v4872, %v6015
  %v6272 = vmul.f32 %v4874, %v6016
  %v6273 = vmul.f32 %v4876, %v6017
  %v6274 = vmul.f32 %v4878, %v6018
  %v6275 = vmul.f32 %v4880, %v6019
  %v6276 = vmul.f32 %v4882, %v6020
  %v6277 = vmul.f32 %v4884, %v6021
  %v6278 = vmul.f32 %v4886, %v6022
  %v6279 = vmul.f32 %v4888, %v6023
  %v6280 = vmul.f32 %v4890, %v6024
  %v6281 = vmul.f32 %v4892, %v6025
  %v6282 = vmul.f32 %v4894, %v6026
  %v6283 = vmul.f32 %v4896, %v6027
  %v6284 = vmul.f32 %v4898, %v6028
  %v6285 = vmul.f32 %v4900, %v6029
  %v6286 = vmul.f32 %v4902, %v6030
  %v6287 = vmul.f32 %v4904, %v6031
  %v6288 = vmul.f32 %v4906, %v6032
  %v6289 = vmul.f32 %v4908, %v6033
  %v6290 = vmul.f32 %v4910, %v6034
  %v6291 = vmul.f32 %v4912, %v6035
  %v6292 = vmul.f32 %v4914, %v6036
  %v6293 = vmul.f32 %v4916, %v6037
  %v6294 = vmul.f32 %v4918, %v6038
  %v6295 = vmul.f32 %v4920, %v6039
  %v6296 = vmul.f32 %v4922, %v6040
  %v6297 = vmul.f32 %v4924, %v6041
  %v6298 = vmul.f32 %v4926, %v6042
  %v6299 = vmul.f32 %v4928, %v6043
  %v6300 = vmul.f32 %v4930, %v6044
  %v6301 = vmul.f32 %v4932, %v6045
  %v6302 = vmul.f32 %v4934, %v6046
  %v6303 = vmul.f32 %v4936, %v6047
  %v6304 = vmul.f32 %v4938, %v6048
  %v6305 = vmul.f32 %v4940, %v6049
  %v6306 = vmul.f32 %v4942, %v6050
  %v6307 = vmul.f32 %v4944, %v6051
  %v6308 = vmul.f32 %v4946, %v6052
  %v6309 = vmul.f32 %v4948, %v6053
  %v6310 = vmul.f32 %v4950, %v6054
  %v6311 = vmul.f32 %v4952, %v6055
  %v6312 = vmul.f32 %v4954, %v6056
  %v6313 = vmul.f32 %v4956, %v6057
  %v6314 = vmul.f32 %v4958, %v6058
  %v6315 = vmul.f32 %v4960, %v6059
  %v6316 = vmul.f32 %v4962, %v6060
  %v6317 = vmul.f32 %v4964, %v6061
  %v6318 = vmul.f32 %v4966, %v6062
  %v6319 = vmul.f32 %v4968, %v6063
  %v6320 = vmul.f32 %v4970, %v6064
  %v6321 = vmul.f32 %v4972, %v6065
  %v6322 = vmul.f32 %v4974, %v6066
  %v6323 = vmul.f32 %v4976, %v6067
  %v6324 = vmul.f32 %v4978, %v6068
  %v6325 = vmul.f32 %v4980, %v6069
  %v6326 = vmul.f32 %v4982, %v6070
  %v6327 = vmul.f32 %v4984, %v6071
  %v6328 = vmul.f32 %v4986, %v6072
  %v6329 = vmul.f32 %v4988, %v6073
  %v6330 = vmul.f32 %v4990, %v6074
  %v6331 = vmul.f32 %v4992, %v6075
  %v6332 = vmul.f32 %v4994, %v6076
  %v6333 = vmul.f32 %v4996, %v6077
  %v6334 = vmul.f32 %v4998, %v6078
  %v6335 = vmul.f32 %v5000, %v6079
  %v6336 = vmul.f32 %v5002, %v6080
  %v6337 = vmul.f32 %v5004, %v6081
  %v6338 = vmul.f32 %v5006, %v6082
  %v6339 = vmul.f32 %v5008, %v6083
  %v6340 = vmul.f32 %v5010, %v6084
  %v6341 = vmul.f32 %v5012, %v6085
  %v6342 = vmul.f32 %v5014, %v6086
  %v6343 = vmul.f32 %v5016, %v6087
  %v6344 = vmul.f32 %v5018, %v6088
  %v6345 = vmul.f32 %v5020, %v6089
  %v6346 = vmul.f32 %v5022, %v6090
  %v6347 = vmul.f32 %v5024, %v6091
  %v6348 = vmul.f32 %v5026, %v6092
  %v6349 = vmul.f32 %v5028, %v6093
  %v6350 = vmul.f32 %v5030, %v6094
  %v6351 = vmul.f32 %v5032, %v6095
  %v6352 = vmul.f32 %v5034, %v6096
  %v6353 = vmul.f32 %v5036, %v6097
  %v6354 = vmul.f32 %v5038, %v6098
  %v6355 = vmul.f32 %v5040, %v6099
  %v6356 = vmul.f32 %v5042, %v6100
  %v6357 = vmul.f32 %v5044, %v6101
  %v6358 = vmul.f32 %v5046, %v6102
  %v6359 = vmul.f32 %v5048, %v6103
  %v6360 = vmul.f32 %v5050, %v6104
  %v6361 = vmul.f32 %v5052, %v6105
  %v6362 = vmul.f32 %v5054, %v6106
  %v6363 = vmul.f32 %v5056, %v6107
  %v6364 = vmul.f32 %v5058, %v6108
  %v6365 = vmul.f32 %v5060, %v6109
  %v6366 = vmul.f32 %v5062, %v6110
  %v6367 = vmul.f32 %v5064, %v6111
  %v6368 = vmul.f32 %v5066, %v6112
  %v6369 = vmul.f32 %v5068, %v6113
  %v6370 = vmul.f32 %v5070, %v6114
  %v6371 = vmul.f32 %v5072, %v6115
  %v6372 = vmul.f32 %v5074, %v6116
  %v6373 = vmul.f32 %v5076, %v6117
  %v6374 = vmul.f32 %v5078, %v6118
  %v6375 = vmul.f32 %v5080, %v6119
  %v6376 = vmul.f32 %v5082, %v6120
  %v6377 = vmul.f32 %v5084, %v6121
  %v6378 = vmul.f32 %v5086, %v6122
  %v6379 = vmul.f32 %v5088, %v6123
  %v6380 = vmul.f32 %v5090, %v6124
  %v6381 = vmul.f32 %v5092, %v6125
  %v6382 = vmul.f32 %v5094, %v6126
  %v6383 = vmul.f32 %v5096, %v6127
  %v6384 = vmul.f32 %v5098, %v6128
  %v6385 = vmul.f32 %v5100, %v6129
  %v6386 = vmul.f32 %v5102, %v6130
  %v6387 = vmul.f32 %v5104, %v6131
  %v6388 = vmul.f32 %v5106, %v6132
  %v6389 = vmul.f32 %v5108, %v6133
  %v6390 = vmul.f32 %v5110, %v6134
  %v6391 = vpack.c.bf16 %v6136, %v6135
  %v6392 = vpack.c.bf16 %v6138, %v6137
  %v6393 = vpack.c.bf16 %v6140, %v6139
  %v6394 = vpack.c.bf16 %v6142, %v6141
  %v6395 = vpack.c.bf16 %v6144, %v6143
  %v6396 = vpack.c.bf16 %v6146, %v6145
  %v6397 = vpack.c.bf16 %v6148, %v6147
  %v6398 = vpack.c.bf16 %v6150, %v6149
  %v6399 = vpack.c.bf16 %v6152, %v6151
  %v6400 = vpack.c.bf16 %v6154, %v6153
  %v6401 = vpack.c.bf16 %v6156, %v6155
  %v6402 = vpack.c.bf16 %v6158, %v6157
  %v6403 = vpack.c.bf16 %v6160, %v6159
  %v6404 = vpack.c.bf16 %v6162, %v6161
  %v6405 = vpack.c.bf16 %v6164, %v6163
  %v6406 = vpack.c.bf16 %v6166, %v6165
  %v6407 = vpack.c.bf16 %v6168, %v6167
  %v6408 = vpack.c.bf16 %v6170, %v6169
  %v6409 = vpack.c.bf16 %v6172, %v6171
  %v6410 = vpack.c.bf16 %v6174, %v6173
  %v6411 = vpack.c.bf16 %v6176, %v6175
  %v6412 = vpack.c.bf16 %v6178, %v6177
  %v6413 = vpack.c.bf16 %v6180, %v6179
  %v6414 = vpack.c.bf16 %v6182, %v6181
  %v6415 = vpack.c.bf16 %v6184, %v6183
  %v6416 = vpack.c.bf16 %v6186, %v6185
  %v6417 = vpack.c.bf16 %v6188, %v6187
  %v6418 = vpack.c.bf16 %v6190, %v6189
  %v6419 = vpack.c.bf16 %v6192, %v6191
  %v6420 = vpack.c.bf16 %v6194, %v6193
  %v6421 = vpack.c.bf16 %v6196, %v6195
  %v6422 = vpack.c.bf16 %v6198, %v6197
  %v6423 = vpack.c.bf16 %v6200, %v6199
  %v6424 = vpack.c.bf16 %v6202, %v6201
  %v6425 = vpack.c.bf16 %v6204, %v6203
  %v6426 = vpack.c.bf16 %v6206, %v6205
  %v6427 = vpack.c.bf16 %v6208, %v6207
  %v6428 = vpack.c.bf16 %v6210, %v6209
  %v6429 = vpack.c.bf16 %v6212, %v6211
  %v6430 = vpack.c.bf16 %v6214, %v6213
  %v6431 = vpack.c.bf16 %v6216, %v6215
  %v6432 = vpack.c.bf16 %v6218, %v6217
  %v6433 = vpack.c.bf16 %v6220, %v6219
  %v6434 = vpack.c.bf16 %v6222, %v6221
  %v6435 = vpack.c.bf16 %v6224, %v6223
  %v6436 = vpack.c.bf16 %v6226, %v6225
  %v6437 = vpack.c.bf16 %v6228, %v6227
  %v6438 = vpack.c.bf16 %v6230, %v6229
  %v6439 = vpack.c.bf16 %v6232, %v6231
  %v6440 = vpack.c.bf16 %v6234, %v6233
  %v6441 = vpack.c.bf16 %v6236, %v6235
  %v6442 = vpack.c.bf16 %v6238, %v6237
  %v6443 = vpack.c.bf16 %v6240, %v6239
  %v6444 = vpack.c.bf16 %v6242, %v6241
  %v6445 = vpack.c.bf16 %v6244, %v6243
  %v6446 = vpack.c.bf16 %v6246, %v6245
  %v6447 = vpack.c.bf16 %v6248, %v6247
  %v6448 = vpack.c.bf16 %v6250, %v6249
  %v6449 = vpack.c.bf16 %v6252, %v6251
  %v6450 = vpack.c.bf16 %v6254, %v6253
  %v6451 = vpack.c.bf16 %v6256, %v6255
  %v6452 = vpack.c.bf16 %v6258, %v6257
  %v6453 = vpack.c.bf16 %v6260, %v6259
  %v6454 = vpack.c.bf16 %v6262, %v6261
  %v6455 = vpack.c.bf16 %v6264, %v6263
  %v6456 = vpack.c.bf16 %v6266, %v6265
  %v6457 = vpack.c.bf16 %v6268, %v6267
  %v6458 = vpack.c.bf16 %v6270, %v6269
  %v6459 = vpack.c.bf16 %v6272, %v6271
  %v6460 = vpack.c.bf16 %v6274, %v6273
  %v6461 = vpack.c.bf16 %v6276, %v6275
  %v6462 = vpack.c.bf16 %v6278, %v6277
  %v6463 = vpack.c.bf16 %v6280, %v6279
  %v6464 = vpack.c.bf16 %v6282, %v6281
  %v6465 = vpack.c.bf16 %v6284, %v6283
  %v6466 = vpack.c.bf16 %v6286, %v6285
  %v6467 = vpack.c.bf16 %v6288, %v6287
  %v6468 = vpack.c.bf16 %v6290, %v6289
  %v6469 = vpack.c.bf16 %v6292, %v6291
  %v6470 = vpack.c.bf16 %v6294, %v6293
  %v6471 = vpack.c.bf16 %v6296, %v6295
  %v6472 = vpack.c.bf16 %v6298, %v6297
  %v6473 = vpack.c.bf16 %v6300, %v6299
  %v6474 = vpack.c.bf16 %v6302, %v6301
  %v6475 = vpack.c.bf16 %v6304, %v6303
  %v6476 = vpack.c.bf16 %v6306, %v6305
  %v6477 = vpack.c.bf16 %v6308, %v6307
  %v6478 = vpack.c.bf16 %v6310, %v6309
  %v6479 = vpack.c.bf16 %v6312, %v6311
  %v6480 = vpack.c.bf16 %v6314, %v6313
  %v6481 = vpack.c.bf16 %v6316, %v6315
  %v6482 = vpack.c.bf16 %v6318, %v6317
  %v6483 = vpack.c.bf16 %v6320, %v6319
  %v6484 = vpack.c.bf16 %v6322, %v6321
  %v6485 = vpack.c.bf16 %v6324, %v6323
  %v6486 = vpack.c.bf16 %v6326, %v6325
  %v6487 = vpack.c.bf16 %v6328, %v6327
  %v6488 = vpack.c.bf16 %v6330, %v6329
  %v6489 = vpack.c.bf16 %v6332, %v6331
  %v6490 = vpack.c.bf16 %v6334, %v6333
  %v6491 = vpack.c.bf16 %v6336, %v6335
  %v6492 = vpack.c.bf16 %v6338, %v6337
  %v6493 = vpack.c.bf16 %v6340, %v6339
  %v6494 = vpack.c.bf16 %v6342, %v6341
  %v6495 = vpack.c.bf16 %v6344, %v6343
  %v6496 = vpack.c.bf16 %v6346, %v6345
  %v6497 = vpack.c.bf16 %v6348, %v6347
  %v6498 = vpack.c.bf16 %v6350, %v6349
  %v6499 = vpack.c.bf16 %v6352, %v6351
  %v6500 = vpack.c.bf16 %v6354, %v6353
  %v6501 = vpack.c.bf16 %v6356, %v6355
  %v6502 = vpack.c.bf16 %v6358, %v6357
  %v6503 = vpack.c.bf16 %v6360, %v6359
  %v6504 = vpack.c.bf16 %v6362, %v6361
  %v6505 = vpack.c.bf16 %v6364, %v6363
  %v6506 = vpack.c.bf16 %v6366, %v6365
  %v6507 = vpack.c.bf16 %v6368, %v6367
  %v6508 = vpack.c.bf16 %v6370, %v6369
  %v6509 = vpack.c.bf16 %v6372, %v6371
  %v6510 = vpack.c.bf16 %v6374, %v6373
  %v6511 = vpack.c.bf16 %v6376, %v6375
  %v6512 = vpack.c.bf16 %v6378, %v6377
  %v6513 = vpack.c.bf16 %v6380, %v6379
  %v6514 = vpack.c.bf16 %v6382, %v6381
  %v6515 = vpack.c.bf16 %v6384, %v6383
  %v6516 = vpack.c.bf16 %v6386, %v6385
  %v6517 = vpack.c.bf16 %v6388, %v6387
  %v6518 = vpack.c.bf16 %v6390, %v6389
  %6519 = vrot.lane.b32.xlu0 %v1041, 32
  %v6520 = vpop.permute.xlu0 %6519
  %6521 = vrot.lane.b32.xlu0 %v1042, 32
  %v6522 = vpop.permute.xlu0 %6521
  %6523 = vrot.lane.b32.xlu0 %v1043, 32
  %v6524 = vpop.permute.xlu0 %6523
  %6525 = vrot.lane.b32.xlu0 %v1044, 32
  %v6526 = vpop.permute.xlu0 %6525
  %v6532 = vsel %vm3574, %v6391, 0
  %v6535 = vsel %vm3574, %v6392, 0
  %v6538 = vsel %vm3574, %v6393, 0
  %v6541 = vsel %vm3574, %v6394, 0
  %v6544 = vsel %vm3574, %v6395, 0
  %v6547 = vsel %vm3574, %v6396, 0
  %v6550 = vsel %vm3574, %v6397, 0
  %v6553 = vsel %vm3574, %v6398, 0
  %v6556 = vsel %vm3574, %v6399, 0
  %v6559 = vsel %vm3574, %v6400, 0
  %v6562 = vsel %vm3574, %v6401, 0
  %v6565 = vsel %vm3574, %v6402, 0
  %v6568 = vsel %vm3574, %v6403, 0
  %v6571 = vsel %vm3574, %v6404, 0
  %v6574 = vsel %vm3574, %v6405, 0
  %v6577 = vsel %vm3574, %v6406, 0
  %6579 = vmatprep.subr.bf16.mxu0 0
  %6580 = vmatpush1.bf16.msra.mxu0 0
  %6581 = vmatprep.subr.bf16.mxu0 0
  %6582 = vmatpush1.bf16.msra.mxu0 0
  %6583 = vmatprep.subr.bf16.mxu0 0
  %6584 = vmatpush1.bf16.msra.mxu0 0
  %6585 = vmatprep.subr.bf16.mxu0 0
  %6586 = vmatpush1.bf16.msra.mxu0 0
  %6587 = vmatprep.subr.bf16.mxu0 0
  %6588 = vmatpush1.bf16.msra.mxu0 %v6526
  %6589 = vmatprep.subr.bf16.mxu0 0
  %6590 = vmatpush1.bf16.msra.mxu0 %v6524
  %6591 = vmatprep.subr.bf16.mxu0 0
  %6592 = vmatpush1.bf16.msra.mxu0 %v6522
  %6593 = vmatprep.subr.bf16.mxu0 0
  %6594 = vmatpush1.bf16.msra.mxu0 %v6520
  %6595 = vmatprep.subr.bf16.mxu0 0
  %6596 = vmatpush2.bf16.msra.mxu0 0
  %6597 = vmatprep.subr.bf16.mxu0 0
  %6598 = vmatpush2.bf16.msra.mxu0 0
  %6599 = vmatprep.subr.bf16.mxu0 0
  %6600 = vmatpush2.bf16.msra.mxu0 0
  %6601 = vmatprep.subr.bf16.mxu0 0
  %6602 = vmatpush2.bf16.msra.mxu0 0
  %6603 = vmatprep.subr.bf16.mxu0 0
  %6604 = vmatpush2.bf16.msra.mxu0 0
  %6605 = vmatprep.subr.bf16.mxu0 0
  %6606 = vmatpush2.bf16.msra.mxu0 0
  %6607 = vmatprep.subr.bf16.mxu0 0
  %6608 = vmatpush2.bf16.msra.mxu0 0
  %6609 = vmatprep.subr.bf16.mxu0 0
  %6610 = vmatpush2.bf16.msra.mxu0 0
  %6611 = vmatprep.mubr.bf16.mxu0 0
  %6612 = vmatmul.mubr.bf16.gmra.mxu0 %v6532
  %v6613 = vpop.f32.mrf.mxu0
  %v6614 = vadd.f32 0.0, %v6613
  %v6615 = vpop.f32.mrf.mxu0
  %v6616 = vpop.f32.mrf.mxu0
  %v6617 = vadd.f32 0.0, %v6616
  %v6618 = vpop.f32.mrf.mxu0
  %6619 = vmatprep.mubr.bf16.mxu0 0
  %6620 = vmatmul.mubr.bf16.gmra.mxu0 %v6535
  %v6621 = vpop.f32.mrf.mxu0
  %v6622 = vadd.f32 0.0, %v6621
  %v6623 = vpop.f32.mrf.mxu0
  %v6624 = vpop.f32.mrf.mxu0
  %v6625 = vadd.f32 0.0, %v6624
  %v6626 = vpop.f32.mrf.mxu0
  %6627 = vmatprep.mubr.bf16.mxu0 0
  %6628 = vmatmul.mubr.bf16.gmra.mxu0 %v6538
  %v6629 = vpop.f32.mrf.mxu0
  %v6630 = vadd.f32 0.0, %v6629
  %v6631 = vpop.f32.mrf.mxu0
  %v6632 = vpop.f32.mrf.mxu0
  %v6633 = vadd.f32 0.0, %v6632
  %v6634 = vpop.f32.mrf.mxu0
  %6635 = vmatprep.mubr.bf16.mxu0 0
  %6636 = vmatmul.mubr.bf16.gmra.mxu0 %v6541
  %v6637 = vpop.f32.mrf.mxu0
  %v6638 = vadd.f32 0.0, %v6637
  %v6639 = vpop.f32.mrf.mxu0
  %v6640 = vpop.f32.mrf.mxu0
  %v6641 = vadd.f32 0.0, %v6640
  %v6642 = vpop.f32.mrf.mxu0
  %6643 = vmatprep.mubr.bf16.mxu0 0
  %6644 = vmatmul.mubr.bf16.gmra.mxu0 %v6544
  %v6645 = vpop.f32.mrf.mxu0
  %v6646 = vadd.f32 0.0, %v6645
  %v6647 = vpop.f32.mrf.mxu0
  %v6648 = vpop.f32.mrf.mxu0
  %v6649 = vadd.f32 0.0, %v6648
  %v6650 = vpop.f32.mrf.mxu0
  %6651 = vmatprep.mubr.bf16.mxu0 0
  %6652 = vmatmul.mubr.bf16.gmra.mxu0 %v6547
  %v6653 = vpop.f32.mrf.mxu0
  %v6654 = vadd.f32 0.0, %v6653
  %v6655 = vpop.f32.mrf.mxu0
  %v6656 = vpop.f32.mrf.mxu0
  %v6657 = vadd.f32 0.0, %v6656
  %v6658 = vpop.f32.mrf.mxu0
  %6659 = vmatprep.mubr.bf16.mxu0 0
  %6660 = vmatmul.mubr.bf16.gmra.mxu0 %v6550
  %v6661 = vpop.f32.mrf.mxu0
  %v6662 = vadd.f32 0.0, %v6661
  %v6663 = vpop.f32.mrf.mxu0
  %v6664 = vpop.f32.mrf.mxu0
  %v6665 = vadd.f32 0.0, %v6664
  %v6666 = vpop.f32.mrf.mxu0
  %6667 = vmatprep.mubr.bf16.mxu0 0
  %6668 = vmatmul.mubr.bf16.gmra.mxu0 %v6553
  %v6669 = vpop.f32.mrf.mxu0
  %v6670 = vadd.f32 0.0, %v6669
  %v6671 = vpop.f32.mrf.mxu0
  %v6672 = vpop.f32.mrf.mxu0
  %v6673 = vadd.f32 0.0, %v6672
  %v6674 = vpop.f32.mrf.mxu0
  %6675 = vmatprep.mubr.bf16.mxu0 0
  %6676 = vmatmul.mubr.bf16.gmra.mxu0 %v6556
  %v6677 = vpop.f32.mrf.mxu0
  %v6678 = vadd.f32 0.0, %v6677
  %v6679 = vpop.f32.mrf.mxu0
  %v6680 = vpop.f32.mrf.mxu0
  %v6681 = vadd.f32 0.0, %v6680
  %v6682 = vpop.f32.mrf.mxu0
  %6683 = vmatprep.mubr.bf16.mxu0 0
  %6684 = vmatmul.mubr.bf16.gmra.mxu0 %v6559
  %v6685 = vpop.f32.mrf.mxu0
  %v6686 = vadd.f32 0.0, %v6685
  %v6687 = vpop.f32.mrf.mxu0
  %v6688 = vpop.f32.mrf.mxu0
  %v6689 = vadd.f32 0.0, %v6688
  %v6690 = vpop.f32.mrf.mxu0
  %6691 = vmatprep.mubr.bf16.mxu0 0
  %6692 = vmatmul.mubr.bf16.gmra.mxu0 %v6562
  %v6693 = vpop.f32.mrf.mxu0
  %v6694 = vadd.f32 0.0, %v6693
  %v6695 = vpop.f32.mrf.mxu0
  %v6696 = vpop.f32.mrf.mxu0
  %v6697 = vadd.f32 0.0, %v6696
  %v6698 = vpop.f32.mrf.mxu0
  %6699 = vmatprep.mubr.bf16.mxu0 0
  %6700 = vmatmul.mubr.bf16.gmra.mxu0 %v6565
  %v6701 = vpop.f32.mrf.mxu0
  %v6702 = vadd.f32 0.0, %v6701
  %v6703 = vpop.f32.mrf.mxu0
  %v6704 = vpop.f32.mrf.mxu0
  %v6705 = vadd.f32 0.0, %v6704
  %v6706 = vpop.f32.mrf.mxu0
  %6707 = vmatprep.mubr.bf16.mxu0 0
  %6708 = vmatmul.mubr.bf16.gmra.mxu0 %v6568
  %v6709 = vpop.f32.mrf.mxu0
  %v6710 = vadd.f32 0.0, %v6709
  %v6711 = vpop.f32.mrf.mxu0
  %v6712 = vpop.f32.mrf.mxu0
  %v6713 = vadd.f32 0.0, %v6712
  %v6714 = vpop.f32.mrf.mxu0
  %6715 = vmatprep.mubr.bf16.mxu0 0
  %6716 = vmatmul.mubr.bf16.gmra.mxu0 %v6571
  %v6717 = vpop.f32.mrf.mxu0
  %v6718 = vadd.f32 0.0, %v6717
  %v6719 = vpop.f32.mrf.mxu0
  %v6720 = vpop.f32.mrf.mxu0
  %v6721 = vadd.f32 0.0, %v6720
  %v6722 = vpop.f32.mrf.mxu0
  %6723 = vmatprep.mubr.bf16.mxu0 0
  %6724 = vmatmul.mubr.bf16.gmra.mxu0 %v6574
  %v6725 = vpop.f32.mrf.mxu0
  %v6726 = vadd.f32 0.0, %v6725
  %v6727 = vpop.f32.mrf.mxu0
  %v6728 = vpop.f32.mrf.mxu0
  %v6729 = vadd.f32 0.0, %v6728
  %v6730 = vpop.f32.mrf.mxu0
  %6731 = vmatprep.mubr.bf16.mxu0 0
  %6732 = vmatmul.mubr.bf16.gmra.mxu0 %v6577
  %v6733 = vpop.f32.mrf.mxu0
  %v6734 = vadd.f32 0.0, %v6733
  %v6735 = vpop.f32.mrf.mxu0
  %v6736 = vpop.f32.mrf.mxu0
  %v6737 = vadd.f32 0.0, %v6736
  %v6738 = vpop.f32.mrf.mxu0
  %6739 = vdwg.mxu0
  %6740 = vrot.lane.b32.xlu0 %v1045, 32
  %v6741 = vpop.permute.xlu0 %6740
  %6742 = vrot.lane.b32.xlu0 %v1046, 32
  %v6743 = vpop.permute.xlu0 %6742
  %6744 = vrot.lane.b32.xlu0 %v1047, 32
  %v6745 = vpop.permute.xlu0 %6744
  %6746 = vrot.lane.b32.xlu0 %v1048, 32
  %v6747 = vpop.permute.xlu0 %6746
  %v6753 = vsel %vm3574, %v6407, 0
  %v6756 = vsel %vm3574, %v6408, 0
  %v6759 = vsel %vm3574, %v6409, 0
  %v6762 = vsel %vm3574, %v6410, 0
  %v6765 = vsel %vm3574, %v6411, 0
  %v6768 = vsel %vm3574, %v6412, 0
  %v6771 = vsel %vm3574, %v6413, 0
  %v6774 = vsel %vm3574, %v6414, 0
  %v6777 = vsel %vm3574, %v6415, 0
  %v6780 = vsel %vm3574, %v6416, 0
  %v6783 = vsel %vm3574, %v6417, 0
  %v6786 = vsel %vm3574, %v6418, 0
  %v6789 = vsel %vm3574, %v6419, 0
  %v6792 = vsel %vm3574, %v6420, 0
  %v6795 = vsel %vm3574, %v6421, 0
  %v6798 = vsel %vm3574, %v6422, 0
  %6800 = vmatprep.subr.bf16.mxu0 0
  %6801 = vmatpush1.bf16.msra.mxu0 0
  %6802 = vmatprep.subr.bf16.mxu0 0
  %6803 = vmatpush1.bf16.msra.mxu0 0
  %6804 = vmatprep.subr.bf16.mxu0 0
  %6805 = vmatpush1.bf16.msra.mxu0 0
  %6806 = vmatprep.subr.bf16.mxu0 0
  %6807 = vmatpush1.bf16.msra.mxu0 0
  %6808 = vmatprep.subr.bf16.mxu0 0
  %6809 = vmatpush1.bf16.msra.mxu0 %v6747
  %6810 = vmatprep.subr.bf16.mxu0 0
  %6811 = vmatpush1.bf16.msra.mxu0 %v6745
  %6812 = vmatprep.subr.bf16.mxu0 0
  %6813 = vmatpush1.bf16.msra.mxu0 %v6743
  %6814 = vmatprep.subr.bf16.mxu0 0
  %6815 = vmatpush1.bf16.msra.mxu0 %v6741
  %6816 = vmatprep.subr.bf16.mxu0 0
  %6817 = vmatpush2.bf16.msra.mxu0 0
  %6818 = vmatprep.subr.bf16.mxu0 0
  %6819 = vmatpush2.bf16.msra.mxu0 0
  %6820 = vmatprep.subr.bf16.mxu0 0
  %6821 = vmatpush2.bf16.msra.mxu0 0
  %6822 = vmatprep.subr.bf16.mxu0 0
  %6823 = vmatpush2.bf16.msra.mxu0 0
  %6824 = vmatprep.subr.bf16.mxu0 0
  %6825 = vmatpush2.bf16.msra.mxu0 0
  %6826 = vmatprep.subr.bf16.mxu0 0
  %6827 = vmatpush2.bf16.msra.mxu0 0
  %6828 = vmatprep.subr.bf16.mxu0 0
  %6829 = vmatpush2.bf16.msra.mxu0 0
  %6830 = vmatprep.subr.bf16.mxu0 0
  %6831 = vmatpush2.bf16.msra.mxu0 0
  %6832 = vmatprep.mubr.bf16.mxu0 0
  %6833 = vmatmul.mubr.bf16.gmra.mxu0 %v6753
  %v6834 = vpop.f32.mrf.mxu0
  %v6835 = vadd.f32 0.0, %v6834
  %v6836 = vpop.f32.mrf.mxu0
  %v6837 = vpop.f32.mrf.mxu0
  %v6838 = vadd.f32 0.0, %v6837
  %v6839 = vpop.f32.mrf.mxu0
  %6840 = vmatprep.mubr.bf16.mxu0 0
  %6841 = vmatmul.mubr.bf16.gmra.mxu0 %v6756
  %v6842 = vpop.f32.mrf.mxu0
  %v6843 = vadd.f32 0.0, %v6842
  %v6844 = vpop.f32.mrf.mxu0
  %v6845 = vpop.f32.mrf.mxu0
  %v6846 = vadd.f32 0.0, %v6845
  %v6847 = vpop.f32.mrf.mxu0
  %6848 = vmatprep.mubr.bf16.mxu0 0
  %6849 = vmatmul.mubr.bf16.gmra.mxu0 %v6759
  %v6850 = vpop.f32.mrf.mxu0
  %v6851 = vadd.f32 0.0, %v6850
  %v6852 = vpop.f32.mrf.mxu0
  %v6853 = vpop.f32.mrf.mxu0
  %v6854 = vadd.f32 0.0, %v6853
  %v6855 = vpop.f32.mrf.mxu0
  %6856 = vmatprep.mubr.bf16.mxu0 0
  %6857 = vmatmul.mubr.bf16.gmra.mxu0 %v6762
  %v6858 = vpop.f32.mrf.mxu0
  %v6859 = vadd.f32 0.0, %v6858
  %v6860 = vpop.f32.mrf.mxu0
  %v6861 = vpop.f32.mrf.mxu0
  %v6862 = vadd.f32 0.0, %v6861
  %v6863 = vpop.f32.mrf.mxu0
  %6864 = vmatprep.mubr.bf16.mxu0 0
  %6865 = vmatmul.mubr.bf16.gmra.mxu0 %v6765
  %v6866 = vpop.f32.mrf.mxu0
  %v6867 = vadd.f32 0.0, %v6866
  %v6868 = vpop.f32.mrf.mxu0
  %v6869 = vpop.f32.mrf.mxu0
  %v6870 = vadd.f32 0.0, %v6869
  %v6871 = vpop.f32.mrf.mxu0
  %6872 = vmatprep.mubr.bf16.mxu0 0
  %6873 = vmatmul.mubr.bf16.gmra.mxu0 %v6768
  %v6874 = vpop.f32.mrf.mxu0
  %v6875 = vadd.f32 0.0, %v6874
  %v6876 = vpop.f32.mrf.mxu0
  %v6877 = vpop.f32.mrf.mxu0
  %v6878 = vadd.f32 0.0, %v6877
  %v6879 = vpop.f32.mrf.mxu0
  %6880 = vmatprep.mubr.bf16.mxu0 0
  %6881 = vmatmul.mubr.bf16.gmra.mxu0 %v6771
  %v6882 = vpop.f32.mrf.mxu0
  %v6883 = vadd.f32 0.0, %v6882
  %v6884 = vpop.f32.mrf.mxu0
  %v6885 = vpop.f32.mrf.mxu0
  %v6886 = vadd.f32 0.0, %v6885
  %v6887 = vpop.f32.mrf.mxu0
  %6888 = vmatprep.mubr.bf16.mxu0 0
  %6889 = vmatmul.mubr.bf16.gmra.mxu0 %v6774
  %v6890 = vpop.f32.mrf.mxu0
  %v6891 = vadd.f32 0.0, %v6890
  %v6892 = vpop.f32.mrf.mxu0
  %v6893 = vpop.f32.mrf.mxu0
  %v6894 = vadd.f32 0.0, %v6893
  %v6895 = vpop.f32.mrf.mxu0
  %6896 = vmatprep.mubr.bf16.mxu0 0
  %6897 = vmatmul.mubr.bf16.gmra.mxu0 %v6777
  %v6898 = vpop.f32.mrf.mxu0
  %v6899 = vadd.f32 0.0, %v6898
  %v6900 = vpop.f32.mrf.mxu0
  %v6901 = vpop.f32.mrf.mxu0
  %v6902 = vadd.f32 0.0, %v6901
  %v6903 = vpop.f32.mrf.mxu0
  %6904 = vmatprep.mubr.bf16.mxu0 0
  %6905 = vmatmul.mubr.bf16.gmra.mxu0 %v6780
  %v6906 = vpop.f32.mrf.mxu0
  %v6907 = vadd.f32 0.0, %v6906
  %v6908 = vpop.f32.mrf.mxu0
  %v6909 = vpop.f32.mrf.mxu0
  %v6910 = vadd.f32 0.0, %v6909
  %v6911 = vpop.f32.mrf.mxu0
  %6912 = vmatprep.mubr.bf16.mxu0 0
  %6913 = vmatmul.mubr.bf16.gmra.mxu0 %v6783
  %v6914 = vpop.f32.mrf.mxu0
  %v6915 = vadd.f32 0.0, %v6914
  %v6916 = vpop.f32.mrf.mxu0
  %v6917 = vpop.f32.mrf.mxu0
  %v6918 = vadd.f32 0.0, %v6917
  %v6919 = vpop.f32.mrf.mxu0
  %6920 = vmatprep.mubr.bf16.mxu0 0
  %6921 = vmatmul.mubr.bf16.gmra.mxu0 %v6786
  %v6922 = vpop.f32.mrf.mxu0
  %v6923 = vadd.f32 0.0, %v6922
  %v6924 = vpop.f32.mrf.mxu0
  %v6925 = vpop.f32.mrf.mxu0
  %v6926 = vadd.f32 0.0, %v6925
  %v6927 = vpop.f32.mrf.mxu0
  %6928 = vmatprep.mubr.bf16.mxu0 0
  %6929 = vmatmul.mubr.bf16.gmra.mxu0 %v6789
  %v6930 = vpop.f32.mrf.mxu0
  %v6931 = vadd.f32 0.0, %v6930
  %v6932 = vpop.f32.mrf.mxu0
  %v6933 = vpop.f32.mrf.mxu0
  %v6934 = vadd.f32 0.0, %v6933
  %v6935 = vpop.f32.mrf.mxu0
  %6936 = vmatprep.mubr.bf16.mxu0 0
  %6937 = vmatmul.mubr.bf16.gmra.mxu0 %v6792
  %v6938 = vpop.f32.mrf.mxu0
  %v6939 = vadd.f32 0.0, %v6938
  %v6940 = vpop.f32.mrf.mxu0
  %v6941 = vpop.f32.mrf.mxu0
  %v6942 = vadd.f32 0.0, %v6941
  %v6943 = vpop.f32.mrf.mxu0
  %6944 = vmatprep.mubr.bf16.mxu0 0
  %6945 = vmatmul.mubr.bf16.gmra.mxu0 %v6795
  %v6946 = vpop.f32.mrf.mxu0
  %v6947 = vadd.f32 0.0, %v6946
  %v6948 = vpop.f32.mrf.mxu0
  %v6949 = vpop.f32.mrf.mxu0
  %v6950 = vadd.f32 0.0, %v6949
  %v6951 = vpop.f32.mrf.mxu0
  %6952 = vmatprep.mubr.bf16.mxu0 0
  %6953 = vmatmul.mubr.bf16.gmra.mxu0 %v6798
  %v6954 = vpop.f32.mrf.mxu0
  %v6955 = vadd.f32 0.0, %v6954
  %v6956 = vpop.f32.mrf.mxu0
  %v6957 = vpop.f32.mrf.mxu0
  %v6958 = vadd.f32 0.0, %v6957
  %v6959 = vpop.f32.mrf.mxu0
  %6960 = vdwg.mxu0
  %6961 = vrot.lane.b32.xlu0 %v1049, 32
  %v6962 = vpop.permute.xlu0 %6961
  %6963 = vrot.lane.b32.xlu0 %v1050, 32
  %v6964 = vpop.permute.xlu0 %6963
  %6965 = vrot.lane.b32.xlu0 %v1051, 32
  %v6966 = vpop.permute.xlu0 %6965
  %6967 = vrot.lane.b32.xlu0 %v1052, 32
  %v6968 = vpop.permute.xlu0 %6967
  %v6974 = vsel %vm3574, %v6423, 0
  %v6977 = vsel %vm3574, %v6424, 0
  %v6980 = vsel %vm3574, %v6425, 0
  %v6983 = vsel %vm3574, %v6426, 0
  %v6986 = vsel %vm3574, %v6427, 0
  %v6989 = vsel %vm3574, %v6428, 0
  %v6992 = vsel %vm3574, %v6429, 0
  %v6995 = vsel %vm3574, %v6430, 0
  %v6998 = vsel %vm3574, %v6431, 0
  %v7001 = vsel %vm3574, %v6432, 0
  %v7004 = vsel %vm3574, %v6433, 0
  %v7007 = vsel %vm3574, %v6434, 0
  %v7010 = vsel %vm3574, %v6435, 0
  %v7013 = vsel %vm3574, %v6436, 0
  %v7016 = vsel %vm3574, %v6437, 0
  %v7019 = vsel %vm3574, %v6438, 0
  %7021 = vmatprep.subr.bf16.mxu0 0
  %7022 = vmatpush1.bf16.msra.mxu0 0
  %7023 = vmatprep.subr.bf16.mxu0 0
  %7024 = vmatpush1.bf16.msra.mxu0 0
  %7025 = vmatprep.subr.bf16.mxu0 0
  %7026 = vmatpush1.bf16.msra.mxu0 0
  %7027 = vmatprep.subr.bf16.mxu0 0
  %7028 = vmatpush1.bf16.msra.mxu0 0
  %7029 = vmatprep.subr.bf16.mxu0 0
  %7030 = vmatpush1.bf16.msra.mxu0 %v6968
  %7031 = vmatprep.subr.bf16.mxu0 0
  %7032 = vmatpush1.bf16.msra.mxu0 %v6966
  %7033 = vmatprep.subr.bf16.mxu0 0
  %7034 = vmatpush1.bf16.msra.mxu0 %v6964
  %7035 = vmatprep.subr.bf16.mxu0 0
  %7036 = vmatpush1.bf16.msra.mxu0 %v6962
  %7037 = vmatprep.subr.bf16.mxu0 0
  %7038 = vmatpush2.bf16.msra.mxu0 0
  %7039 = vmatprep.subr.bf16.mxu0 0
  %7040 = vmatpush2.bf16.msra.mxu0 0
  %7041 = vmatprep.subr.bf16.mxu0 0
  %7042 = vmatpush2.bf16.msra.mxu0 0
  %7043 = vmatprep.subr.bf16.mxu0 0
  %7044 = vmatpush2.bf16.msra.mxu0 0
  %7045 = vmatprep.subr.bf16.mxu0 0
  %7046 = vmatpush2.bf16.msra.mxu0 0
  %7047 = vmatprep.subr.bf16.mxu0 0
  %7048 = vmatpush2.bf16.msra.mxu0 0
  %7049 = vmatprep.subr.bf16.mxu0 0
  %7050 = vmatpush2.bf16.msra.mxu0 0
  %7051 = vmatprep.subr.bf16.mxu0 0
  %7052 = vmatpush2.bf16.msra.mxu0 0
  %7053 = vmatprep.mubr.bf16.mxu0 0
  %7054 = vmatmul.mubr.bf16.gmra.mxu0 %v6974
  %v7055 = vpop.f32.mrf.mxu0
  %v7056 = vadd.f32 0.0, %v7055
  %v7057 = vpop.f32.mrf.mxu0
  %v7058 = vpop.f32.mrf.mxu0
  %v7059 = vadd.f32 0.0, %v7058
  %v7060 = vpop.f32.mrf.mxu0
  %7061 = vmatprep.mubr.bf16.mxu0 0
  %7062 = vmatmul.mubr.bf16.gmra.mxu0 %v6977
  %v7063 = vpop.f32.mrf.mxu0
  %v7064 = vadd.f32 0.0, %v7063
  %v7065 = vpop.f32.mrf.mxu0
  %v7066 = vpop.f32.mrf.mxu0
  %v7067 = vadd.f32 0.0, %v7066
  %v7068 = vpop.f32.mrf.mxu0
  %7069 = vmatprep.mubr.bf16.mxu0 0
  %7070 = vmatmul.mubr.bf16.gmra.mxu0 %v6980
  %v7071 = vpop.f32.mrf.mxu0
  %v7072 = vadd.f32 0.0, %v7071
  %v7073 = vpop.f32.mrf.mxu0
  %v7074 = vpop.f32.mrf.mxu0
  %v7075 = vadd.f32 0.0, %v7074
  %v7076 = vpop.f32.mrf.mxu0
  %7077 = vmatprep.mubr.bf16.mxu0 0
  %7078 = vmatmul.mubr.bf16.gmra.mxu0 %v6983
  %v7079 = vpop.f32.mrf.mxu0
  %v7080 = vadd.f32 0.0, %v7079
  %v7081 = vpop.f32.mrf.mxu0
  %v7082 = vpop.f32.mrf.mxu0
  %v7083 = vadd.f32 0.0, %v7082
  %v7084 = vpop.f32.mrf.mxu0
  %7085 = vmatprep.mubr.bf16.mxu0 0
  %7086 = vmatmul.mubr.bf16.gmra.mxu0 %v6986
  %v7087 = vpop.f32.mrf.mxu0
  %v7088 = vadd.f32 0.0, %v7087
  %v7089 = vpop.f32.mrf.mxu0
  %v7090 = vpop.f32.mrf.mxu0
  %v7091 = vadd.f32 0.0, %v7090
  %v7092 = vpop.f32.mrf.mxu0
  %7093 = vmatprep.mubr.bf16.mxu0 0
  %7094 = vmatmul.mubr.bf16.gmra.mxu0 %v6989
  %v7095 = vpop.f32.mrf.mxu0
  %v7096 = vadd.f32 0.0, %v7095
  %v7097 = vpop.f32.mrf.mxu0
  %v7098 = vpop.f32.mrf.mxu0
  %v7099 = vadd.f32 0.0, %v7098
  %v7100 = vpop.f32.mrf.mxu0
  %7101 = vmatprep.mubr.bf16.mxu0 0
  %7102 = vmatmul.mubr.bf16.gmra.mxu0 %v6992
  %v7103 = vpop.f32.mrf.mxu0
  %v7104 = vadd.f32 0.0, %v7103
  %v7105 = vpop.f32.mrf.mxu0
  %v7106 = vpop.f32.mrf.mxu0
  %v7107 = vadd.f32 0.0, %v7106
  %v7108 = vpop.f32.mrf.mxu0
  %7109 = vmatprep.mubr.bf16.mxu0 0
  %7110 = vmatmul.mubr.bf16.gmra.mxu0 %v6995
  %v7111 = vpop.f32.mrf.mxu0
  %v7112 = vadd.f32 0.0, %v7111
  %v7113 = vpop.f32.mrf.mxu0
  %v7114 = vpop.f32.mrf.mxu0
  %v7115 = vadd.f32 0.0, %v7114
  %v7116 = vpop.f32.mrf.mxu0
  %7117 = vmatprep.mubr.bf16.mxu0 0
  %7118 = vmatmul.mubr.bf16.gmra.mxu0 %v6998
  %v7119 = vpop.f32.mrf.mxu0
  %v7120 = vadd.f32 0.0, %v7119
  %v7121 = vpop.f32.mrf.mxu0
  %v7122 = vpop.f32.mrf.mxu0
  %v7123 = vadd.f32 0.0, %v7122
  %v7124 = vpop.f32.mrf.mxu0
  %7125 = vmatprep.mubr.bf16.mxu0 0
  %7126 = vmatmul.mubr.bf16.gmra.mxu0 %v7001
  %v7127 = vpop.f32.mrf.mxu0
  %v7128 = vadd.f32 0.0, %v7127
  %v7129 = vpop.f32.mrf.mxu0
  %v7130 = vpop.f32.mrf.mxu0
  %v7131 = vadd.f32 0.0, %v7130
  %v7132 = vpop.f32.mrf.mxu0
  %7133 = vmatprep.mubr.bf16.mxu0 0
  %7134 = vmatmul.mubr.bf16.gmra.mxu0 %v7004
  %v7135 = vpop.f32.mrf.mxu0
  %v7136 = vadd.f32 0.0, %v7135
  %v7137 = vpop.f32.mrf.mxu0
  %v7138 = vpop.f32.mrf.mxu0
  %v7139 = vadd.f32 0.0, %v7138
  %v7140 = vpop.f32.mrf.mxu0
  %7141 = vmatprep.mubr.bf16.mxu0 0
  %7142 = vmatmul.mubr.bf16.gmra.mxu0 %v7007
  %v7143 = vpop.f32.mrf.mxu0
  %v7144 = vadd.f32 0.0, %v7143
  %v7145 = vpop.f32.mrf.mxu0
  %v7146 = vpop.f32.mrf.mxu0
  %v7147 = vadd.f32 0.0, %v7146
  %v7148 = vpop.f32.mrf.mxu0
  %7149 = vmatprep.mubr.bf16.mxu0 0
  %7150 = vmatmul.mubr.bf16.gmra.mxu0 %v7010
  %v7151 = vpop.f32.mrf.mxu0
  %v7152 = vadd.f32 0.0, %v7151
  %v7153 = vpop.f32.mrf.mxu0
  %v7154 = vpop.f32.mrf.mxu0
  %v7155 = vadd.f32 0.0, %v7154
  %v7156 = vpop.f32.mrf.mxu0
  %7157 = vmatprep.mubr.bf16.mxu0 0
  %7158 = vmatmul.mubr.bf16.gmra.mxu0 %v7013
  %v7159 = vpop.f32.mrf.mxu0
  %v7160 = vadd.f32 0.0, %v7159
  %v7161 = vpop.f32.mrf.mxu0
  %v7162 = vpop.f32.mrf.mxu0
  %v7163 = vadd.f32 0.0, %v7162
  %v7164 = vpop.f32.mrf.mxu0
  %7165 = vmatprep.mubr.bf16.mxu0 0
  %7166 = vmatmul.mubr.bf16.gmra.mxu0 %v7016
  %v7167 = vpop.f32.mrf.mxu0
  %v7168 = vadd.f32 0.0, %v7167
  %v7169 = vpop.f32.mrf.mxu0
  %v7170 = vpop.f32.mrf.mxu0
  %v7171 = vadd.f32 0.0, %v7170
  %v7172 = vpop.f32.mrf.mxu0
  %7173 = vmatprep.mubr.bf16.mxu0 0
  %7174 = vmatmul.mubr.bf16.gmra.mxu0 %v7019
  %v7175 = vpop.f32.mrf.mxu0
  %v7176 = vadd.f32 0.0, %v7175
  %v7177 = vpop.f32.mrf.mxu0
  %v7178 = vpop.f32.mrf.mxu0
  %v7179 = vadd.f32 0.0, %v7178
  %v7180 = vpop.f32.mrf.mxu0
  %7181 = vdwg.mxu0
  %7182 = vrot.lane.b32.xlu0 %v1053, 32
  %v7183 = vpop.permute.xlu0 %7182
  %7184 = vrot.lane.b32.xlu0 %v1054, 32
  %v7185 = vpop.permute.xlu0 %7184
  %7186 = vrot.lane.b32.xlu0 %v1055, 32
  %v7187 = vpop.permute.xlu0 %7186
  %7188 = vrot.lane.b32.xlu0 %v1056, 32
  %v7189 = vpop.permute.xlu0 %7188
  %v7195 = vsel %vm3574, %v6439, 0
  %v7198 = vsel %vm3574, %v6440, 0
  %v7201 = vsel %vm3574, %v6441, 0
  %v7204 = vsel %vm3574, %v6442, 0
  %v7207 = vsel %vm3574, %v6443, 0
  %v7210 = vsel %vm3574, %v6444, 0
  %v7213 = vsel %vm3574, %v6445, 0
  %v7216 = vsel %vm3574, %v6446, 0
  %v7219 = vsel %vm3574, %v6447, 0
  %v7222 = vsel %vm3574, %v6448, 0
  %v7225 = vsel %vm3574, %v6449, 0
  %v7228 = vsel %vm3574, %v6450, 0
  %v7231 = vsel %vm3574, %v6451, 0
  %v7234 = vsel %vm3574, %v6452, 0
  %v7237 = vsel %vm3574, %v6453, 0
  %v7240 = vsel %vm3574, %v6454, 0
  %7242 = vmatprep.subr.bf16.mxu0 0
  %7243 = vmatpush1.bf16.msra.mxu0 0
  %7244 = vmatprep.subr.bf16.mxu0 0
  %7245 = vmatpush1.bf16.msra.mxu0 0
  %7246 = vmatprep.subr.bf16.mxu0 0
  %7247 = vmatpush1.bf16.msra.mxu0 0
  %7248 = vmatprep.subr.bf16.mxu0 0
  %7249 = vmatpush1.bf16.msra.mxu0 0
  %7250 = vmatprep.subr.bf16.mxu0 0
  %7251 = vmatpush1.bf16.msra.mxu0 %v7189
  %7252 = vmatprep.subr.bf16.mxu0 0
  %7253 = vmatpush1.bf16.msra.mxu0 %v7187
  %7254 = vmatprep.subr.bf16.mxu0 0
  %7255 = vmatpush1.bf16.msra.mxu0 %v7185
  %7256 = vmatprep.subr.bf16.mxu0 0
  %7257 = vmatpush1.bf16.msra.mxu0 %v7183
  %7258 = vmatprep.subr.bf16.mxu0 0
  %7259 = vmatpush2.bf16.msra.mxu0 0
  %7260 = vmatprep.subr.bf16.mxu0 0
  %7261 = vmatpush2.bf16.msra.mxu0 0
  %7262 = vmatprep.subr.bf16.mxu0 0
  %7263 = vmatpush2.bf16.msra.mxu0 0
  %7264 = vmatprep.subr.bf16.mxu0 0
  %7265 = vmatpush2.bf16.msra.mxu0 0
  %7266 = vmatprep.subr.bf16.mxu0 0
  %7267 = vmatpush2.bf16.msra.mxu0 0
  %7268 = vmatprep.subr.bf16.mxu0 0
  %7269 = vmatpush2.bf16.msra.mxu0 0
  %7270 = vmatprep.subr.bf16.mxu0 0
  %7271 = vmatpush2.bf16.msra.mxu0 0
  %7272 = vmatprep.subr.bf16.mxu0 0
  %7273 = vmatpush2.bf16.msra.mxu0 0
  %7274 = vmatprep.mubr.bf16.mxu0 0
  %7275 = vmatmul.mubr.bf16.gmra.mxu0 %v7195
  %v7276 = vpop.f32.mrf.mxu0
  %v7277 = vadd.f32 0.0, %v7276
  %v7278 = vpop.f32.mrf.mxu0
  %v7279 = vpop.f32.mrf.mxu0
  %v7280 = vadd.f32 0.0, %v7279
  %v7281 = vpop.f32.mrf.mxu0
  %7282 = vmatprep.mubr.bf16.mxu0 0
  %7283 = vmatmul.mubr.bf16.gmra.mxu0 %v7198
  %v7284 = vpop.f32.mrf.mxu0
  %v7285 = vadd.f32 0.0, %v7284
  %v7286 = vpop.f32.mrf.mxu0
  %v7287 = vpop.f32.mrf.mxu0
  %v7288 = vadd.f32 0.0, %v7287
  %v7289 = vpop.f32.mrf.mxu0
  %7290 = vmatprep.mubr.bf16.mxu0 0
  %7291 = vmatmul.mubr.bf16.gmra.mxu0 %v7201
  %v7292 = vpop.f32.mrf.mxu0
  %v7293 = vadd.f32 0.0, %v7292
  %v7294 = vpop.f32.mrf.mxu0
  %v7295 = vpop.f32.mrf.mxu0
  %v7296 = vadd.f32 0.0, %v7295
  %v7297 = vpop.f32.mrf.mxu0
  %7298 = vmatprep.mubr.bf16.mxu0 0
  %7299 = vmatmul.mubr.bf16.gmra.mxu0 %v7204
  %v7300 = vpop.f32.mrf.mxu0
  %v7301 = vadd.f32 0.0, %v7300
  %v7302 = vpop.f32.mrf.mxu0
  %v7303 = vpop.f32.mrf.mxu0
  %v7304 = vadd.f32 0.0, %v7303
  %v7305 = vpop.f32.mrf.mxu0
  %7306 = vmatprep.mubr.bf16.mxu0 0
  %7307 = vmatmul.mubr.bf16.gmra.mxu0 %v7207
  %v7308 = vpop.f32.mrf.mxu0
  %v7309 = vadd.f32 0.0, %v7308
  %v7310 = vpop.f32.mrf.mxu0
  %v7311 = vpop.f32.mrf.mxu0
  %v7312 = vadd.f32 0.0, %v7311
  %v7313 = vpop.f32.mrf.mxu0
  %7314 = vmatprep.mubr.bf16.mxu0 0
  %7315 = vmatmul.mubr.bf16.gmra.mxu0 %v7210
  %v7316 = vpop.f32.mrf.mxu0
  %v7317 = vadd.f32 0.0, %v7316
  %v7318 = vpop.f32.mrf.mxu0
  %v7319 = vpop.f32.mrf.mxu0
  %v7320 = vadd.f32 0.0, %v7319
  %v7321 = vpop.f32.mrf.mxu0
  %7322 = vmatprep.mubr.bf16.mxu0 0
  %7323 = vmatmul.mubr.bf16.gmra.mxu0 %v7213
  %v7324 = vpop.f32.mrf.mxu0
  %v7325 = vadd.f32 0.0, %v7324
  %v7326 = vpop.f32.mrf.mxu0
  %v7327 = vpop.f32.mrf.mxu0
  %v7328 = vadd.f32 0.0, %v7327
  %v7329 = vpop.f32.mrf.mxu0
  %7330 = vmatprep.mubr.bf16.mxu0 0
  %7331 = vmatmul.mubr.bf16.gmra.mxu0 %v7216
  %v7332 = vpop.f32.mrf.mxu0
  %v7333 = vadd.f32 0.0, %v7332
  %v7334 = vpop.f32.mrf.mxu0
  %v7335 = vpop.f32.mrf.mxu0
  %v7336 = vadd.f32 0.0, %v7335
  %v7337 = vpop.f32.mrf.mxu0
  %7338 = vmatprep.mubr.bf16.mxu0 0
  %7339 = vmatmul.mubr.bf16.gmra.mxu0 %v7219
  %v7340 = vpop.f32.mrf.mxu0
  %v7341 = vadd.f32 0.0, %v7340
  %v7342 = vpop.f32.mrf.mxu0
  %v7343 = vpop.f32.mrf.mxu0
  %v7344 = vadd.f32 0.0, %v7343
  %v7345 = vpop.f32.mrf.mxu0
  %7346 = vmatprep.mubr.bf16.mxu0 0
  %7347 = vmatmul.mubr.bf16.gmra.mxu0 %v7222
  %v7348 = vpop.f32.mrf.mxu0
  %v7349 = vadd.f32 0.0, %v7348
  %v7350 = vpop.f32.mrf.mxu0
  %v7351 = vpop.f32.mrf.mxu0
  %v7352 = vadd.f32 0.0, %v7351
  %v7353 = vpop.f32.mrf.mxu0
  %7354 = vmatprep.mubr.bf16.mxu0 0
  %7355 = vmatmul.mubr.bf16.gmra.mxu0 %v7225
  %v7356 = vpop.f32.mrf.mxu0
  %v7357 = vadd.f32 0.0, %v7356
  %v7358 = vpop.f32.mrf.mxu0
  %v7359 = vpop.f32.mrf.mxu0
  %v7360 = vadd.f32 0.0, %v7359
  %v7361 = vpop.f32.mrf.mxu0
  %7362 = vmatprep.mubr.bf16.mxu0 0
  %7363 = vmatmul.mubr.bf16.gmra.mxu0 %v7228
  %v7364 = vpop.f32.mrf.mxu0
  %v7365 = vadd.f32 0.0, %v7364
  %v7366 = vpop.f32.mrf.mxu0
  %v7367 = vpop.f32.mrf.mxu0
  %v7368 = vadd.f32 0.0, %v7367
  %v7369 = vpop.f32.mrf.mxu0
  %7370 = vmatprep.mubr.bf16.mxu0 0
  %7371 = vmatmul.mubr.bf16.gmra.mxu0 %v7231
  %v7372 = vpop.f32.mrf.mxu0
  %v7373 = vadd.f32 0.0, %v7372
  %v7374 = vpop.f32.mrf.mxu0
  %v7375 = vpop.f32.mrf.mxu0
  %v7376 = vadd.f32 0.0, %v7375
  %v7377 = vpop.f32.mrf.mxu0
  %7378 = vmatprep.mubr.bf16.mxu0 0
  %7379 = vmatmul.mubr.bf16.gmra.mxu0 %v7234
  %v7380 = vpop.f32.mrf.mxu0
  %v7381 = vadd.f32 0.0, %v7380
  %v7382 = vpop.f32.mrf.mxu0
  %v7383 = vpop.f32.mrf.mxu0
  %v7384 = vadd.f32 0.0, %v7383
  %v7385 = vpop.f32.mrf.mxu0
  %7386 = vmatprep.mubr.bf16.mxu0 0
  %7387 = vmatmul.mubr.bf16.gmra.mxu0 %v7237
  %v7388 = vpop.f32.mrf.mxu0
  %v7389 = vadd.f32 0.0, %v7388
  %v7390 = vpop.f32.mrf.mxu0
  %v7391 = vpop.f32.mrf.mxu0
  %v7392 = vadd.f32 0.0, %v7391
  %v7393 = vpop.f32.mrf.mxu0
  %7394 = vmatprep.mubr.bf16.mxu0 0
  %7395 = vmatmul.mubr.bf16.gmra.mxu0 %v7240
  %v7396 = vpop.f32.mrf.mxu0
  %v7397 = vadd.f32 0.0, %v7396
  %v7398 = vpop.f32.mrf.mxu0
  %v7399 = vpop.f32.mrf.mxu0
  %v7400 = vadd.f32 0.0, %v7399
  %v7401 = vpop.f32.mrf.mxu0
  %7402 = vdwg.mxu0
  %7403 = vrot.lane.b32.xlu0 %v1057, 32
  %v7404 = vpop.permute.xlu0 %7403
  %7405 = vrot.lane.b32.xlu0 %v1058, 32
  %v7406 = vpop.permute.xlu0 %7405
  %7407 = vrot.lane.b32.xlu0 %v1059, 32
  %v7408 = vpop.permute.xlu0 %7407
  %7409 = vrot.lane.b32.xlu0 %v1060, 32
  %v7410 = vpop.permute.xlu0 %7409
  %v7416 = vsel %vm3574, %v6455, 0
  %v7419 = vsel %vm3574, %v6456, 0
  %v7422 = vsel %vm3574, %v6457, 0
  %v7425 = vsel %vm3574, %v6458, 0
  %v7428 = vsel %vm3574, %v6459, 0
  %v7431 = vsel %vm3574, %v6460, 0
  %v7434 = vsel %vm3574, %v6461, 0
  %v7437 = vsel %vm3574, %v6462, 0
  %v7440 = vsel %vm3574, %v6463, 0
  %v7443 = vsel %vm3574, %v6464, 0
  %v7446 = vsel %vm3574, %v6465, 0
  %v7449 = vsel %vm3574, %v6466, 0
  %v7452 = vsel %vm3574, %v6467, 0
  %v7455 = vsel %vm3574, %v6468, 0
  %v7458 = vsel %vm3574, %v6469, 0
  %v7461 = vsel %vm3574, %v6470, 0
  %7463 = vmatprep.subr.bf16.mxu0 0
  %7464 = vmatpush1.bf16.msra.mxu0 0
  %7465 = vmatprep.subr.bf16.mxu0 0
  %7466 = vmatpush1.bf16.msra.mxu0 0
  %7467 = vmatprep.subr.bf16.mxu0 0
  %7468 = vmatpush1.bf16.msra.mxu0 0
  %7469 = vmatprep.subr.bf16.mxu0 0
  %7470 = vmatpush1.bf16.msra.mxu0 0
  %7471 = vmatprep.subr.bf16.mxu0 0
  %7472 = vmatpush1.bf16.msra.mxu0 %v7410
  %7473 = vmatprep.subr.bf16.mxu0 0
  %7474 = vmatpush1.bf16.msra.mxu0 %v7408
  %7475 = vmatprep.subr.bf16.mxu0 0
  %7476 = vmatpush1.bf16.msra.mxu0 %v7406
  %7477 = vmatprep.subr.bf16.mxu0 0
  %7478 = vmatpush1.bf16.msra.mxu0 %v7404
  %7479 = vmatprep.subr.bf16.mxu0 0
  %7480 = vmatpush2.bf16.msra.mxu0 0
  %7481 = vmatprep.subr.bf16.mxu0 0
  %7482 = vmatpush2.bf16.msra.mxu0 0
  %7483 = vmatprep.subr.bf16.mxu0 0
  %7484 = vmatpush2.bf16.msra.mxu0 0
  %7485 = vmatprep.subr.bf16.mxu0 0
  %7486 = vmatpush2.bf16.msra.mxu0 0
  %7487 = vmatprep.subr.bf16.mxu0 0
  %7488 = vmatpush2.bf16.msra.mxu0 0
  %7489 = vmatprep.subr.bf16.mxu0 0
  %7490 = vmatpush2.bf16.msra.mxu0 0
  %7491 = vmatprep.subr.bf16.mxu0 0
  %7492 = vmatpush2.bf16.msra.mxu0 0
  %7493 = vmatprep.subr.bf16.mxu0 0
  %7494 = vmatpush2.bf16.msra.mxu0 0
  %7495 = vmatprep.mubr.bf16.mxu0 0
  %7496 = vmatmul.mubr.bf16.gmra.mxu0 %v7416
  %v7497 = vpop.f32.mrf.mxu0
  %v7498 = vadd.f32 0.0, %v7497
  %v7499 = vpop.f32.mrf.mxu0
  %v7500 = vpop.f32.mrf.mxu0
  %v7501 = vadd.f32 0.0, %v7500
  %v7502 = vpop.f32.mrf.mxu0
  %7503 = vmatprep.mubr.bf16.mxu0 0
  %7504 = vmatmul.mubr.bf16.gmra.mxu0 %v7419
  %v7505 = vpop.f32.mrf.mxu0
  %v7506 = vadd.f32 0.0, %v7505
  %v7507 = vpop.f32.mrf.mxu0
  %v7508 = vpop.f32.mrf.mxu0
  %v7509 = vadd.f32 0.0, %v7508
  %v7510 = vpop.f32.mrf.mxu0
  %7511 = vmatprep.mubr.bf16.mxu0 0
  %7512 = vmatmul.mubr.bf16.gmra.mxu0 %v7422
  %v7513 = vpop.f32.mrf.mxu0
  %v7514 = vadd.f32 0.0, %v7513
  %v7515 = vpop.f32.mrf.mxu0
  %v7516 = vpop.f32.mrf.mxu0
  %v7517 = vadd.f32 0.0, %v7516
  %v7518 = vpop.f32.mrf.mxu0
  %7519 = vmatprep.mubr.bf16.mxu0 0
  %7520 = vmatmul.mubr.bf16.gmra.mxu0 %v7425
  %v7521 = vpop.f32.mrf.mxu0
  %v7522 = vadd.f32 0.0, %v7521
  %v7523 = vpop.f32.mrf.mxu0
  %v7524 = vpop.f32.mrf.mxu0
  %v7525 = vadd.f32 0.0, %v7524
  %v7526 = vpop.f32.mrf.mxu0
  %7527 = vmatprep.mubr.bf16.mxu0 0
  %7528 = vmatmul.mubr.bf16.gmra.mxu0 %v7428
  %v7529 = vpop.f32.mrf.mxu0
  %v7530 = vadd.f32 0.0, %v7529
  %v7531 = vpop.f32.mrf.mxu0
  %v7532 = vpop.f32.mrf.mxu0
  %v7533 = vadd.f32 0.0, %v7532
  %v7534 = vpop.f32.mrf.mxu0
  %7535 = vmatprep.mubr.bf16.mxu0 0
  %7536 = vmatmul.mubr.bf16.gmra.mxu0 %v7431
  %v7537 = vpop.f32.mrf.mxu0
  %v7538 = vadd.f32 0.0, %v7537
  %v7539 = vpop.f32.mrf.mxu0
  %v7540 = vpop.f32.mrf.mxu0
  %v7541 = vadd.f32 0.0, %v7540
  %v7542 = vpop.f32.mrf.mxu0
  %7543 = vmatprep.mubr.bf16.mxu0 0
  %7544 = vmatmul.mubr.bf16.gmra.mxu0 %v7434
  %v7545 = vpop.f32.mrf.mxu0
  %v7546 = vadd.f32 0.0, %v7545
  %v7547 = vpop.f32.mrf.mxu0
  %v7548 = vpop.f32.mrf.mxu0
  %v7549 = vadd.f32 0.0, %v7548
  %v7550 = vpop.f32.mrf.mxu0
  %7551 = vmatprep.mubr.bf16.mxu0 0
  %7552 = vmatmul.mubr.bf16.gmra.mxu0 %v7437
  %v7553 = vpop.f32.mrf.mxu0
  %v7554 = vadd.f32 0.0, %v7553
  %v7555 = vpop.f32.mrf.mxu0
  %v7556 = vpop.f32.mrf.mxu0
  %v7557 = vadd.f32 0.0, %v7556
  %v7558 = vpop.f32.mrf.mxu0
  %7559 = vmatprep.mubr.bf16.mxu0 0
  %7560 = vmatmul.mubr.bf16.gmra.mxu0 %v7440
  %v7561 = vpop.f32.mrf.mxu0
  %v7562 = vadd.f32 0.0, %v7561
  %v7563 = vpop.f32.mrf.mxu0
  %v7564 = vpop.f32.mrf.mxu0
  %v7565 = vadd.f32 0.0, %v7564
  %v7566 = vpop.f32.mrf.mxu0
  %7567 = vmatprep.mubr.bf16.mxu0 0
  %7568 = vmatmul.mubr.bf16.gmra.mxu0 %v7443
  %v7569 = vpop.f32.mrf.mxu0
  %v7570 = vadd.f32 0.0, %v7569
  %v7571 = vpop.f32.mrf.mxu0
  %v7572 = vpop.f32.mrf.mxu0
  %v7573 = vadd.f32 0.0, %v7572
  %v7574 = vpop.f32.mrf.mxu0
  %7575 = vmatprep.mubr.bf16.mxu0 0
  %7576 = vmatmul.mubr.bf16.gmra.mxu0 %v7446
  %v7577 = vpop.f32.mrf.mxu0
  %v7578 = vadd.f32 0.0, %v7577
  %v7579 = vpop.f32.mrf.mxu0
  %v7580 = vpop.f32.mrf.mxu0
  %v7581 = vadd.f32 0.0, %v7580
  %v7582 = vpop.f32.mrf.mxu0
  %7583 = vmatprep.mubr.bf16.mxu0 0
  %7584 = vmatmul.mubr.bf16.gmra.mxu0 %v7449
  %v7585 = vpop.f32.mrf.mxu0
  %v7586 = vadd.f32 0.0, %v7585
  %v7587 = vpop.f32.mrf.mxu0
  %v7588 = vpop.f32.mrf.mxu0
  %v7589 = vadd.f32 0.0, %v7588
  %v7590 = vpop.f32.mrf.mxu0
  %7591 = vmatprep.mubr.bf16.mxu0 0
  %7592 = vmatmul.mubr.bf16.gmra.mxu0 %v7452
  %v7593 = vpop.f32.mrf.mxu0
  %v7594 = vadd.f32 0.0, %v7593
  %v7595 = vpop.f32.mrf.mxu0
  %v7596 = vpop.f32.mrf.mxu0
  %v7597 = vadd.f32 0.0, %v7596
  %v7598 = vpop.f32.mrf.mxu0
  %7599 = vmatprep.mubr.bf16.mxu0 0
  %7600 = vmatmul.mubr.bf16.gmra.mxu0 %v7455
  %v7601 = vpop.f32.mrf.mxu0
  %v7602 = vadd.f32 0.0, %v7601
  %v7603 = vpop.f32.mrf.mxu0
  %v7604 = vpop.f32.mrf.mxu0
  %v7605 = vadd.f32 0.0, %v7604
  %v7606 = vpop.f32.mrf.mxu0
  %7607 = vmatprep.mubr.bf16.mxu0 0
  %7608 = vmatmul.mubr.bf16.gmra.mxu0 %v7458
  %v7609 = vpop.f32.mrf.mxu0
  %v7610 = vadd.f32 0.0, %v7609
  %v7611 = vpop.f32.mrf.mxu0
  %v7612 = vpop.f32.mrf.mxu0
  %v7613 = vadd.f32 0.0, %v7612
  %v7614 = vpop.f32.mrf.mxu0
  %7615 = vmatprep.mubr.bf16.mxu0 0
  %7616 = vmatmul.mubr.bf16.gmra.mxu0 %v7461
  %v7617 = vpop.f32.mrf.mxu0
  %v7618 = vadd.f32 0.0, %v7617
  %v7619 = vpop.f32.mrf.mxu0
  %v7620 = vpop.f32.mrf.mxu0
  %v7621 = vadd.f32 0.0, %v7620
  %v7622 = vpop.f32.mrf.mxu0
  %7623 = vdwg.mxu0
  %7624 = vrot.lane.b32.xlu0 %v1061, 32
  %v7625 = vpop.permute.xlu0 %7624
  %7626 = vrot.lane.b32.xlu0 %v1062, 32
  %v7627 = vpop.permute.xlu0 %7626
  %7628 = vrot.lane.b32.xlu0 %v1063, 32
  %v7629 = vpop.permute.xlu0 %7628
  %7630 = vrot.lane.b32.xlu0 %v1064, 32
  %v7631 = vpop.permute.xlu0 %7630
  %v7637 = vsel %vm3574, %v6471, 0
  %v7640 = vsel %vm3574, %v6472, 0
  %v7643 = vsel %vm3574, %v6473, 0
  %v7646 = vsel %vm3574, %v6474, 0
  %v7649 = vsel %vm3574, %v6475, 0
  %v7652 = vsel %vm3574, %v6476, 0
  %v7655 = vsel %vm3574, %v6477, 0
  %v7658 = vsel %vm3574, %v6478, 0
  %v7661 = vsel %vm3574, %v6479, 0
  %v7664 = vsel %vm3574, %v6480, 0
  %v7667 = vsel %vm3574, %v6481, 0
  %v7670 = vsel %vm3574, %v6482, 0
  %v7673 = vsel %vm3574, %v6483, 0
  %v7676 = vsel %vm3574, %v6484, 0
  %v7679 = vsel %vm3574, %v6485, 0
  %v7682 = vsel %vm3574, %v6486, 0
  %7684 = vmatprep.subr.bf16.mxu0 0
  %7685 = vmatpush1.bf16.msra.mxu0 0
  %7686 = vmatprep.subr.bf16.mxu0 0
  %7687 = vmatpush1.bf16.msra.mxu0 0
  %7688 = vmatprep.subr.bf16.mxu0 0
  %7689 = vmatpush1.bf16.msra.mxu0 0
  %7690 = vmatprep.subr.bf16.mxu0 0
  %7691 = vmatpush1.bf16.msra.mxu0 0
  %7692 = vmatprep.subr.bf16.mxu0 0
  %7693 = vmatpush1.bf16.msra.mxu0 %v7631
  %7694 = vmatprep.subr.bf16.mxu0 0
  %7695 = vmatpush1.bf16.msra.mxu0 %v7629
  %7696 = vmatprep.subr.bf16.mxu0 0
  %7697 = vmatpush1.bf16.msra.mxu0 %v7627
  %7698 = vmatprep.subr.bf16.mxu0 0
  %7699 = vmatpush1.bf16.msra.mxu0 %v7625
  %7700 = vmatprep.subr.bf16.mxu0 0
  %7701 = vmatpush2.bf16.msra.mxu0 0
  %7702 = vmatprep.subr.bf16.mxu0 0
  %7703 = vmatpush2.bf16.msra.mxu0 0
  %7704 = vmatprep.subr.bf16.mxu0 0
  %7705 = vmatpush2.bf16.msra.mxu0 0
  %7706 = vmatprep.subr.bf16.mxu0 0
  %7707 = vmatpush2.bf16.msra.mxu0 0
  %7708 = vmatprep.subr.bf16.mxu0 0
  %7709 = vmatpush2.bf16.msra.mxu0 0
  %7710 = vmatprep.subr.bf16.mxu0 0
  %7711 = vmatpush2.bf16.msra.mxu0 0
  %7712 = vmatprep.subr.bf16.mxu0 0
  %7713 = vmatpush2.bf16.msra.mxu0 0
  %7714 = vmatprep.subr.bf16.mxu0 0
  %7715 = vmatpush2.bf16.msra.mxu0 0
  %7716 = vmatprep.mubr.bf16.mxu0 0
  %7717 = vmatmul.mubr.bf16.gmra.mxu0 %v7637
  %v7718 = vpop.f32.mrf.mxu0
  %v7719 = vadd.f32 0.0, %v7718
  %v7720 = vpop.f32.mrf.mxu0
  %v7721 = vpop.f32.mrf.mxu0
  %v7722 = vadd.f32 0.0, %v7721
  %v7723 = vpop.f32.mrf.mxu0
  %7724 = vmatprep.mubr.bf16.mxu0 0
  %7725 = vmatmul.mubr.bf16.gmra.mxu0 %v7640
  %v7726 = vpop.f32.mrf.mxu0
  %v7727 = vadd.f32 0.0, %v7726
  %v7728 = vpop.f32.mrf.mxu0
  %v7729 = vpop.f32.mrf.mxu0
  %v7730 = vadd.f32 0.0, %v7729
  %v7731 = vpop.f32.mrf.mxu0
  %7732 = vmatprep.mubr.bf16.mxu0 0
  %7733 = vmatmul.mubr.bf16.gmra.mxu0 %v7643
  %v7734 = vpop.f32.mrf.mxu0
  %v7735 = vadd.f32 0.0, %v7734
  %v7736 = vpop.f32.mrf.mxu0
  %v7737 = vpop.f32.mrf.mxu0
  %v7738 = vadd.f32 0.0, %v7737
  %v7739 = vpop.f32.mrf.mxu0
  %7740 = vmatprep.mubr.bf16.mxu0 0
  %7741 = vmatmul.mubr.bf16.gmra.mxu0 %v7646
  %v7742 = vpop.f32.mrf.mxu0
  %v7743 = vadd.f32 0.0, %v7742
  %v7744 = vpop.f32.mrf.mxu0
  %v7745 = vpop.f32.mrf.mxu0
  %v7746 = vadd.f32 0.0, %v7745
  %v7747 = vpop.f32.mrf.mxu0
  %7748 = vmatprep.mubr.bf16.mxu0 0
  %7749 = vmatmul.mubr.bf16.gmra.mxu0 %v7649
  %v7750 = vpop.f32.mrf.mxu0
  %v7751 = vadd.f32 0.0, %v7750
  %v7752 = vpop.f32.mrf.mxu0
  %v7753 = vpop.f32.mrf.mxu0
  %v7754 = vadd.f32 0.0, %v7753
  %v7755 = vpop.f32.mrf.mxu0
  %7756 = vmatprep.mubr.bf16.mxu0 0
  %7757 = vmatmul.mubr.bf16.gmra.mxu0 %v7652
  %v7758 = vpop.f32.mrf.mxu0
  %v7759 = vadd.f32 0.0, %v7758
  %v7760 = vpop.f32.mrf.mxu0
  %v7761 = vpop.f32.mrf.mxu0
  %v7762 = vadd.f32 0.0, %v7761
  %v7763 = vpop.f32.mrf.mxu0
  %7764 = vmatprep.mubr.bf16.mxu0 0
  %7765 = vmatmul.mubr.bf16.gmra.mxu0 %v7655
  %v7766 = vpop.f32.mrf.mxu0
  %v7767 = vadd.f32 0.0, %v7766
  %v7768 = vpop.f32.mrf.mxu0
  %v7769 = vpop.f32.mrf.mxu0
  %v7770 = vadd.f32 0.0, %v7769
  %v7771 = vpop.f32.mrf.mxu0
  %7772 = vmatprep.mubr.bf16.mxu0 0
  %7773 = vmatmul.mubr.bf16.gmra.mxu0 %v7658
  %v7774 = vpop.f32.mrf.mxu0
  %v7775 = vadd.f32 0.0, %v7774
  %v7776 = vpop.f32.mrf.mxu0
  %v7777 = vpop.f32.mrf.mxu0
  %v7778 = vadd.f32 0.0, %v7777
  %v7779 = vpop.f32.mrf.mxu0
  %7780 = vmatprep.mubr.bf16.mxu0 0
  %7781 = vmatmul.mubr.bf16.gmra.mxu0 %v7661
  %v7782 = vpop.f32.mrf.mxu0
  %v7783 = vadd.f32 0.0, %v7782
  %v7784 = vpop.f32.mrf.mxu0
  %v7785 = vpop.f32.mrf.mxu0
  %v7786 = vadd.f32 0.0, %v7785
  %v7787 = vpop.f32.mrf.mxu0
  %7788 = vmatprep.mubr.bf16.mxu0 0
  %7789 = vmatmul.mubr.bf16.gmra.mxu0 %v7664
  %v7790 = vpop.f32.mrf.mxu0
  %v7791 = vadd.f32 0.0, %v7790
  %v7792 = vpop.f32.mrf.mxu0
  %v7793 = vpop.f32.mrf.mxu0
  %v7794 = vadd.f32 0.0, %v7793
  %v7795 = vpop.f32.mrf.mxu0
  %7796 = vmatprep.mubr.bf16.mxu0 0
  %7797 = vmatmul.mubr.bf16.gmra.mxu0 %v7667
  %v7798 = vpop.f32.mrf.mxu0
  %v7799 = vadd.f32 0.0, %v7798
  %v7800 = vpop.f32.mrf.mxu0
  %v7801 = vpop.f32.mrf.mxu0
  %v7802 = vadd.f32 0.0, %v7801
  %v7803 = vpop.f32.mrf.mxu0
  %7804 = vmatprep.mubr.bf16.mxu0 0
  %7805 = vmatmul.mubr.bf16.gmra.mxu0 %v7670
  %v7806 = vpop.f32.mrf.mxu0
  %v7807 = vadd.f32 0.0, %v7806
  %v7808 = vpop.f32.mrf.mxu0
  %v7809 = vpop.f32.mrf.mxu0
  %v7810 = vadd.f32 0.0, %v7809
  %v7811 = vpop.f32.mrf.mxu0
  %7812 = vmatprep.mubr.bf16.mxu0 0
  %7813 = vmatmul.mubr.bf16.gmra.mxu0 %v7673
  %v7814 = vpop.f32.mrf.mxu0
  %v7815 = vadd.f32 0.0, %v7814
  %v7816 = vpop.f32.mrf.mxu0
  %v7817 = vpop.f32.mrf.mxu0
  %v7818 = vadd.f32 0.0, %v7817
  %v7819 = vpop.f32.mrf.mxu0
  %7820 = vmatprep.mubr.bf16.mxu0 0
  %7821 = vmatmul.mubr.bf16.gmra.mxu0 %v7676
  %v7822 = vpop.f32.mrf.mxu0
  %v7823 = vadd.f32 0.0, %v7822
  %v7824 = vpop.f32.mrf.mxu0
  %v7825 = vpop.f32.mrf.mxu0
  %v7826 = vadd.f32 0.0, %v7825
  %v7827 = vpop.f32.mrf.mxu0
  %7828 = vmatprep.mubr.bf16.mxu0 0
  %7829 = vmatmul.mubr.bf16.gmra.mxu0 %v7679
  %v7830 = vpop.f32.mrf.mxu0
  %v7831 = vadd.f32 0.0, %v7830
  %v7832 = vpop.f32.mrf.mxu0
  %v7833 = vpop.f32.mrf.mxu0
  %v7834 = vadd.f32 0.0, %v7833
  %v7835 = vpop.f32.mrf.mxu0
  %7836 = vmatprep.mubr.bf16.mxu0 0
  %7837 = vmatmul.mubr.bf16.gmra.mxu0 %v7682
  %v7838 = vpop.f32.mrf.mxu0
  %v7839 = vadd.f32 0.0, %v7838
  %v7840 = vpop.f32.mrf.mxu0
  %v7841 = vpop.f32.mrf.mxu0
  %v7842 = vadd.f32 0.0, %v7841
  %v7843 = vpop.f32.mrf.mxu0
  %7844 = vdwg.mxu0
  %7845 = vrot.lane.b32.xlu0 %v1065, 32
  %v7846 = vpop.permute.xlu0 %7845
  %7847 = vrot.lane.b32.xlu0 %v1066, 32
  %v7848 = vpop.permute.xlu0 %7847
  %7849 = vrot.lane.b32.xlu0 %v1067, 32
  %v7850 = vpop.permute.xlu0 %7849
  %7851 = vrot.lane.b32.xlu0 %v1068, 32
  %v7852 = vpop.permute.xlu0 %7851
  %v7858 = vsel %vm3574, %v6487, 0
  %v7861 = vsel %vm3574, %v6488, 0
  %v7864 = vsel %vm3574, %v6489, 0
  %v7867 = vsel %vm3574, %v6490, 0
  %v7870 = vsel %vm3574, %v6491, 0
  %v7873 = vsel %vm3574, %v6492, 0
  %v7876 = vsel %vm3574, %v6493, 0
  %v7879 = vsel %vm3574, %v6494, 0
  %v7882 = vsel %vm3574, %v6495, 0
  %v7885 = vsel %vm3574, %v6496, 0
  %v7888 = vsel %vm3574, %v6497, 0
  %v7891 = vsel %vm3574, %v6498, 0
  %v7894 = vsel %vm3574, %v6499, 0
  %v7897 = vsel %vm3574, %v6500, 0
  %v7900 = vsel %vm3574, %v6501, 0
  %v7903 = vsel %vm3574, %v6502, 0
  %7905 = vmatprep.subr.bf16.mxu0 0
  %7906 = vmatpush1.bf16.msra.mxu0 0
  %7907 = vmatprep.subr.bf16.mxu0 0
  %7908 = vmatpush1.bf16.msra.mxu0 0
  %7909 = vmatprep.subr.bf16.mxu0 0
  %7910 = vmatpush1.bf16.msra.mxu0 0
  %7911 = vmatprep.subr.bf16.mxu0 0
  %7912 = vmatpush1.bf16.msra.mxu0 0
  %7913 = vmatprep.subr.bf16.mxu0 0
  %7914 = vmatpush1.bf16.msra.mxu0 %v7852
  %7915 = vmatprep.subr.bf16.mxu0 0
  %7916 = vmatpush1.bf16.msra.mxu0 %v7850
  %7917 = vmatprep.subr.bf16.mxu0 0
  %7918 = vmatpush1.bf16.msra.mxu0 %v7848
  %7919 = vmatprep.subr.bf16.mxu0 0
  %7920 = vmatpush1.bf16.msra.mxu0 %v7846
  %7921 = vmatprep.subr.bf16.mxu0 0
  %7922 = vmatpush2.bf16.msra.mxu0 0
  %7923 = vmatprep.subr.bf16.mxu0 0
  %7924 = vmatpush2.bf16.msra.mxu0 0
  %7925 = vmatprep.subr.bf16.mxu0 0
  %7926 = vmatpush2.bf16.msra.mxu0 0
  %7927 = vmatprep.subr.bf16.mxu0 0
  %7928 = vmatpush2.bf16.msra.mxu0 0
  %7929 = vmatprep.subr.bf16.mxu0 0
  %7930 = vmatpush2.bf16.msra.mxu0 0
  %7931 = vmatprep.subr.bf16.mxu0 0
  %7932 = vmatpush2.bf16.msra.mxu0 0
  %7933 = vmatprep.subr.bf16.mxu0 0
  %7934 = vmatpush2.bf16.msra.mxu0 0
  %7935 = vmatprep.subr.bf16.mxu0 0
  %7936 = vmatpush2.bf16.msra.mxu0 0
  %7937 = vmatprep.mubr.bf16.mxu0 0
  %7938 = vmatmul.mubr.bf16.gmra.mxu0 %v7858
  %v7939 = vpop.f32.mrf.mxu0
  %v7940 = vadd.f32 0.0, %v7939
  %v7941 = vpop.f32.mrf.mxu0
  %v7942 = vpop.f32.mrf.mxu0
  %v7943 = vadd.f32 0.0, %v7942
  %v7944 = vpop.f32.mrf.mxu0
  %7945 = vmatprep.mubr.bf16.mxu0 0
  %7946 = vmatmul.mubr.bf16.gmra.mxu0 %v7861
  %v7947 = vpop.f32.mrf.mxu0
  %v7948 = vadd.f32 0.0, %v7947
  %v7949 = vpop.f32.mrf.mxu0
  %v7950 = vpop.f32.mrf.mxu0
  %v7951 = vadd.f32 0.0, %v7950
  %v7952 = vpop.f32.mrf.mxu0
  %7953 = vmatprep.mubr.bf16.mxu0 0
  %7954 = vmatmul.mubr.bf16.gmra.mxu0 %v7864
  %v7955 = vpop.f32.mrf.mxu0
  %v7956 = vadd.f32 0.0, %v7955
  %v7957 = vpop.f32.mrf.mxu0
  %v7958 = vpop.f32.mrf.mxu0
  %v7959 = vadd.f32 0.0, %v7958
  %v7960 = vpop.f32.mrf.mxu0
  %7961 = vmatprep.mubr.bf16.mxu0 0
  %7962 = vmatmul.mubr.bf16.gmra.mxu0 %v7867
  %v7963 = vpop.f32.mrf.mxu0
  %v7964 = vadd.f32 0.0, %v7963
  %v7965 = vpop.f32.mrf.mxu0
  %v7966 = vpop.f32.mrf.mxu0
  %v7967 = vadd.f32 0.0, %v7966
  %v7968 = vpop.f32.mrf.mxu0
  %7969 = vmatprep.mubr.bf16.mxu0 0
  %7970 = vmatmul.mubr.bf16.gmra.mxu0 %v7870
  %v7971 = vpop.f32.mrf.mxu0
  %v7972 = vadd.f32 0.0, %v7971
  %v7973 = vpop.f32.mrf.mxu0
  %v7974 = vpop.f32.mrf.mxu0
  %v7975 = vadd.f32 0.0, %v7974
  %v7976 = vpop.f32.mrf.mxu0
  %7977 = vmatprep.mubr.bf16.mxu0 0
  %7978 = vmatmul.mubr.bf16.gmra.mxu0 %v7873
  %v7979 = vpop.f32.mrf.mxu0
  %v7980 = vadd.f32 0.0, %v7979
  %v7981 = vpop.f32.mrf.mxu0
  %v7982 = vpop.f32.mrf.mxu0
  %v7983 = vadd.f32 0.0, %v7982
  %v7984 = vpop.f32.mrf.mxu0
  %7985 = vmatprep.mubr.bf16.mxu0 0
  %7986 = vmatmul.mubr.bf16.gmra.mxu0 %v7876
  %v7987 = vpop.f32.mrf.mxu0
  %v7988 = vadd.f32 0.0, %v7987
  %v7989 = vpop.f32.mrf.mxu0
  %v7990 = vpop.f32.mrf.mxu0
  %v7991 = vadd.f32 0.0, %v7990
  %v7992 = vpop.f32.mrf.mxu0
  %7993 = vmatprep.mubr.bf16.mxu0 0
  %7994 = vmatmul.mubr.bf16.gmra.mxu0 %v7879
  %v7995 = vpop.f32.mrf.mxu0
  %v7996 = vadd.f32 0.0, %v7995
  %v7997 = vpop.f32.mrf.mxu0
  %v7998 = vpop.f32.mrf.mxu0
  %v7999 = vadd.f32 0.0, %v7998
  %v8000 = vpop.f32.mrf.mxu0
  %8001 = vmatprep.mubr.bf16.mxu0 0
  %8002 = vmatmul.mubr.bf16.gmra.mxu0 %v7882
  %v8003 = vpop.f32.mrf.mxu0
  %v8004 = vadd.f32 0.0, %v8003
  %v8005 = vpop.f32.mrf.mxu0
  %v8006 = vpop.f32.mrf.mxu0
  %v8007 = vadd.f32 0.0, %v8006
  %v8008 = vpop.f32.mrf.mxu0
  %8009 = vmatprep.mubr.bf16.mxu0 0
  %8010 = vmatmul.mubr.bf16.gmra.mxu0 %v7885
  %v8011 = vpop.f32.mrf.mxu0
  %v8012 = vadd.f32 0.0, %v8011
  %v8013 = vpop.f32.mrf.mxu0
  %v8014 = vpop.f32.mrf.mxu0
  %v8015 = vadd.f32 0.0, %v8014
  %v8016 = vpop.f32.mrf.mxu0
  %8017 = vmatprep.mubr.bf16.mxu0 0
  %8018 = vmatmul.mubr.bf16.gmra.mxu0 %v7888
  %v8019 = vpop.f32.mrf.mxu0
  %v8020 = vadd.f32 0.0, %v8019
  %v8021 = vpop.f32.mrf.mxu0
  %v8022 = vpop.f32.mrf.mxu0
  %v8023 = vadd.f32 0.0, %v8022
  %v8024 = vpop.f32.mrf.mxu0
  %8025 = vmatprep.mubr.bf16.mxu0 0
  %8026 = vmatmul.mubr.bf16.gmra.mxu0 %v7891
  %v8027 = vpop.f32.mrf.mxu0
  %v8028 = vadd.f32 0.0, %v8027
  %v8029 = vpop.f32.mrf.mxu0
  %v8030 = vpop.f32.mrf.mxu0
  %v8031 = vadd.f32 0.0, %v8030
  %v8032 = vpop.f32.mrf.mxu0
  %8033 = vmatprep.mubr.bf16.mxu0 0
  %8034 = vmatmul.mubr.bf16.gmra.mxu0 %v7894
  %v8035 = vpop.f32.mrf.mxu0
  %v8036 = vadd.f32 0.0, %v8035
  %v8037 = vpop.f32.mrf.mxu0
  %v8038 = vpop.f32.mrf.mxu0
  %v8039 = vadd.f32 0.0, %v8038
  %v8040 = vpop.f32.mrf.mxu0
  %8041 = vmatprep.mubr.bf16.mxu0 0
  %8042 = vmatmul.mubr.bf16.gmra.mxu0 %v7897
  %v8043 = vpop.f32.mrf.mxu0
  %v8044 = vadd.f32 0.0, %v8043
  %v8045 = vpop.f32.mrf.mxu0
  %v8046 = vpop.f32.mrf.mxu0
  %v8047 = vadd.f32 0.0, %v8046
  %v8048 = vpop.f32.mrf.mxu0
  %8049 = vmatprep.mubr.bf16.mxu0 0
  %8050 = vmatmul.mubr.bf16.gmra.mxu0 %v7900
  %v8051 = vpop.f32.mrf.mxu0
  %v8052 = vadd.f32 0.0, %v8051
  %v8053 = vpop.f32.mrf.mxu0
  %v8054 = vpop.f32.mrf.mxu0
  %v8055 = vadd.f32 0.0, %v8054
  %v8056 = vpop.f32.mrf.mxu0
  %8057 = vmatprep.mubr.bf16.mxu0 0
  %8058 = vmatmul.mubr.bf16.gmra.mxu0 %v7903
  %v8059 = vpop.f32.mrf.mxu0
  %v8060 = vadd.f32 0.0, %v8059
  %v8061 = vpop.f32.mrf.mxu0
  %v8062 = vpop.f32.mrf.mxu0
  %v8063 = vadd.f32 0.0, %v8062
  %v8064 = vpop.f32.mrf.mxu0
  %8065 = vdwg.mxu0
  %8066 = vrot.lane.b32.xlu0 %v1069, 32
  %v8067 = vpop.permute.xlu0 %8066
  %8068 = vrot.lane.b32.xlu0 %v1070, 32
  %v8069 = vpop.permute.xlu0 %8068
  %8070 = vrot.lane.b32.xlu0 %v1071, 32
  %v8071 = vpop.permute.xlu0 %8070
  %8072 = vrot.lane.b32.xlu0 %v1072, 32
  %v8073 = vpop.permute.xlu0 %8072
  %v8079 = vsel %vm3574, %v6503, 0
  %v8082 = vsel %vm3574, %v6504, 0
  %v8085 = vsel %vm3574, %v6505, 0
  %v8088 = vsel %vm3574, %v6506, 0
  %v8091 = vsel %vm3574, %v6507, 0
  %v8094 = vsel %vm3574, %v6508, 0
  %v8097 = vsel %vm3574, %v6509, 0
  %v8100 = vsel %vm3574, %v6510, 0
  %v8103 = vsel %vm3574, %v6511, 0
  %v8106 = vsel %vm3574, %v6512, 0
  %v8109 = vsel %vm3574, %v6513, 0
  %v8112 = vsel %vm3574, %v6514, 0
  %v8115 = vsel %vm3574, %v6515, 0
  %v8118 = vsel %vm3574, %v6516, 0
  %v8121 = vsel %vm3574, %v6517, 0
  %v8124 = vsel %vm3574, %v6518, 0
  %8126 = vmatprep.subr.bf16.mxu0 0
  %8127 = vmatpush1.bf16.msra.mxu0 0
  %8128 = vmatprep.subr.bf16.mxu0 0
  %8129 = vmatpush1.bf16.msra.mxu0 0
  %8130 = vmatprep.subr.bf16.mxu0 0
  %8131 = vmatpush1.bf16.msra.mxu0 0
  %8132 = vmatprep.subr.bf16.mxu0 0
  %8133 = vmatpush1.bf16.msra.mxu0 0
  %8134 = vmatprep.subr.bf16.mxu0 0
  %8135 = vmatpush1.bf16.msra.mxu0 %v8073
  %8136 = vmatprep.subr.bf16.mxu0 0
  %8137 = vmatpush1.bf16.msra.mxu0 %v8071
  %8138 = vmatprep.subr.bf16.mxu0 0
  %8139 = vmatpush1.bf16.msra.mxu0 %v8069
  %8140 = vmatprep.subr.bf16.mxu0 0
  %8141 = vmatpush1.bf16.msra.mxu0 %v8067
  %8142 = vmatprep.subr.bf16.mxu0 0
  %8143 = vmatpush2.bf16.msra.mxu0 0
  %8144 = vmatprep.subr.bf16.mxu0 0
  %8145 = vmatpush2.bf16.msra.mxu0 0
  %8146 = vmatprep.subr.bf16.mxu0 0
  %8147 = vmatpush2.bf16.msra.mxu0 0
  %8148 = vmatprep.subr.bf16.mxu0 0
  %8149 = vmatpush2.bf16.msra.mxu0 0
  %8150 = vmatprep.subr.bf16.mxu0 0
  %8151 = vmatpush2.bf16.msra.mxu0 0
  %8152 = vmatprep.subr.bf16.mxu0 0
  %8153 = vmatpush2.bf16.msra.mxu0 0
  %8154 = vmatprep.subr.bf16.mxu0 0
  %8155 = vmatpush2.bf16.msra.mxu0 0
  %8156 = vmatprep.subr.bf16.mxu0 0
  %8157 = vmatpush2.bf16.msra.mxu0 0
  %8158 = vmatprep.mubr.bf16.mxu0 0
  %8159 = vmatmul.mubr.bf16.gmra.mxu0 %v8079
  %v8160 = vpop.f32.mrf.mxu0
  %v8161 = vadd.f32 0.0, %v8160
  %v8162 = vpop.f32.mrf.mxu0
  %v8163 = vpop.f32.mrf.mxu0
  %v8164 = vadd.f32 0.0, %v8163
  %v8165 = vpop.f32.mrf.mxu0
  %8166 = vmatprep.mubr.bf16.mxu0 0
  %8167 = vmatmul.mubr.bf16.gmra.mxu0 %v8082
  %v8168 = vpop.f32.mrf.mxu0
  %v8169 = vadd.f32 0.0, %v8168
  %v8170 = vpop.f32.mrf.mxu0
  %v8171 = vpop.f32.mrf.mxu0
  %v8172 = vadd.f32 0.0, %v8171
  %v8173 = vpop.f32.mrf.mxu0
  %8174 = vmatprep.mubr.bf16.mxu0 0
  %8175 = vmatmul.mubr.bf16.gmra.mxu0 %v8085
  %v8176 = vpop.f32.mrf.mxu0
  %v8177 = vadd.f32 0.0, %v8176
  %v8178 = vpop.f32.mrf.mxu0
  %v8179 = vpop.f32.mrf.mxu0
  %v8180 = vadd.f32 0.0, %v8179
  %v8181 = vpop.f32.mrf.mxu0
  %8182 = vmatprep.mubr.bf16.mxu0 0
  %8183 = vmatmul.mubr.bf16.gmra.mxu0 %v8088
  %v8184 = vpop.f32.mrf.mxu0
  %v8185 = vadd.f32 0.0, %v8184
  %v8186 = vpop.f32.mrf.mxu0
  %v8187 = vpop.f32.mrf.mxu0
  %v8188 = vadd.f32 0.0, %v8187
  %v8189 = vpop.f32.mrf.mxu0
  %8190 = vmatprep.mubr.bf16.mxu0 0
  %8191 = vmatmul.mubr.bf16.gmra.mxu0 %v8091
  %v8192 = vpop.f32.mrf.mxu0
  %v8193 = vadd.f32 0.0, %v8192
  %v8194 = vpop.f32.mrf.mxu0
  %v8195 = vpop.f32.mrf.mxu0
  %v8196 = vadd.f32 0.0, %v8195
  %v8197 = vpop.f32.mrf.mxu0
  %8198 = vmatprep.mubr.bf16.mxu0 0
  %8199 = vmatmul.mubr.bf16.gmra.mxu0 %v8094
  %v8200 = vpop.f32.mrf.mxu0
  %v8201 = vadd.f32 0.0, %v8200
  %v8202 = vpop.f32.mrf.mxu0
  %v8203 = vpop.f32.mrf.mxu0
  %v8204 = vadd.f32 0.0, %v8203
  %v8205 = vpop.f32.mrf.mxu0
  %8206 = vmatprep.mubr.bf16.mxu0 0
  %8207 = vmatmul.mubr.bf16.gmra.mxu0 %v8097
  %v8208 = vpop.f32.mrf.mxu0
  %v8209 = vadd.f32 0.0, %v8208
  %v8210 = vpop.f32.mrf.mxu0
  %v8211 = vpop.f32.mrf.mxu0
  %v8212 = vadd.f32 0.0, %v8211
  %v8213 = vpop.f32.mrf.mxu0
  %8214 = vmatprep.mubr.bf16.mxu0 0
  %8215 = vmatmul.mubr.bf16.gmra.mxu0 %v8100
  %v8216 = vpop.f32.mrf.mxu0
  %v8217 = vadd.f32 0.0, %v8216
  %v8218 = vpop.f32.mrf.mxu0
  %v8219 = vpop.f32.mrf.mxu0
  %v8220 = vadd.f32 0.0, %v8219
  %v8221 = vpop.f32.mrf.mxu0
  %8222 = vmatprep.mubr.bf16.mxu0 0
  %8223 = vmatmul.mubr.bf16.gmra.mxu0 %v8103
  %v8224 = vpop.f32.mrf.mxu0
  %v8225 = vadd.f32 0.0, %v8224
  %v8226 = vpop.f32.mrf.mxu0
  %v8227 = vpop.f32.mrf.mxu0
  %v8228 = vadd.f32 0.0, %v8227
  %v8229 = vpop.f32.mrf.mxu0
  %8230 = vmatprep.mubr.bf16.mxu0 0
  %8231 = vmatmul.mubr.bf16.gmra.mxu0 %v8106
  %v8232 = vpop.f32.mrf.mxu0
  %v8233 = vadd.f32 0.0, %v8232
  %v8234 = vpop.f32.mrf.mxu0
  %v8235 = vpop.f32.mrf.mxu0
  %v8236 = vadd.f32 0.0, %v8235
  %v8237 = vpop.f32.mrf.mxu0
  %8238 = vmatprep.mubr.bf16.mxu0 0
  %8239 = vmatmul.mubr.bf16.gmra.mxu0 %v8109
  %v8240 = vpop.f32.mrf.mxu0
  %v8241 = vadd.f32 0.0, %v8240
  %v8242 = vpop.f32.mrf.mxu0
  %v8243 = vpop.f32.mrf.mxu0
  %v8244 = vadd.f32 0.0, %v8243
  %v8245 = vpop.f32.mrf.mxu0
  %8246 = vmatprep.mubr.bf16.mxu0 0
  %8247 = vmatmul.mubr.bf16.gmra.mxu0 %v8112
  %v8248 = vpop.f32.mrf.mxu0
  %v8249 = vadd.f32 0.0, %v8248
  %v8250 = vpop.f32.mrf.mxu0
  %v8251 = vpop.f32.mrf.mxu0
  %v8252 = vadd.f32 0.0, %v8251
  %v8253 = vpop.f32.mrf.mxu0
  %8254 = vmatprep.mubr.bf16.mxu0 0
  %8255 = vmatmul.mubr.bf16.gmra.mxu0 %v8115
  %v8256 = vpop.f32.mrf.mxu0
  %v8257 = vadd.f32 0.0, %v8256
  %v8258 = vpop.f32.mrf.mxu0
  %v8259 = vpop.f32.mrf.mxu0
  %v8260 = vadd.f32 0.0, %v8259
  %v8261 = vpop.f32.mrf.mxu0
  %8262 = vmatprep.mubr.bf16.mxu0 0
  %8263 = vmatmul.mubr.bf16.gmra.mxu0 %v8118
  %v8264 = vpop.f32.mrf.mxu0
  %v8265 = vadd.f32 0.0, %v8264
  %v8266 = vpop.f32.mrf.mxu0
  %v8267 = vpop.f32.mrf.mxu0
  %v8268 = vadd.f32 0.0, %v8267
  %v8269 = vpop.f32.mrf.mxu0
  %8270 = vmatprep.mubr.bf16.mxu0 0
  %8271 = vmatmul.mubr.bf16.gmra.mxu0 %v8121
  %v8272 = vpop.f32.mrf.mxu0
  %v8273 = vadd.f32 0.0, %v8272
  %v8274 = vpop.f32.mrf.mxu0
  %v8275 = vpop.f32.mrf.mxu0
  %v8276 = vadd.f32 0.0, %v8275
  %v8277 = vpop.f32.mrf.mxu0
  %8278 = vmatprep.mubr.bf16.mxu0 0
  %8279 = vmatmul.mubr.bf16.gmra.mxu0 %v8124
  %v8280 = vpop.f32.mrf.mxu0
  %v8281 = vadd.f32 0.0, %v8280
  %v8282 = vpop.f32.mrf.mxu0
  %v8283 = vpop.f32.mrf.mxu0
  %v8284 = vadd.f32 0.0, %v8283
  %v8285 = vpop.f32.mrf.mxu0
  %8286 = vdwg.mxu0
  %v8289 = vunpack.c.l.s4 1966171168
  %v8290 = vunpack.c.0.s8 %v8289
  %v8291 = vlaneseq
  %v8292 = vshrl.u32 %v8291, 7
  %v8293 = vsub.s32 %v8290, %v8292
  %v8294 = vrot.slane %v1073, %v8293
  %v8295 = vcombine.high %v8294, %v8294
  %v8297 = vunpack.c.l.s4 1966171168
  %v8298 = vunpack.c.0.s8 %v8297
  %v8299 = vlaneseq
  %v8300 = vshrl.u32 %v8299, 7
  %v8301 = vsub.s32 %v8298, %v8300
  %v8302 = vrot.slane %v8294, %v8301
  %v8304 = vunpack.c.l.s4 1966171168
  %v8305 = vunpack.c.0.s8 %v8304
  %v8306 = vlaneseq
  %v8307 = vshrl.u32 %v8306, 7
  %v8308 = vsub.s32 %v8305, %v8307
  %v8309 = vrot.slane %v8295, %v8308
  %v8310 = vcombine.high %v8302, %v8302
  %v8311 = vcombine.high %v8309, %v8309
  %v8312 = vlaneseq
  %v8313 = vshrl.u32 %v8312, 7
  %v8314 = vsub.s32 0, %v8313
  %v8315 = vrot.slane %v8302, %v8314
  %v8316 = vlaneseq
  %v8317 = vshrl.u32 %v8316, 7
  %v8318 = vsub.s32 0, %v8317
  %v8319 = vrot.slane %v8309, %v8318
  %v8320 = vlaneseq
  %v8321 = vshrl.u32 %v8320, 7
  %v8322 = vsub.s32 0, %v8321
  %v8323 = vrot.slane %v8310, %v8322
  %v8324 = vlaneseq
  %v8325 = vshrl.u32 %v8324, 7
  %v8326 = vsub.s32 0, %v8325
  %v8327 = vrot.slane %v8311, %v8326
  %v8332 = vmul.f32 %v6614, %v8315
  %v8333 = vmul.f32 %v6617, %v8315
  %v8334 = vmul.f32 %v6622, %v8315
  %v8335 = vmul.f32 %v6625, %v8315
  %v8336 = vmul.f32 %v6630, %v8315
  %v8337 = vmul.f32 %v6633, %v8315
  %v8338 = vmul.f32 %v6638, %v8315
  %v8339 = vmul.f32 %v6641, %v8315
  %v8340 = vmul.f32 %v6646, %v8319
  %v8341 = vmul.f32 %v6649, %v8319
  %v8342 = vmul.f32 %v6654, %v8319
  %v8343 = vmul.f32 %v6657, %v8319
  %v8344 = vmul.f32 %v6662, %v8319
  %v8345 = vmul.f32 %v6665, %v8319
  %v8346 = vmul.f32 %v6670, %v8319
  %v8347 = vmul.f32 %v6673, %v8319
  %v8348 = vmul.f32 %v6678, %v8323
  %v8349 = vmul.f32 %v6681, %v8323
  %v8350 = vmul.f32 %v6686, %v8323
  %v8351 = vmul.f32 %v6689, %v8323
  %v8352 = vmul.f32 %v6694, %v8323
  %v8353 = vmul.f32 %v6697, %v8323
  %v8354 = vmul.f32 %v6702, %v8323
  %v8355 = vmul.f32 %v6705, %v8323
  %v8356 = vmul.f32 %v6710, %v8327
  %v8357 = vmul.f32 %v6713, %v8327
  %v8358 = vmul.f32 %v6718, %v8327
  %v8359 = vmul.f32 %v6721, %v8327
  %v8360 = vmul.f32 %v6726, %v8327
  %v8361 = vmul.f32 %v6729, %v8327
  %v8362 = vmul.f32 %v6734, %v8327
  %v8363 = vmul.f32 %v6737, %v8327
  %v8364 = vmul.f32 %v6835, %v8315
  %v8365 = vmul.f32 %v6838, %v8315
  %v8366 = vmul.f32 %v6843, %v8315
  %v8367 = vmul.f32 %v6846, %v8315
  %v8368 = vmul.f32 %v6851, %v8315
  %v8369 = vmul.f32 %v6854, %v8315
  %v8370 = vmul.f32 %v6859, %v8315
  %v8371 = vmul.f32 %v6862, %v8315
  %v8372 = vmul.f32 %v6867, %v8319
  %v8373 = vmul.f32 %v6870, %v8319
  %v8374 = vmul.f32 %v6875, %v8319
  %v8375 = vmul.f32 %v6878, %v8319
  %v8376 = vmul.f32 %v6883, %v8319
  %v8377 = vmul.f32 %v6886, %v8319
  %v8378 = vmul.f32 %v6891, %v8319
  %v8379 = vmul.f32 %v6894, %v8319
  %v8380 = vmul.f32 %v6899, %v8323
  %v8381 = vmul.f32 %v6902, %v8323
  %v8382 = vmul.f32 %v6907, %v8323
  %v8383 = vmul.f32 %v6910, %v8323
  %v8384 = vmul.f32 %v6915, %v8323
  %v8385 = vmul.f32 %v6918, %v8323
  %v8386 = vmul.f32 %v6923, %v8323
  %v8387 = vmul.f32 %v6926, %v8323
  %v8388 = vmul.f32 %v6931, %v8327
  %v8389 = vmul.f32 %v6934, %v8327
  %v8390 = vmul.f32 %v6939, %v8327
  %v8391 = vmul.f32 %v6942, %v8327
  %v8392 = vmul.f32 %v6947, %v8327
  %v8393 = vmul.f32 %v6950, %v8327
  %v8394 = vmul.f32 %v6955, %v8327
  %v8395 = vmul.f32 %v6958, %v8327
  %v8396 = vmul.f32 %v7056, %v8315
  %v8397 = vmul.f32 %v7059, %v8315
  %v8398 = vmul.f32 %v7064, %v8315
  %v8399 = vmul.f32 %v7067, %v8315
  %v8400 = vmul.f32 %v7072, %v8315
  %v8401 = vmul.f32 %v7075, %v8315
  %v8402 = vmul.f32 %v7080, %v8315
  %v8403 = vmul.f32 %v7083, %v8315
  %v8404 = vmul.f32 %v7088, %v8319
  %v8405 = vmul.f32 %v7091, %v8319
  %v8406 = vmul.f32 %v7096, %v8319
  %v8407 = vmul.f32 %v7099, %v8319
  %v8408 = vmul.f32 %v7104, %v8319
  %v8409 = vmul.f32 %v7107, %v8319
  %v8410 = vmul.f32 %v7112, %v8319
  %v8411 = vmul.f32 %v7115, %v8319
  %v8412 = vmul.f32 %v7120, %v8323
  %v8413 = vmul.f32 %v7123, %v8323
  %v8414 = vmul.f32 %v7128, %v8323
  %v8415 = vmul.f32 %v7131, %v8323
  %v8416 = vmul.f32 %v7136, %v8323
  %v8417 = vmul.f32 %v7139, %v8323
  %v8418 = vmul.f32 %v7144, %v8323
  %v8419 = vmul.f32 %v7147, %v8323
  %v8420 = vmul.f32 %v7152, %v8327
  %v8421 = vmul.f32 %v7155, %v8327
  %v8422 = vmul.f32 %v7160, %v8327
  %v8423 = vmul.f32 %v7163, %v8327
  %v8424 = vmul.f32 %v7168, %v8327
  %v8425 = vmul.f32 %v7171, %v8327
  %v8426 = vmul.f32 %v7176, %v8327
  %v8427 = vmul.f32 %v7179, %v8327
  %v8428 = vmul.f32 %v7277, %v8315
  %v8429 = vmul.f32 %v7280, %v8315
  %v8430 = vmul.f32 %v7285, %v8315
  %v8431 = vmul.f32 %v7288, %v8315
  %v8432 = vmul.f32 %v7293, %v8315
  %v8433 = vmul.f32 %v7296, %v8315
  %v8434 = vmul.f32 %v7301, %v8315
  %v8435 = vmul.f32 %v7304, %v8315
  %v8436 = vmul.f32 %v7309, %v8319
  %v8437 = vmul.f32 %v7312, %v8319
  %v8438 = vmul.f32 %v7317, %v8319
  %v8439 = vmul.f32 %v7320, %v8319
  %v8440 = vmul.f32 %v7325, %v8319
  %v8441 = vmul.f32 %v7328, %v8319
  %v8442 = vmul.f32 %v7333, %v8319
  %v8443 = vmul.f32 %v7336, %v8319
  %v8444 = vmul.f32 %v7341, %v8323
  %v8445 = vmul.f32 %v7344, %v8323
  %v8446 = vmul.f32 %v7349, %v8323
  %v8447 = vmul.f32 %v7352, %v8323
  %v8448 = vmul.f32 %v7357, %v8323
  %v8449 = vmul.f32 %v7360, %v8323
  %v8450 = vmul.f32 %v7365, %v8323
  %v8451 = vmul.f32 %v7368, %v8323
  %v8452 = vmul.f32 %v7373, %v8327
  %v8453 = vmul.f32 %v7376, %v8327
  %v8454 = vmul.f32 %v7381, %v8327
  %v8455 = vmul.f32 %v7384, %v8327
  %v8456 = vmul.f32 %v7389, %v8327
  %v8457 = vmul.f32 %v7392, %v8327
  %v8458 = vmul.f32 %v7397, %v8327
  %v8459 = vmul.f32 %v7400, %v8327
  %v8460 = vmul.f32 %v7498, %v8315
  %v8461 = vmul.f32 %v7501, %v8315
  %v8462 = vmul.f32 %v7506, %v8315
  %v8463 = vmul.f32 %v7509, %v8315
  %v8464 = vmul.f32 %v7514, %v8315
  %v8465 = vmul.f32 %v7517, %v8315
  %v8466 = vmul.f32 %v7522, %v8315
  %v8467 = vmul.f32 %v7525, %v8315
  %v8468 = vmul.f32 %v7530, %v8319
  %v8469 = vmul.f32 %v7533, %v8319
  %v8470 = vmul.f32 %v7538, %v8319
  %v8471 = vmul.f32 %v7541, %v8319
  %v8472 = vmul.f32 %v7546, %v8319
  %v8473 = vmul.f32 %v7549, %v8319
  %v8474 = vmul.f32 %v7554, %v8319
  %v8475 = vmul.f32 %v7557, %v8319
  %v8476 = vmul.f32 %v7562, %v8323
  %v8477 = vmul.f32 %v7565, %v8323
  %v8478 = vmul.f32 %v7570, %v8323
  %v8479 = vmul.f32 %v7573, %v8323
  %v8480 = vmul.f32 %v7578, %v8323
  %v8481 = vmul.f32 %v7581, %v8323
  %v8482 = vmul.f32 %v7586, %v8323
  %v8483 = vmul.f32 %v7589, %v8323
  %v8484 = vmul.f32 %v7594, %v8327
  %v8485 = vmul.f32 %v7597, %v8327
  %v8486 = vmul.f32 %v7602, %v8327
  %v8487 = vmul.f32 %v7605, %v8327
  %v8488 = vmul.f32 %v7610, %v8327
  %v8489 = vmul.f32 %v7613, %v8327
  %v8490 = vmul.f32 %v7618, %v8327
  %v8491 = vmul.f32 %v7621, %v8327
  %v8492 = vmul.f32 %v7719, %v8315
  %v8493 = vmul.f32 %v7722, %v8315
  %v8494 = vmul.f32 %v7727, %v8315
  %v8495 = vmul.f32 %v7730, %v8315
  %v8496 = vmul.f32 %v7735, %v8315
  %v8497 = vmul.f32 %v7738, %v8315
  %v8498 = vmul.f32 %v7743, %v8315
  %v8499 = vmul.f32 %v7746, %v8315
  %v8500 = vmul.f32 %v7751, %v8319
  %v8501 = vmul.f32 %v7754, %v8319
  %v8502 = vmul.f32 %v7759, %v8319
  %v8503 = vmul.f32 %v7762, %v8319
  %v8504 = vmul.f32 %v7767, %v8319
  %v8505 = vmul.f32 %v7770, %v8319
  %v8506 = vmul.f32 %v7775, %v8319
  %v8507 = vmul.f32 %v7778, %v8319
  %v8508 = vmul.f32 %v7783, %v8323
  %v8509 = vmul.f32 %v7786, %v8323
  %v8510 = vmul.f32 %v7791, %v8323
  %v8511 = vmul.f32 %v7794, %v8323
  %v8512 = vmul.f32 %v7799, %v8323
  %v8513 = vmul.f32 %v7802, %v8323
  %v8514 = vmul.f32 %v7807, %v8323
  %v8515 = vmul.f32 %v7810, %v8323
  %v8516 = vmul.f32 %v7815, %v8327
  %v8517 = vmul.f32 %v7818, %v8327
  %v8518 = vmul.f32 %v7823, %v8327
  %v8519 = vmul.f32 %v7826, %v8327
  %v8520 = vmul.f32 %v7831, %v8327
  %v8521 = vmul.f32 %v7834, %v8327
  %v8522 = vmul.f32 %v7839, %v8327
  %v8523 = vmul.f32 %v7842, %v8327
  %v8524 = vmul.f32 %v7940, %v8315
  %v8525 = vmul.f32 %v7943, %v8315
  %v8526 = vmul.f32 %v7948, %v8315
  %v8527 = vmul.f32 %v7951, %v8315
  %v8528 = vmul.f32 %v7956, %v8315
  %v8529 = vmul.f32 %v7959, %v8315
  %v8530 = vmul.f32 %v7964, %v8315
  %v8531 = vmul.f32 %v7967, %v8315
  %v8532 = vmul.f32 %v7972, %v8319
  %v8533 = vmul.f32 %v7975, %v8319
  %v8534 = vmul.f32 %v7980, %v8319
  %v8535 = vmul.f32 %v7983, %v8319
  %v8536 = vmul.f32 %v7988, %v8319
  %v8537 = vmul.f32 %v7991, %v8319
  %v8538 = vmul.f32 %v7996, %v8319
  %v8539 = vmul.f32 %v7999, %v8319
  %v8540 = vmul.f32 %v8004, %v8323
  %v8541 = vmul.f32 %v8007, %v8323
  %v8542 = vmul.f32 %v8012, %v8323
  %v8543 = vmul.f32 %v8015, %v8323
  %v8544 = vmul.f32 %v8020, %v8323
  %v8545 = vmul.f32 %v8023, %v8323
  %v8546 = vmul.f32 %v8028, %v8323
  %v8547 = vmul.f32 %v8031, %v8323
  %v8548 = vmul.f32 %v8036, %v8327
  %v8549 = vmul.f32 %v8039, %v8327
  %v8550 = vmul.f32 %v8044, %v8327
  %v8551 = vmul.f32 %v8047, %v8327
  %v8552 = vmul.f32 %v8052, %v8327
  %v8553 = vmul.f32 %v8055, %v8327
  %v8554 = vmul.f32 %v8060, %v8327
  %v8555 = vmul.f32 %v8063, %v8327
  %v8556 = vmul.f32 %v8161, %v8315
  %v8557 = vmul.f32 %v8164, %v8315
  %v8558 = vmul.f32 %v8169, %v8315
  %v8559 = vmul.f32 %v8172, %v8315
  %v8560 = vmul.f32 %v8177, %v8315
  %v8561 = vmul.f32 %v8180, %v8315
  %v8562 = vmul.f32 %v8185, %v8315
  %v8563 = vmul.f32 %v8188, %v8315
  %v8564 = vmul.f32 %v8193, %v8319
  %v8565 = vmul.f32 %v8196, %v8319
  %v8566 = vmul.f32 %v8201, %v8319
  %v8567 = vmul.f32 %v8204, %v8319
  %v8568 = vmul.f32 %v8209, %v8319
  %v8569 = vmul.f32 %v8212, %v8319
  %v8570 = vmul.f32 %v8217, %v8319
  %v8571 = vmul.f32 %v8220, %v8319
  %v8572 = vmul.f32 %v8225, %v8323
  %v8573 = vmul.f32 %v8228, %v8323
  %v8574 = vmul.f32 %v8233, %v8323
  %v8575 = vmul.f32 %v8236, %v8323
  %v8576 = vmul.f32 %v8241, %v8323
  %v8577 = vmul.f32 %v8244, %v8323
  %v8578 = vmul.f32 %v8249, %v8323
  %v8579 = vmul.f32 %v8252, %v8323
  %v8580 = vmul.f32 %v8257, %v8327
  %v8581 = vmul.f32 %v8260, %v8327
  %v8582 = vmul.f32 %v8265, %v8327
  %v8583 = vmul.f32 %v8268, %v8327
  %v8584 = vmul.f32 %v8273, %v8327
  %v8585 = vmul.f32 %v8276, %v8327
  %v8586 = vmul.f32 %v8281, %v8327
  %v8587 = vmul.f32 %v8284, %v8327
  %v8588 = vsel %vm263, %v8332, 0.0
  %v8589 = vsel %vm263, %v8340, 0.0
  %v8590 = vadd.f32 %v8588, %v8589
  %v8591 = vsel %vm263, %v8348, 0.0
  %v8592 = vadd.f32 %v8590, %v8591
  %v8593 = vsel %vm263, %v8356, 0.0
  %v8594 = vadd.f32 %v8592, %v8593
  %v8595 = vsel %vm263, %v8333, 0.0
  %v8596 = vsel %vm263, %v8341, 0.0
  %v8597 = vadd.f32 %v8595, %v8596
  %v8598 = vsel %vm263, %v8349, 0.0
  %v8599 = vadd.f32 %v8597, %v8598
  %v8600 = vsel %vm263, %v8357, 0.0
  %v8601 = vadd.f32 %v8599, %v8600
  %v8602 = vsel %vm263, %v8334, 0.0
  %v8603 = vsel %vm263, %v8342, 0.0
  %v8604 = vadd.f32 %v8602, %v8603
  %v8605 = vsel %vm263, %v8350, 0.0
  %v8606 = vadd.f32 %v8604, %v8605
  %v8607 = vsel %vm263, %v8358, 0.0
  %v8608 = vadd.f32 %v8606, %v8607
  %v8609 = vsel %vm263, %v8335, 0.0
  %v8610 = vsel %vm263, %v8343, 0.0
  %v8611 = vadd.f32 %v8609, %v8610
  %v8612 = vsel %vm263, %v8351, 0.0
  %v8613 = vadd.f32 %v8611, %v8612
  %v8614 = vsel %vm263, %v8359, 0.0
  %v8615 = vadd.f32 %v8613, %v8614
  %v8616 = vsel %vm263, %v8336, 0.0
  %v8617 = vsel %vm263, %v8344, 0.0
  %v8618 = vadd.f32 %v8616, %v8617
  %v8619 = vsel %vm263, %v8352, 0.0
  %v8620 = vadd.f32 %v8618, %v8619
  %v8621 = vsel %vm263, %v8360, 0.0
  %v8622 = vadd.f32 %v8620, %v8621
  %v8623 = vsel %vm263, %v8337, 0.0
  %v8624 = vsel %vm263, %v8345, 0.0
  %v8625 = vadd.f32 %v8623, %v8624
  %v8626 = vsel %vm263, %v8353, 0.0
  %v8627 = vadd.f32 %v8625, %v8626
  %v8628 = vsel %vm263, %v8361, 0.0
  %v8629 = vadd.f32 %v8627, %v8628
  %v8630 = vsel %vm263, %v8338, 0.0
  %v8631 = vsel %vm263, %v8346, 0.0
  %v8632 = vadd.f32 %v8630, %v8631
  %v8633 = vsel %vm263, %v8354, 0.0
  %v8634 = vadd.f32 %v8632, %v8633
  %v8635 = vsel %vm263, %v8362, 0.0
  %v8636 = vadd.f32 %v8634, %v8635
  %v8637 = vsel %vm263, %v8339, 0.0
  %v8638 = vsel %vm263, %v8347, 0.0
  %v8639 = vadd.f32 %v8637, %v8638
  %v8640 = vsel %vm263, %v8355, 0.0
  %v8641 = vadd.f32 %v8639, %v8640
  %v8642 = vsel %vm263, %v8363, 0.0
  %v8643 = vadd.f32 %v8641, %v8642
  %v8644 = vsel %vm263, %v8364, 0.0
  %v8645 = vsel %vm263, %v8372, 0.0
  %v8646 = vadd.f32 %v8644, %v8645
  %v8647 = vsel %vm263, %v8380, 0.0
  %v8648 = vadd.f32 %v8646, %v8647
  %v8649 = vsel %vm263, %v8388, 0.0
  %v8650 = vadd.f32 %v8648, %v8649
  %v8651 = vsel %vm263, %v8365, 0.0
  %v8652 = vsel %vm263, %v8373, 0.0
  %v8653 = vadd.f32 %v8651, %v8652
  %v8654 = vsel %vm263, %v8381, 0.0
  %v8655 = vadd.f32 %v8653, %v8654
  %v8656 = vsel %vm263, %v8389, 0.0
  %v8657 = vadd.f32 %v8655, %v8656
  %v8658 = vsel %vm263, %v8366, 0.0
  %v8659 = vsel %vm263, %v8374, 0.0
  %v8660 = vadd.f32 %v8658, %v8659
  %v8661 = vsel %vm263, %v8382, 0.0
  %v8662 = vadd.f32 %v8660, %v8661
  %v8663 = vsel %vm263, %v8390, 0.0
  %v8664 = vadd.f32 %v8662, %v8663
  %v8665 = vsel %vm263, %v8367, 0.0
  %v8666 = vsel %vm263, %v8375, 0.0
  %v8667 = vadd.f32 %v8665, %v8666
  %v8668 = vsel %vm263, %v8383, 0.0
  %v8669 = vadd.f32 %v8667, %v8668
  %v8670 = vsel %vm263, %v8391, 0.0
  %v8671 = vadd.f32 %v8669, %v8670
  %v8672 = vsel %vm263, %v8368, 0.0
  %v8673 = vsel %vm263, %v8376, 0.0
  %v8674 = vadd.f32 %v8672, %v8673
  %v8675 = vsel %vm263, %v8384, 0.0
  %v8676 = vadd.f32 %v8674, %v8675
  %v8677 = vsel %vm263, %v8392, 0.0
  %v8678 = vadd.f32 %v8676, %v8677
  %v8679 = vsel %vm263, %v8369, 0.0
  %v8680 = vsel %vm263, %v8377, 0.0
  %v8681 = vadd.f32 %v8679, %v8680
  %v8682 = vsel %vm263, %v8385, 0.0
  %v8683 = vadd.f32 %v8681, %v8682
  %v8684 = vsel %vm263, %v8393, 0.0
  %v8685 = vadd.f32 %v8683, %v8684
  %v8686 = vsel %vm263, %v8370, 0.0
  %v8687 = vsel %vm263, %v8378, 0.0
  %v8688 = vadd.f32 %v8686, %v8687
  %v8689 = vsel %vm263, %v8386, 0.0
  %v8690 = vadd.f32 %v8688, %v8689
  %v8691 = vsel %vm263, %v8394, 0.0
  %v8692 = vadd.f32 %v8690, %v8691
  %v8693 = vsel %vm263, %v8371, 0.0
  %v8694 = vsel %vm263, %v8379, 0.0
  %v8695 = vadd.f32 %v8693, %v8694
  %v8696 = vsel %vm263, %v8387, 0.0
  %v8697 = vadd.f32 %v8695, %v8696
  %v8698 = vsel %vm263, %v8395, 0.0
  %v8699 = vadd.f32 %v8697, %v8698
  %v8700 = vsel %vm263, %v8396, 0.0
  %v8701 = vsel %vm263, %v8404, 0.0
  %v8702 = vadd.f32 %v8700, %v8701
  %v8703 = vsel %vm263, %v8412, 0.0
  %v8704 = vadd.f32 %v8702, %v8703
  %v8705 = vsel %vm263, %v8420, 0.0
  %v8706 = vadd.f32 %v8704, %v8705
  %v8707 = vsel %vm263, %v8397, 0.0
  %v8708 = vsel %vm263, %v8405, 0.0
  %v8709 = vadd.f32 %v8707, %v8708
  %v8710 = vsel %vm263, %v8413, 0.0
  %v8711 = vadd.f32 %v8709, %v8710
  %v8712 = vsel %vm263, %v8421, 0.0
  %v8713 = vadd.f32 %v8711, %v8712
  %v8714 = vsel %vm263, %v8398, 0.0
  %v8715 = vsel %vm263, %v8406, 0.0
  %v8716 = vadd.f32 %v8714, %v8715
  %v8717 = vsel %vm263, %v8414, 0.0
  %v8718 = vadd.f32 %v8716, %v8717
  %v8719 = vsel %vm263, %v8422, 0.0
  %v8720 = vadd.f32 %v8718, %v8719
  %v8721 = vsel %vm263, %v8399, 0.0
  %v8722 = vsel %vm263, %v8407, 0.0
  %v8723 = vadd.f32 %v8721, %v8722
  %v8724 = vsel %vm263, %v8415, 0.0
  %v8725 = vadd.f32 %v8723, %v8724
  %v8726 = vsel %vm263, %v8423, 0.0
  %v8727 = vadd.f32 %v8725, %v8726
  %v8728 = vsel %vm263, %v8400, 0.0
  %v8729 = vsel %vm263, %v8408, 0.0
  %v8730 = vadd.f32 %v8728, %v8729
  %v8731 = vsel %vm263, %v8416, 0.0
  %v8732 = vadd.f32 %v8730, %v8731
  %v8733 = vsel %vm263, %v8424, 0.0
  %v8734 = vadd.f32 %v8732, %v8733
  %v8735 = vsel %vm263, %v8401, 0.0
  %v8736 = vsel %vm263, %v8409, 0.0
  %v8737 = vadd.f32 %v8735, %v8736
  %v8738 = vsel %vm263, %v8417, 0.0
  %v8739 = vadd.f32 %v8737, %v8738
  %v8740 = vsel %vm263, %v8425, 0.0
  %v8741 = vadd.f32 %v8739, %v8740
  %v8742 = vsel %vm263, %v8402, 0.0
  %v8743 = vsel %vm263, %v8410, 0.0
  %v8744 = vadd.f32 %v8742, %v8743
  %v8745 = vsel %vm263, %v8418, 0.0
  %v8746 = vadd.f32 %v8744, %v8745
  %v8747 = vsel %vm263, %v8426, 0.0
  %v8748 = vadd.f32 %v8746, %v8747
  %v8749 = vsel %vm263, %v8403, 0.0
  %v8750 = vsel %vm263, %v8411, 0.0
  %v8751 = vadd.f32 %v8749, %v8750
  %v8752 = vsel %vm263, %v8419, 0.0
  %v8753 = vadd.f32 %v8751, %v8752
  %v8754 = vsel %vm263, %v8427, 0.0
  %v8755 = vadd.f32 %v8753, %v8754
  %v8756 = vsel %vm263, %v8428, 0.0
  %v8757 = vsel %vm263, %v8436, 0.0
  %v8758 = vadd.f32 %v8756, %v8757
  %v8759 = vsel %vm263, %v8444, 0.0
  %v8760 = vadd.f32 %v8758, %v8759
  %v8761 = vsel %vm263, %v8452, 0.0
  %v8762 = vadd.f32 %v8760, %v8761
  %v8763 = vsel %vm263, %v8429, 0.0
  %v8764 = vsel %vm263, %v8437, 0.0
  %v8765 = vadd.f32 %v8763, %v8764
  %v8766 = vsel %vm263, %v8445, 0.0
  %v8767 = vadd.f32 %v8765, %v8766
  %v8768 = vsel %vm263, %v8453, 0.0
  %v8769 = vadd.f32 %v8767, %v8768
  %v8770 = vsel %vm263, %v8430, 0.0
  %v8771 = vsel %vm263, %v8438, 0.0
  %v8772 = vadd.f32 %v8770, %v8771
  %v8773 = vsel %vm263, %v8446, 0.0
  %v8774 = vadd.f32 %v8772, %v8773
  %v8775 = vsel %vm263, %v8454, 0.0
  %v8776 = vadd.f32 %v8774, %v8775
  %v8777 = vsel %vm263, %v8431, 0.0
  %v8778 = vsel %vm263, %v8439, 0.0
  %v8779 = vadd.f32 %v8777, %v8778
  %v8780 = vsel %vm263, %v8447, 0.0
  %v8781 = vadd.f32 %v8779, %v8780
  %v8782 = vsel %vm263, %v8455, 0.0
  %v8783 = vadd.f32 %v8781, %v8782
  %v8784 = vsel %vm263, %v8432, 0.0
  %v8785 = vsel %vm263, %v8440, 0.0
  %v8786 = vadd.f32 %v8784, %v8785
  %v8787 = vsel %vm263, %v8448, 0.0
  %v8788 = vadd.f32 %v8786, %v8787
  %v8789 = vsel %vm263, %v8456, 0.0
  %v8790 = vadd.f32 %v8788, %v8789
  %v8791 = vsel %vm263, %v8433, 0.0
  %v8792 = vsel %vm263, %v8441, 0.0
  %v8793 = vadd.f32 %v8791, %v8792
  %v8794 = vsel %vm263, %v8449, 0.0
  %v8795 = vadd.f32 %v8793, %v8794
  %v8796 = vsel %vm263, %v8457, 0.0
  %v8797 = vadd.f32 %v8795, %v8796
  %v8798 = vsel %vm263, %v8434, 0.0
  %v8799 = vsel %vm263, %v8442, 0.0
  %v8800 = vadd.f32 %v8798, %v8799
  %v8801 = vsel %vm263, %v8450, 0.0
  %v8802 = vadd.f32 %v8800, %v8801
  %v8803 = vsel %vm263, %v8458, 0.0
  %v8804 = vadd.f32 %v8802, %v8803
  %v8805 = vsel %vm263, %v8435, 0.0
  %v8806 = vsel %vm263, %v8443, 0.0
  %v8807 = vadd.f32 %v8805, %v8806
  %v8808 = vsel %vm263, %v8451, 0.0
  %v8809 = vadd.f32 %v8807, %v8808
  %v8810 = vsel %vm263, %v8459, 0.0
  %v8811 = vadd.f32 %v8809, %v8810
  %v8812 = vsel %vm263, %v8460, 0.0
  %v8813 = vsel %vm263, %v8468, 0.0
  %v8814 = vadd.f32 %v8812, %v8813
  %v8815 = vsel %vm263, %v8476, 0.0
  %v8816 = vadd.f32 %v8814, %v8815
  %v8817 = vsel %vm263, %v8484, 0.0
  %v8818 = vadd.f32 %v8816, %v8817
  %v8819 = vsel %vm263, %v8461, 0.0
  %v8820 = vsel %vm263, %v8469, 0.0
  %v8821 = vadd.f32 %v8819, %v8820
  %v8822 = vsel %vm263, %v8477, 0.0
  %v8823 = vadd.f32 %v8821, %v8822
  %v8824 = vsel %vm263, %v8485, 0.0
  %v8825 = vadd.f32 %v8823, %v8824
  %v8826 = vsel %vm263, %v8462, 0.0
  %v8827 = vsel %vm263, %v8470, 0.0
  %v8828 = vadd.f32 %v8826, %v8827
  %v8829 = vsel %vm263, %v8478, 0.0
  %v8830 = vadd.f32 %v8828, %v8829
  %v8831 = vsel %vm263, %v8486, 0.0
  %v8832 = vadd.f32 %v8830, %v8831
  %v8833 = vsel %vm263, %v8463, 0.0
  %v8834 = vsel %vm263, %v8471, 0.0
  %v8835 = vadd.f32 %v8833, %v8834
  %v8836 = vsel %vm263, %v8479, 0.0
  %v8837 = vadd.f32 %v8835, %v8836
  %v8838 = vsel %vm263, %v8487, 0.0
  %v8839 = vadd.f32 %v8837, %v8838
  %v8840 = vsel %vm263, %v8464, 0.0
  %v8841 = vsel %vm263, %v8472, 0.0
  %v8842 = vadd.f32 %v8840, %v8841
  %v8843 = vsel %vm263, %v8480, 0.0
  %v8844 = vadd.f32 %v8842, %v8843
  %v8845 = vsel %vm263, %v8488, 0.0
  %v8846 = vadd.f32 %v8844, %v8845
  %v8847 = vsel %vm263, %v8465, 0.0
  %v8848 = vsel %vm263, %v8473, 0.0
  %v8849 = vadd.f32 %v8847, %v8848
  %v8850 = vsel %vm263, %v8481, 0.0
  %v8851 = vadd.f32 %v8849, %v8850
  %v8852 = vsel %vm263, %v8489, 0.0
  %v8853 = vadd.f32 %v8851, %v8852
  %v8854 = vsel %vm263, %v8466, 0.0
  %v8855 = vsel %vm263, %v8474, 0.0
  %v8856 = vadd.f32 %v8854, %v8855
  %v8857 = vsel %vm263, %v8482, 0.0
  %v8858 = vadd.f32 %v8856, %v8857
  %v8859 = vsel %vm263, %v8490, 0.0
  %v8860 = vadd.f32 %v8858, %v8859
  %v8861 = vsel %vm263, %v8467, 0.0
  %v8862 = vsel %vm263, %v8475, 0.0
  %v8863 = vadd.f32 %v8861, %v8862
  %v8864 = vsel %vm263, %v8483, 0.0
  %v8865 = vadd.f32 %v8863, %v8864
  %v8866 = vsel %vm263, %v8491, 0.0
  %v8867 = vadd.f32 %v8865, %v8866
  %v8868 = vsel %vm263, %v8492, 0.0
  %v8869 = vsel %vm263, %v8500, 0.0
  %v8870 = vadd.f32 %v8868, %v8869
  %v8871 = vsel %vm263, %v8508, 0.0
  %v8872 = vadd.f32 %v8870, %v8871
  %v8873 = vsel %vm263, %v8516, 0.0
  %v8874 = vadd.f32 %v8872, %v8873
  %v8875 = vsel %vm263, %v8493, 0.0
  %v8876 = vsel %vm263, %v8501, 0.0
  %v8877 = vadd.f32 %v8875, %v8876
  %v8878 = vsel %vm263, %v8509, 0.0
  %v8879 = vadd.f32 %v8877, %v8878
  %v8880 = vsel %vm263, %v8517, 0.0
  %v8881 = vadd.f32 %v8879, %v8880
  %v8882 = vsel %vm263, %v8494, 0.0
  %v8883 = vsel %vm263, %v8502, 0.0
  %v8884 = vadd.f32 %v8882, %v8883
  %v8885 = vsel %vm263, %v8510, 0.0
  %v8886 = vadd.f32 %v8884, %v8885
  %v8887 = vsel %vm263, %v8518, 0.0
  %v8888 = vadd.f32 %v8886, %v8887
  %v8889 = vsel %vm263, %v8495, 0.0
  %v8890 = vsel %vm263, %v8503, 0.0
  %v8891 = vadd.f32 %v8889, %v8890
  %v8892 = vsel %vm263, %v8511, 0.0
  %v8893 = vadd.f32 %v8891, %v8892
  %v8894 = vsel %vm263, %v8519, 0.0
  %v8895 = vadd.f32 %v8893, %v8894
  %v8896 = vsel %vm263, %v8496, 0.0
  %v8897 = vsel %vm263, %v8504, 0.0
  %v8898 = vadd.f32 %v8896, %v8897
  %v8899 = vsel %vm263, %v8512, 0.0
  %v8900 = vadd.f32 %v8898, %v8899
  %v8901 = vsel %vm263, %v8520, 0.0
  %v8902 = vadd.f32 %v8900, %v8901
  %v8903 = vsel %vm263, %v8497, 0.0
  %v8904 = vsel %vm263, %v8505, 0.0
  %v8905 = vadd.f32 %v8903, %v8904
  %v8906 = vsel %vm263, %v8513, 0.0
  %v8907 = vadd.f32 %v8905, %v8906
  %v8908 = vsel %vm263, %v8521, 0.0
  %v8909 = vadd.f32 %v8907, %v8908
  %v8910 = vsel %vm263, %v8498, 0.0
  %v8911 = vsel %vm263, %v8506, 0.0
  %v8912 = vadd.f32 %v8910, %v8911
  %v8913 = vsel %vm263, %v8514, 0.0
  %v8914 = vadd.f32 %v8912, %v8913
  %v8915 = vsel %vm263, %v8522, 0.0
  %v8916 = vadd.f32 %v8914, %v8915
  %v8917 = vsel %vm263, %v8499, 0.0
  %v8918 = vsel %vm263, %v8507, 0.0
  %v8919 = vadd.f32 %v8917, %v8918
  %v8920 = vsel %vm263, %v8515, 0.0
  %v8921 = vadd.f32 %v8919, %v8920
  %v8922 = vsel %vm263, %v8523, 0.0
  %v8923 = vadd.f32 %v8921, %v8922
  %v8924 = vsel %vm263, %v8524, 0.0
  %v8925 = vsel %vm263, %v8532, 0.0
  %v8926 = vadd.f32 %v8924, %v8925
  %v8927 = vsel %vm263, %v8540, 0.0
  %v8928 = vadd.f32 %v8926, %v8927
  %v8929 = vsel %vm263, %v8548, 0.0
  %v8930 = vadd.f32 %v8928, %v8929
  %v8931 = vsel %vm263, %v8525, 0.0
  %v8932 = vsel %vm263, %v8533, 0.0
  %v8933 = vadd.f32 %v8931, %v8932
  %v8934 = vsel %vm263, %v8541, 0.0
  %v8935 = vadd.f32 %v8933, %v8934
  %v8936 = vsel %vm263, %v8549, 0.0
  %v8937 = vadd.f32 %v8935, %v8936
  %v8938 = vsel %vm263, %v8526, 0.0
  %v8939 = vsel %vm263, %v8534, 0.0
  %v8940 = vadd.f32 %v8938, %v8939
  %v8941 = vsel %vm263, %v8542, 0.0
  %v8942 = vadd.f32 %v8940, %v8941
  %v8943 = vsel %vm263, %v8550, 0.0
  %v8944 = vadd.f32 %v8942, %v8943
  %v8945 = vsel %vm263, %v8527, 0.0
  %v8946 = vsel %vm263, %v8535, 0.0
  %v8947 = vadd.f32 %v8945, %v8946
  %v8948 = vsel %vm263, %v8543, 0.0
  %v8949 = vadd.f32 %v8947, %v8948
  %v8950 = vsel %vm263, %v8551, 0.0
  %v8951 = vadd.f32 %v8949, %v8950
  %v8952 = vsel %vm263, %v8528, 0.0
  %v8953 = vsel %vm263, %v8536, 0.0
  %v8954 = vadd.f32 %v8952, %v8953
  %v8955 = vsel %vm263, %v8544, 0.0
  %v8956 = vadd.f32 %v8954, %v8955
  %v8957 = vsel %vm263, %v8552, 0.0
  %v8958 = vadd.f32 %v8956, %v8957
  %v8959 = vsel %vm263, %v8529, 0.0
  %v8960 = vsel %vm263, %v8537, 0.0
  %v8961 = vadd.f32 %v8959, %v8960
  %v8962 = vsel %vm263, %v8545, 0.0
  %v8963 = vadd.f32 %v8961, %v8962
  %v8964 = vsel %vm263, %v8553, 0.0
  %v8965 = vadd.f32 %v8963, %v8964
  %v8966 = vsel %vm263, %v8530, 0.0
  %v8967 = vsel %vm263, %v8538, 0.0
  %v8968 = vadd.f32 %v8966, %v8967
  %v8969 = vsel %vm263, %v8546, 0.0
  %v8970 = vadd.f32 %v8968, %v8969
  %v8971 = vsel %vm263, %v8554, 0.0
  %v8972 = vadd.f32 %v8970, %v8971
  %v8973 = vsel %vm263, %v8531, 0.0
  %v8974 = vsel %vm263, %v8539, 0.0
  %v8975 = vadd.f32 %v8973, %v8974
  %v8976 = vsel %vm263, %v8547, 0.0
  %v8977 = vadd.f32 %v8975, %v8976
  %v8978 = vsel %vm263, %v8555, 0.0
  %v8979 = vadd.f32 %v8977, %v8978
  %v8980 = vsel %vm263, %v8556, 0.0
  %v8981 = vsel %vm263, %v8564, 0.0
  %v8982 = vadd.f32 %v8980, %v8981
  %v8983 = vsel %vm263, %v8572, 0.0
  %v8984 = vadd.f32 %v8982, %v8983
  %v8985 = vsel %vm263, %v8580, 0.0
  %v8986 = vadd.f32 %v8984, %v8985
  %v8987 = vsel %vm263, %v8557, 0.0
  %v8988 = vsel %vm263, %v8565, 0.0
  %v8989 = vadd.f32 %v8987, %v8988
  %v8990 = vsel %vm263, %v8573, 0.0
  %v8991 = vadd.f32 %v8989, %v8990
  %v8992 = vsel %vm263, %v8581, 0.0
  %v8993 = vadd.f32 %v8991, %v8992
  %v8994 = vsel %vm263, %v8558, 0.0
  %v8995 = vsel %vm263, %v8566, 0.0
  %v8996 = vadd.f32 %v8994, %v8995
  %v8997 = vsel %vm263, %v8574, 0.0
  %v8998 = vadd.f32 %v8996, %v8997
  %v8999 = vsel %vm263, %v8582, 0.0
  %v9000 = vadd.f32 %v8998, %v8999
  %v9001 = vsel %vm263, %v8559, 0.0
  %v9002 = vsel %vm263, %v8567, 0.0
  %v9003 = vadd.f32 %v9001, %v9002
  %v9004 = vsel %vm263, %v8575, 0.0
  %v9005 = vadd.f32 %v9003, %v9004
  %v9006 = vsel %vm263, %v8583, 0.0
  %v9007 = vadd.f32 %v9005, %v9006
  %v9008 = vsel %vm263, %v8560, 0.0
  %v9009 = vsel %vm263, %v8568, 0.0
  %v9010 = vadd.f32 %v9008, %v9009
  %v9011 = vsel %vm263, %v8576, 0.0
  %v9012 = vadd.f32 %v9010, %v9011
  %v9013 = vsel %vm263, %v8584, 0.0
  %v9014 = vadd.f32 %v9012, %v9013
  %v9015 = vsel %vm263, %v8561, 0.0
  %v9016 = vsel %vm263, %v8569, 0.0
  %v9017 = vadd.f32 %v9015, %v9016
  %v9018 = vsel %vm263, %v8577, 0.0
  %v9019 = vadd.f32 %v9017, %v9018
  %v9020 = vsel %vm263, %v8585, 0.0
  %v9021 = vadd.f32 %v9019, %v9020
  %v9022 = vsel %vm263, %v8562, 0.0
  %v9023 = vsel %vm263, %v8570, 0.0
  %v9024 = vadd.f32 %v9022, %v9023
  %v9025 = vsel %vm263, %v8578, 0.0
  %v9026 = vadd.f32 %v9024, %v9025
  %v9027 = vsel %vm263, %v8586, 0.0
  %v9028 = vadd.f32 %v9026, %v9027
  %v9029 = vsel %vm263, %v8563, 0.0
  %v9030 = vsel %vm263, %v8571, 0.0
  %v9031 = vadd.f32 %v9029, %v9030
  %v9032 = vsel %vm263, %v8579, 0.0
  %v9033 = vadd.f32 %v9031, %v9032
  %v9034 = vsel %vm263, %v8587, 0.0
  %v9035 = vadd.f32 %v9033, %v9034
  %v9036 = vpack.c.bf16 %v8601, %v8594
  %v9037 = vpack.c.bf16 %v8615, %v8608
  %v9038 = vpack.c.bf16 %v8629, %v8622
  %v9039 = vpack.c.bf16 %v8643, %v8636
  %v9040 = vpack.c.bf16 %v8657, %v8650
  %v9041 = vpack.c.bf16 %v8671, %v8664
  %v9042 = vpack.c.bf16 %v8685, %v8678
  %v9043 = vpack.c.bf16 %v8699, %v8692
  %v9044 = vpack.c.bf16 %v8713, %v8706
  %v9045 = vpack.c.bf16 %v8727, %v8720
  %v9046 = vpack.c.bf16 %v8741, %v8734
  %v9047 = vpack.c.bf16 %v8755, %v8748
  %v9048 = vpack.c.bf16 %v8769, %v8762
  %v9049 = vpack.c.bf16 %v8783, %v8776
  %v9050 = vpack.c.bf16 %v8797, %v8790
  %v9051 = vpack.c.bf16 %v8811, %v8804
  %v9052 = vpack.c.bf16 %v8825, %v8818
  %v9053 = vpack.c.bf16 %v8839, %v8832
  %v9054 = vpack.c.bf16 %v8853, %v8846
  %v9055 = vpack.c.bf16 %v8867, %v8860
  %v9056 = vpack.c.bf16 %v8881, %v8874
  %v9057 = vpack.c.bf16 %v8895, %v8888
  %v9058 = vpack.c.bf16 %v8909, %v8902
  %v9059 = vpack.c.bf16 %v8923, %v8916
  %v9060 = vpack.c.bf16 %v8937, %v8930
  %v9061 = vpack.c.bf16 %v8951, %v8944
  %v9062 = vpack.c.bf16 %v8965, %v8958
  %v9063 = vpack.c.bf16 %v8979, %v8972
  %v9064 = vpack.c.bf16 %v8993, %v8986
  %v9065 = vpack.c.bf16 %v9007, %v9000
  %v9066 = vpack.c.bf16 %v9021, %v9014
  %v9067 = vpack.c.bf16 %v9035, %v9028
  %v9100 = vunpack.c.l.b16 %v9036
  %v9101 = vunpack.c.h.b16 %v9036
  %v9102 = vunpack.c.l.b16 %v9037
  %v9103 = vunpack.c.h.b16 %v9037
  %v9104 = vunpack.c.l.b16 %v9038
  %v9105 = vunpack.c.h.b16 %v9038
  %v9106 = vunpack.c.l.b16 %v9039
  %v9107 = vunpack.c.h.b16 %v9039
  %v9108 = vunpack.c.l.b16 %v9040
  %v9109 = vunpack.c.h.b16 %v9040
  %v9110 = vunpack.c.l.b16 %v9041
  %v9111 = vunpack.c.h.b16 %v9041
  %v9112 = vunpack.c.l.b16 %v9042
  %v9113 = vunpack.c.h.b16 %v9042
  %v9114 = vunpack.c.l.b16 %v9043
  %v9115 = vunpack.c.h.b16 %v9043
  %v9116 = vunpack.c.l.b16 %v9044
  %v9117 = vunpack.c.h.b16 %v9044
  %v9118 = vunpack.c.l.b16 %v9045
  %v9119 = vunpack.c.h.b16 %v9045
  %v9120 = vunpack.c.l.b16 %v9046
  %v9121 = vunpack.c.h.b16 %v9046
  %v9122 = vunpack.c.l.b16 %v9047
  %v9123 = vunpack.c.h.b16 %v9047
  %v9124 = vunpack.c.l.b16 %v9048
  %v9125 = vunpack.c.h.b16 %v9048
  %v9126 = vunpack.c.l.b16 %v9049
  %v9127 = vunpack.c.h.b16 %v9049
  %v9128 = vunpack.c.l.b16 %v9050
  %v9129 = vunpack.c.h.b16 %v9050
  %v9130 = vunpack.c.l.b16 %v9051
  %v9131 = vunpack.c.h.b16 %v9051
  %v9132 = vunpack.c.l.b16 %v9052
  %v9133 = vunpack.c.h.b16 %v9052
  %v9134 = vunpack.c.l.b16 %v9053
  %v9135 = vunpack.c.h.b16 %v9053
  %v9136 = vunpack.c.l.b16 %v9054
  %v9137 = vunpack.c.h.b16 %v9054
  %v9138 = vunpack.c.l.b16 %v9055
  %v9139 = vunpack.c.h.b16 %v9055
  %v9140 = vunpack.c.l.b16 %v9056
  %v9141 = vunpack.c.h.b16 %v9056
  %v9142 = vunpack.c.l.b16 %v9057
  %v9143 = vunpack.c.h.b16 %v9057
  %v9144 = vunpack.c.l.b16 %v9058
  %v9145 = vunpack.c.h.b16 %v9058
  %v9146 = vunpack.c.l.b16 %v9059
  %v9147 = vunpack.c.h.b16 %v9059
  %v9148 = vunpack.c.l.b16 %v9060
  %v9149 = vunpack.c.h.b16 %v9060
  %v9150 = vunpack.c.l.b16 %v9061
  %v9151 = vunpack.c.h.b16 %v9061
  %v9152 = vunpack.c.l.b16 %v9062
  %v9153 = vunpack.c.h.b16 %v9062
  %v9154 = vunpack.c.l.b16 %v9063
  %v9155 = vunpack.c.h.b16 %v9063
  %v9156 = vunpack.c.l.b16 %v9064
  %v9157 = vunpack.c.h.b16 %v9064
  %v9158 = vunpack.c.l.b16 %v9065
  %v9159 = vunpack.c.h.b16 %v9065
  %v9160 = vunpack.c.l.b16 %v9066
  %v9161 = vunpack.c.h.b16 %v9066
  %v9162 = vunpack.c.l.b16 %v9067
  %v9163 = vunpack.c.h.b16 %v9067
  %v9164 = vpack.c.b16 %v9100, %v9100
  %v9165 = vpack.c.b16 %v9101, %v9101
  %v9166 = vpack.c.b16 %v9102, %v9102
  %v9167 = vpack.c.b16 %v9103, %v9103
  %v9168 = vpack.c.b16 %v9104, %v9104
  %v9169 = vpack.c.b16 %v9105, %v9105
  %v9170 = vpack.c.b16 %v9106, %v9106
  %v9171 = vpack.c.b16 %v9107, %v9107
  %v9172 = vpack.c.b16 %v9108, %v9108
  %v9173 = vpack.c.b16 %v9109, %v9109
  %v9174 = vpack.c.b16 %v9110, %v9110
  %v9175 = vpack.c.b16 %v9111, %v9111
  %v9176 = vpack.c.b16 %v9112, %v9112
  %v9177 = vpack.c.b16 %v9113, %v9113
  %v9178 = vpack.c.b16 %v9114, %v9114
  %v9179 = vpack.c.b16 %v9115, %v9115
  %v9180 = vpack.c.b16 %v9116, %v9116
  %v9181 = vpack.c.b16 %v9117, %v9117
  %v9182 = vpack.c.b16 %v9118, %v9118
  %v9183 = vpack.c.b16 %v9119, %v9119
  %v9184 = vpack.c.b16 %v9120, %v9120
  %v9185 = vpack.c.b16 %v9121, %v9121
  %v9186 = vpack.c.b16 %v9122, %v9122
  %v9187 = vpack.c.b16 %v9123, %v9123
  %v9188 = vpack.c.b16 %v9124, %v9124
  %v9189 = vpack.c.b16 %v9125, %v9125
  %v9190 = vpack.c.b16 %v9126, %v9126
  %v9191 = vpack.c.b16 %v9127, %v9127
  %v9192 = vpack.c.b16 %v9128, %v9128
  %v9193 = vpack.c.b16 %v9129, %v9129
  %v9194 = vpack.c.b16 %v9130, %v9130
  %v9195 = vpack.c.b16 %v9131, %v9131
  %v9196 = vpack.c.b16 %v9132, %v9132
  %v9197 = vpack.c.b16 %v9133, %v9133
  %v9198 = vpack.c.b16 %v9134, %v9134
  %v9199 = vpack.c.b16 %v9135, %v9135
  %v9200 = vpack.c.b16 %v9136, %v9136
  %v9201 = vpack.c.b16 %v9137, %v9137
  %v9202 = vpack.c.b16 %v9138, %v9138
  %v9203 = vpack.c.b16 %v9139, %v9139
  %v9204 = vpack.c.b16 %v9140, %v9140
  %v9205 = vpack.c.b16 %v9141, %v9141
  %v9206 = vpack.c.b16 %v9142, %v9142
  %v9207 = vpack.c.b16 %v9143, %v9143
  %v9208 = vpack.c.b16 %v9144, %v9144
  %v9209 = vpack.c.b16 %v9145, %v9145
  %v9210 = vpack.c.b16 %v9146, %v9146
  %v9211 = vpack.c.b16 %v9147, %v9147
  %v9212 = vpack.c.b16 %v9148, %v9148
  %v9213 = vpack.c.b16 %v9149, %v9149
  %v9214 = vpack.c.b16 %v9150, %v9150
  %v9215 = vpack.c.b16 %v9151, %v9151
  %v9216 = vpack.c.b16 %v9152, %v9152
  %v9217 = vpack.c.b16 %v9153, %v9153
  %v9218 = vpack.c.b16 %v9154, %v9154
  %v9219 = vpack.c.b16 %v9155, %v9155
  %v9220 = vpack.c.b16 %v9156, %v9156
  %v9221 = vpack.c.b16 %v9157, %v9157
  %v9222 = vpack.c.b16 %v9158, %v9158
  %v9223 = vpack.c.b16 %v9159, %v9159
  %v9224 = vpack.c.b16 %v9160, %v9160
  %v9225 = vpack.c.b16 %v9161, %v9161
  %v9226 = vpack.c.b16 %v9162, %v9162
  %v9227 = vpack.c.b16 %v9163, %v9163
  %9292 = vst.msk [vmem:[%s5] sm:$0xf] %vm976, %v9164
  %9293 = vst.msk [vmem:[%s5 + $0x4] sm:$0xf] %vm976, %v9165
  %9294 = vst.msk [vmem:[%s5 + $0x8] sm:$0xf] %vm976, %v9166
  %9295 = vst.msk [vmem:[%s5 + $0xc] sm:$0xf] %vm976, %v9167
  %9296 = vst.msk [vmem:[%s5 + $0x10] sm:$0xf] %vm976, %v9168
  %9297 = vst.msk [vmem:[%s5 + $0x14] sm:$0xf] %vm976, %v9169
  %9298 = vst.msk [vmem:[%s5 + $0x18] sm:$0xf] %vm976, %v9170
  %9299 = vst.msk [vmem:[%s5 + $0x1c] sm:$0xf] %vm976, %v9171
  %9300 = vst.msk [vmem:[%s5 + $0x20] sm:$0xf] %vm976, %v9172
  %9301 = vst.msk [vmem:[%s5 + $0x24] sm:$0xf] %vm976, %v9173
  %9302 = vst.msk [vmem:[%s5 + $0x28] sm:$0xf] %vm976, %v9174
  %9303 = vst.msk [vmem:[%s5 + $0x2c] sm:$0xf] %vm976, %v9175
  %9304 = vst.msk [vmem:[%s5 + $0x30] sm:$0xf] %vm976, %v9176
  %9305 = vst.msk [vmem:[%s5 + $0x34] sm:$0xf] %vm976, %v9177
  %9306 = vst.msk [vmem:[%s5 + $0x38] sm:$0xf] %vm976, %v9178
  %9307 = vst.msk [vmem:[%s5 + $0x3c] sm:$0xf] %vm976, %v9179
  %9308 = vst.msk [vmem:[%s5 + $0x40] sm:$0xf] %vm976, %v9180
  %9309 = vst.msk [vmem:[%s5 + $0x44] sm:$0xf] %vm976, %v9181
  %9310 = vst.msk [vmem:[%s5 + $0x48] sm:$0xf] %vm976, %v9182
  %9311 = vst.msk [vmem:[%s5 + $0x4c] sm:$0xf] %vm976, %v9183
  %9312 = vst.msk [vmem:[%s5 + $0x50] sm:$0xf] %vm976, %v9184
  %9313 = vst.msk [vmem:[%s5 + $0x54] sm:$0xf] %vm976, %v9185
  %9314 = vst.msk [vmem:[%s5 + $0x58] sm:$0xf] %vm976, %v9186
  %9315 = vst.msk [vmem:[%s5 + $0x5c] sm:$0xf] %vm976, %v9187
  %9316 = vst.msk [vmem:[%s5 + $0x60] sm:$0xf] %vm976, %v9188
  %9317 = vst.msk [vmem:[%s5 + $0x64] sm:$0xf] %vm976, %v9189
  %9318 = vst.msk [vmem:[%s5 + $0x68] sm:$0xf] %vm976, %v9190
  %9319 = vst.msk [vmem:[%s5 + $0x6c] sm:$0xf] %vm976, %v9191
  %9320 = vst.msk [vmem:[%s5 + $0x70] sm:$0xf] %vm976, %v9192
  %9321 = vst.msk [vmem:[%s5 + $0x74] sm:$0xf] %vm976, %v9193
  %9322 = vst.msk [vmem:[%s5 + $0x78] sm:$0xf] %vm976, %v9194
  %9323 = vst.msk [vmem:[%s5 + $0x7c] sm:$0xf] %vm976, %v9195
  %9324 = vst.msk [vmem:[%s5 + $0x80] sm:$0xf] %vm976, %v9196
  %9325 = vst.msk [vmem:[%s5 + $0x84] sm:$0xf] %vm976, %v9197
  %9326 = vst.msk [vmem:[%s5 + $0x88] sm:$0xf] %vm976, %v9198
  %9327 = vst.msk [vmem:[%s5 + $0x8c] sm:$0xf] %vm976, %v9199
  %9328 = vst.msk [vmem:[%s5 + $0x90] sm:$0xf] %vm976, %v9200
  %9329 = vst.msk [vmem:[%s5 + $0x94] sm:$0xf] %vm976, %v9201
  %9330 = vst.msk [vmem:[%s5 + $0x98] sm:$0xf] %vm976, %v9202
  %9331 = vst.msk [vmem:[%s5 + $0x9c] sm:$0xf] %vm976, %v9203
  %9332 = vst.msk [vmem:[%s5 + $0xa0] sm:$0xf] %vm976, %v9204
  %9333 = vst.msk [vmem:[%s5 + $0xa4] sm:$0xf] %vm976, %v9205
  %9334 = vst.msk [vmem:[%s5 + $0xa8] sm:$0xf] %vm976, %v9206
  %9335 = vst.msk [vmem:[%s5 + $0xac] sm:$0xf] %vm976, %v9207
  %9336 = vst.msk [vmem:[%s5 + $0xb0] sm:$0xf] %vm976, %v9208
  %9337 = vst.msk [vmem:[%s5 + $0xb4] sm:$0xf] %vm976, %v9209
  %9338 = vst.msk [vmem:[%s5 + $0xb8] sm:$0xf] %vm976, %v9210
  %9339 = vst.msk [vmem:[%s5 + $0xbc] sm:$0xf] %vm976, %v9211
  %9340 = vst.msk [vmem:[%s5 + $0xc0] sm:$0xf] %vm976, %v9212
  %9341 = vst.msk [vmem:[%s5 + $0xc4] sm:$0xf] %vm976, %v9213
  %9342 = vst.msk [vmem:[%s5 + $0xc8] sm:$0xf] %vm976, %v9214
  %9343 = vst.msk [vmem:[%s5 + $0xcc] sm:$0xf] %vm976, %v9215
  %9344 = vst.msk [vmem:[%s5 + $0xd0] sm:$0xf] %vm976, %v9216
  %9345 = vst.msk [vmem:[%s5 + $0xd4] sm:$0xf] %vm976, %v9217
  %9346 = vst.msk [vmem:[%s5 + $0xd8] sm:$0xf] %vm976, %v9218
  %9347 = vst.msk [vmem:[%s5 + $0xdc] sm:$0xf] %vm976, %v9219
  %9348 = vst.msk [vmem:[%s5 + $0xe0] sm:$0xf] %vm976, %v9220
  %9349 = vst.msk [vmem:[%s5 + $0xe4] sm:$0xf] %vm976, %v9221
  %9350 = vst.msk [vmem:[%s5 + $0xe8] sm:$0xf] %vm976, %v9222
  %9351 = vst.msk [vmem:[%s5 + $0xec] sm:$0xf] %vm976, %v9223
  %9352 = vst.msk [vmem:[%s5 + $0xf0] sm:$0xf] %vm976, %v9224
  %9353 = vst.msk [vmem:[%s5 + $0xf4] sm:$0xf] %vm976, %v9225
  %9354 = vst.msk [vmem:[%s5 + $0xf8] sm:$0xf] %vm976, %v9226
  %9355 = vst.msk [vmem:[%s5 + $0xfc] sm:$0xf] %vm976, %v9227
  // Predicated region
  $region22: #{global_local_attention_forward.2} parent=0 // pred_check
    _
  $region23: #{global_local_attention_forward.2} parent=0 // pred_check_branch
    %9357 = sbr.rel (0) target = $region25
  $region24: #{global_local_attention_forward.2} parent=0 // pred_region
    _
  $region25: #{global_local_attention_forward.2} parent=0 // pred_fallthru
    _
  // Predicated region
  $region26: #{global_local_attention_forward.2} parent=0 // pred_check
    _
  $region27: #{global_local_attention_forward.2} parent=0 // pred_check_branch
    %9359 = sbr.rel (0) target = $region29
  $region28: #{global_local_attention_forward.2} parent=0 // pred_region
    _
  $region29: #{global_local_attention_forward.2} parent=0 // pred_fallthru
    _
  // Predicated region
  $region30: #{global_local_attention_forward.2} parent=0 // pred_check
    _
  $region31: #{global_local_attention_forward.2} parent=0 // pred_check_branch
    %9361 = sbr.rel (0) target = $region33
  $region32: #{global_local_attention_forward.2} parent=0 // pred_region
    _
  $region33: #{global_local_attention_forward.2} parent=0 // pred_fallthru
    _
  // Predicated region
  $region34: #{global_local_attention_forward.2} parent=0 // pred_check
    _
  $region35: #{global_local_attention_forward.2} parent=0 // pred_check_branch
    %9363 = sbr.rel (0) target = $region37
  $region36: #{global_local_attention_forward.2} parent=0 // pred_region
    _
  $region37: #{global_local_attention_forward.2} parent=0 // pred_fallthru
    _

// kernel: tile.8
$region0: #{tile.8}
  #allocation0 [shape = 's32[1]{0}', space=sflag, size = 0x4, scoped, tag = 'scoped memory for tile.8']
  %s0 = inlined_call_operand.vmem [shape: f32[32], index: 0, kind: input, shape index: {}]
  %s1 = inlined_call_operand.vmem [shape: f32[4,32], index: 1, kind: output, shape index: {}]
  // Predicated region
  $region2: #{tile.8} parent=0 // pred_check
    _
  $region3: #{tile.8} parent=0 // pred_check_branch
    %3 = sbr.rel (0) target = $region5
  $region4: #{tile.8} parent=0 // pred_region
    _
  $region5: #{tile.8} parent=0 // pred_fallthru
    _
  %v4 = vld [vmem:[%s0] ss:$0 sm:$0xff]
  %5 = vst [vmem:[%s1] sm:$0xf] %v4

// kernel: tile.9
$region0: #{tile.9}
  %s0 = inlined_call_operand.vmem [shape: f32[4,32], index: 0, kind: input, shape index: {}]
  %s1 = inlined_call_operand.vmem [shape: f32[1,128], index: 1, kind: output, shape index: {}]
  $region1: #{tile.9} parent=0
    #allocation0 [shape = 'u8[4096]{0}', space=vmem, size = 0x1000, scoped, tag = 'scoped mem for output reshape']
    #allocation1 [shape = 'u8[4096]{0}', space=vmem, size = 0x1000, scoped, tag = 'scoped mem for input reshape']
    %s3 = sshll.u32 1, 4
    %s4 = ssub.s32 %s3, 1
    %v5 = vld [vmem:[%s0] sm:%s4]
    %6 = vst [vmem:[#allocation1] sm:%s4] %v5
    %v7 = vld [vmem:[#allocation1] sm:$0x1]
    %vm8 = vcmask 261120
    %9 = vst.msk [vmem:[#allocation0] sm:$0x1] %vm8, %v7
    %s10 = scalar_lea.vmem [#allocation1], 3
    %v11 = vld [vmem:[%s10] sm:$0x1]
    %12 = vrot.lane.b32.xlu0 %v11, 96
    %v13 = vpop.permute.xlu0 %12
    %vm14 = vcmask 1048320
    %15 = vst.msk [vmem:[#allocation0] sm:$0x1] %vm14, %v13
    %s16 = scalar_lea.vmem [#allocation1], 2
    %v17 = vld [vmem:[%s16] sm:$0x1]
    %18 = vrot.lane.b32.xlu0 %v17, 64
    %v19 = vpop.permute.xlu0 %18
    %vm20 = vcmask 785920
    %21 = vst.msk [vmem:[#allocation0] sm:$0x1] %vm20, %v19
    %s22 = scalar_lea.vmem [#allocation1], 1
    %v23 = vld [vmem:[%s22] sm:$0x1]
    %24 = vrot.lane.b32.xlu0 %v23, 32
    %v25 = vpop.permute.xlu0 %24
    %vm26 = vcmask 523520
    %27 = vst.msk [vmem:[#allocation0] sm:$0x1] %vm26, %v25
    %s29 = sshll.u32 1, 1
    %s30 = ssub.s32 %s29, 1
    %v32 = vld [vmem:[#allocation0] sm:%s30]
    %s33 = sshll.u32 1, 1
    %s34 = ssub.s32 %s33, 1
    %35 = vst [vmem:[%s1] sm:%s34] %v32

// kernel: global_local_attention_forward.3
$region0: #{global_local_attention_forward.3}
  #allocation0 [shape = 'u32[]', space=smem, size = 0x4, offset = 0x4, fixed_abs, tag = 'smem constant byte address 0x4 - core index']
  #allocation1 [shape = 'u32[144,128]{1,0:T(1,128)}', space=vmem, size = 0x12000, scoped, tag = 'internal scratch']
  %s0 = inlined_call_operand.vmem [shape: bf16[128,128], index: 0, kind: input, shape index: {}]
  %s1 = inlined_call_operand.vmem [shape: bf16[128,128], index: 1, kind: input, shape index: {}]
  %s2 = inlined_call_operand.vmem [shape: f32[1,128], index: 2, kind: input, shape index: {}]
  %s3 = inlined_call_operand.vmem [shape: f32[128,128], index: 3, kind: output, shape index: {}]
  %s4 = sld [smem:[#allocation0]]
  $region22: #{global_local_attention_forward.3} parent=0
    _
  %s6 = ssub.s32 1, %s4
  %s7 = scalar_select 0, %s6, %s4
  // Predicated region
  $region2: #{global_local_attention_forward.3} parent=0 // pred_check
    _
  $region3: #{global_local_attention_forward.3} parent=0 // pred_check_branch
    %9 = sbr.rel (0) target = $region5
  $region4: #{global_local_attention_forward.3} parent=0 // pred_region
    _
  $region5: #{global_local_attention_forward.3} parent=0 // pred_fallthru
    _
  // Predicated region
  $region6: #{global_local_attention_forward.3} parent=0 // pred_check
    _
  $region7: #{global_local_attention_forward.3} parent=0 // pred_check_branch
    %11 = sbr.rel (0) target = $region9
  $region8: #{global_local_attention_forward.3} parent=0 // pred_region
    _
  $region9: #{global_local_attention_forward.3} parent=0 // pred_fallthru
    _
  // Predicated region
  $region10: #{global_local_attention_forward.3} parent=0 // pred_check
    _
  $region11: #{global_local_attention_forward.3} parent=0 // pred_check_branch
    %13 = sbr.rel (0) target = $region13
  $region12: #{global_local_attention_forward.3} parent=0 // pred_region
    _
  $region13: #{global_local_attention_forward.3} parent=0 // pred_fallthru
    _
  %v15 = vld [vmem:[%s0] sm:$0xf]
  %v16 = vld [vmem:[%s0 + $0x4] sm:$0xf]
  %v17 = vld [vmem:[%s0 + $0x8] sm:$0xf]
  %v18 = vld [vmem:[%s0 + $0xc] sm:$0xf]
  %v19 = vld [vmem:[%s0 + $0x10] sm:$0xf]
  %v20 = vld [vmem:[%s0 + $0x14] sm:$0xf]
  %v21 = vld [vmem:[%s0 + $0x18] sm:$0xf]
  %v22 = vld [vmem:[%s0 + $0x1c] sm:$0xf]
  %v23 = vld [vmem:[%s0 + $0x20] sm:$0xf]
  %v24 = vld [vmem:[%s0 + $0x24] sm:$0xf]
  %v25 = vld [vmem:[%s0 + $0x28] sm:$0xf]
  %v26 = vld [vmem:[%s0 + $0x2c] sm:$0xf]
  %v27 = vld [vmem:[%s0 + $0x30] sm:$0xf]
  %v28 = vld [vmem:[%s0 + $0x34] sm:$0xf]
  %v29 = vld [vmem:[%s0 + $0x38] sm:$0xf]
  %v30 = vld [vmem:[%s0 + $0x3c] sm:$0xf]
  %v31 = vld [vmem:[%s1] sm:$0xf]
  %v32 = vld [vmem:[%s1 + $0x4] sm:$0xf]
  %v33 = vld [vmem:[%s1 + $0x8] sm:$0xf]
  %v34 = vld [vmem:[%s1 + $0xc] sm:$0xf]
  %v35 = vld [vmem:[%s1 + $0x10] sm:$0xf]
  %v36 = vld [vmem:[%s1 + $0x14] sm:$0xf]
  %v37 = vld [vmem:[%s1 + $0x18] sm:$0xf]
  %v38 = vld [vmem:[%s1 + $0x1c] sm:$0xf]
  %v39 = vld [vmem:[%s1 + $0x20] sm:$0xf]
  %v40 = vld [vmem:[%s1 + $0x24] sm:$0xf]
  %v41 = vld [vmem:[%s1 + $0x28] sm:$0xf]
  %v42 = vld [vmem:[%s1 + $0x2c] sm:$0xf]
  %v43 = vld [vmem:[%s1 + $0x30] sm:$0xf]
  %v44 = vld [vmem:[%s1 + $0x34] sm:$0xf]
  %v45 = vld [vmem:[%s1 + $0x38] sm:$0xf]
  %v46 = vld [vmem:[%s1 + $0x3c] sm:$0xf]
  %v47 = vld [vmem:[%s2] sm:$0x1]
  %v49 = vlaneseq
  %v50 = vshrl.u32 %v49, 7
  %v51 = vsub.s32 0, %v50
  %v52 = vrot.slane %v47, %v51
  %v70 = vunpack.c.l.b16 %v15
  %v71 = vunpack.c.l.b16 %v16
  %v72 = vunpack.c.l.b16 %v17
  %v73 = vunpack.c.l.b16 %v18
  %v74 = vunpack.c.l.b16 %v19
  %v75 = vunpack.c.l.b16 %v20
  %v76 = vunpack.c.l.b16 %v21
  %v77 = vunpack.c.l.b16 %v22
  %v78 = vunpack.c.l.b16 %v23
  %v79 = vunpack.c.l.b16 %v24
  %v80 = vunpack.c.l.b16 %v25
  %v81 = vunpack.c.l.b16 %v26
  %v82 = vunpack.c.l.b16 %v27
  %v83 = vunpack.c.l.b16 %v28
  %v84 = vunpack.c.l.b16 %v29
  %v85 = vunpack.c.l.b16 %v30
  %v86 = vpack.c.b16 %v71, %v70
  %v87 = vpack.c.b16 %v73, %v72
  %v88 = vpack.c.b16 %v75, %v74
  %v89 = vpack.c.b16 %v77, %v76
  %v90 = vpack.c.b16 %v79, %v78
  %v91 = vpack.c.b16 %v81, %v80
  %v92 = vpack.c.b16 %v83, %v82
  %v93 = vpack.c.b16 %v85, %v84
  %v118 = vunpack.c.l.b16 %v31
  %v119 = vunpack.c.l.b16 %v32
  %v120 = vunpack.c.l.b16 %v33
  %v121 = vunpack.c.l.b16 %v34
  %v122 = vunpack.c.l.b16 %v35
  %v123 = vunpack.c.l.b16 %v36
  %v124 = vunpack.c.l.b16 %v37
  %v125 = vunpack.c.l.b16 %v38
  %v126 = vunpack.c.l.b16 %v39
  %v127 = vunpack.c.l.b16 %v40
  %v128 = vunpack.c.l.b16 %v41
  %v129 = vunpack.c.l.b16 %v42
  %v130 = vunpack.c.l.b16 %v43
  %v131 = vunpack.c.l.b16 %v44
  %v132 = vunpack.c.l.b16 %v45
  %v133 = vunpack.c.l.b16 %v46
  %v134 = vpack.c.b16 %v119, %v118
  %v135 = vpack.c.b16 %v121, %v120
  %v136 = vpack.c.b16 %v123, %v122
  %v137 = vpack.c.b16 %v125, %v124
  %v138 = vpack.c.b16 %v127, %v126
  %v139 = vpack.c.b16 %v129, %v128
  %v140 = vpack.c.b16 %v131, %v130
  %v141 = vpack.c.b16 %v133, %v132
  %150 = vmatprep.subr.bf16.mxu0 0
  %151 = vmatpush1.bf16.msra.mxu0 %v141
  %152 = vmatprep.subr.bf16.mxu0 0
  %153 = vmatpush1.bf16.msra.mxu0 %v140
  %154 = vmatprep.subr.bf16.mxu0 0
  %155 = vmatpush1.bf16.msra.mxu0 %v139
  %156 = vmatprep.subr.bf16.mxu0 0
  %157 = vmatpush1.bf16.msra.mxu0 %v138
  %158 = vmatprep.subr.bf16.mxu0 0
  %159 = vmatpush1.bf16.msra.mxu0 %v137
  %160 = vmatprep.subr.bf16.mxu0 0
  %161 = vmatpush1.bf16.msra.mxu0 %v136
  %162 = vmatprep.subr.bf16.mxu0 0
  %163 = vmatpush1.bf16.msra.mxu0 %v135
  %164 = vmatprep.subr.bf16.mxu0 0
  %165 = vmatpush1.bf16.msra.mxu0 %v134
  %166 = vmatprep.subr.bf16.mxu0 0
  %167 = vmatpush2.bf16.msra.mxu0 0
  %168 = vmatprep.subr.bf16.mxu0 0
  %169 = vmatpush2.bf16.msra.mxu0 0
  %170 = vmatprep.subr.bf16.mxu0 0
  %171 = vmatpush2.bf16.msra.mxu0 0
  %172 = vmatprep.subr.bf16.mxu0 0
  %173 = vmatpush2.bf16.msra.mxu0 0
  %174 = vmatprep.subr.bf16.mxu0 0
  %175 = vmatpush2.bf16.msra.mxu0 0
  %176 = vmatprep.subr.bf16.mxu0 0
  %177 = vmatpush2.bf16.msra.mxu0 0
  %178 = vmatprep.subr.bf16.mxu0 0
  %179 = vmatpush2.bf16.msra.mxu0 0
  %180 = vmatprep.subr.bf16.mxu0 0
  %181 = vmatpush2.bf16.msra.mxu0 0
  %182 = vmatprep.mubr.bf16.mxu0 0
  %183 = vmatmul.mubr.bf16.gmra.mxu0 %v86
  %v184 = vpop.f32.mrf.mxu0
  %v185 = vadd.f32 %v52, %v184
  %v186 = vpop.f32.mrf.mxu0
  %v187 = vpop.f32.mrf.mxu0
  %v188 = vadd.f32 %v52, %v187
  %v189 = vpop.f32.mrf.mxu0
  %190 = vmatprep.mubr.bf16.mxu0 0
  %191 = vmatmul.mubr.bf16.gmra.mxu0 %v87
  %v192 = vpop.f32.mrf.mxu0
  %v193 = vadd.f32 %v52, %v192
  %v194 = vpop.f32.mrf.mxu0
  %v195 = vpop.f32.mrf.mxu0
  %v196 = vadd.f32 %v52, %v195
  %v197 = vpop.f32.mrf.mxu0
  %198 = vmatprep.mubr.bf16.mxu0 0
  %199 = vmatmul.mubr.bf16.gmra.mxu0 %v88
  %v200 = vpop.f32.mrf.mxu0
  %v201 = vadd.f32 %v52, %v200
  %v202 = vpop.f32.mrf.mxu0
  %v203 = vpop.f32.mrf.mxu0
  %v204 = vadd.f32 %v52, %v203
  %v205 = vpop.f32.mrf.mxu0
  %206 = vmatprep.mubr.bf16.mxu0 0
  %207 = vmatmul.mubr.bf16.gmra.mxu0 %v89
  %v208 = vpop.f32.mrf.mxu0
  %v209 = vadd.f32 %v52, %v208
  %v210 = vpop.f32.mrf.mxu0
  %v211 = vpop.f32.mrf.mxu0
  %v212 = vadd.f32 %v52, %v211
  %v213 = vpop.f32.mrf.mxu0
  %214 = vmatprep.mubr.bf16.mxu0 0
  %215 = vmatmul.mubr.bf16.gmra.mxu0 %v90
  %v216 = vpop.f32.mrf.mxu0
  %v217 = vadd.f32 %v52, %v216
  %v218 = vpop.f32.mrf.mxu0
  %v219 = vpop.f32.mrf.mxu0
  %v220 = vadd.f32 %v52, %v219
  %v221 = vpop.f32.mrf.mxu0
  %222 = vmatprep.mubr.bf16.mxu0 0
  %223 = vmatmul.mubr.bf16.gmra.mxu0 %v91
  %v224 = vpop.f32.mrf.mxu0
  %v225 = vadd.f32 %v52, %v224
  %v226 = vpop.f32.mrf.mxu0
  %v227 = vpop.f32.mrf.mxu0
  %v228 = vadd.f32 %v52, %v227
  %v229 = vpop.f32.mrf.mxu0
  %230 = vmatprep.mubr.bf16.mxu0 0
  %231 = vmatmul.mubr.bf16.gmra.mxu0 %v92
  %v232 = vpop.f32.mrf.mxu0
  %v233 = vadd.f32 %v52, %v232
  %v234 = vpop.f32.mrf.mxu0
  %v235 = vpop.f32.mrf.mxu0
  %v236 = vadd.f32 %v52, %v235
  %v237 = vpop.f32.mrf.mxu0
  %238 = vmatprep.mubr.bf16.mxu0 0
  %239 = vmatmul.mubr.bf16.gmra.mxu0 %v93
  %v240 = vpop.f32.mrf.mxu0
  %v241 = vadd.f32 %v52, %v240
  %v242 = vpop.f32.mrf.mxu0
  %v243 = vpop.f32.mrf.mxu0
  %v244 = vadd.f32 %v52, %v243
  %v245 = vpop.f32.mrf.mxu0
  %246 = vdwg.mxu0
  %247 = vst [vmem:[%s3] sm:$0xff] %v185
  %248 = vst [vmem:[%s3 + $0x8] sm:$0xff] %v188
  %249 = vst [vmem:[%s3 + $0x10] sm:$0xff] %v193
  %250 = vst [vmem:[%s3 + $0x18] sm:$0xff] %v196
  %251 = vst [vmem:[%s3 + $0x20] sm:$0xff] %v201
  %252 = vst [vmem:[%s3 + $0x28] sm:$0xff] %v204
  %253 = vst [vmem:[%s3 + $0x30] sm:$0xff] %v209
  %254 = vst [vmem:[%s3 + $0x38] sm:$0xff] %v212
  %255 = vst [vmem:[%s3 + $0x40] sm:$0xff] %v217
  %256 = vst [vmem:[%s3 + $0x48] sm:$0xff] %v220
  %257 = vst [vmem:[%s3 + $0x50] sm:$0xff] %v225
  %258 = vst [vmem:[%s3 + $0x58] sm:$0xff] %v228
  %259 = vst [vmem:[%s3 + $0x60] sm:$0xff] %v233
  %260 = vst [vmem:[%s3 + $0x68] sm:$0xff] %v236
  %261 = vst [vmem:[%s3 + $0x70] sm:$0xff] %v241
  %262 = vst [vmem:[%s3 + $0x78] sm:$0xff] %v244
  // Predicated region
  $region14: #{global_local_attention_forward.3} parent=0 // pred_check
    _
  $region15: #{global_local_attention_forward.3} parent=0 // pred_check_branch
    %264 = sbr.rel (0) target = $region17
  $region16: #{global_local_attention_forward.3} parent=0 // pred_region
    _
  $region17: #{global_local_attention_forward.3} parent=0 // pred_fallthru
    _
  // Predicated region
  $region18: #{global_local_attention_forward.3} parent=0 // pred_check
    _
  $region19: #{global_local_attention_forward.3} parent=0 // pred_check_branch
    %266 = sbr.rel (0) target = $region21
  $region20: #{global_local_attention_forward.3} parent=0 // pred_region
    _
  $region21: #{global_local_attention_forward.3} parent=0 // pred_fallthru
    _

</llo_original>
